<compile_context>
chip_gen: v7x
topology: tpu7x:2x2x1
jax: 0.10.0
libtpu: 0.0.40
codegen_flags: <defaults>
</compile_context>

<pallas_src>
import jax
import jax.numpy as jnp
from jax.experimental import pallas as pl
from jax.experimental.pallas import tpu as pltpu

HIDDEN = 100      # PyTorch module hidden width
HP = 128          # lane-padded hidden width used inside the kernel
IN_DIM = 2        # cat([x, t], dim=1)
OUT_DIM = 2       # (u, v)
OUT_PAD = 8       # lane-padded output-layer width
ROW_TILE = 1024   # rows per grid step for large batches (multiple of 8)


def _mlp_kernel(x_ref, t_ref,
                w0_ref, b0_ref,
                w1_ref, b1_ref,
                w2_ref, b2_ref,
                w3_ref, b3_ref,
                wo_ref, bo_ref,
                u_ref, v_ref):
    """4-hidden-layer tanh MLP + linear head for one row tile."""
    xv = x_ref[...]                                    # [tm, 1]
    tv = t_ref[...]                                    # [tm, 1]
    # First layer (K=2): two VPU broadcast FMAs instead of an MXU push.
    h = jnp.tanh(xv * w0_ref[0:1, :] + tv * w0_ref[1:2, :] + b0_ref[...])
    h = jnp.tanh(jnp.dot(h, w1_ref[...],
                         preferred_element_type=jnp.float32) + b1_ref[...])
    h = jnp.tanh(jnp.dot(h, w2_ref[...],
                         preferred_element_type=jnp.float32) + b2_ref[...])
    h = jnp.tanh(jnp.dot(h, w3_ref[...],
                         preferred_element_type=jnp.float32) + b3_ref[...])
    o = jnp.dot(h, wo_ref[...],
                preferred_element_type=jnp.float32) + bo_ref[...]   # [tm, 8]
    u_ref[...] = o[:, 0:1]
    v_ref[...] = o[:, 1:2]


def init_params(key):
    """Deterministic params, same shapes as the PyTorch module.

    Weights stored as [in_features, out_features] (transposed vs
    torch.nn.Linear.weight) so the kernel computes `h @ W + b`.
    """
    dims = [(IN_DIM, HIDDEN), (HIDDEN, HIDDEN), (HIDDEN, HIDDEN),
            (HIDDEN, HIDDEN), (HIDDEN, OUT_DIM)]
    params = []
    for fan_in, fan_out in dims:
        key, kw, kb = jax.random.split(key, 3)
        bound = 1.0 / jnp.sqrt(float(fan_in))      # matches nn.Linear default
        w = jax.random.uniform(kw, (fan_in, fan_out), jnp.float32,
                               -bound, bound)
        b = jax.random.uniform(kb, (fan_out,), jnp.float32, -bound, bound)
        params.append((w, b))
    return params


def _pad_params(params):
    """Zero-pad feature dims (hidden -> 128, output -> 8); padding is inert."""
    padded = []
    last = len(params) - 1
    for i, (w, b) in enumerate(params):
        fin, fout = w.shape
        fin_p = fin if i == 0 else HP               # first layer keeps K=2
        fout_p = OUT_PAD if i == last else HP
        wp = jnp.zeros((fin_p, fout_p), jnp.float32).at[:fin, :fout].set(w)
        bp = jnp.zeros((1, fout_p), jnp.float32).at[0, :fout].set(b)
        padded.append((wp, bp))
    return padded


def _tiling(n):
    """Pick the row tile and padded row count (static, from array shape)."""
    if n >= 2 * ROW_TILE:
        tm = ROW_TILE
        # Even number of tiles so the parallel grid axis splits across both
        # v7x TensorCores.
        n_pad = -(-n // (2 * tm)) * (2 * tm)
    else:
        tm = -(-n // 8) * 8                         # single tile, 8-row aligned
        n_pad = tm
    return tm, n_pad


@jax.jit
def dnn_forward(x, t, params_padded):
    """x: [N, 1], t: [N, 1]  ->  (u: [N, 1], v: [N, 1])"""
    x = x.astype(jnp.float32)
    t = t.astype(jnp.float32)
    n = x.shape[0]
    tm, n_pad = _tiling(n)
    x_p = jnp.pad(x, ((0, n_pad - n), (0, 0)))
    t_p = jnp.pad(t, ((0, n_pad - n), (0, 0)))

    (w0, b0), (w1, b1), (w2, b2), (w3, b3), (wo, bo) = params_padded

    full = lambda a: pl.BlockSpec(a.shape, lambda i: (0, 0))
    col = pl.BlockSpec((tm, 1), lambda i: (i, 0))

    u_pad, v_pad = pl.pallas_call(
        _mlp_kernel,
        out_shape=(jax.ShapeDtypeStruct((n_pad, 1), jnp.float32),
                   jax.ShapeDtypeStruct((n_pad, 1), jnp.float32)),
        grid_spec=pltpu.PrefetchScalarGridSpec(
            num_scalar_prefetch=0,
            grid=(n_pad // tm,),
            in_specs=[
                col, col,                            # x tile, t tile
                full(w0), full(b0),
                full(w1), full(b1),
                full(w2), full(b2),
                full(w3), full(b3),
                full(wo), full(bo),
            ],
            out_specs=[col, col],                    # u tile, v tile
        ),
        compiler_params=pltpu.CompilerParams(
            dimension_semantics=("parallel",)),
    )(x_p, t_p, w0, b0, w1, b1, w2, b2, w3, b3, wo, bo)

    return u_pad[:n], v_pad[:n]


def _reference_forward(x, t, params):
    """Pure-JAX reference matching the PyTorch forward."""
    h = jnp.concatenate([x, t], axis=1)
    for (w, b) in params[:-1]:
        h = jnp.tanh(h @ w + b)
    w, b = params[-1]
    out = h @ w + b
    return out[:, 0:1], out[:, 1:2]


if __name__ == "__main__":
    key = jax.random.PRNGKey(0)
    kp, kx, kt = jax.random.split(key, 3)

    params = init_params(kp)
    params_padded = _pad_params(params)

    N = 3000                                # small batch of collocation points
    x = jax.random.uniform(kx, (N, 1), jnp.float32, -5.0, 5.0)
    t = jax.random.uniform(kt, (N, 1), jnp.float32, 0.0, 1.5)

    u, v = dnn_forward(x, t, params_padded)
    u = jax.block_until_ready(u)
    v = jax.block_until_ready(v)

    u_ref, v_ref = _reference_forward(x, t, params)
    assert u.shape == (N, 1) and v.shape == (N, 1)
    assert jnp.allclose(u, u_ref, atol=1e-4, rtol=1e-4)
    assert jnp.allclose(v, v_ref, atol=1e-4, rtol=1e-4)

    print("KERNEL_OK")
</pallas_src>

<mosaic_0001>
module attributes {stable_mosaic.version = 11 : i64} {
  func.func @_mlp_kernel(%arg0: i32, %arg1: memref<1024x1xf32, #tpu.memory_space<vmem>>, %arg2: memref<1024x1xf32, #tpu.memory_space<vmem>>, %arg3: memref<2x128xf32, #tpu.memory_space<vmem>>, %arg4: memref<1x128xf32, #tpu.memory_space<vmem>>, %arg5: memref<128x128xf32, #tpu.memory_space<vmem>>, %arg6: memref<1x128xf32, #tpu.memory_space<vmem>>, %arg7: memref<128x128xf32, #tpu.memory_space<vmem>>, %arg8: memref<1x128xf32, #tpu.memory_space<vmem>>, %arg9: memref<128x128xf32, #tpu.memory_space<vmem>>, %arg10: memref<1x128xf32, #tpu.memory_space<vmem>>, %arg11: memref<128x8xf32, #tpu.memory_space<vmem>>, %arg12: memref<1x8xf32, #tpu.memory_space<vmem>>, %arg13: memref<1024x1xf32, #tpu.memory_space<vmem>>, %arg14: memref<1024x1xf32, #tpu.memory_space<vmem>>) attributes {dimension_semantics = [#tpu.dimension_semantics<parallel>], iteration_bounds = array<i64: 4>, scalar_prefetch = 0 : i64, scratch_operands = 0 : i64, tpu.core_type = #tpu.core_type<tc>, window_params = [{transform_indices = @transform_0, window_bounds = array<i64: 1024, 1>}, {transform_indices = @transform_1, window_bounds = array<i64: 1024, 1>}, {pipeline_mode = #tpu.pipeline_mode<synchronous>, transform_indices = @transform_2, window_bounds = array<i64: 2, 128>}, {pipeline_mode = #tpu.pipeline_mode<synchronous>, transform_indices = @transform_3, window_bounds = array<i64: 1, 128>}, {pipeline_mode = #tpu.pipeline_mode<synchronous>, transform_indices = @transform_4, window_bounds = array<i64: 128, 128>}, {pipeline_mode = #tpu.pipeline_mode<synchronous>, transform_indices = @transform_5, window_bounds = array<i64: 1, 128>}, {pipeline_mode = #tpu.pipeline_mode<synchronous>, transform_indices = @transform_6, window_bounds = array<i64: 128, 128>}, {pipeline_mode = #tpu.pipeline_mode<synchronous>, transform_indices = @transform_7, window_bounds = array<i64: 1, 128>}, {pipeline_mode = #tpu.pipeline_mode<synchronous>, transform_indices = @transform_8, window_bounds = array<i64: 128, 128>}, {pipeline_mode = #tpu.pipeline_mode<synchronous>, transform_indices = @transform_9, window_bounds = array<i64: 1, 128>}, {pipeline_mode = #tpu.pipeline_mode<synchronous>, transform_indices = @transform_10, window_bounds = array<i64: 128, 8>}, {pipeline_mode = #tpu.pipeline_mode<synchronous>, transform_indices = @transform_11, window_bounds = array<i64: 1, 8>}, {transform_indices = @transform_12, window_bounds = array<i64: 1024, 1>}, {transform_indices = @transform_13, window_bounds = array<i64: 1024, 1>}]} {
    %c0 = arith.constant 0 : index
    %c0_0 = arith.constant 0 : index
    %0 = vector.load %arg1[%c0, %c0_0] : memref<1024x1xf32, #tpu.memory_space<vmem>>, vector<1024x1xf32>
    %c0_1 = arith.constant 0 : index
    %c0_2 = arith.constant 0 : index
    %1 = vector.load %arg2[%c0_1, %c0_2] : memref<1024x1xf32, #tpu.memory_space<vmem>>, vector<1024x1xf32>
    %c0_3 = arith.constant 0 : index
    %c0_4 = arith.constant 0 : index
    %2 = vector.load %arg3[%c0_3, %c0_4] : memref<2x128xf32, #tpu.memory_space<vmem>>, vector<1x128xf32>
    %3 = vector.broadcast %0 : vector<1024x1xf32> to vector<1024x128xf32>
    %4 = vector.broadcast %2 : vector<1x128xf32> to vector<1024x128xf32>
    %5 = arith.mulf %3, %4 : vector<1024x128xf32>
    %c1 = arith.constant 1 : index
    %c0_5 = arith.constant 0 : index
    %6 = vector.load %arg3[%c1, %c0_5] : memref<2x128xf32, #tpu.memory_space<vmem>>, vector<1x128xf32>
    %7 = vector.broadcast %1 : vector<1024x1xf32> to vector<1024x128xf32>
    %8 = vector.broadcast %6 : vector<1x128xf32> to vector<1024x128xf32>
    %9 = arith.mulf %7, %8 : vector<1024x128xf32>
    %10 = arith.addf %5, %9 : vector<1024x128xf32>
    %c0_6 = arith.constant 0 : index
    %c0_7 = arith.constant 0 : index
    %11 = vector.load %arg4[%c0_6, %c0_7] : memref<1x128xf32, #tpu.memory_space<vmem>>, vector<1x128xf32>
    %12 = vector.broadcast %11 : vector<1x128xf32> to vector<1024x128xf32>
    %13 = arith.addf %10, %12 : vector<1024x128xf32>
    %14 = math.tanh %13 : vector<1024x128xf32>
    %c0_8 = arith.constant 0 : index
    %c0_9 = arith.constant 0 : index
    %15 = vector.load %arg5[%c0_8, %c0_9] : memref<128x128xf32, #tpu.memory_space<vmem>>, vector<128x128xf32>
    %cst = arith.constant dense<0.000000e+00> : vector<1024x128xf32>
    %16 = tpu.matmul %14, %15, %cst {dimension_numbers = #tpu.dot_dimension_numbers<[1], [0], [0], [1], [0, 0, 1, 1], [], []>} : vector<1024x128xf32>, vector<128x128xf32>, vector<1024x128xf32> -> vector<1024x128xf32>
    %c0_10 = arith.constant 0 : index
    %c0_11 = arith.constant 0 : index
    %17 = vector.load %arg6[%c0_10, %c0_11] : memref<1x128xf32, #tpu.memory_space<vmem>>, vector<1x128xf32>
    %18 = vector.broadcast %17 : vector<1x128xf32> to vector<1024x128xf32>
    %19 = arith.addf %16, %18 : vector<1024x128xf32>
    %20 = math.tanh %19 : vector<1024x128xf32>
    %c0_12 = arith.constant 0 : index
    %c0_13 = arith.constant 0 : index
    %21 = vector.load %arg7[%c0_12, %c0_13] : memref<128x128xf32, #tpu.memory_space<vmem>>, vector<128x128xf32>
    %cst_14 = arith.constant dense<0.000000e+00> : vector<1024x128xf32>
    %22 = tpu.matmul %20, %21, %cst_14 {dimension_numbers = #tpu.dot_dimension_numbers<[1], [0], [0], [1], [0, 0, 1, 1], [], []>} : vector<1024x128xf32>, vector<128x128xf32>, vector<1024x128xf32> -> vector<1024x128xf32>
    %c0_15 = arith.constant 0 : index
    %c0_16 = arith.constant 0 : index
    %23 = vector.load %arg8[%c0_15, %c0_16] : memref<1x128xf32, #tpu.memory_space<vmem>>, vector<1x128xf32>
    %24 = vector.broadcast %23 : vector<1x128xf32> to vector<1024x128xf32>
    %25 = arith.addf %22, %24 : vector<1024x128xf32>
    %26 = math.tanh %25 : vector<1024x128xf32>
    %c0_17 = arith.constant 0 : index
    %c0_18 = arith.constant 0 : index
    %27 = vector.load %arg9[%c0_17, %c0_18] : memref<128x128xf32, #tpu.memory_space<vmem>>, vector<128x128xf32>
    %cst_19 = arith.constant dense<0.000000e+00> : vector<1024x128xf32>
    %28 = tpu.matmul %26, %27, %cst_19 {dimension_numbers = #tpu.dot_dimension_numbers<[1], [0], [0], [1], [0, 0, 1, 1], [], []>} : vector<1024x128xf32>, vector<128x128xf32>, vector<1024x128xf32> -> vector<1024x128xf32>
    %c0_20 = arith.constant 0 : index
    %c0_21 = arith.constant 0 : index
    %29 = vector.load %arg10[%c0_20, %c0_21] : memref<1x128xf32, #tpu.memory_space<vmem>>, vector<1x128xf32>
    %30 = vector.broadcast %29 : vector<1x128xf32> to vector<1024x128xf32>
    %31 = arith.addf %28, %30 : vector<1024x128xf32>
    %32 = math.tanh %31 : vector<1024x128xf32>
    %c0_22 = arith.constant 0 : index
    %c0_23 = arith.constant 0 : index
    %33 = vector.load %arg11[%c0_22, %c0_23] : memref<128x8xf32, #tpu.memory_space<vmem>>, vector<128x8xf32>
    %cst_24 = arith.constant dense<0.000000e+00> : vector<1024x8xf32>
    %34 = tpu.matmul %32, %33, %cst_24 {dimension_numbers = #tpu.dot_dimension_numbers<[1], [0], [0], [1], [0, 0, 1, 1], [], []>} : vector<1024x128xf32>, vector<128x8xf32>, vector<1024x8xf32> -> vector<1024x8xf32>
    %c0_25 = arith.constant 0 : index
    %c0_26 = arith.constant 0 : index
    %35 = vector.load %arg12[%c0_25, %c0_26] : memref<1x8xf32, #tpu.memory_space<vmem>>, vector<1x8xf32>
    %36 = vector.broadcast %35 : vector<1x8xf32> to vector<1024x8xf32>
    %37 = arith.addf %34, %36 : vector<1024x8xf32>
    %38 = vector.extract_strided_slice %37 {offsets = [0, 0], sizes = [1024, 1], strides = [1, 1]} : vector<1024x8xf32> to vector<1024x1xf32>
    %c0_27 = arith.constant 0 : index
    %c0_28 = arith.constant 0 : index
    %39 = vector.load %arg13[%c0_27, %c0_28] : memref<1024x1xf32, #tpu.memory_space<vmem>>, vector<1024x1xf32>
    tpu.vector_store %arg13[%c0_27, %c0_28], %38 {strides = array<i32>} : memref<1024x1xf32, #tpu.memory_space<vmem>>, vector<1024x1xf32>,
    %40 = vector.extract_strided_slice %37 {offsets = [0, 1], sizes = [1024, 1], strides = [1, 1]} : vector<1024x8xf32> to vector<1024x1xf32>
    %c0_29 = arith.constant 0 : index
    %c0_30 = arith.constant 0 : index
    %41 = vector.load %arg14[%c0_29, %c0_30] : memref<1024x1xf32, #tpu.memory_space<vmem>>, vector<1024x1xf32>
    tpu.vector_store %arg14[%c0_29, %c0_30], %40 {strides = array<i32>} : memref<1024x1xf32, #tpu.memory_space<vmem>>, vector<1024x1xf32>,
    return
  }
  func.func @transform_0(%arg0: i32) -> (i32, i32) {
    %c0_i32 = arith.constant 0 : i32
    %c0_i32_0 = arith.constant 0 : i32
    return %arg0, %c0_i32 : i32, i32
  }
  func.func @transform_1(%arg0: i32) -> (i32, i32) {
    %c0_i32 = arith.constant 0 : i32
    %c0_i32_0 = arith.constant 0 : i32
    return %arg0, %c0_i32 : i32, i32
  }
  func.func @transform_2(%arg0: i32) -> (i32, i32) {
    %c0_i32 = arith.constant 0 : i32
    %c0_i32_0 = arith.constant 0 : i32
    %c0_i32_1 = arith.constant 0 : i32
    return %c0_i32, %c0_i32_0 : i32, i32
  }
  func.func @transform_3(%arg0: i32) -> (i32, i32) {
    %c0_i32 = arith.constant 0 : i32
    %c0_i32_0 = arith.constant 0 : i32
    %c0_i32_1 = arith.constant 0 : i32
    return %c0_i32, %c0_i32_0 : i32, i32
  }
  func.func @transform_4(%arg0: i32) -> (i32, i32) {
    %c0_i32 = arith.constant 0 : i32
    %c0_i32_0 = arith.constant 0 : i32
    %c0_i32_1 = arith.constant 0 : i32
    return %c0_i32, %c0_i32_0 : i32, i32
  }
  func.func @transform_5(%arg0: i32) -> (i32, i32) {
    %c0_i32 = arith.constant 0 : i32
    %c0_i32_0 = arith.constant 0 : i32
    %c0_i32_1 = arith.constant 0 : i32
    return %c0_i32, %c0_i32_0 : i32, i32
  }
  func.func @transform_6(%arg0: i32) -> (i32, i32) {
    %c0_i32 = arith.constant 0 : i32
    %c0_i32_0 = arith.constant 0 : i32
    %c0_i32_1 = arith.constant 0 : i32
    return %c0_i32, %c0_i32_0 : i32, i32
  }
  func.func @transform_7(%arg0: i32) -> (i32, i32) {
    %c0_i32 = arith.constant 0 : i32
    %c0_i32_0 = arith.constant 0 : i32
    %c0_i32_1 = arith.constant 0 : i32
    return %c0_i32, %c0_i32_0 : i32, i32
  }
  func.func @transform_8(%arg0: i32) -> (i32, i32) {
    %c0_i32 = arith.constant 0 : i32
    %c0_i32_0 = arith.constant 0 : i32
    %c0_i32_1 = arith.constant 0 : i32
    return %c0_i32, %c0_i32_0 : i32, i32
  }
  func.func @transform_9(%arg0: i32) -> (i32, i32) {
    %c0_i32 = arith.constant 0 : i32
    %c0_i32_0 = arith.constant 0 : i32
    %c0_i32_1 = arith.constant 0 : i32
    return %c0_i32, %c0_i32_0 : i32, i32
  }
  func.func @transform_10(%arg0: i32) -> (i32, i32) {
    %c0_i32 = arith.constant 0 : i32
    %c0_i32_0 = arith.constant 0 : i32
    %c0_i32_1 = arith.constant 0 : i32
    return %c0_i32, %c0_i32_0 : i32, i32
  }
  func.func @transform_11(%arg0: i32) -> (i32, i32) {
    %c0_i32 = arith.constant 0 : i32
    %c0_i32_0 = arith.constant 0 : i32
    %c0_i32_1 = arith.constant 0 : i32
    return %c0_i32, %c0_i32_0 : i32, i32
  }
  func.func @transform_12(%arg0: i32) -> (i32, i32) {
    %c0_i32 = arith.constant 0 : i32
    %c0_i32_0 = arith.constant 0 : i32
    return %arg0, %c0_i32 : i32, i32
  }
  func.func @transform_13(%arg0: i32) -> (i32, i32) {
    %c0_i32 = arith.constant 0 : i32
    %c0_i32_0 = arith.constant 0 : i32
    return %arg0, %c0_i32 : i32, i32
  }
}

</mosaic_0001>

<llo_original>
// kernel: dnn_forward.1
$region0: #{dnn_forward.1}
  #allocation0 [shape = 'u32[]', space=smem, size = 0x4, offset = 0x4, fixed_abs, tag = 'smem constant byte address 0x4 - core index']
  #allocation1 [shape = 'u32[144,128]{1,0:T(1,128)}', space=vmem, size = 0x12000, scoped, tag = 'internal scratch']
  %s0 = inlined_call_operand.vmem [shape: f32[4096,1], index: 0, kind: input, shape index: {}]
  %s1 = inlined_call_operand.vmem [shape: f32[4096,1], index: 1, kind: input, shape index: {}]
  %s2 = inlined_call_operand.vmem [shape: f32[2,128], index: 2, kind: input, shape index: {}]
  %s3 = inlined_call_operand.vmem [shape: f32[1,128], index: 3, kind: input, shape index: {}]
  %s4 = inlined_call_operand.vmem [shape: f32[128,128], index: 4, kind: input, shape index: {}]
  %s5 = inlined_call_operand.vmem [shape: f32[1,128], index: 5, kind: input, shape index: {}]
  %s6 = inlined_call_operand.vmem [shape: f32[128,128], index: 6, kind: input, shape index: {}]
  %s7 = inlined_call_operand.vmem [shape: f32[1,128], index: 7, kind: input, shape index: {}]
  %s8 = inlined_call_operand.vmem [shape: f32[128,128], index: 8, kind: input, shape index: {}]
  %s9 = inlined_call_operand.vmem [shape: f32[1,128], index: 9, kind: input, shape index: {}]
  %s10 = inlined_call_operand.vmem [shape: f32[128,8], index: 10, kind: input, shape index: {}]
  %s11 = inlined_call_operand.vmem [shape: f32[1,8], index: 11, kind: input, shape index: {}]
  %s12 = inlined_call_operand.vmem [shape: f32[4096,1], index: 12, kind: output, shape index: {0}]
  %s13 = inlined_call_operand.vmem [shape: f32[4096,1], index: 13, kind: output, shape index: {1}]
  %14 = xla_tuple %s12, %s13
  %s15 = sld [smem:[#allocation0]]
  $region89: #{dnn_forward.1} parent=0
    _
  %s17 = ssub.s32 1, %s15
  %s18 = scalar_select 0, %s17, %s15
  loop: start=0, step=1, limit=6
  $region2: #{dnn_forward.1} parent=0 // loop_pre_header
    _
  $region3: #{dnn_forward.1} parent=0 // loop_header
    %s20 = sphi 0, %s24
    %p21 = scmp.ge.s32.totalorder %s20, 6
    %s30 = sphi 0, %s32
    %s33 = sphi 0, %s30
    %s34 = sphi 0, %s33
    %s50 = sphi 0, %s34
    %s56 = sphi 0, %s58
    %s59 = sphi 0, %s56
    %s60 = sphi 0, %s59
    %s76 = sphi 0, %s60
    %s80 = sphi 0, %s80
    %s82 = sphi 0, %s80
    %s83 = sphi 0, %s82
    %s97 = sphi 0, %s83
    %s101 = sphi 0, %s101
    %s103 = sphi 0, %s101
    %s104 = sphi 0, %s103
    %s118 = sphi 0, %s104
    %s122 = sphi 0, %s122
    %s124 = sphi 0, %s122
    %s125 = sphi 0, %s124
    %s139 = sphi 0, %s125
    %s143 = sphi 0, %s143
    %s145 = sphi 0, %s143
    %s146 = sphi 0, %s145
    %s160 = sphi 0, %s146
    %s164 = sphi 0, %s164
    %s166 = sphi 0, %s164
    %s167 = sphi 0, %s166
    %s181 = sphi 0, %s167
    %s185 = sphi 0, %s185
    %s187 = sphi 0, %s185
    %s188 = sphi 0, %s187
    %s202 = sphi 0, %s188
    %s206 = sphi 0, %s206
    %s208 = sphi 0, %s206
    %s209 = sphi 0, %s208
    %s223 = sphi 0, %s209
    %s227 = sphi 0, %s227
    %s229 = sphi 0, %s227
    %s230 = sphi 0, %s229
    %s244 = sphi 0, %s230
    %s248 = sphi 0, %s248
    %s250 = sphi 0, %s248
    %s251 = sphi 0, %s250
    %s265 = sphi 0, %s251
    %s269 = sphi 0, %s269
    %s271 = sphi 0, %s269
    %s272 = sphi 0, %s271
    %s286 = sphi 0, %s272
    %s292 = sphi 0, %s294
    %s295 = sphi 0, %s292
    %s296 = sphi 0, %s295
    %s312 = sphi 0, %s296
    %s318 = sphi 0, %s320
    %s321 = sphi 0, %s318
    %s322 = sphi 0, %s321
    %s338 = sphi 0, %s322
  $region4: #{dnn_forward.1} parent=0 // loop_header_branch
    %23 = sbr.rel (%p21) target = $region8
  $region5: #{dnn_forward.1} parent=0 // loop_body
    %s25 = ssub.s32 %s20, 1
    %s26 = ssub.s32 %s20, 2
    %s27 = sadd.s32 %s20, 1
    %s28 = ssub.s32 %s20, %s27
    %p29 = scmp.eq.s32.totalorder %s28, 0
    %s31 = sadd.s32 %s30, 1
    %s32 = scalar_select %p29, %s30, %s31
    %p35 = pneg %p29
    %p36 = scmp.eq.s32.totalorder %s20, 3
    %p37 = por %p35, %p36
    %p38 = scmp.ne.s32.totalorder %s30, %s33
    %p39 = scmp.eq.s32.totalorder %s20, 0
    %p40 = por %p38, %p39
    %p41 = scmp.ne.s32.totalorder %s30, %s33
    %p42 = scmp.eq.s32.totalorder %s25, 3
    %p43 = por %p41, %p42
    %p44 = scmp.ne.s32.totalorder %s33, %s34
    %p45 = scmp.eq.s32.totalorder %s25, 0
    %p46 = por %p44, %p45
    %p47 = scmp.ne.s32.totalorder %s33, %s34
    %p48 = scmp.eq.s32.totalorder %s26, 3
    %p49 = por %p47, %p48
    %p51 = scmp.ne.s32.totalorder %s34, %s50
    %p52 = scmp.eq.s32.totalorder %s26, 0
    %p53 = por %p51, %p52
    %s54 = ssub.s32 %s20, %s27
    %p55 = scmp.eq.s32.totalorder %s54, 0
    %s57 = sadd.s32 %s56, 1
    %s58 = scalar_select %p55, %s56, %s57
    %p61 = pneg %p55
    %p62 = scmp.eq.s32.totalorder %s20, 3
    %p63 = por %p61, %p62
    %p64 = scmp.ne.s32.totalorder %s56, %s59
    %p65 = scmp.eq.s32.totalorder %s20, 0
    %p66 = por %p64, %p65
    %p67 = scmp.ne.s32.totalorder %s56, %s59
    %p68 = scmp.eq.s32.totalorder %s25, 3
    %p69 = por %p67, %p68
    %p70 = scmp.ne.s32.totalorder %s59, %s60
    %p71 = scmp.eq.s32.totalorder %s25, 0
    %p72 = por %p70, %p71
    %p73 = scmp.ne.s32.totalorder %s59, %s60
    %p74 = scmp.eq.s32.totalorder %s26, 3
    %p75 = por %p73, %p74
    %p77 = scmp.ne.s32.totalorder %s60, %s76
    %p78 = scmp.eq.s32.totalorder %s26, 0
    %p79 = por %p77, %p78
    %s81 = sadd.s32 %s80, 1
    %p84 = scmp.eq.s32.totalorder %s20, 3
    %p85 = scmp.ne.s32.totalorder %s80, %s82
    %p86 = scmp.eq.s32.totalorder %s20, 0
    %p87 = por %p85, %p86
    %p88 = scmp.ne.s32.totalorder %s80, %s82
    %p89 = scmp.eq.s32.totalorder %s25, 3
    %p90 = por %p88, %p89
    %p91 = scmp.ne.s32.totalorder %s82, %s83
    %p92 = scmp.eq.s32.totalorder %s25, 0
    %p93 = por %p91, %p92
    %p94 = scmp.ne.s32.totalorder %s82, %s83
    %p95 = scmp.eq.s32.totalorder %s26, 3
    %p96 = por %p94, %p95
    %p98 = scmp.ne.s32.totalorder %s83, %s97
    %p99 = scmp.eq.s32.totalorder %s26, 0
    %p100 = por %p98, %p99
    %s102 = sadd.s32 %s101, 1
    %p105 = scmp.eq.s32.totalorder %s20, 3
    %p106 = scmp.ne.s32.totalorder %s101, %s103
    %p107 = scmp.eq.s32.totalorder %s20, 0
    %p108 = por %p106, %p107
    %p109 = scmp.ne.s32.totalorder %s101, %s103
    %p110 = scmp.eq.s32.totalorder %s25, 3
    %p111 = por %p109, %p110
    %p112 = scmp.ne.s32.totalorder %s103, %s104
    %p113 = scmp.eq.s32.totalorder %s25, 0
    %p114 = por %p112, %p113
    %p115 = scmp.ne.s32.totalorder %s103, %s104
    %p116 = scmp.eq.s32.totalorder %s26, 3
    %p117 = por %p115, %p116
    %p119 = scmp.ne.s32.totalorder %s104, %s118
    %p120 = scmp.eq.s32.totalorder %s26, 0
    %p121 = por %p119, %p120
    %s123 = sadd.s32 %s122, 1
    %p126 = scmp.eq.s32.totalorder %s20, 3
    %p127 = scmp.ne.s32.totalorder %s122, %s124
    %p128 = scmp.eq.s32.totalorder %s20, 0
    %p129 = por %p127, %p128
    %p130 = scmp.ne.s32.totalorder %s122, %s124
    %p131 = scmp.eq.s32.totalorder %s25, 3
    %p132 = por %p130, %p131
    %p133 = scmp.ne.s32.totalorder %s124, %s125
    %p134 = scmp.eq.s32.totalorder %s25, 0
    %p135 = por %p133, %p134
    %p136 = scmp.ne.s32.totalorder %s124, %s125
    %p137 = scmp.eq.s32.totalorder %s26, 3
    %p138 = por %p136, %p137
    %p140 = scmp.ne.s32.totalorder %s125, %s139
    %p141 = scmp.eq.s32.totalorder %s26, 0
    %p142 = por %p140, %p141
    %s144 = sadd.s32 %s143, 1
    %p147 = scmp.eq.s32.totalorder %s20, 3
    %p148 = scmp.ne.s32.totalorder %s143, %s145
    %p149 = scmp.eq.s32.totalorder %s20, 0
    %p150 = por %p148, %p149
    %p151 = scmp.ne.s32.totalorder %s143, %s145
    %p152 = scmp.eq.s32.totalorder %s25, 3
    %p153 = por %p151, %p152
    %p154 = scmp.ne.s32.totalorder %s145, %s146
    %p155 = scmp.eq.s32.totalorder %s25, 0
    %p156 = por %p154, %p155
    %p157 = scmp.ne.s32.totalorder %s145, %s146
    %p158 = scmp.eq.s32.totalorder %s26, 3
    %p159 = por %p157, %p158
    %p161 = scmp.ne.s32.totalorder %s146, %s160
    %p162 = scmp.eq.s32.totalorder %s26, 0
    %p163 = por %p161, %p162
    %s165 = sadd.s32 %s164, 1
    %p168 = scmp.eq.s32.totalorder %s20, 3
    %p169 = scmp.ne.s32.totalorder %s164, %s166
    %p170 = scmp.eq.s32.totalorder %s20, 0
    %p171 = por %p169, %p170
    %p172 = scmp.ne.s32.totalorder %s164, %s166
    %p173 = scmp.eq.s32.totalorder %s25, 3
    %p174 = por %p172, %p173
    %p175 = scmp.ne.s32.totalorder %s166, %s167
    %p176 = scmp.eq.s32.totalorder %s25, 0
    %p177 = por %p175, %p176
    %p178 = scmp.ne.s32.totalorder %s166, %s167
    %p179 = scmp.eq.s32.totalorder %s26, 3
    %p180 = por %p178, %p179
    %p182 = scmp.ne.s32.totalorder %s167, %s181
    %p183 = scmp.eq.s32.totalorder %s26, 0
    %p184 = por %p182, %p183
    %s186 = sadd.s32 %s185, 1
    %p189 = scmp.eq.s32.totalorder %s20, 3
    %p190 = scmp.ne.s32.totalorder %s185, %s187
    %p191 = scmp.eq.s32.totalorder %s20, 0
    %p192 = por %p190, %p191
    %p193 = scmp.ne.s32.totalorder %s185, %s187
    %p194 = scmp.eq.s32.totalorder %s25, 3
    %p195 = por %p193, %p194
    %p196 = scmp.ne.s32.totalorder %s187, %s188
    %p197 = scmp.eq.s32.totalorder %s25, 0
    %p198 = por %p196, %p197
    %p199 = scmp.ne.s32.totalorder %s187, %s188
    %p200 = scmp.eq.s32.totalorder %s26, 3
    %p201 = por %p199, %p200
    %p203 = scmp.ne.s32.totalorder %s188, %s202
    %p204 = scmp.eq.s32.totalorder %s26, 0
    %p205 = por %p203, %p204
    %s207 = sadd.s32 %s206, 1
    %p210 = scmp.eq.s32.totalorder %s20, 3
    %p211 = scmp.ne.s32.totalorder %s206, %s208
    %p212 = scmp.eq.s32.totalorder %s20, 0
    %p213 = por %p211, %p212
    %p214 = scmp.ne.s32.totalorder %s206, %s208
    %p215 = scmp.eq.s32.totalorder %s25, 3
    %p216 = por %p214, %p215
    %p217 = scmp.ne.s32.totalorder %s208, %s209
    %p218 = scmp.eq.s32.totalorder %s25, 0
    %p219 = por %p217, %p218
    %p220 = scmp.ne.s32.totalorder %s208, %s209
    %p221 = scmp.eq.s32.totalorder %s26, 3
    %p222 = por %p220, %p221
    %p224 = scmp.ne.s32.totalorder %s209, %s223
    %p225 = scmp.eq.s32.totalorder %s26, 0
    %p226 = por %p224, %p225
    %s228 = sadd.s32 %s227, 1
    %p231 = scmp.eq.s32.totalorder %s20, 3
    %p232 = scmp.ne.s32.totalorder %s227, %s229
    %p233 = scmp.eq.s32.totalorder %s20, 0
    %p234 = por %p232, %p233
    %p235 = scmp.ne.s32.totalorder %s227, %s229
    %p236 = scmp.eq.s32.totalorder %s25, 3
    %p237 = por %p235, %p236
    %p238 = scmp.ne.s32.totalorder %s229, %s230
    %p239 = scmp.eq.s32.totalorder %s25, 0
    %p240 = por %p238, %p239
    %p241 = scmp.ne.s32.totalorder %s229, %s230
    %p242 = scmp.eq.s32.totalorder %s26, 3
    %p243 = por %p241, %p242
    %p245 = scmp.ne.s32.totalorder %s230, %s244
    %p246 = scmp.eq.s32.totalorder %s26, 0
    %p247 = por %p245, %p246
    %s249 = sadd.s32 %s248, 1
    %p252 = scmp.eq.s32.totalorder %s20, 3
    %p253 = scmp.ne.s32.totalorder %s248, %s250
    %p254 = scmp.eq.s32.totalorder %s20, 0
    %p255 = por %p253, %p254
    %p256 = scmp.ne.s32.totalorder %s248, %s250
    %p257 = scmp.eq.s32.totalorder %s25, 3
    %p258 = por %p256, %p257
    %p259 = scmp.ne.s32.totalorder %s250, %s251
    %p260 = scmp.eq.s32.totalorder %s25, 0
    %p261 = por %p259, %p260
    %p262 = scmp.ne.s32.totalorder %s250, %s251
    %p263 = scmp.eq.s32.totalorder %s26, 3
    %p264 = por %p262, %p263
    %p266 = scmp.ne.s32.totalorder %s251, %s265
    %p267 = scmp.eq.s32.totalorder %s26, 0
    %p268 = por %p266, %p267
    %s270 = sadd.s32 %s269, 1
    %p273 = scmp.eq.s32.totalorder %s20, 3
    %p274 = scmp.ne.s32.totalorder %s269, %s271
    %p275 = scmp.eq.s32.totalorder %s20, 0
    %p276 = por %p274, %p275
    %p277 = scmp.ne.s32.totalorder %s269, %s271
    %p278 = scmp.eq.s32.totalorder %s25, 3
    %p279 = por %p277, %p278
    %p280 = scmp.ne.s32.totalorder %s271, %s272
    %p281 = scmp.eq.s32.totalorder %s25, 0
    %p282 = por %p280, %p281
    %p283 = scmp.ne.s32.totalorder %s271, %s272
    %p284 = scmp.eq.s32.totalorder %s26, 3
    %p285 = por %p283, %p284
    %p287 = scmp.ne.s32.totalorder %s272, %s286
    %p288 = scmp.eq.s32.totalorder %s26, 0
    %p289 = por %p287, %p288
    %s290 = ssub.s32 %s20, %s27
    %p291 = scmp.eq.s32.totalorder %s290, 0
    %s293 = sadd.s32 %s292, 1
    %s294 = scalar_select %p291, %s292, %s293
    %p297 = pneg %p291
    %p298 = scmp.eq.s32.totalorder %s20, 3
    %p299 = por %p297, %p298
    %p300 = scmp.ne.s32.totalorder %s292, %s295
    %p301 = scmp.eq.s32.totalorder %s20, 0
    %p302 = por %p300, %p301
    %p303 = scmp.ne.s32.totalorder %s292, %s295
    %p304 = scmp.eq.s32.totalorder %s25, 3
    %p305 = por %p303, %p304
    %p306 = scmp.ne.s32.totalorder %s295, %s296
    %p307 = scmp.eq.s32.totalorder %s25, 0
    %p308 = por %p306, %p307
    %p309 = scmp.ne.s32.totalorder %s295, %s296
    %p310 = scmp.eq.s32.totalorder %s26, 3
    %p311 = por %p309, %p310
    %p313 = scmp.ne.s32.totalorder %s296, %s312
    %p314 = scmp.eq.s32.totalorder %s26, 0
    %p315 = por %p313, %p314
    %s316 = ssub.s32 %s20, %s27
    %p317 = scmp.eq.s32.totalorder %s316, 0
    %s319 = sadd.s32 %s318, 1
    %s320 = scalar_select %p317, %s318, %s319
    %p323 = pneg %p317
    %p324 = scmp.eq.s32.totalorder %s20, 3
    %p325 = por %p323, %p324
    %p326 = scmp.ne.s32.totalorder %s318, %s321
    %p327 = scmp.eq.s32.totalorder %s20, 0
    %p328 = por %p326, %p327
    %p329 = scmp.ne.s32.totalorder %s318, %s321
    %p330 = scmp.eq.s32.totalorder %s25, 3
    %p331 = por %p329, %p330
    %p332 = scmp.ne.s32.totalorder %s321, %s322
    %p333 = scmp.eq.s32.totalorder %s25, 0
    %p334 = por %p332, %p333
    %p335 = scmp.ne.s32.totalorder %s321, %s322
    %p336 = scmp.eq.s32.totalorder %s26, 3
    %p337 = por %p335, %p336
    %p339 = scmp.ne.s32.totalorder %s322, %s338
    %p340 = scmp.eq.s32.totalorder %s26, 0
    %p341 = por %p339, %p340
    %p342 = scmp.le.s32.totalorder 1, %s20
    %p343 = scmp.lt.s32.totalorder %s20, 5
    %p344 = pnand %p342, %p343
    %p345 = pneg %p344
    // Predicated region
    $region9: #{dnn_forward.1} parent=5 // pred_check
      _
    $region10: #{dnn_forward.1} parent=5 // pred_check_branch
      %347 = sbr.rel (%p344) target = $region12
    $region11: #{dnn_forward.1} parent=5 // pred_region
      %s348 = ssub.s32 %s20, 1
      // Predicated region
      $region13: #{dnn_forward.1} parent=11 // pred_check
        %p349 = pneg %p93
      $region14: #{dnn_forward.1} parent=11 // pred_check_branch
        %351 = sbr.rel (%p349) target = $region16
      $region15: #{dnn_forward.1} parent=11 // pred_region
        _
      $region16: #{dnn_forward.1} parent=11 // pred_fallthru
        _
      // Predicated region
      $region17: #{dnn_forward.1} parent=11 // pred_check
        %p352 = pneg %p114
      $region18: #{dnn_forward.1} parent=11 // pred_check_branch
        %354 = sbr.rel (%p352) target = $region20
      $region19: #{dnn_forward.1} parent=11 // pred_region
        _
      $region20: #{dnn_forward.1} parent=11 // pred_fallthru
        _
      // Predicated region
      $region21: #{dnn_forward.1} parent=11 // pred_check
        %p355 = pneg %p135
      $region22: #{dnn_forward.1} parent=11 // pred_check_branch
        %357 = sbr.rel (%p355) target = $region24
      $region23: #{dnn_forward.1} parent=11 // pred_region
        _
      $region24: #{dnn_forward.1} parent=11 // pred_fallthru
        _
      // Predicated region
      $region25: #{dnn_forward.1} parent=11 // pred_check
        %p358 = pneg %p156
      $region26: #{dnn_forward.1} parent=11 // pred_check_branch
        %360 = sbr.rel (%p358) target = $region28
      $region27: #{dnn_forward.1} parent=11 // pred_region
        _
      $region28: #{dnn_forward.1} parent=11 // pred_fallthru
        _
      // Predicated region
      $region29: #{dnn_forward.1} parent=11 // pred_check
        %p361 = pneg %p177
      $region30: #{dnn_forward.1} parent=11 // pred_check_branch
        %363 = sbr.rel (%p361) target = $region32
      $region31: #{dnn_forward.1} parent=11 // pred_region
        _
      $region32: #{dnn_forward.1} parent=11 // pred_fallthru
        _
      // Predicated region
      $region33: #{dnn_forward.1} parent=11 // pred_check
        %p364 = pneg %p198
      $region34: #{dnn_forward.1} parent=11 // pred_check_branch
        %366 = sbr.rel (%p364) target = $region36
      $region35: #{dnn_forward.1} parent=11 // pred_region
        _
      $region36: #{dnn_forward.1} parent=11 // pred_fallthru
        _
      // Predicated region
      $region37: #{dnn_forward.1} parent=11 // pred_check
        %p367 = pneg %p219
      $region38: #{dnn_forward.1} parent=11 // pred_check_branch
        %369 = sbr.rel (%p367) target = $region40
      $region39: #{dnn_forward.1} parent=11 // pred_region
        _
      $region40: #{dnn_forward.1} parent=11 // pred_fallthru
        _
      // Predicated region
      $region41: #{dnn_forward.1} parent=11 // pred_check
        %p370 = pneg %p240
      $region42: #{dnn_forward.1} parent=11 // pred_check_branch
        %372 = sbr.rel (%p370) target = $region44
      $region43: #{dnn_forward.1} parent=11 // pred_region
        _
      $region44: #{dnn_forward.1} parent=11 // pred_fallthru
        _
      // Predicated region
      $region45: #{dnn_forward.1} parent=11 // pred_check
        %p373 = pneg %p261
      $region46: #{dnn_forward.1} parent=11 // pred_check_branch
        %375 = sbr.rel (%p373) target = $region48
      $region47: #{dnn_forward.1} parent=11 // pred_region
        _
      $region48: #{dnn_forward.1} parent=11 // pred_fallthru
        _
      // Predicated region
      $region49: #{dnn_forward.1} parent=11 // pred_check
        %p376 = pneg %p282
      $region50: #{dnn_forward.1} parent=11 // pred_check_branch
        %378 = sbr.rel (%p376) target = $region52
      $region51: #{dnn_forward.1} parent=11 // pred_region
        _
      $region52: #{dnn_forward.1} parent=11 // pred_fallthru
        _
    $region12: #{dnn_forward.1} parent=5 // pred_fallthru
      _
    %p379 = scmp.lt.s32.totalorder %s20, 4
    // Predicated region
    $region53: #{dnn_forward.1} parent=5 // pred_check
      %p380 = pneg %p379
    $region54: #{dnn_forward.1} parent=5 // pred_check_branch
      %382 = sbr.rel (%p380) target = $region56
    $region55: #{dnn_forward.1} parent=5 // pred_region
      // Predicated region
      $region57: #{dnn_forward.1} parent=55 // pred_check
        %p383 = pneg %p40
      $region58: #{dnn_forward.1} parent=55 // pred_check_branch
        %385 = sbr.rel (%p383) target = $region60
      $region59: #{dnn_forward.1} parent=55 // pred_region
        %s386 = smul.u32 128, %s20
        %p387 = scmp.lt.s32.totalorder %s386, 511
        %s388 = scalar_select %p387, %s386, 511
        %s389 = smul.addr %s388, 8
        %s390 = scalar_lea.vmem %s0, %s389
        %s391 = smul.u32 128, %s20
      $region60: #{dnn_forward.1} parent=55 // pred_fallthru
        _
      // Predicated region
      $region61: #{dnn_forward.1} parent=55 // pred_check
        %p392 = pneg %p66
      $region62: #{dnn_forward.1} parent=55 // pred_check_branch
        %394 = sbr.rel (%p392) target = $region64
      $region63: #{dnn_forward.1} parent=55 // pred_region
        %s395 = smul.u32 128, %s20
        %p396 = scmp.lt.s32.totalorder %s395, 511
        %s397 = scalar_select %p396, %s395, 511
        %s398 = smul.addr %s397, 8
        %s399 = scalar_lea.vmem %s1, %s398
        %s400 = smul.u32 128, %s20
      $region64: #{dnn_forward.1} parent=55 // pred_fallthru
        _
    $region56: #{dnn_forward.1} parent=5 // pred_fallthru
      _
    %p401 = scmp.le.s32.totalorder 1, %s20
    %p402 = scmp.lt.s32.totalorder %s20, 5
    %p403 = pnand %p401, %p402
    %p404 = pneg %p403
    // Predicated region
    $region65: #{dnn_forward.1} parent=5 // pred_check
      _
    $region66: #{dnn_forward.1} parent=5 // pred_check_branch
      %406 = sbr.rel (%p403) target = $region68
    $region67: #{dnn_forward.1} parent=5 // pred_region
      %s407 = ssub.s32 %s20, 1
      %s408 = smul.u32 128, %s25
      %p409 = scmp.lt.s32.totalorder %s408, 511
      %s410 = scalar_select %p409, %s408, 511
      %s411 = smul.addr %s410, 8
      %s412 = scalar_lea.vmem %s0, %s411
      %p413 = pneg %p46
      %p414 = pneg %p43
      %s415 = smul.u32 128, %s25
      %p416 = scmp.lt.s32.totalorder %s415, 511
      %s417 = scalar_select %p416, %s415, 511
      %s418 = smul.addr %s417, 8
      %s419 = scalar_lea.vmem %s1, %s418
      %p420 = pneg %p72
      %p421 = pneg %p69
      %p422 = pneg %p93
      %p423 = pneg %p90
      %p424 = pneg %p114
      %p425 = pneg %p111
      %p426 = pneg %p135
      %p427 = pneg %p132
      %p428 = pneg %p156
      %p429 = pneg %p153
      %p430 = pneg %p177
      %p431 = pneg %p174
      %p432 = pneg %p198
      %p433 = pneg %p195
      %p434 = pneg %p219
      %p435 = pneg %p216
      %p436 = pneg %p240
      %p437 = pneg %p237
      %p438 = pneg %p261
      %p439 = pneg %p258
      %p440 = pneg %p282
      %p441 = pneg %p279
      %p442 = pneg %p308
      %p443 = pneg %p305
      %s444 = smul.u32 128, %s25
      %p445 = scmp.lt.s32.totalorder %s444, 511
      %s446 = scalar_select %p445, %s444, 511
      %s447 = smul.addr %s446, 8
      %s448 = scalar_lea.vmem %s12, %s447
      %p449 = pneg %p334
      %p450 = pneg %p331
      %s451 = smul.u32 128, %s25
      %p452 = scmp.lt.s32.totalorder %s451, 511
      %s453 = scalar_select %p452, %s451, 511
      %s454 = smul.addr %s453, 8
      %s455 = scalar_lea.vmem %s13, %s454
      %s456 = smul.u32 128, %s25
      %p457 = scmp.lt.s32.totalorder %s456, 511
      %s458 = scalar_select %p457, %s456, 511
      %s459 = smul.addr %s458, 8
      %s460 = scalar_lea.vmem %s0, %s459
      %s461 = smul.u32 128, %s25
      %s462 = smul.u32 128, %s25
      %p463 = scmp.lt.s32.totalorder %s462, 511
      %s464 = scalar_select %p463, %s462, 511
      %s465 = smul.addr %s464, 8
      %s466 = scalar_lea.vmem %s1, %s465
      %s467 = smul.u32 128, %s25
      %s468 = smul.u32 128, %s25
      %p469 = scmp.lt.s32.totalorder %s468, 511
      %s470 = scalar_select %p469, %s468, 511
      %s471 = smul.addr %s470, 8
      %s472 = scalar_lea.vmem %s12, %s471
      %s473 = smul.u32 128, %s25
      %s474 = smul.u32 128, %s25
      %p475 = scmp.lt.s32.totalorder %s474, 511
      %s476 = scalar_select %p475, %s474, 511
      %s477 = smul.addr %s476, 8
      %s478 = scalar_lea.vmem %s13, %s477
      %s479 = smul.u32 128, %s25
      %v480 = vld [vmem:[%s460] sm:$0xff]
      %v481 = vld [vmem:[%s460 + $0x8] sm:$0xff]
      %v482 = vld [vmem:[%s460 + $0x10] sm:$0xff]
      %v483 = vld [vmem:[%s460 + $0x18] sm:$0xff]
      %v484 = vld [vmem:[%s460 + $0x20] sm:$0xff]
      %v485 = vld [vmem:[%s460 + $0x28] sm:$0xff]
      %v486 = vld [vmem:[%s460 + $0x30] sm:$0xff]
      %v487 = vld [vmem:[%s460 + $0x38] sm:$0xff]
      %v488 = vld [vmem:[%s460 + $0x40] sm:$0xff]
      %v489 = vld [vmem:[%s460 + $0x48] sm:$0xff]
      %v490 = vld [vmem:[%s460 + $0x50] sm:$0xff]
      %v491 = vld [vmem:[%s460 + $0x58] sm:$0xff]
      %v492 = vld [vmem:[%s460 + $0x60] sm:$0xff]
      %v493 = vld [vmem:[%s460 + $0x68] sm:$0xff]
      %v494 = vld [vmem:[%s460 + $0x70] sm:$0xff]
      %v495 = vld [vmem:[%s460 + $0x78] sm:$0xff]
      %v496 = vld [vmem:[%s460 + $0x80] sm:$0xff]
      %v497 = vld [vmem:[%s460 + $0x88] sm:$0xff]
      %v498 = vld [vmem:[%s460 + $0x90] sm:$0xff]
      %v499 = vld [vmem:[%s460 + $0x98] sm:$0xff]
      %v500 = vld [vmem:[%s460 + $0xa0] sm:$0xff]
      %v501 = vld [vmem:[%s460 + $0xa8] sm:$0xff]
      %v502 = vld [vmem:[%s460 + $0xb0] sm:$0xff]
      %v503 = vld [vmem:[%s460 + $0xb8] sm:$0xff]
      %v504 = vld [vmem:[%s460 + $0xc0] sm:$0xff]
      %v505 = vld [vmem:[%s460 + $0xc8] sm:$0xff]
      %v506 = vld [vmem:[%s460 + $0xd0] sm:$0xff]
      %v507 = vld [vmem:[%s460 + $0xd8] sm:$0xff]
      %v508 = vld [vmem:[%s460 + $0xe0] sm:$0xff]
      %v509 = vld [vmem:[%s460 + $0xe8] sm:$0xff]
      %v510 = vld [vmem:[%s460 + $0xf0] sm:$0xff]
      %v511 = vld [vmem:[%s460 + $0xf8] sm:$0xff]
      %v512 = vld [vmem:[%s460 + $0x100] sm:$0xff]
      %v513 = vld [vmem:[%s460 + $0x108] sm:$0xff]
      %v514 = vld [vmem:[%s460 + $0x110] sm:$0xff]
      %v515 = vld [vmem:[%s460 + $0x118] sm:$0xff]
      %v516 = vld [vmem:[%s460 + $0x120] sm:$0xff]
      %v517 = vld [vmem:[%s460 + $0x128] sm:$0xff]
      %v518 = vld [vmem:[%s460 + $0x130] sm:$0xff]
      %v519 = vld [vmem:[%s460 + $0x138] sm:$0xff]
      %v520 = vld [vmem:[%s460 + $0x140] sm:$0xff]
      %v521 = vld [vmem:[%s460 + $0x148] sm:$0xff]
      %v522 = vld [vmem:[%s460 + $0x150] sm:$0xff]
      %v523 = vld [vmem:[%s460 + $0x158] sm:$0xff]
      %v524 = vld [vmem:[%s460 + $0x160] sm:$0xff]
      %v525 = vld [vmem:[%s460 + $0x168] sm:$0xff]
      %v526 = vld [vmem:[%s460 + $0x170] sm:$0xff]
      %v527 = vld [vmem:[%s460 + $0x178] sm:$0xff]
      %v528 = vld [vmem:[%s460 + $0x180] sm:$0xff]
      %v529 = vld [vmem:[%s460 + $0x188] sm:$0xff]
      %v530 = vld [vmem:[%s460 + $0x190] sm:$0xff]
      %v531 = vld [vmem:[%s460 + $0x198] sm:$0xff]
      %v532 = vld [vmem:[%s460 + $0x1a0] sm:$0xff]
      %v533 = vld [vmem:[%s460 + $0x1a8] sm:$0xff]
      %v534 = vld [vmem:[%s460 + $0x1b0] sm:$0xff]
      %v535 = vld [vmem:[%s460 + $0x1b8] sm:$0xff]
      %v536 = vld [vmem:[%s460 + $0x1c0] sm:$0xff]
      %v537 = vld [vmem:[%s460 + $0x1c8] sm:$0xff]
      %v538 = vld [vmem:[%s460 + $0x1d0] sm:$0xff]
      %v539 = vld [vmem:[%s460 + $0x1d8] sm:$0xff]
      %v540 = vld [vmem:[%s460 + $0x1e0] sm:$0xff]
      %v541 = vld [vmem:[%s460 + $0x1e8] sm:$0xff]
      %v542 = vld [vmem:[%s460 + $0x1f0] sm:$0xff]
      %v543 = vld [vmem:[%s460 + $0x1f8] sm:$0xff]
      %v544 = vld [vmem:[%s460 + $0x200] sm:$0xff]
      %v545 = vld [vmem:[%s460 + $0x208] sm:$0xff]
      %v546 = vld [vmem:[%s460 + $0x210] sm:$0xff]
      %v547 = vld [vmem:[%s460 + $0x218] sm:$0xff]
      %v548 = vld [vmem:[%s460 + $0x220] sm:$0xff]
      %v549 = vld [vmem:[%s460 + $0x228] sm:$0xff]
      %v550 = vld [vmem:[%s460 + $0x230] sm:$0xff]
      %v551 = vld [vmem:[%s460 + $0x238] sm:$0xff]
      %v552 = vld [vmem:[%s460 + $0x240] sm:$0xff]
      %v553 = vld [vmem:[%s460 + $0x248] sm:$0xff]
      %v554 = vld [vmem:[%s460 + $0x250] sm:$0xff]
      %v555 = vld [vmem:[%s460 + $0x258] sm:$0xff]
      %v556 = vld [vmem:[%s460 + $0x260] sm:$0xff]
      %v557 = vld [vmem:[%s460 + $0x268] sm:$0xff]
      %v558 = vld [vmem:[%s460 + $0x270] sm:$0xff]
      %v559 = vld [vmem:[%s460 + $0x278] sm:$0xff]
      %v560 = vld [vmem:[%s460 + $0x280] sm:$0xff]
      %v561 = vld [vmem:[%s460 + $0x288] sm:$0xff]
      %v562 = vld [vmem:[%s460 + $0x290] sm:$0xff]
      %v563 = vld [vmem:[%s460 + $0x298] sm:$0xff]
      %v564 = vld [vmem:[%s460 + $0x2a0] sm:$0xff]
      %v565 = vld [vmem:[%s460 + $0x2a8] sm:$0xff]
      %v566 = vld [vmem:[%s460 + $0x2b0] sm:$0xff]
      %v567 = vld [vmem:[%s460 + $0x2b8] sm:$0xff]
      %v568 = vld [vmem:[%s460 + $0x2c0] sm:$0xff]
      %v569 = vld [vmem:[%s460 + $0x2c8] sm:$0xff]
      %v570 = vld [vmem:[%s460 + $0x2d0] sm:$0xff]
      %v571 = vld [vmem:[%s460 + $0x2d8] sm:$0xff]
      %v572 = vld [vmem:[%s460 + $0x2e0] sm:$0xff]
      %v573 = vld [vmem:[%s460 + $0x2e8] sm:$0xff]
      %v574 = vld [vmem:[%s460 + $0x2f0] sm:$0xff]
      %v575 = vld [vmem:[%s460 + $0x2f8] sm:$0xff]
      %v576 = vld [vmem:[%s460 + $0x300] sm:$0xff]
      %v577 = vld [vmem:[%s460 + $0x308] sm:$0xff]
      %v578 = vld [vmem:[%s460 + $0x310] sm:$0xff]
      %v579 = vld [vmem:[%s460 + $0x318] sm:$0xff]
      %v580 = vld [vmem:[%s460 + $0x320] sm:$0xff]
      %v581 = vld [vmem:[%s460 + $0x328] sm:$0xff]
      %v582 = vld [vmem:[%s460 + $0x330] sm:$0xff]
      %v583 = vld [vmem:[%s460 + $0x338] sm:$0xff]
      %v584 = vld [vmem:[%s460 + $0x340] sm:$0xff]
      %v585 = vld [vmem:[%s460 + $0x348] sm:$0xff]
      %v586 = vld [vmem:[%s460 + $0x350] sm:$0xff]
      %v587 = vld [vmem:[%s460 + $0x358] sm:$0xff]
      %v588 = vld [vmem:[%s460 + $0x360] sm:$0xff]
      %v589 = vld [vmem:[%s460 + $0x368] sm:$0xff]
      %v590 = vld [vmem:[%s460 + $0x370] sm:$0xff]
      %v591 = vld [vmem:[%s460 + $0x378] sm:$0xff]
      %v592 = vld [vmem:[%s460 + $0x380] sm:$0xff]
      %v593 = vld [vmem:[%s460 + $0x388] sm:$0xff]
      %v594 = vld [vmem:[%s460 + $0x390] sm:$0xff]
      %v595 = vld [vmem:[%s460 + $0x398] sm:$0xff]
      %v596 = vld [vmem:[%s460 + $0x3a0] sm:$0xff]
      %v597 = vld [vmem:[%s460 + $0x3a8] sm:$0xff]
      %v598 = vld [vmem:[%s460 + $0x3b0] sm:$0xff]
      %v599 = vld [vmem:[%s460 + $0x3b8] sm:$0xff]
      %v600 = vld [vmem:[%s460 + $0x3c0] sm:$0xff]
      %v601 = vld [vmem:[%s460 + $0x3c8] sm:$0xff]
      %v602 = vld [vmem:[%s460 + $0x3d0] sm:$0xff]
      %v603 = vld [vmem:[%s460 + $0x3d8] sm:$0xff]
      %v604 = vld [vmem:[%s460 + $0x3e0] sm:$0xff]
      %v605 = vld [vmem:[%s460 + $0x3e8] sm:$0xff]
      %v606 = vld [vmem:[%s460 + $0x3f0] sm:$0xff]
      %v607 = vld [vmem:[%s460 + $0x3f8] sm:$0xff]
      %v608 = vld [vmem:[%s466] sm:$0xff]
      %v609 = vld [vmem:[%s466 + $0x8] sm:$0xff]
      %v610 = vld [vmem:[%s466 + $0x10] sm:$0xff]
      %v611 = vld [vmem:[%s466 + $0x18] sm:$0xff]
      %v612 = vld [vmem:[%s466 + $0x20] sm:$0xff]
      %v613 = vld [vmem:[%s466 + $0x28] sm:$0xff]
      %v614 = vld [vmem:[%s466 + $0x30] sm:$0xff]
      %v615 = vld [vmem:[%s466 + $0x38] sm:$0xff]
      %v616 = vld [vmem:[%s466 + $0x40] sm:$0xff]
      %v617 = vld [vmem:[%s466 + $0x48] sm:$0xff]
      %v618 = vld [vmem:[%s466 + $0x50] sm:$0xff]
      %v619 = vld [vmem:[%s466 + $0x58] sm:$0xff]
      %v620 = vld [vmem:[%s466 + $0x60] sm:$0xff]
      %v621 = vld [vmem:[%s466 + $0x68] sm:$0xff]
      %v622 = vld [vmem:[%s466 + $0x70] sm:$0xff]
      %v623 = vld [vmem:[%s466 + $0x78] sm:$0xff]
      %v624 = vld [vmem:[%s466 + $0x80] sm:$0xff]
      %v625 = vld [vmem:[%s466 + $0x88] sm:$0xff]
      %v626 = vld [vmem:[%s466 + $0x90] sm:$0xff]
      %v627 = vld [vmem:[%s466 + $0x98] sm:$0xff]
      %v628 = vld [vmem:[%s466 + $0xa0] sm:$0xff]
      %v629 = vld [vmem:[%s466 + $0xa8] sm:$0xff]
      %v630 = vld [vmem:[%s466 + $0xb0] sm:$0xff]
      %v631 = vld [vmem:[%s466 + $0xb8] sm:$0xff]
      %v632 = vld [vmem:[%s466 + $0xc0] sm:$0xff]
      %v633 = vld [vmem:[%s466 + $0xc8] sm:$0xff]
      %v634 = vld [vmem:[%s466 + $0xd0] sm:$0xff]
      %v635 = vld [vmem:[%s466 + $0xd8] sm:$0xff]
      %v636 = vld [vmem:[%s466 + $0xe0] sm:$0xff]
      %v637 = vld [vmem:[%s466 + $0xe8] sm:$0xff]
      %v638 = vld [vmem:[%s466 + $0xf0] sm:$0xff]
      %v639 = vld [vmem:[%s466 + $0xf8] sm:$0xff]
      %v640 = vld [vmem:[%s466 + $0x100] sm:$0xff]
      %v641 = vld [vmem:[%s466 + $0x108] sm:$0xff]
      %v642 = vld [vmem:[%s466 + $0x110] sm:$0xff]
      %v643 = vld [vmem:[%s466 + $0x118] sm:$0xff]
      %v644 = vld [vmem:[%s466 + $0x120] sm:$0xff]
      %v645 = vld [vmem:[%s466 + $0x128] sm:$0xff]
      %v646 = vld [vmem:[%s466 + $0x130] sm:$0xff]
      %v647 = vld [vmem:[%s466 + $0x138] sm:$0xff]
      %v648 = vld [vmem:[%s466 + $0x140] sm:$0xff]
      %v649 = vld [vmem:[%s466 + $0x148] sm:$0xff]
      %v650 = vld [vmem:[%s466 + $0x150] sm:$0xff]
      %v651 = vld [vmem:[%s466 + $0x158] sm:$0xff]
      %v652 = vld [vmem:[%s466 + $0x160] sm:$0xff]
      %v653 = vld [vmem:[%s466 + $0x168] sm:$0xff]
      %v654 = vld [vmem:[%s466 + $0x170] sm:$0xff]
      %v655 = vld [vmem:[%s466 + $0x178] sm:$0xff]
      %v656 = vld [vmem:[%s466 + $0x180] sm:$0xff]
      %v657 = vld [vmem:[%s466 + $0x188] sm:$0xff]
      %v658 = vld [vmem:[%s466 + $0x190] sm:$0xff]
      %v659 = vld [vmem:[%s466 + $0x198] sm:$0xff]
      %v660 = vld [vmem:[%s466 + $0x1a0] sm:$0xff]
      %v661 = vld [vmem:[%s466 + $0x1a8] sm:$0xff]
      %v662 = vld [vmem:[%s466 + $0x1b0] sm:$0xff]
      %v663 = vld [vmem:[%s466 + $0x1b8] sm:$0xff]
      %v664 = vld [vmem:[%s466 + $0x1c0] sm:$0xff]
      %v665 = vld [vmem:[%s466 + $0x1c8] sm:$0xff]
      %v666 = vld [vmem:[%s466 + $0x1d0] sm:$0xff]
      %v667 = vld [vmem:[%s466 + $0x1d8] sm:$0xff]
      %v668 = vld [vmem:[%s466 + $0x1e0] sm:$0xff]
      %v669 = vld [vmem:[%s466 + $0x1e8] sm:$0xff]
      %v670 = vld [vmem:[%s466 + $0x1f0] sm:$0xff]
      %v671 = vld [vmem:[%s466 + $0x1f8] sm:$0xff]
      %v672 = vld [vmem:[%s466 + $0x200] sm:$0xff]
      %v673 = vld [vmem:[%s466 + $0x208] sm:$0xff]
      %v674 = vld [vmem:[%s466 + $0x210] sm:$0xff]
      %v675 = vld [vmem:[%s466 + $0x218] sm:$0xff]
      %v676 = vld [vmem:[%s466 + $0x220] sm:$0xff]
      %v677 = vld [vmem:[%s466 + $0x228] sm:$0xff]
      %v678 = vld [vmem:[%s466 + $0x230] sm:$0xff]
      %v679 = vld [vmem:[%s466 + $0x238] sm:$0xff]
      %v680 = vld [vmem:[%s466 + $0x240] sm:$0xff]
      %v681 = vld [vmem:[%s466 + $0x248] sm:$0xff]
      %v682 = vld [vmem:[%s466 + $0x250] sm:$0xff]
      %v683 = vld [vmem:[%s466 + $0x258] sm:$0xff]
      %v684 = vld [vmem:[%s466 + $0x260] sm:$0xff]
      %v685 = vld [vmem:[%s466 + $0x268] sm:$0xff]
      %v686 = vld [vmem:[%s466 + $0x270] sm:$0xff]
      %v687 = vld [vmem:[%s466 + $0x278] sm:$0xff]
      %v688 = vld [vmem:[%s466 + $0x280] sm:$0xff]
      %v689 = vld [vmem:[%s466 + $0x288] sm:$0xff]
      %v690 = vld [vmem:[%s466 + $0x290] sm:$0xff]
      %v691 = vld [vmem:[%s466 + $0x298] sm:$0xff]
      %v692 = vld [vmem:[%s466 + $0x2a0] sm:$0xff]
      %v693 = vld [vmem:[%s466 + $0x2a8] sm:$0xff]
      %v694 = vld [vmem:[%s466 + $0x2b0] sm:$0xff]
      %v695 = vld [vmem:[%s466 + $0x2b8] sm:$0xff]
      %v696 = vld [vmem:[%s466 + $0x2c0] sm:$0xff]
      %v697 = vld [vmem:[%s466 + $0x2c8] sm:$0xff]
      %v698 = vld [vmem:[%s466 + $0x2d0] sm:$0xff]
      %v699 = vld [vmem:[%s466 + $0x2d8] sm:$0xff]
      %v700 = vld [vmem:[%s466 + $0x2e0] sm:$0xff]
      %v701 = vld [vmem:[%s466 + $0x2e8] sm:$0xff]
      %v702 = vld [vmem:[%s466 + $0x2f0] sm:$0xff]
      %v703 = vld [vmem:[%s466 + $0x2f8] sm:$0xff]
      %v704 = vld [vmem:[%s466 + $0x300] sm:$0xff]
      %v705 = vld [vmem:[%s466 + $0x308] sm:$0xff]
      %v706 = vld [vmem:[%s466 + $0x310] sm:$0xff]
      %v707 = vld [vmem:[%s466 + $0x318] sm:$0xff]
      %v708 = vld [vmem:[%s466 + $0x320] sm:$0xff]
      %v709 = vld [vmem:[%s466 + $0x328] sm:$0xff]
      %v710 = vld [vmem:[%s466 + $0x330] sm:$0xff]
      %v711 = vld [vmem:[%s466 + $0x338] sm:$0xff]
      %v712 = vld [vmem:[%s466 + $0x340] sm:$0xff]
      %v713 = vld [vmem:[%s466 + $0x348] sm:$0xff]
      %v714 = vld [vmem:[%s466 + $0x350] sm:$0xff]
      %v715 = vld [vmem:[%s466 + $0x358] sm:$0xff]
      %v716 = vld [vmem:[%s466 + $0x360] sm:$0xff]
      %v717 = vld [vmem:[%s466 + $0x368] sm:$0xff]
      %v718 = vld [vmem:[%s466 + $0x370] sm:$0xff]
      %v719 = vld [vmem:[%s466 + $0x378] sm:$0xff]
      %v720 = vld [vmem:[%s466 + $0x380] sm:$0xff]
      %v721 = vld [vmem:[%s466 + $0x388] sm:$0xff]
      %v722 = vld [vmem:[%s466 + $0x390] sm:$0xff]
      %v723 = vld [vmem:[%s466 + $0x398] sm:$0xff]
      %v724 = vld [vmem:[%s466 + $0x3a0] sm:$0xff]
      %v725 = vld [vmem:[%s466 + $0x3a8] sm:$0xff]
      %v726 = vld [vmem:[%s466 + $0x3b0] sm:$0xff]
      %v727 = vld [vmem:[%s466 + $0x3b8] sm:$0xff]
      %v728 = vld [vmem:[%s466 + $0x3c0] sm:$0xff]
      %v729 = vld [vmem:[%s466 + $0x3c8] sm:$0xff]
      %v730 = vld [vmem:[%s466 + $0x3d0] sm:$0xff]
      %v731 = vld [vmem:[%s466 + $0x3d8] sm:$0xff]
      %v732 = vld [vmem:[%s466 + $0x3e0] sm:$0xff]
      %v733 = vld [vmem:[%s466 + $0x3e8] sm:$0xff]
      %v734 = vld [vmem:[%s466 + $0x3f0] sm:$0xff]
      %v735 = vld [vmem:[%s466 + $0x3f8] sm:$0xff]
      %v736 = vld [vmem:[%s2] sm:$0x1]
      %738 = vset.pattern.permute.xlu0 0
      %739 = vperm.xlu0 %738, %v480
      %v740 = vpop.permute.xlu0 %739
      %743 = vset.pattern.permute.xlu0 0
      %744 = vperm.xlu0 %743, %v481
      %v745 = vpop.permute.xlu0 %744
      %748 = vset.pattern.permute.xlu0 0
      %749 = vperm.xlu0 %748, %v482
      %v750 = vpop.permute.xlu0 %749
      %753 = vset.pattern.permute.xlu0 0
      %754 = vperm.xlu0 %753, %v483
      %v755 = vpop.permute.xlu0 %754
      %758 = vset.pattern.permute.xlu0 0
      %759 = vperm.xlu0 %758, %v484
      %v760 = vpop.permute.xlu0 %759
      %763 = vset.pattern.permute.xlu0 0
      %764 = vperm.xlu0 %763, %v485
      %v765 = vpop.permute.xlu0 %764
      %768 = vset.pattern.permute.xlu0 0
      %769 = vperm.xlu0 %768, %v486
      %v770 = vpop.permute.xlu0 %769
      %773 = vset.pattern.permute.xlu0 0
      %774 = vperm.xlu0 %773, %v487
      %v775 = vpop.permute.xlu0 %774
      %778 = vset.pattern.permute.xlu0 0
      %779 = vperm.xlu0 %778, %v488
      %v780 = vpop.permute.xlu0 %779
      %783 = vset.pattern.permute.xlu0 0
      %784 = vperm.xlu0 %783, %v489
      %v785 = vpop.permute.xlu0 %784
      %788 = vset.pattern.permute.xlu0 0
      %789 = vperm.xlu0 %788, %v490
      %v790 = vpop.permute.xlu0 %789
      %793 = vset.pattern.permute.xlu0 0
      %794 = vperm.xlu0 %793, %v491
      %v795 = vpop.permute.xlu0 %794
      %798 = vset.pattern.permute.xlu0 0
      %799 = vperm.xlu0 %798, %v492
      %v800 = vpop.permute.xlu0 %799
      %803 = vset.pattern.permute.xlu0 0
      %804 = vperm.xlu0 %803, %v493
      %v805 = vpop.permute.xlu0 %804
      %808 = vset.pattern.permute.xlu0 0
      %809 = vperm.xlu0 %808, %v494
      %v810 = vpop.permute.xlu0 %809
      %813 = vset.pattern.permute.xlu0 0
      %814 = vperm.xlu0 %813, %v495
      %v815 = vpop.permute.xlu0 %814
      %818 = vset.pattern.permute.xlu0 0
      %819 = vperm.xlu0 %818, %v496
      %v820 = vpop.permute.xlu0 %819
      %823 = vset.pattern.permute.xlu0 0
      %824 = vperm.xlu0 %823, %v497
      %v825 = vpop.permute.xlu0 %824
      %828 = vset.pattern.permute.xlu0 0
      %829 = vperm.xlu0 %828, %v498
      %v830 = vpop.permute.xlu0 %829
      %833 = vset.pattern.permute.xlu0 0
      %834 = vperm.xlu0 %833, %v499
      %v835 = vpop.permute.xlu0 %834
      %838 = vset.pattern.permute.xlu0 0
      %839 = vperm.xlu0 %838, %v500
      %v840 = vpop.permute.xlu0 %839
      %843 = vset.pattern.permute.xlu0 0
      %844 = vperm.xlu0 %843, %v501
      %v845 = vpop.permute.xlu0 %844
      %848 = vset.pattern.permute.xlu0 0
      %849 = vperm.xlu0 %848, %v502
      %v850 = vpop.permute.xlu0 %849
      %853 = vset.pattern.permute.xlu0 0
      %854 = vperm.xlu0 %853, %v503
      %v855 = vpop.permute.xlu0 %854
      %858 = vset.pattern.permute.xlu0 0
      %859 = vperm.xlu0 %858, %v504
      %v860 = vpop.permute.xlu0 %859
      %863 = vset.pattern.permute.xlu0 0
      %864 = vperm.xlu0 %863, %v505
      %v865 = vpop.permute.xlu0 %864
      %868 = vset.pattern.permute.xlu0 0
      %869 = vperm.xlu0 %868, %v506
      %v870 = vpop.permute.xlu0 %869
      %873 = vset.pattern.permute.xlu0 0
      %874 = vperm.xlu0 %873, %v507
      %v875 = vpop.permute.xlu0 %874
      %878 = vset.pattern.permute.xlu0 0
      %879 = vperm.xlu0 %878, %v508
      %v880 = vpop.permute.xlu0 %879
      %883 = vset.pattern.permute.xlu0 0
      %884 = vperm.xlu0 %883, %v509
      %v885 = vpop.permute.xlu0 %884
      %888 = vset.pattern.permute.xlu0 0
      %889 = vperm.xlu0 %888, %v510
      %v890 = vpop.permute.xlu0 %889
      %893 = vset.pattern.permute.xlu0 0
      %894 = vperm.xlu0 %893, %v511
      %v895 = vpop.permute.xlu0 %894
      %898 = vset.pattern.permute.xlu0 0
      %899 = vperm.xlu0 %898, %v512
      %v900 = vpop.permute.xlu0 %899
      %903 = vset.pattern.permute.xlu0 0
      %904 = vperm.xlu0 %903, %v513
      %v905 = vpop.permute.xlu0 %904
      %908 = vset.pattern.permute.xlu0 0
      %909 = vperm.xlu0 %908, %v514
      %v910 = vpop.permute.xlu0 %909
      %913 = vset.pattern.permute.xlu0 0
      %914 = vperm.xlu0 %913, %v515
      %v915 = vpop.permute.xlu0 %914
      %918 = vset.pattern.permute.xlu0 0
      %919 = vperm.xlu0 %918, %v516
      %v920 = vpop.permute.xlu0 %919
      %923 = vset.pattern.permute.xlu0 0
      %924 = vperm.xlu0 %923, %v517
      %v925 = vpop.permute.xlu0 %924
      %928 = vset.pattern.permute.xlu0 0
      %929 = vperm.xlu0 %928, %v518
      %v930 = vpop.permute.xlu0 %929
      %933 = vset.pattern.permute.xlu0 0
      %934 = vperm.xlu0 %933, %v519
      %v935 = vpop.permute.xlu0 %934
      %938 = vset.pattern.permute.xlu0 0
      %939 = vperm.xlu0 %938, %v520
      %v940 = vpop.permute.xlu0 %939
      %943 = vset.pattern.permute.xlu0 0
      %944 = vperm.xlu0 %943, %v521
      %v945 = vpop.permute.xlu0 %944
      %948 = vset.pattern.permute.xlu0 0
      %949 = vperm.xlu0 %948, %v522
      %v950 = vpop.permute.xlu0 %949
      %953 = vset.pattern.permute.xlu0 0
      %954 = vperm.xlu0 %953, %v523
      %v955 = vpop.permute.xlu0 %954
      %958 = vset.pattern.permute.xlu0 0
      %959 = vperm.xlu0 %958, %v524
      %v960 = vpop.permute.xlu0 %959
      %963 = vset.pattern.permute.xlu0 0
      %964 = vperm.xlu0 %963, %v525
      %v965 = vpop.permute.xlu0 %964
      %968 = vset.pattern.permute.xlu0 0
      %969 = vperm.xlu0 %968, %v526
      %v970 = vpop.permute.xlu0 %969
      %973 = vset.pattern.permute.xlu0 0
      %974 = vperm.xlu0 %973, %v527
      %v975 = vpop.permute.xlu0 %974
      %978 = vset.pattern.permute.xlu0 0
      %979 = vperm.xlu0 %978, %v528
      %v980 = vpop.permute.xlu0 %979
      %983 = vset.pattern.permute.xlu0 0
      %984 = vperm.xlu0 %983, %v529
      %v985 = vpop.permute.xlu0 %984
      %988 = vset.pattern.permute.xlu0 0
      %989 = vperm.xlu0 %988, %v530
      %v990 = vpop.permute.xlu0 %989
      %993 = vset.pattern.permute.xlu0 0
      %994 = vperm.xlu0 %993, %v531
      %v995 = vpop.permute.xlu0 %994
      %998 = vset.pattern.permute.xlu0 0
      %999 = vperm.xlu0 %998, %v532
      %v1000 = vpop.permute.xlu0 %999
      %1003 = vset.pattern.permute.xlu0 0
      %1004 = vperm.xlu0 %1003, %v533
      %v1005 = vpop.permute.xlu0 %1004
      %1008 = vset.pattern.permute.xlu0 0
      %1009 = vperm.xlu0 %1008, %v534
      %v1010 = vpop.permute.xlu0 %1009
      %1013 = vset.pattern.permute.xlu0 0
      %1014 = vperm.xlu0 %1013, %v535
      %v1015 = vpop.permute.xlu0 %1014
      %1018 = vset.pattern.permute.xlu0 0
      %1019 = vperm.xlu0 %1018, %v536
      %v1020 = vpop.permute.xlu0 %1019
      %1023 = vset.pattern.permute.xlu0 0
      %1024 = vperm.xlu0 %1023, %v537
      %v1025 = vpop.permute.xlu0 %1024
      %1028 = vset.pattern.permute.xlu0 0
      %1029 = vperm.xlu0 %1028, %v538
      %v1030 = vpop.permute.xlu0 %1029
      %1033 = vset.pattern.permute.xlu0 0
      %1034 = vperm.xlu0 %1033, %v539
      %v1035 = vpop.permute.xlu0 %1034
      %1038 = vset.pattern.permute.xlu0 0
      %1039 = vperm.xlu0 %1038, %v540
      %v1040 = vpop.permute.xlu0 %1039
      %1043 = vset.pattern.permute.xlu0 0
      %1044 = vperm.xlu0 %1043, %v541
      %v1045 = vpop.permute.xlu0 %1044
      %1048 = vset.pattern.permute.xlu0 0
      %1049 = vperm.xlu0 %1048, %v542
      %v1050 = vpop.permute.xlu0 %1049
      %1053 = vset.pattern.permute.xlu0 0
      %1054 = vperm.xlu0 %1053, %v543
      %v1055 = vpop.permute.xlu0 %1054
      %1058 = vset.pattern.permute.xlu0 0
      %1059 = vperm.xlu0 %1058, %v544
      %v1060 = vpop.permute.xlu0 %1059
      %1063 = vset.pattern.permute.xlu0 0
      %1064 = vperm.xlu0 %1063, %v545
      %v1065 = vpop.permute.xlu0 %1064
      %1068 = vset.pattern.permute.xlu0 0
      %1069 = vperm.xlu0 %1068, %v546
      %v1070 = vpop.permute.xlu0 %1069
      %1073 = vset.pattern.permute.xlu0 0
      %1074 = vperm.xlu0 %1073, %v547
      %v1075 = vpop.permute.xlu0 %1074
      %1078 = vset.pattern.permute.xlu0 0
      %1079 = vperm.xlu0 %1078, %v548
      %v1080 = vpop.permute.xlu0 %1079
      %1083 = vset.pattern.permute.xlu0 0
      %1084 = vperm.xlu0 %1083, %v549
      %v1085 = vpop.permute.xlu0 %1084
      %1088 = vset.pattern.permute.xlu0 0
      %1089 = vperm.xlu0 %1088, %v550
      %v1090 = vpop.permute.xlu0 %1089
      %1093 = vset.pattern.permute.xlu0 0
      %1094 = vperm.xlu0 %1093, %v551
      %v1095 = vpop.permute.xlu0 %1094
      %1098 = vset.pattern.permute.xlu0 0
      %1099 = vperm.xlu0 %1098, %v552
      %v1100 = vpop.permute.xlu0 %1099
      %1103 = vset.pattern.permute.xlu0 0
      %1104 = vperm.xlu0 %1103, %v553
      %v1105 = vpop.permute.xlu0 %1104
      %1108 = vset.pattern.permute.xlu0 0
      %1109 = vperm.xlu0 %1108, %v554
      %v1110 = vpop.permute.xlu0 %1109
      %1113 = vset.pattern.permute.xlu0 0
      %1114 = vperm.xlu0 %1113, %v555
      %v1115 = vpop.permute.xlu0 %1114
      %1118 = vset.pattern.permute.xlu0 0
      %1119 = vperm.xlu0 %1118, %v556
      %v1120 = vpop.permute.xlu0 %1119
      %1123 = vset.pattern.permute.xlu0 0
      %1124 = vperm.xlu0 %1123, %v557
      %v1125 = vpop.permute.xlu0 %1124
      %1128 = vset.pattern.permute.xlu0 0
      %1129 = vperm.xlu0 %1128, %v558
      %v1130 = vpop.permute.xlu0 %1129
      %1133 = vset.pattern.permute.xlu0 0
      %1134 = vperm.xlu0 %1133, %v559
      %v1135 = vpop.permute.xlu0 %1134
      %1138 = vset.pattern.permute.xlu0 0
      %1139 = vperm.xlu0 %1138, %v560
      %v1140 = vpop.permute.xlu0 %1139
      %1143 = vset.pattern.permute.xlu0 0
      %1144 = vperm.xlu0 %1143, %v561
      %v1145 = vpop.permute.xlu0 %1144
      %1148 = vset.pattern.permute.xlu0 0
      %1149 = vperm.xlu0 %1148, %v562
      %v1150 = vpop.permute.xlu0 %1149
      %1153 = vset.pattern.permute.xlu0 0
      %1154 = vperm.xlu0 %1153, %v563
      %v1155 = vpop.permute.xlu0 %1154
      %1158 = vset.pattern.permute.xlu0 0
      %1159 = vperm.xlu0 %1158, %v564
      %v1160 = vpop.permute.xlu0 %1159
      %1163 = vset.pattern.permute.xlu0 0
      %1164 = vperm.xlu0 %1163, %v565
      %v1165 = vpop.permute.xlu0 %1164
      %1168 = vset.pattern.permute.xlu0 0
      %1169 = vperm.xlu0 %1168, %v566
      %v1170 = vpop.permute.xlu0 %1169
      %1173 = vset.pattern.permute.xlu0 0
      %1174 = vperm.xlu0 %1173, %v567
      %v1175 = vpop.permute.xlu0 %1174
      %1178 = vset.pattern.permute.xlu0 0
      %1179 = vperm.xlu0 %1178, %v568
      %v1180 = vpop.permute.xlu0 %1179
      %1183 = vset.pattern.permute.xlu0 0
      %1184 = vperm.xlu0 %1183, %v569
      %v1185 = vpop.permute.xlu0 %1184
      %1188 = vset.pattern.permute.xlu0 0
      %1189 = vperm.xlu0 %1188, %v570
      %v1190 = vpop.permute.xlu0 %1189
      %1193 = vset.pattern.permute.xlu0 0
      %1194 = vperm.xlu0 %1193, %v571
      %v1195 = vpop.permute.xlu0 %1194
      %1198 = vset.pattern.permute.xlu0 0
      %1199 = vperm.xlu0 %1198, %v572
      %v1200 = vpop.permute.xlu0 %1199
      %1203 = vset.pattern.permute.xlu0 0
      %1204 = vperm.xlu0 %1203, %v573
      %v1205 = vpop.permute.xlu0 %1204
      %1208 = vset.pattern.permute.xlu0 0
      %1209 = vperm.xlu0 %1208, %v574
      %v1210 = vpop.permute.xlu0 %1209
      %1213 = vset.pattern.permute.xlu0 0
      %1214 = vperm.xlu0 %1213, %v575
      %v1215 = vpop.permute.xlu0 %1214
      %1218 = vset.pattern.permute.xlu0 0
      %1219 = vperm.xlu0 %1218, %v576
      %v1220 = vpop.permute.xlu0 %1219
      %1223 = vset.pattern.permute.xlu0 0
      %1224 = vperm.xlu0 %1223, %v577
      %v1225 = vpop.permute.xlu0 %1224
      %1228 = vset.pattern.permute.xlu0 0
      %1229 = vperm.xlu0 %1228, %v578
      %v1230 = vpop.permute.xlu0 %1229
      %1233 = vset.pattern.permute.xlu0 0
      %1234 = vperm.xlu0 %1233, %v579
      %v1235 = vpop.permute.xlu0 %1234
      %1238 = vset.pattern.permute.xlu0 0
      %1239 = vperm.xlu0 %1238, %v580
      %v1240 = vpop.permute.xlu0 %1239
      %1243 = vset.pattern.permute.xlu0 0
      %1244 = vperm.xlu0 %1243, %v581
      %v1245 = vpop.permute.xlu0 %1244
      %1248 = vset.pattern.permute.xlu0 0
      %1249 = vperm.xlu0 %1248, %v582
      %v1250 = vpop.permute.xlu0 %1249
      %1253 = vset.pattern.permute.xlu0 0
      %1254 = vperm.xlu0 %1253, %v583
      %v1255 = vpop.permute.xlu0 %1254
      %1258 = vset.pattern.permute.xlu0 0
      %1259 = vperm.xlu0 %1258, %v584
      %v1260 = vpop.permute.xlu0 %1259
      %1263 = vset.pattern.permute.xlu0 0
      %1264 = vperm.xlu0 %1263, %v585
      %v1265 = vpop.permute.xlu0 %1264
      %1268 = vset.pattern.permute.xlu0 0
      %1269 = vperm.xlu0 %1268, %v586
      %v1270 = vpop.permute.xlu0 %1269
      %1273 = vset.pattern.permute.xlu0 0
      %1274 = vperm.xlu0 %1273, %v587
      %v1275 = vpop.permute.xlu0 %1274
      %1278 = vset.pattern.permute.xlu0 0
      %1279 = vperm.xlu0 %1278, %v588
      %v1280 = vpop.permute.xlu0 %1279
      %1283 = vset.pattern.permute.xlu0 0
      %1284 = vperm.xlu0 %1283, %v589
      %v1285 = vpop.permute.xlu0 %1284
      %1288 = vset.pattern.permute.xlu0 0
      %1289 = vperm.xlu0 %1288, %v590
      %v1290 = vpop.permute.xlu0 %1289
      %1293 = vset.pattern.permute.xlu0 0
      %1294 = vperm.xlu0 %1293, %v591
      %v1295 = vpop.permute.xlu0 %1294
      %1298 = vset.pattern.permute.xlu0 0
      %1299 = vperm.xlu0 %1298, %v592
      %v1300 = vpop.permute.xlu0 %1299
      %1303 = vset.pattern.permute.xlu0 0
      %1304 = vperm.xlu0 %1303, %v593
      %v1305 = vpop.permute.xlu0 %1304
      %1308 = vset.pattern.permute.xlu0 0
      %1309 = vperm.xlu0 %1308, %v594
      %v1310 = vpop.permute.xlu0 %1309
      %1313 = vset.pattern.permute.xlu0 0
      %1314 = vperm.xlu0 %1313, %v595
      %v1315 = vpop.permute.xlu0 %1314
      %1318 = vset.pattern.permute.xlu0 0
      %1319 = vperm.xlu0 %1318, %v596
      %v1320 = vpop.permute.xlu0 %1319
      %1323 = vset.pattern.permute.xlu0 0
      %1324 = vperm.xlu0 %1323, %v597
      %v1325 = vpop.permute.xlu0 %1324
      %1328 = vset.pattern.permute.xlu0 0
      %1329 = vperm.xlu0 %1328, %v598
      %v1330 = vpop.permute.xlu0 %1329
      %1333 = vset.pattern.permute.xlu0 0
      %1334 = vperm.xlu0 %1333, %v599
      %v1335 = vpop.permute.xlu0 %1334
      %1338 = vset.pattern.permute.xlu0 0
      %1339 = vperm.xlu0 %1338, %v600
      %v1340 = vpop.permute.xlu0 %1339
      %1343 = vset.pattern.permute.xlu0 0
      %1344 = vperm.xlu0 %1343, %v601
      %v1345 = vpop.permute.xlu0 %1344
      %1348 = vset.pattern.permute.xlu0 0
      %1349 = vperm.xlu0 %1348, %v602
      %v1350 = vpop.permute.xlu0 %1349
      %1353 = vset.pattern.permute.xlu0 0
      %1354 = vperm.xlu0 %1353, %v603
      %v1355 = vpop.permute.xlu0 %1354
      %1358 = vset.pattern.permute.xlu0 0
      %1359 = vperm.xlu0 %1358, %v604
      %v1360 = vpop.permute.xlu0 %1359
      %1363 = vset.pattern.permute.xlu0 0
      %1364 = vperm.xlu0 %1363, %v605
      %v1365 = vpop.permute.xlu0 %1364
      %1368 = vset.pattern.permute.xlu0 0
      %1369 = vperm.xlu0 %1368, %v606
      %v1370 = vpop.permute.xlu0 %1369
      %1373 = vset.pattern.permute.xlu0 0
      %1374 = vperm.xlu0 %1373, %v607
      %v1375 = vpop.permute.xlu0 %1374
      %v1377 = vlaneseq
      %v1378 = vshrl.u32 %v1377, 7
      %v1379 = vsub.s32 0, %v1378
      %v1380 = vrot.slane %v736, %v1379
      %v1381 = vmul.f32 %v740, %v1380
      %v1382 = vmul.f32 %v745, %v1380
      %v1383 = vmul.f32 %v750, %v1380
      %v1384 = vmul.f32 %v755, %v1380
      %v1385 = vmul.f32 %v760, %v1380
      %v1386 = vmul.f32 %v765, %v1380
      %v1387 = vmul.f32 %v770, %v1380
      %v1388 = vmul.f32 %v775, %v1380
      %v1389 = vmul.f32 %v780, %v1380
      %v1390 = vmul.f32 %v785, %v1380
      %v1391 = vmul.f32 %v790, %v1380
      %v1392 = vmul.f32 %v795, %v1380
      %v1393 = vmul.f32 %v800, %v1380
      %v1394 = vmul.f32 %v805, %v1380
      %v1395 = vmul.f32 %v810, %v1380
      %v1396 = vmul.f32 %v815, %v1380
      %v1397 = vmul.f32 %v820, %v1380
      %v1398 = vmul.f32 %v825, %v1380
      %v1399 = vmul.f32 %v830, %v1380
      %v1400 = vmul.f32 %v835, %v1380
      %v1401 = vmul.f32 %v840, %v1380
      %v1402 = vmul.f32 %v845, %v1380
      %v1403 = vmul.f32 %v850, %v1380
      %v1404 = vmul.f32 %v855, %v1380
      %v1405 = vmul.f32 %v860, %v1380
      %v1406 = vmul.f32 %v865, %v1380
      %v1407 = vmul.f32 %v870, %v1380
      %v1408 = vmul.f32 %v875, %v1380
      %v1409 = vmul.f32 %v880, %v1380
      %v1410 = vmul.f32 %v885, %v1380
      %v1411 = vmul.f32 %v890, %v1380
      %v1412 = vmul.f32 %v895, %v1380
      %v1413 = vmul.f32 %v900, %v1380
      %v1414 = vmul.f32 %v905, %v1380
      %v1415 = vmul.f32 %v910, %v1380
      %v1416 = vmul.f32 %v915, %v1380
      %v1417 = vmul.f32 %v920, %v1380
      %v1418 = vmul.f32 %v925, %v1380
      %v1419 = vmul.f32 %v930, %v1380
      %v1420 = vmul.f32 %v935, %v1380
      %v1421 = vmul.f32 %v940, %v1380
      %v1422 = vmul.f32 %v945, %v1380
      %v1423 = vmul.f32 %v950, %v1380
      %v1424 = vmul.f32 %v955, %v1380
      %v1425 = vmul.f32 %v960, %v1380
      %v1426 = vmul.f32 %v965, %v1380
      %v1427 = vmul.f32 %v970, %v1380
      %v1428 = vmul.f32 %v975, %v1380
      %v1429 = vmul.f32 %v980, %v1380
      %v1430 = vmul.f32 %v985, %v1380
      %v1431 = vmul.f32 %v990, %v1380
      %v1432 = vmul.f32 %v995, %v1380
      %v1433 = vmul.f32 %v1000, %v1380
      %v1434 = vmul.f32 %v1005, %v1380
      %v1435 = vmul.f32 %v1010, %v1380
      %v1436 = vmul.f32 %v1015, %v1380
      %v1437 = vmul.f32 %v1020, %v1380
      %v1438 = vmul.f32 %v1025, %v1380
      %v1439 = vmul.f32 %v1030, %v1380
      %v1440 = vmul.f32 %v1035, %v1380
      %v1441 = vmul.f32 %v1040, %v1380
      %v1442 = vmul.f32 %v1045, %v1380
      %v1443 = vmul.f32 %v1050, %v1380
      %v1444 = vmul.f32 %v1055, %v1380
      %v1445 = vmul.f32 %v1060, %v1380
      %v1446 = vmul.f32 %v1065, %v1380
      %v1447 = vmul.f32 %v1070, %v1380
      %v1448 = vmul.f32 %v1075, %v1380
      %v1449 = vmul.f32 %v1080, %v1380
      %v1450 = vmul.f32 %v1085, %v1380
      %v1451 = vmul.f32 %v1090, %v1380
      %v1452 = vmul.f32 %v1095, %v1380
      %v1453 = vmul.f32 %v1100, %v1380
      %v1454 = vmul.f32 %v1105, %v1380
      %v1455 = vmul.f32 %v1110, %v1380
      %v1456 = vmul.f32 %v1115, %v1380
      %v1457 = vmul.f32 %v1120, %v1380
      %v1458 = vmul.f32 %v1125, %v1380
      %v1459 = vmul.f32 %v1130, %v1380
      %v1460 = vmul.f32 %v1135, %v1380
      %v1461 = vmul.f32 %v1140, %v1380
      %v1462 = vmul.f32 %v1145, %v1380
      %v1463 = vmul.f32 %v1150, %v1380
      %v1464 = vmul.f32 %v1155, %v1380
      %v1465 = vmul.f32 %v1160, %v1380
      %v1466 = vmul.f32 %v1165, %v1380
      %v1467 = vmul.f32 %v1170, %v1380
      %v1468 = vmul.f32 %v1175, %v1380
      %v1469 = vmul.f32 %v1180, %v1380
      %v1470 = vmul.f32 %v1185, %v1380
      %v1471 = vmul.f32 %v1190, %v1380
      %v1472 = vmul.f32 %v1195, %v1380
      %v1473 = vmul.f32 %v1200, %v1380
      %v1474 = vmul.f32 %v1205, %v1380
      %v1475 = vmul.f32 %v1210, %v1380
      %v1476 = vmul.f32 %v1215, %v1380
      %v1477 = vmul.f32 %v1220, %v1380
      %v1478 = vmul.f32 %v1225, %v1380
      %v1479 = vmul.f32 %v1230, %v1380
      %v1480 = vmul.f32 %v1235, %v1380
      %v1481 = vmul.f32 %v1240, %v1380
      %v1482 = vmul.f32 %v1245, %v1380
      %v1483 = vmul.f32 %v1250, %v1380
      %v1484 = vmul.f32 %v1255, %v1380
      %v1485 = vmul.f32 %v1260, %v1380
      %v1486 = vmul.f32 %v1265, %v1380
      %v1487 = vmul.f32 %v1270, %v1380
      %v1488 = vmul.f32 %v1275, %v1380
      %v1489 = vmul.f32 %v1280, %v1380
      %v1490 = vmul.f32 %v1285, %v1380
      %v1491 = vmul.f32 %v1290, %v1380
      %v1492 = vmul.f32 %v1295, %v1380
      %v1493 = vmul.f32 %v1300, %v1380
      %v1494 = vmul.f32 %v1305, %v1380
      %v1495 = vmul.f32 %v1310, %v1380
      %v1496 = vmul.f32 %v1315, %v1380
      %v1497 = vmul.f32 %v1320, %v1380
      %v1498 = vmul.f32 %v1325, %v1380
      %v1499 = vmul.f32 %v1330, %v1380
      %v1500 = vmul.f32 %v1335, %v1380
      %v1501 = vmul.f32 %v1340, %v1380
      %v1502 = vmul.f32 %v1345, %v1380
      %v1503 = vmul.f32 %v1350, %v1380
      %v1504 = vmul.f32 %v1355, %v1380
      %v1505 = vmul.f32 %v1360, %v1380
      %v1506 = vmul.f32 %v1365, %v1380
      %v1507 = vmul.f32 %v1370, %v1380
      %v1508 = vmul.f32 %v1375, %v1380
      %v1509 = vld [vmem:[%s2 + $0x1] sm:$0x1]
      %1511 = vset.pattern.permute.xlu0 0
      %1512 = vperm.xlu0 %1511, %v608
      %v1513 = vpop.permute.xlu0 %1512
      %1516 = vset.pattern.permute.xlu0 0
      %1517 = vperm.xlu0 %1516, %v609
      %v1518 = vpop.permute.xlu0 %1517
      %1521 = vset.pattern.permute.xlu0 0
      %1522 = vperm.xlu0 %1521, %v610
      %v1523 = vpop.permute.xlu0 %1522
      %1526 = vset.pattern.permute.xlu0 0
      %1527 = vperm.xlu0 %1526, %v611
      %v1528 = vpop.permute.xlu0 %1527
      %1531 = vset.pattern.permute.xlu0 0
      %1532 = vperm.xlu0 %1531, %v612
      %v1533 = vpop.permute.xlu0 %1532
      %1536 = vset.pattern.permute.xlu0 0
      %1537 = vperm.xlu0 %1536, %v613
      %v1538 = vpop.permute.xlu0 %1537
      %1541 = vset.pattern.permute.xlu0 0
      %1542 = vperm.xlu0 %1541, %v614
      %v1543 = vpop.permute.xlu0 %1542
      %1546 = vset.pattern.permute.xlu0 0
      %1547 = vperm.xlu0 %1546, %v615
      %v1548 = vpop.permute.xlu0 %1547
      %1551 = vset.pattern.permute.xlu0 0
      %1552 = vperm.xlu0 %1551, %v616
      %v1553 = vpop.permute.xlu0 %1552
      %1556 = vset.pattern.permute.xlu0 0
      %1557 = vperm.xlu0 %1556, %v617
      %v1558 = vpop.permute.xlu0 %1557
      %1561 = vset.pattern.permute.xlu0 0
      %1562 = vperm.xlu0 %1561, %v618
      %v1563 = vpop.permute.xlu0 %1562
      %1566 = vset.pattern.permute.xlu0 0
      %1567 = vperm.xlu0 %1566, %v619
      %v1568 = vpop.permute.xlu0 %1567
      %1571 = vset.pattern.permute.xlu0 0
      %1572 = vperm.xlu0 %1571, %v620
      %v1573 = vpop.permute.xlu0 %1572
      %1576 = vset.pattern.permute.xlu0 0
      %1577 = vperm.xlu0 %1576, %v621
      %v1578 = vpop.permute.xlu0 %1577
      %1581 = vset.pattern.permute.xlu0 0
      %1582 = vperm.xlu0 %1581, %v622
      %v1583 = vpop.permute.xlu0 %1582
      %1586 = vset.pattern.permute.xlu0 0
      %1587 = vperm.xlu0 %1586, %v623
      %v1588 = vpop.permute.xlu0 %1587
      %1591 = vset.pattern.permute.xlu0 0
      %1592 = vperm.xlu0 %1591, %v624
      %v1593 = vpop.permute.xlu0 %1592
      %1596 = vset.pattern.permute.xlu0 0
      %1597 = vperm.xlu0 %1596, %v625
      %v1598 = vpop.permute.xlu0 %1597
      %1601 = vset.pattern.permute.xlu0 0
      %1602 = vperm.xlu0 %1601, %v626
      %v1603 = vpop.permute.xlu0 %1602
      %1606 = vset.pattern.permute.xlu0 0
      %1607 = vperm.xlu0 %1606, %v627
      %v1608 = vpop.permute.xlu0 %1607
      %1611 = vset.pattern.permute.xlu0 0
      %1612 = vperm.xlu0 %1611, %v628
      %v1613 = vpop.permute.xlu0 %1612
      %1616 = vset.pattern.permute.xlu0 0
      %1617 = vperm.xlu0 %1616, %v629
      %v1618 = vpop.permute.xlu0 %1617
      %1621 = vset.pattern.permute.xlu0 0
      %1622 = vperm.xlu0 %1621, %v630
      %v1623 = vpop.permute.xlu0 %1622
      %1626 = vset.pattern.permute.xlu0 0
      %1627 = vperm.xlu0 %1626, %v631
      %v1628 = vpop.permute.xlu0 %1627
      %1631 = vset.pattern.permute.xlu0 0
      %1632 = vperm.xlu0 %1631, %v632
      %v1633 = vpop.permute.xlu0 %1632
      %1636 = vset.pattern.permute.xlu0 0
      %1637 = vperm.xlu0 %1636, %v633
      %v1638 = vpop.permute.xlu0 %1637
      %1641 = vset.pattern.permute.xlu0 0
      %1642 = vperm.xlu0 %1641, %v634
      %v1643 = vpop.permute.xlu0 %1642
      %1646 = vset.pattern.permute.xlu0 0
      %1647 = vperm.xlu0 %1646, %v635
      %v1648 = vpop.permute.xlu0 %1647
      %1651 = vset.pattern.permute.xlu0 0
      %1652 = vperm.xlu0 %1651, %v636
      %v1653 = vpop.permute.xlu0 %1652
      %1656 = vset.pattern.permute.xlu0 0
      %1657 = vperm.xlu0 %1656, %v637
      %v1658 = vpop.permute.xlu0 %1657
      %1661 = vset.pattern.permute.xlu0 0
      %1662 = vperm.xlu0 %1661, %v638
      %v1663 = vpop.permute.xlu0 %1662
      %1666 = vset.pattern.permute.xlu0 0
      %1667 = vperm.xlu0 %1666, %v639
      %v1668 = vpop.permute.xlu0 %1667
      %1671 = vset.pattern.permute.xlu0 0
      %1672 = vperm.xlu0 %1671, %v640
      %v1673 = vpop.permute.xlu0 %1672
      %1676 = vset.pattern.permute.xlu0 0
      %1677 = vperm.xlu0 %1676, %v641
      %v1678 = vpop.permute.xlu0 %1677
      %1681 = vset.pattern.permute.xlu0 0
      %1682 = vperm.xlu0 %1681, %v642
      %v1683 = vpop.permute.xlu0 %1682
      %1686 = vset.pattern.permute.xlu0 0
      %1687 = vperm.xlu0 %1686, %v643
      %v1688 = vpop.permute.xlu0 %1687
      %1691 = vset.pattern.permute.xlu0 0
      %1692 = vperm.xlu0 %1691, %v644
      %v1693 = vpop.permute.xlu0 %1692
      %1696 = vset.pattern.permute.xlu0 0
      %1697 = vperm.xlu0 %1696, %v645
      %v1698 = vpop.permute.xlu0 %1697
      %1701 = vset.pattern.permute.xlu0 0
      %1702 = vperm.xlu0 %1701, %v646
      %v1703 = vpop.permute.xlu0 %1702
      %1706 = vset.pattern.permute.xlu0 0
      %1707 = vperm.xlu0 %1706, %v647
      %v1708 = vpop.permute.xlu0 %1707
      %1711 = vset.pattern.permute.xlu0 0
      %1712 = vperm.xlu0 %1711, %v648
      %v1713 = vpop.permute.xlu0 %1712
      %1716 = vset.pattern.permute.xlu0 0
      %1717 = vperm.xlu0 %1716, %v649
      %v1718 = vpop.permute.xlu0 %1717
      %1721 = vset.pattern.permute.xlu0 0
      %1722 = vperm.xlu0 %1721, %v650
      %v1723 = vpop.permute.xlu0 %1722
      %1726 = vset.pattern.permute.xlu0 0
      %1727 = vperm.xlu0 %1726, %v651
      %v1728 = vpop.permute.xlu0 %1727
      %1731 = vset.pattern.permute.xlu0 0
      %1732 = vperm.xlu0 %1731, %v652
      %v1733 = vpop.permute.xlu0 %1732
      %1736 = vset.pattern.permute.xlu0 0
      %1737 = vperm.xlu0 %1736, %v653
      %v1738 = vpop.permute.xlu0 %1737
      %1741 = vset.pattern.permute.xlu0 0
      %1742 = vperm.xlu0 %1741, %v654
      %v1743 = vpop.permute.xlu0 %1742
      %1746 = vset.pattern.permute.xlu0 0
      %1747 = vperm.xlu0 %1746, %v655
      %v1748 = vpop.permute.xlu0 %1747
      %1751 = vset.pattern.permute.xlu0 0
      %1752 = vperm.xlu0 %1751, %v656
      %v1753 = vpop.permute.xlu0 %1752
      %1756 = vset.pattern.permute.xlu0 0
      %1757 = vperm.xlu0 %1756, %v657
      %v1758 = vpop.permute.xlu0 %1757
      %1761 = vset.pattern.permute.xlu0 0
      %1762 = vperm.xlu0 %1761, %v658
      %v1763 = vpop.permute.xlu0 %1762
      %1766 = vset.pattern.permute.xlu0 0
      %1767 = vperm.xlu0 %1766, %v659
      %v1768 = vpop.permute.xlu0 %1767
      %1771 = vset.pattern.permute.xlu0 0
      %1772 = vperm.xlu0 %1771, %v660
      %v1773 = vpop.permute.xlu0 %1772
      %1776 = vset.pattern.permute.xlu0 0
      %1777 = vperm.xlu0 %1776, %v661
      %v1778 = vpop.permute.xlu0 %1777
      %1781 = vset.pattern.permute.xlu0 0
      %1782 = vperm.xlu0 %1781, %v662
      %v1783 = vpop.permute.xlu0 %1782
      %1786 = vset.pattern.permute.xlu0 0
      %1787 = vperm.xlu0 %1786, %v663
      %v1788 = vpop.permute.xlu0 %1787
      %1791 = vset.pattern.permute.xlu0 0
      %1792 = vperm.xlu0 %1791, %v664
      %v1793 = vpop.permute.xlu0 %1792
      %1796 = vset.pattern.permute.xlu0 0
      %1797 = vperm.xlu0 %1796, %v665
      %v1798 = vpop.permute.xlu0 %1797
      %1801 = vset.pattern.permute.xlu0 0
      %1802 = vperm.xlu0 %1801, %v666
      %v1803 = vpop.permute.xlu0 %1802
      %1806 = vset.pattern.permute.xlu0 0
      %1807 = vperm.xlu0 %1806, %v667
      %v1808 = vpop.permute.xlu0 %1807
      %1811 = vset.pattern.permute.xlu0 0
      %1812 = vperm.xlu0 %1811, %v668
      %v1813 = vpop.permute.xlu0 %1812
      %1816 = vset.pattern.permute.xlu0 0
      %1817 = vperm.xlu0 %1816, %v669
      %v1818 = vpop.permute.xlu0 %1817
      %1821 = vset.pattern.permute.xlu0 0
      %1822 = vperm.xlu0 %1821, %v670
      %v1823 = vpop.permute.xlu0 %1822
      %1826 = vset.pattern.permute.xlu0 0
      %1827 = vperm.xlu0 %1826, %v671
      %v1828 = vpop.permute.xlu0 %1827
      %1831 = vset.pattern.permute.xlu0 0
      %1832 = vperm.xlu0 %1831, %v672
      %v1833 = vpop.permute.xlu0 %1832
      %1836 = vset.pattern.permute.xlu0 0
      %1837 = vperm.xlu0 %1836, %v673
      %v1838 = vpop.permute.xlu0 %1837
      %1841 = vset.pattern.permute.xlu0 0
      %1842 = vperm.xlu0 %1841, %v674
      %v1843 = vpop.permute.xlu0 %1842
      %1846 = vset.pattern.permute.xlu0 0
      %1847 = vperm.xlu0 %1846, %v675
      %v1848 = vpop.permute.xlu0 %1847
      %1851 = vset.pattern.permute.xlu0 0
      %1852 = vperm.xlu0 %1851, %v676
      %v1853 = vpop.permute.xlu0 %1852
      %1856 = vset.pattern.permute.xlu0 0
      %1857 = vperm.xlu0 %1856, %v677
      %v1858 = vpop.permute.xlu0 %1857
      %1861 = vset.pattern.permute.xlu0 0
      %1862 = vperm.xlu0 %1861, %v678
      %v1863 = vpop.permute.xlu0 %1862
      %1866 = vset.pattern.permute.xlu0 0
      %1867 = vperm.xlu0 %1866, %v679
      %v1868 = vpop.permute.xlu0 %1867
      %1871 = vset.pattern.permute.xlu0 0
      %1872 = vperm.xlu0 %1871, %v680
      %v1873 = vpop.permute.xlu0 %1872
      %1876 = vset.pattern.permute.xlu0 0
      %1877 = vperm.xlu0 %1876, %v681
      %v1878 = vpop.permute.xlu0 %1877
      %1881 = vset.pattern.permute.xlu0 0
      %1882 = vperm.xlu0 %1881, %v682
      %v1883 = vpop.permute.xlu0 %1882
      %1886 = vset.pattern.permute.xlu0 0
      %1887 = vperm.xlu0 %1886, %v683
      %v1888 = vpop.permute.xlu0 %1887
      %1891 = vset.pattern.permute.xlu0 0
      %1892 = vperm.xlu0 %1891, %v684
      %v1893 = vpop.permute.xlu0 %1892
      %1896 = vset.pattern.permute.xlu0 0
      %1897 = vperm.xlu0 %1896, %v685
      %v1898 = vpop.permute.xlu0 %1897
      %1901 = vset.pattern.permute.xlu0 0
      %1902 = vperm.xlu0 %1901, %v686
      %v1903 = vpop.permute.xlu0 %1902
      %1906 = vset.pattern.permute.xlu0 0
      %1907 = vperm.xlu0 %1906, %v687
      %v1908 = vpop.permute.xlu0 %1907
      %1911 = vset.pattern.permute.xlu0 0
      %1912 = vperm.xlu0 %1911, %v688
      %v1913 = vpop.permute.xlu0 %1912
      %1916 = vset.pattern.permute.xlu0 0
      %1917 = vperm.xlu0 %1916, %v689
      %v1918 = vpop.permute.xlu0 %1917
      %1921 = vset.pattern.permute.xlu0 0
      %1922 = vperm.xlu0 %1921, %v690
      %v1923 = vpop.permute.xlu0 %1922
      %1926 = vset.pattern.permute.xlu0 0
      %1927 = vperm.xlu0 %1926, %v691
      %v1928 = vpop.permute.xlu0 %1927
      %1931 = vset.pattern.permute.xlu0 0
      %1932 = vperm.xlu0 %1931, %v692
      %v1933 = vpop.permute.xlu0 %1932
      %1936 = vset.pattern.permute.xlu0 0
      %1937 = vperm.xlu0 %1936, %v693
      %v1938 = vpop.permute.xlu0 %1937
      %1941 = vset.pattern.permute.xlu0 0
      %1942 = vperm.xlu0 %1941, %v694
      %v1943 = vpop.permute.xlu0 %1942
      %1946 = vset.pattern.permute.xlu0 0
      %1947 = vperm.xlu0 %1946, %v695
      %v1948 = vpop.permute.xlu0 %1947
      %1951 = vset.pattern.permute.xlu0 0
      %1952 = vperm.xlu0 %1951, %v696
      %v1953 = vpop.permute.xlu0 %1952
      %1956 = vset.pattern.permute.xlu0 0
      %1957 = vperm.xlu0 %1956, %v697
      %v1958 = vpop.permute.xlu0 %1957
      %1961 = vset.pattern.permute.xlu0 0
      %1962 = vperm.xlu0 %1961, %v698
      %v1963 = vpop.permute.xlu0 %1962
      %1966 = vset.pattern.permute.xlu0 0
      %1967 = vperm.xlu0 %1966, %v699
      %v1968 = vpop.permute.xlu0 %1967
      %1971 = vset.pattern.permute.xlu0 0
      %1972 = vperm.xlu0 %1971, %v700
      %v1973 = vpop.permute.xlu0 %1972
      %1976 = vset.pattern.permute.xlu0 0
      %1977 = vperm.xlu0 %1976, %v701
      %v1978 = vpop.permute.xlu0 %1977
      %1981 = vset.pattern.permute.xlu0 0
      %1982 = vperm.xlu0 %1981, %v702
      %v1983 = vpop.permute.xlu0 %1982
      %1986 = vset.pattern.permute.xlu0 0
      %1987 = vperm.xlu0 %1986, %v703
      %v1988 = vpop.permute.xlu0 %1987
      %1991 = vset.pattern.permute.xlu0 0
      %1992 = vperm.xlu0 %1991, %v704
      %v1993 = vpop.permute.xlu0 %1992
      %1996 = vset.pattern.permute.xlu0 0
      %1997 = vperm.xlu0 %1996, %v705
      %v1998 = vpop.permute.xlu0 %1997
      %2001 = vset.pattern.permute.xlu0 0
      %2002 = vperm.xlu0 %2001, %v706
      %v2003 = vpop.permute.xlu0 %2002
      %2006 = vset.pattern.permute.xlu0 0
      %2007 = vperm.xlu0 %2006, %v707
      %v2008 = vpop.permute.xlu0 %2007
      %2011 = vset.pattern.permute.xlu0 0
      %2012 = vperm.xlu0 %2011, %v708
      %v2013 = vpop.permute.xlu0 %2012
      %2016 = vset.pattern.permute.xlu0 0
      %2017 = vperm.xlu0 %2016, %v709
      %v2018 = vpop.permute.xlu0 %2017
      %2021 = vset.pattern.permute.xlu0 0
      %2022 = vperm.xlu0 %2021, %v710
      %v2023 = vpop.permute.xlu0 %2022
      %2026 = vset.pattern.permute.xlu0 0
      %2027 = vperm.xlu0 %2026, %v711
      %v2028 = vpop.permute.xlu0 %2027
      %2031 = vset.pattern.permute.xlu0 0
      %2032 = vperm.xlu0 %2031, %v712
      %v2033 = vpop.permute.xlu0 %2032
      %2036 = vset.pattern.permute.xlu0 0
      %2037 = vperm.xlu0 %2036, %v713
      %v2038 = vpop.permute.xlu0 %2037
      %2041 = vset.pattern.permute.xlu0 0
      %2042 = vperm.xlu0 %2041, %v714
      %v2043 = vpop.permute.xlu0 %2042
      %2046 = vset.pattern.permute.xlu0 0
      %2047 = vperm.xlu0 %2046, %v715
      %v2048 = vpop.permute.xlu0 %2047
      %2051 = vset.pattern.permute.xlu0 0
      %2052 = vperm.xlu0 %2051, %v716
      %v2053 = vpop.permute.xlu0 %2052
      %2056 = vset.pattern.permute.xlu0 0
      %2057 = vperm.xlu0 %2056, %v717
      %v2058 = vpop.permute.xlu0 %2057
      %2061 = vset.pattern.permute.xlu0 0
      %2062 = vperm.xlu0 %2061, %v718
      %v2063 = vpop.permute.xlu0 %2062
      %2066 = vset.pattern.permute.xlu0 0
      %2067 = vperm.xlu0 %2066, %v719
      %v2068 = vpop.permute.xlu0 %2067
      %2071 = vset.pattern.permute.xlu0 0
      %2072 = vperm.xlu0 %2071, %v720
      %v2073 = vpop.permute.xlu0 %2072
      %2076 = vset.pattern.permute.xlu0 0
      %2077 = vperm.xlu0 %2076, %v721
      %v2078 = vpop.permute.xlu0 %2077
      %2081 = vset.pattern.permute.xlu0 0
      %2082 = vperm.xlu0 %2081, %v722
      %v2083 = vpop.permute.xlu0 %2082
      %2086 = vset.pattern.permute.xlu0 0
      %2087 = vperm.xlu0 %2086, %v723
      %v2088 = vpop.permute.xlu0 %2087
      %2091 = vset.pattern.permute.xlu0 0
      %2092 = vperm.xlu0 %2091, %v724
      %v2093 = vpop.permute.xlu0 %2092
      %2096 = vset.pattern.permute.xlu0 0
      %2097 = vperm.xlu0 %2096, %v725
      %v2098 = vpop.permute.xlu0 %2097
      %2101 = vset.pattern.permute.xlu0 0
      %2102 = vperm.xlu0 %2101, %v726
      %v2103 = vpop.permute.xlu0 %2102
      %2106 = vset.pattern.permute.xlu0 0
      %2107 = vperm.xlu0 %2106, %v727
      %v2108 = vpop.permute.xlu0 %2107
      %2111 = vset.pattern.permute.xlu0 0
      %2112 = vperm.xlu0 %2111, %v728
      %v2113 = vpop.permute.xlu0 %2112
      %2116 = vset.pattern.permute.xlu0 0
      %2117 = vperm.xlu0 %2116, %v729
      %v2118 = vpop.permute.xlu0 %2117
      %2121 = vset.pattern.permute.xlu0 0
      %2122 = vperm.xlu0 %2121, %v730
      %v2123 = vpop.permute.xlu0 %2122
      %2126 = vset.pattern.permute.xlu0 0
      %2127 = vperm.xlu0 %2126, %v731
      %v2128 = vpop.permute.xlu0 %2127
      %2131 = vset.pattern.permute.xlu0 0
      %2132 = vperm.xlu0 %2131, %v732
      %v2133 = vpop.permute.xlu0 %2132
      %2136 = vset.pattern.permute.xlu0 0
      %2137 = vperm.xlu0 %2136, %v733
      %v2138 = vpop.permute.xlu0 %2137
      %2141 = vset.pattern.permute.xlu0 0
      %2142 = vperm.xlu0 %2141, %v734
      %v2143 = vpop.permute.xlu0 %2142
      %2146 = vset.pattern.permute.xlu0 0
      %2147 = vperm.xlu0 %2146, %v735
      %v2148 = vpop.permute.xlu0 %2147
      %v2150 = vlaneseq
      %v2151 = vshrl.u32 %v2150, 7
      %v2152 = vsub.s32 0, %v2151
      %v2153 = vrot.slane %v1509, %v2152
      %v2154 = vmul.f32 %v1513, %v2153
      %v2155 = vmul.f32 %v1518, %v2153
      %v2156 = vmul.f32 %v1523, %v2153
      %v2157 = vmul.f32 %v1528, %v2153
      %v2158 = vmul.f32 %v1533, %v2153
      %v2159 = vmul.f32 %v1538, %v2153
      %v2160 = vmul.f32 %v1543, %v2153
      %v2161 = vmul.f32 %v1548, %v2153
      %v2162 = vmul.f32 %v1553, %v2153
      %v2163 = vmul.f32 %v1558, %v2153
      %v2164 = vmul.f32 %v1563, %v2153
      %v2165 = vmul.f32 %v1568, %v2153
      %v2166 = vmul.f32 %v1573, %v2153
      %v2167 = vmul.f32 %v1578, %v2153
      %v2168 = vmul.f32 %v1583, %v2153
      %v2169 = vmul.f32 %v1588, %v2153
      %v2170 = vmul.f32 %v1593, %v2153
      %v2171 = vmul.f32 %v1598, %v2153
      %v2172 = vmul.f32 %v1603, %v2153
      %v2173 = vmul.f32 %v1608, %v2153
      %v2174 = vmul.f32 %v1613, %v2153
      %v2175 = vmul.f32 %v1618, %v2153
      %v2176 = vmul.f32 %v1623, %v2153
      %v2177 = vmul.f32 %v1628, %v2153
      %v2178 = vmul.f32 %v1633, %v2153
      %v2179 = vmul.f32 %v1638, %v2153
      %v2180 = vmul.f32 %v1643, %v2153
      %v2181 = vmul.f32 %v1648, %v2153
      %v2182 = vmul.f32 %v1653, %v2153
      %v2183 = vmul.f32 %v1658, %v2153
      %v2184 = vmul.f32 %v1663, %v2153
      %v2185 = vmul.f32 %v1668, %v2153
      %v2186 = vmul.f32 %v1673, %v2153
      %v2187 = vmul.f32 %v1678, %v2153
      %v2188 = vmul.f32 %v1683, %v2153
      %v2189 = vmul.f32 %v1688, %v2153
      %v2190 = vmul.f32 %v1693, %v2153
      %v2191 = vmul.f32 %v1698, %v2153
      %v2192 = vmul.f32 %v1703, %v2153
      %v2193 = vmul.f32 %v1708, %v2153
      %v2194 = vmul.f32 %v1713, %v2153
      %v2195 = vmul.f32 %v1718, %v2153
      %v2196 = vmul.f32 %v1723, %v2153
      %v2197 = vmul.f32 %v1728, %v2153
      %v2198 = vmul.f32 %v1733, %v2153
      %v2199 = vmul.f32 %v1738, %v2153
      %v2200 = vmul.f32 %v1743, %v2153
      %v2201 = vmul.f32 %v1748, %v2153
      %v2202 = vmul.f32 %v1753, %v2153
      %v2203 = vmul.f32 %v1758, %v2153
      %v2204 = vmul.f32 %v1763, %v2153
      %v2205 = vmul.f32 %v1768, %v2153
      %v2206 = vmul.f32 %v1773, %v2153
      %v2207 = vmul.f32 %v1778, %v2153
      %v2208 = vmul.f32 %v1783, %v2153
      %v2209 = vmul.f32 %v1788, %v2153
      %v2210 = vmul.f32 %v1793, %v2153
      %v2211 = vmul.f32 %v1798, %v2153
      %v2212 = vmul.f32 %v1803, %v2153
      %v2213 = vmul.f32 %v1808, %v2153
      %v2214 = vmul.f32 %v1813, %v2153
      %v2215 = vmul.f32 %v1818, %v2153
      %v2216 = vmul.f32 %v1823, %v2153
      %v2217 = vmul.f32 %v1828, %v2153
      %v2218 = vmul.f32 %v1833, %v2153
      %v2219 = vmul.f32 %v1838, %v2153
      %v2220 = vmul.f32 %v1843, %v2153
      %v2221 = vmul.f32 %v1848, %v2153
      %v2222 = vmul.f32 %v1853, %v2153
      %v2223 = vmul.f32 %v1858, %v2153
      %v2224 = vmul.f32 %v1863, %v2153
      %v2225 = vmul.f32 %v1868, %v2153
      %v2226 = vmul.f32 %v1873, %v2153
      %v2227 = vmul.f32 %v1878, %v2153
      %v2228 = vmul.f32 %v1883, %v2153
      %v2229 = vmul.f32 %v1888, %v2153
      %v2230 = vmul.f32 %v1893, %v2153
      %v2231 = vmul.f32 %v1898, %v2153
      %v2232 = vmul.f32 %v1903, %v2153
      %v2233 = vmul.f32 %v1908, %v2153
      %v2234 = vmul.f32 %v1913, %v2153
      %v2235 = vmul.f32 %v1918, %v2153
      %v2236 = vmul.f32 %v1923, %v2153
      %v2237 = vmul.f32 %v1928, %v2153
      %v2238 = vmul.f32 %v1933, %v2153
      %v2239 = vmul.f32 %v1938, %v2153
      %v2240 = vmul.f32 %v1943, %v2153
      %v2241 = vmul.f32 %v1948, %v2153
      %v2242 = vmul.f32 %v1953, %v2153
      %v2243 = vmul.f32 %v1958, %v2153
      %v2244 = vmul.f32 %v1963, %v2153
      %v2245 = vmul.f32 %v1968, %v2153
      %v2246 = vmul.f32 %v1973, %v2153
      %v2247 = vmul.f32 %v1978, %v2153
      %v2248 = vmul.f32 %v1983, %v2153
      %v2249 = vmul.f32 %v1988, %v2153
      %v2250 = vmul.f32 %v1993, %v2153
      %v2251 = vmul.f32 %v1998, %v2153
      %v2252 = vmul.f32 %v2003, %v2153
      %v2253 = vmul.f32 %v2008, %v2153
      %v2254 = vmul.f32 %v2013, %v2153
      %v2255 = vmul.f32 %v2018, %v2153
      %v2256 = vmul.f32 %v2023, %v2153
      %v2257 = vmul.f32 %v2028, %v2153
      %v2258 = vmul.f32 %v2033, %v2153
      %v2259 = vmul.f32 %v2038, %v2153
      %v2260 = vmul.f32 %v2043, %v2153
      %v2261 = vmul.f32 %v2048, %v2153
      %v2262 = vmul.f32 %v2053, %v2153
      %v2263 = vmul.f32 %v2058, %v2153
      %v2264 = vmul.f32 %v2063, %v2153
      %v2265 = vmul.f32 %v2068, %v2153
      %v2266 = vmul.f32 %v2073, %v2153
      %v2267 = vmul.f32 %v2078, %v2153
      %v2268 = vmul.f32 %v2083, %v2153
      %v2269 = vmul.f32 %v2088, %v2153
      %v2270 = vmul.f32 %v2093, %v2153
      %v2271 = vmul.f32 %v2098, %v2153
      %v2272 = vmul.f32 %v2103, %v2153
      %v2273 = vmul.f32 %v2108, %v2153
      %v2274 = vmul.f32 %v2113, %v2153
      %v2275 = vmul.f32 %v2118, %v2153
      %v2276 = vmul.f32 %v2123, %v2153
      %v2277 = vmul.f32 %v2128, %v2153
      %v2278 = vmul.f32 %v2133, %v2153
      %v2279 = vmul.f32 %v2138, %v2153
      %v2280 = vmul.f32 %v2143, %v2153
      %v2281 = vmul.f32 %v2148, %v2153
      %v2282 = vadd.f32 %v1381, %v2154
      %v2283 = vadd.f32 %v1382, %v2155
      %v2284 = vadd.f32 %v1383, %v2156
      %v2285 = vadd.f32 %v1384, %v2157
      %v2286 = vadd.f32 %v1385, %v2158
      %v2287 = vadd.f32 %v1386, %v2159
      %v2288 = vadd.f32 %v1387, %v2160
      %v2289 = vadd.f32 %v1388, %v2161
      %v2290 = vadd.f32 %v1389, %v2162
      %v2291 = vadd.f32 %v1390, %v2163
      %v2292 = vadd.f32 %v1391, %v2164
      %v2293 = vadd.f32 %v1392, %v2165
      %v2294 = vadd.f32 %v1393, %v2166
      %v2295 = vadd.f32 %v1394, %v2167
      %v2296 = vadd.f32 %v1395, %v2168
      %v2297 = vadd.f32 %v1396, %v2169
      %v2298 = vadd.f32 %v1397, %v2170
      %v2299 = vadd.f32 %v1398, %v2171
      %v2300 = vadd.f32 %v1399, %v2172
      %v2301 = vadd.f32 %v1400, %v2173
      %v2302 = vadd.f32 %v1401, %v2174
      %v2303 = vadd.f32 %v1402, %v2175
      %v2304 = vadd.f32 %v1403, %v2176
      %v2305 = vadd.f32 %v1404, %v2177
      %v2306 = vadd.f32 %v1405, %v2178
      %v2307 = vadd.f32 %v1406, %v2179
      %v2308 = vadd.f32 %v1407, %v2180
      %v2309 = vadd.f32 %v1408, %v2181
      %v2310 = vadd.f32 %v1409, %v2182
      %v2311 = vadd.f32 %v1410, %v2183
      %v2312 = vadd.f32 %v1411, %v2184
      %v2313 = vadd.f32 %v1412, %v2185
      %v2314 = vadd.f32 %v1413, %v2186
      %v2315 = vadd.f32 %v1414, %v2187
      %v2316 = vadd.f32 %v1415, %v2188
      %v2317 = vadd.f32 %v1416, %v2189
      %v2318 = vadd.f32 %v1417, %v2190
      %v2319 = vadd.f32 %v1418, %v2191
      %v2320 = vadd.f32 %v1419, %v2192
      %v2321 = vadd.f32 %v1420, %v2193
      %v2322 = vadd.f32 %v1421, %v2194
      %v2323 = vadd.f32 %v1422, %v2195
      %v2324 = vadd.f32 %v1423, %v2196
      %v2325 = vadd.f32 %v1424, %v2197
      %v2326 = vadd.f32 %v1425, %v2198
      %v2327 = vadd.f32 %v1426, %v2199
      %v2328 = vadd.f32 %v1427, %v2200
      %v2329 = vadd.f32 %v1428, %v2201
      %v2330 = vadd.f32 %v1429, %v2202
      %v2331 = vadd.f32 %v1430, %v2203
      %v2332 = vadd.f32 %v1431, %v2204
      %v2333 = vadd.f32 %v1432, %v2205
      %v2334 = vadd.f32 %v1433, %v2206
      %v2335 = vadd.f32 %v1434, %v2207
      %v2336 = vadd.f32 %v1435, %v2208
      %v2337 = vadd.f32 %v1436, %v2209
      %v2338 = vadd.f32 %v1437, %v2210
      %v2339 = vadd.f32 %v1438, %v2211
      %v2340 = vadd.f32 %v1439, %v2212
      %v2341 = vadd.f32 %v1440, %v2213
      %v2342 = vadd.f32 %v1441, %v2214
      %v2343 = vadd.f32 %v1442, %v2215
      %v2344 = vadd.f32 %v1443, %v2216
      %v2345 = vadd.f32 %v1444, %v2217
      %v2346 = vadd.f32 %v1445, %v2218
      %v2347 = vadd.f32 %v1446, %v2219
      %v2348 = vadd.f32 %v1447, %v2220
      %v2349 = vadd.f32 %v1448, %v2221
      %v2350 = vadd.f32 %v1449, %v2222
      %v2351 = vadd.f32 %v1450, %v2223
      %v2352 = vadd.f32 %v1451, %v2224
      %v2353 = vadd.f32 %v1452, %v2225
      %v2354 = vadd.f32 %v1453, %v2226
      %v2355 = vadd.f32 %v1454, %v2227
      %v2356 = vadd.f32 %v1455, %v2228
      %v2357 = vadd.f32 %v1456, %v2229
      %v2358 = vadd.f32 %v1457, %v2230
      %v2359 = vadd.f32 %v1458, %v2231
      %v2360 = vadd.f32 %v1459, %v2232
      %v2361 = vadd.f32 %v1460, %v2233
      %v2362 = vadd.f32 %v1461, %v2234
      %v2363 = vadd.f32 %v1462, %v2235
      %v2364 = vadd.f32 %v1463, %v2236
      %v2365 = vadd.f32 %v1464, %v2237
      %v2366 = vadd.f32 %v1465, %v2238
      %v2367 = vadd.f32 %v1466, %v2239
      %v2368 = vadd.f32 %v1467, %v2240
      %v2369 = vadd.f32 %v1468, %v2241
      %v2370 = vadd.f32 %v1469, %v2242
      %v2371 = vadd.f32 %v1470, %v2243
      %v2372 = vadd.f32 %v1471, %v2244
      %v2373 = vadd.f32 %v1472, %v2245
      %v2374 = vadd.f32 %v1473, %v2246
      %v2375 = vadd.f32 %v1474, %v2247
      %v2376 = vadd.f32 %v1475, %v2248
      %v2377 = vadd.f32 %v1476, %v2249
      %v2378 = vadd.f32 %v1477, %v2250
      %v2379 = vadd.f32 %v1478, %v2251
      %v2380 = vadd.f32 %v1479, %v2252
      %v2381 = vadd.f32 %v1480, %v2253
      %v2382 = vadd.f32 %v1481, %v2254
      %v2383 = vadd.f32 %v1482, %v2255
      %v2384 = vadd.f32 %v1483, %v2256
      %v2385 = vadd.f32 %v1484, %v2257
      %v2386 = vadd.f32 %v1485, %v2258
      %v2387 = vadd.f32 %v1486, %v2259
      %v2388 = vadd.f32 %v1487, %v2260
      %v2389 = vadd.f32 %v1488, %v2261
      %v2390 = vadd.f32 %v1489, %v2262
      %v2391 = vadd.f32 %v1490, %v2263
      %v2392 = vadd.f32 %v1491, %v2264
      %v2393 = vadd.f32 %v1492, %v2265
      %v2394 = vadd.f32 %v1493, %v2266
      %v2395 = vadd.f32 %v1494, %v2267
      %v2396 = vadd.f32 %v1495, %v2268
      %v2397 = vadd.f32 %v1496, %v2269
      %v2398 = vadd.f32 %v1497, %v2270
      %v2399 = vadd.f32 %v1498, %v2271
      %v2400 = vadd.f32 %v1499, %v2272
      %v2401 = vadd.f32 %v1500, %v2273
      %v2402 = vadd.f32 %v1501, %v2274
      %v2403 = vadd.f32 %v1502, %v2275
      %v2404 = vadd.f32 %v1503, %v2276
      %v2405 = vadd.f32 %v1504, %v2277
      %v2406 = vadd.f32 %v1505, %v2278
      %v2407 = vadd.f32 %v1506, %v2279
      %v2408 = vadd.f32 %v1507, %v2280
      %v2409 = vadd.f32 %v1508, %v2281
      %v2410 = vld [vmem:[%s3] sm:$0x1]
      %v2412 = vlaneseq
      %v2413 = vshrl.u32 %v2412, 7
      %v2414 = vsub.s32 0, %v2413
      %v2415 = vrot.slane %v2410, %v2414
      %v2417 = vadd.f32 %v2282, %v2415
      %v2418 = vadd.f32 %v2283, %v2415
      %v2419 = vadd.f32 %v2284, %v2415
      %v2420 = vadd.f32 %v2285, %v2415
      %v2421 = vadd.f32 %v2286, %v2415
      %v2422 = vadd.f32 %v2287, %v2415
      %v2423 = vadd.f32 %v2288, %v2415
      %v2424 = vadd.f32 %v2289, %v2415
      %v2425 = vadd.f32 %v2290, %v2415
      %v2426 = vadd.f32 %v2291, %v2415
      %v2427 = vadd.f32 %v2292, %v2415
      %v2428 = vadd.f32 %v2293, %v2415
      %v2429 = vadd.f32 %v2294, %v2415
      %v2430 = vadd.f32 %v2295, %v2415
      %v2431 = vadd.f32 %v2296, %v2415
      %v2432 = vadd.f32 %v2297, %v2415
      %v2433 = vadd.f32 %v2298, %v2415
      %v2434 = vadd.f32 %v2299, %v2415
      %v2435 = vadd.f32 %v2300, %v2415
      %v2436 = vadd.f32 %v2301, %v2415
      %v2437 = vadd.f32 %v2302, %v2415
      %v2438 = vadd.f32 %v2303, %v2415
      %v2439 = vadd.f32 %v2304, %v2415
      %v2440 = vadd.f32 %v2305, %v2415
      %v2441 = vadd.f32 %v2306, %v2415
      %v2442 = vadd.f32 %v2307, %v2415
      %v2443 = vadd.f32 %v2308, %v2415
      %v2444 = vadd.f32 %v2309, %v2415
      %v2445 = vadd.f32 %v2310, %v2415
      %v2446 = vadd.f32 %v2311, %v2415
      %v2447 = vadd.f32 %v2312, %v2415
      %v2448 = vadd.f32 %v2313, %v2415
      %v2449 = vadd.f32 %v2314, %v2415
      %v2450 = vadd.f32 %v2315, %v2415
      %v2451 = vadd.f32 %v2316, %v2415
      %v2452 = vadd.f32 %v2317, %v2415
      %v2453 = vadd.f32 %v2318, %v2415
      %v2454 = vadd.f32 %v2319, %v2415
      %v2455 = vadd.f32 %v2320, %v2415
      %v2456 = vadd.f32 %v2321, %v2415
      %v2457 = vadd.f32 %v2322, %v2415
      %v2458 = vadd.f32 %v2323, %v2415
      %v2459 = vadd.f32 %v2324, %v2415
      %v2460 = vadd.f32 %v2325, %v2415
      %v2461 = vadd.f32 %v2326, %v2415
      %v2462 = vadd.f32 %v2327, %v2415
      %v2463 = vadd.f32 %v2328, %v2415
      %v2464 = vadd.f32 %v2329, %v2415
      %v2465 = vadd.f32 %v2330, %v2415
      %v2466 = vadd.f32 %v2331, %v2415
      %v2467 = vadd.f32 %v2332, %v2415
      %v2468 = vadd.f32 %v2333, %v2415
      %v2469 = vadd.f32 %v2334, %v2415
      %v2470 = vadd.f32 %v2335, %v2415
      %v2471 = vadd.f32 %v2336, %v2415
      %v2472 = vadd.f32 %v2337, %v2415
      %v2473 = vadd.f32 %v2338, %v2415
      %v2474 = vadd.f32 %v2339, %v2415
      %v2475 = vadd.f32 %v2340, %v2415
      %v2476 = vadd.f32 %v2341, %v2415
      %v2477 = vadd.f32 %v2342, %v2415
      %v2478 = vadd.f32 %v2343, %v2415
      %v2479 = vadd.f32 %v2344, %v2415
      %v2480 = vadd.f32 %v2345, %v2415
      %v2481 = vadd.f32 %v2346, %v2415
      %v2482 = vadd.f32 %v2347, %v2415
      %v2483 = vadd.f32 %v2348, %v2415
      %v2484 = vadd.f32 %v2349, %v2415
      %v2485 = vadd.f32 %v2350, %v2415
      %v2486 = vadd.f32 %v2351, %v2415
      %v2487 = vadd.f32 %v2352, %v2415
      %v2488 = vadd.f32 %v2353, %v2415
      %v2489 = vadd.f32 %v2354, %v2415
      %v2490 = vadd.f32 %v2355, %v2415
      %v2491 = vadd.f32 %v2356, %v2415
      %v2492 = vadd.f32 %v2357, %v2415
      %v2493 = vadd.f32 %v2358, %v2415
      %v2494 = vadd.f32 %v2359, %v2415
      %v2495 = vadd.f32 %v2360, %v2415
      %v2496 = vadd.f32 %v2361, %v2415
      %v2497 = vadd.f32 %v2362, %v2415
      %v2498 = vadd.f32 %v2363, %v2415
      %v2499 = vadd.f32 %v2364, %v2415
      %v2500 = vadd.f32 %v2365, %v2415
      %v2501 = vadd.f32 %v2366, %v2415
      %v2502 = vadd.f32 %v2367, %v2415
      %v2503 = vadd.f32 %v2368, %v2415
      %v2504 = vadd.f32 %v2369, %v2415
      %v2505 = vadd.f32 %v2370, %v2415
      %v2506 = vadd.f32 %v2371, %v2415
      %v2507 = vadd.f32 %v2372, %v2415
      %v2508 = vadd.f32 %v2373, %v2415
      %v2509 = vadd.f32 %v2374, %v2415
      %v2510 = vadd.f32 %v2375, %v2415
      %v2511 = vadd.f32 %v2376, %v2415
      %v2512 = vadd.f32 %v2377, %v2415
      %v2513 = vadd.f32 %v2378, %v2415
      %v2514 = vadd.f32 %v2379, %v2415
      %v2515 = vadd.f32 %v2380, %v2415
      %v2516 = vadd.f32 %v2381, %v2415
      %v2517 = vadd.f32 %v2382, %v2415
      %v2518 = vadd.f32 %v2383, %v2415
      %v2519 = vadd.f32 %v2384, %v2415
      %v2520 = vadd.f32 %v2385, %v2415
      %v2521 = vadd.f32 %v2386, %v2415
      %v2522 = vadd.f32 %v2387, %v2415
      %v2523 = vadd.f32 %v2388, %v2415
      %v2524 = vadd.f32 %v2389, %v2415
      %v2525 = vadd.f32 %v2390, %v2415
      %v2526 = vadd.f32 %v2391, %v2415
      %v2527 = vadd.f32 %v2392, %v2415
      %v2528 = vadd.f32 %v2393, %v2415
      %v2529 = vadd.f32 %v2394, %v2415
      %v2530 = vadd.f32 %v2395, %v2415
      %v2531 = vadd.f32 %v2396, %v2415
      %v2532 = vadd.f32 %v2397, %v2415
      %v2533 = vadd.f32 %v2398, %v2415
      %v2534 = vadd.f32 %v2399, %v2415
      %v2535 = vadd.f32 %v2400, %v2415
      %v2536 = vadd.f32 %v2401, %v2415
      %v2537 = vadd.f32 %v2402, %v2415
      %v2538 = vadd.f32 %v2403, %v2415
      %v2539 = vadd.f32 %v2404, %v2415
      %v2540 = vadd.f32 %v2405, %v2415
      %v2541 = vadd.f32 %v2406, %v2415
      %v2542 = vadd.f32 %v2407, %v2415
      %v2543 = vadd.f32 %v2408, %v2415
      %v2544 = vadd.f32 %v2409, %v2415
      %v2545 = vtanh.pop %v2417
      %v2546 = vtanh.pop %v2418
      %v2547 = vtanh.pop %v2419
      %v2548 = vtanh.pop %v2420
      %v2549 = vtanh.pop %v2421
      %v2550 = vtanh.pop %v2422
      %v2551 = vtanh.pop %v2423
      %v2552 = vtanh.pop %v2424
      %v2553 = vtanh.pop %v2425
      %v2554 = vtanh.pop %v2426
      %v2555 = vtanh.pop %v2427
      %v2556 = vtanh.pop %v2428
      %v2557 = vtanh.pop %v2429
      %v2558 = vtanh.pop %v2430
      %v2559 = vtanh.pop %v2431
      %v2560 = vtanh.pop %v2432
      %v2561 = vtanh.pop %v2433
      %v2562 = vtanh.pop %v2434
      %v2563 = vtanh.pop %v2435
      %v2564 = vtanh.pop %v2436
      %v2565 = vtanh.pop %v2437
      %v2566 = vtanh.pop %v2438
      %v2567 = vtanh.pop %v2439
      %v2568 = vtanh.pop %v2440
      %v2569 = vtanh.pop %v2441
      %v2570 = vtanh.pop %v2442
      %v2571 = vtanh.pop %v2443
      %v2572 = vtanh.pop %v2444
      %v2573 = vtanh.pop %v2445
      %v2574 = vtanh.pop %v2446
      %v2575 = vtanh.pop %v2447
      %v2576 = vtanh.pop %v2448
      %v2577 = vtanh.pop %v2449
      %v2578 = vtanh.pop %v2450
      %v2579 = vtanh.pop %v2451
      %v2580 = vtanh.pop %v2452
      %v2581 = vtanh.pop %v2453
      %v2582 = vtanh.pop %v2454
      %v2583 = vtanh.pop %v2455
      %v2584 = vtanh.pop %v2456
      %v2585 = vtanh.pop %v2457
      %v2586 = vtanh.pop %v2458
      %v2587 = vtanh.pop %v2459
      %v2588 = vtanh.pop %v2460
      %v2589 = vtanh.pop %v2461
      %v2590 = vtanh.pop %v2462
      %v2591 = vtanh.pop %v2463
      %v2592 = vtanh.pop %v2464
      %v2593 = vtanh.pop %v2465
      %v2594 = vtanh.pop %v2466
      %v2595 = vtanh.pop %v2467
      %v2596 = vtanh.pop %v2468
      %v2597 = vtanh.pop %v2469
      %v2598 = vtanh.pop %v2470
      %v2599 = vtanh.pop %v2471
      %v2600 = vtanh.pop %v2472
      %v2601 = vtanh.pop %v2473
      %v2602 = vtanh.pop %v2474
      %v2603 = vtanh.pop %v2475
      %v2604 = vtanh.pop %v2476
      %v2605 = vtanh.pop %v2477
      %v2606 = vtanh.pop %v2478
      %v2607 = vtanh.pop %v2479
      %v2608 = vtanh.pop %v2480
      %v2609 = vtanh.pop %v2481
      %v2610 = vtanh.pop %v2482
      %v2611 = vtanh.pop %v2483
      %v2612 = vtanh.pop %v2484
      %v2613 = vtanh.pop %v2485
      %v2614 = vtanh.pop %v2486
      %v2615 = vtanh.pop %v2487
      %v2616 = vtanh.pop %v2488
      %v2617 = vtanh.pop %v2489
      %v2618 = vtanh.pop %v2490
      %v2619 = vtanh.pop %v2491
      %v2620 = vtanh.pop %v2492
      %v2621 = vtanh.pop %v2493
      %v2622 = vtanh.pop %v2494
      %v2623 = vtanh.pop %v2495
      %v2624 = vtanh.pop %v2496
      %v2625 = vtanh.pop %v2497
      %v2626 = vtanh.pop %v2498
      %v2627 = vtanh.pop %v2499
      %v2628 = vtanh.pop %v2500
      %v2629 = vtanh.pop %v2501
      %v2630 = vtanh.pop %v2502
      %v2631 = vtanh.pop %v2503
      %v2632 = vtanh.pop %v2504
      %v2633 = vtanh.pop %v2505
      %v2634 = vtanh.pop %v2506
      %v2635 = vtanh.pop %v2507
      %v2636 = vtanh.pop %v2508
      %v2637 = vtanh.pop %v2509
      %v2638 = vtanh.pop %v2510
      %v2639 = vtanh.pop %v2511
      %v2640 = vtanh.pop %v2512
      %v2641 = vtanh.pop %v2513
      %v2642 = vtanh.pop %v2514
      %v2643 = vtanh.pop %v2515
      %v2644 = vtanh.pop %v2516
      %v2645 = vtanh.pop %v2517
      %v2646 = vtanh.pop %v2518
      %v2647 = vtanh.pop %v2519
      %v2648 = vtanh.pop %v2520
      %v2649 = vtanh.pop %v2521
      %v2650 = vtanh.pop %v2522
      %v2651 = vtanh.pop %v2523
      %v2652 = vtanh.pop %v2524
      %v2653 = vtanh.pop %v2525
      %v2654 = vtanh.pop %v2526
      %v2655 = vtanh.pop %v2527
      %v2656 = vtanh.pop %v2528
      %v2657 = vtanh.pop %v2529
      %v2658 = vtanh.pop %v2530
      %v2659 = vtanh.pop %v2531
      %v2660 = vtanh.pop %v2532
      %v2661 = vtanh.pop %v2533
      %v2662 = vtanh.pop %v2534
      %v2663 = vtanh.pop %v2535
      %v2664 = vtanh.pop %v2536
      %v2665 = vtanh.pop %v2537
      %v2666 = vtanh.pop %v2538
      %v2667 = vtanh.pop %v2539
      %v2668 = vtanh.pop %v2540
      %v2669 = vtanh.pop %v2541
      %v2670 = vtanh.pop %v2542
      %v2671 = vtanh.pop %v2543
      %v2672 = vtanh.pop %v2544
      %v2673 = vld [vmem:[%s4] sm:$0xff]
      %v2674 = vld [vmem:[%s4 + $0x8] sm:$0xff]
      %v2675 = vld [vmem:[%s4 + $0x10] sm:$0xff]
      %v2676 = vld [vmem:[%s4 + $0x18] sm:$0xff]
      %v2677 = vld [vmem:[%s4 + $0x20] sm:$0xff]
      %v2678 = vld [vmem:[%s4 + $0x28] sm:$0xff]
      %v2679 = vld [vmem:[%s4 + $0x30] sm:$0xff]
      %v2680 = vld [vmem:[%s4 + $0x38] sm:$0xff]
      %v2681 = vld [vmem:[%s4 + $0x40] sm:$0xff]
      %v2682 = vld [vmem:[%s4 + $0x48] sm:$0xff]
      %v2683 = vld [vmem:[%s4 + $0x50] sm:$0xff]
      %v2684 = vld [vmem:[%s4 + $0x58] sm:$0xff]
      %v2685 = vld [vmem:[%s4 + $0x60] sm:$0xff]
      %v2686 = vld [vmem:[%s4 + $0x68] sm:$0xff]
      %v2687 = vld [vmem:[%s4 + $0x70] sm:$0xff]
      %v2688 = vld [vmem:[%s4 + $0x78] sm:$0xff]
      %v2689 = vld [vmem:[%s5] sm:$0x1]
      %v2691 = vlaneseq
      %v2692 = vshrl.u32 %v2691, 7
      %v2693 = vsub.s32 0, %v2692
      %v2694 = vrot.slane %v2689, %v2693
      %2696 = vmatprep.subr.mxu0 0.0
      %2697 = vmatpush1.msra.mxu0 %v2673
      %2698 = vmatprep.subr.mxu0 0.0
      %2699 = vmatpush1.msra.mxu0 %v2674
      %2700 = vmatprep.subr.mxu0 0.0
      %2701 = vmatpush1.msra.mxu0 %v2675
      %2702 = vmatprep.subr.mxu0 0.0
      %2703 = vmatpush1.msra.mxu0 %v2676
      %2704 = vmatprep.subr.mxu0 0.0
      %2705 = vmatpush1.msra.mxu0 %v2677
      %2706 = vmatprep.subr.mxu0 0.0
      %2707 = vmatpush1.msra.mxu0 %v2678
      %2708 = vmatprep.subr.mxu0 0.0
      %2709 = vmatpush1.msra.mxu0 %v2679
      %2710 = vmatprep.subr.mxu0 0.0
      %2711 = vmatpush1.msra.mxu0 %v2680
      %2712 = vmatprep.subr.mxu0 0.0
      %2713 = vmatpush1.msra.mxu0 %v2681
      %2714 = vmatprep.subr.mxu0 0.0
      %2715 = vmatpush1.msra.mxu0 %v2682
      %2716 = vmatprep.subr.mxu0 0.0
      %2717 = vmatpush1.msra.mxu0 %v2683
      %2718 = vmatprep.subr.mxu0 0.0
      %2719 = vmatpush1.msra.mxu0 %v2684
      %2720 = vmatprep.subr.mxu0 0.0
      %2721 = vmatpush1.msra.mxu0 %v2685
      %2722 = vmatprep.subr.mxu0 0.0
      %2723 = vmatpush1.msra.mxu0 %v2686
      %2724 = vmatprep.subr.mxu0 0.0
      %2725 = vmatpush1.msra.mxu0 %v2687
      %2726 = vmatprep.subr.mxu0 0.0
      %2727 = vmatpush1.msra.mxu0 %v2688
      %2728 = vmatprep.subr.mxu0 0.0
      %2729 = vmatpush1.msra.mxu0 0.0
      %2730 = vmatprep.subr.mxu0 0.0
      %2731 = vmatpush1.msra.mxu0 0.0
      %2732 = vmatprep.subr.mxu0 0.0
      %2733 = vmatpush1.msra.mxu0 0.0
      %2734 = vmatprep.subr.mxu0 0.0
      %2735 = vmatpush1.msra.mxu0 0.0
      %2736 = vmatprep.subr.mxu0 0.0
      %2737 = vmatpush1.msra.mxu0 0.0
      %2738 = vmatprep.subr.mxu0 0.0
      %2739 = vmatpush1.msra.mxu0 0.0
      %2740 = vmatprep.subr.mxu0 0.0
      %2741 = vmatpush1.msra.mxu0 0.0
      %2742 = vmatprep.subr.mxu0 0.0
      %2743 = vmatpush1.msra.mxu0 0.0
      %2744 = vmatprep.subr.mxu0 0.0
      %2745 = vmatpush1.msra.mxu0 0.0
      %2746 = vmatprep.subr.mxu0 0.0
      %2747 = vmatpush1.msra.mxu0 0.0
      %2748 = vmatprep.subr.mxu0 0.0
      %2749 = vmatpush1.msra.mxu0 0.0
      %2750 = vmatprep.subr.mxu0 0.0
      %2751 = vmatpush1.msra.mxu0 0.0
      %2752 = vmatprep.subr.mxu0 0.0
      %2753 = vmatpush1.msra.mxu0 0.0
      %2754 = vmatprep.subr.mxu0 0.0
      %2755 = vmatpush1.msra.mxu0 0.0
      %2756 = vmatprep.subr.mxu0 0.0
      %2757 = vmatpush1.msra.mxu0 0.0
      %2758 = vmatprep.subr.mxu0 0.0
      %2759 = vmatpush1.msra.mxu0 0.0
      %2760 = vmatprep.mubr.f32.mxu0 0.0
      %2761 = vmatmul.mubr.f32.gmra.mrb[0].mxu0 %v2545
      %v2762 = vpop.f32.mrb[0].mxu0
      %v2763 = vadd.f32 %v2694, %v2762
      %v2764 = vpop.f32.mrb[0].mxu0
      %2765 = vmatprep.mubr.f32.mxu0 0.0
      %2766 = vmatmul.mubr.f32.gmra.mrb[0].mxu0 %v2546
      %v2767 = vpop.f32.mrb[0].mxu0
      %v2768 = vadd.f32 %v2694, %v2767
      %v2769 = vpop.f32.mrb[0].mxu0
      %2770 = vmatprep.mubr.f32.mxu0 0.0
      %2771 = vmatmul.mubr.f32.gmra.mrb[0].mxu0 %v2547
      %v2772 = vpop.f32.mrb[0].mxu0
      %v2773 = vadd.f32 %v2694, %v2772
      %v2774 = vpop.f32.mrb[0].mxu0
      %2775 = vmatprep.mubr.f32.mxu0 0.0
      %2776 = vmatmul.mubr.f32.gmra.mrb[0].mxu0 %v2548
      %v2777 = vpop.f32.mrb[0].mxu0
      %v2778 = vadd.f32 %v2694, %v2777
      %v2779 = vpop.f32.mrb[0].mxu0
      %2780 = vmatprep.mubr.f32.mxu0 0.0
      %2781 = vmatmul.mubr.f32.gmra.mrb[0].mxu0 %v2549
      %v2782 = vpop.f32.mrb[0].mxu0
      %v2783 = vadd.f32 %v2694, %v2782
      %v2784 = vpop.f32.mrb[0].mxu0
      %2785 = vmatprep.mubr.f32.mxu0 0.0
      %2786 = vmatmul.mubr.f32.gmra.mrb[0].mxu0 %v2550
      %v2787 = vpop.f32.mrb[0].mxu0
      %v2788 = vadd.f32 %v2694, %v2787
      %v2789 = vpop.f32.mrb[0].mxu0
      %2790 = vmatprep.mubr.f32.mxu0 0.0
      %2791 = vmatmul.mubr.f32.gmra.mrb[0].mxu0 %v2551
      %v2792 = vpop.f32.mrb[0].mxu0
      %v2793 = vadd.f32 %v2694, %v2792
      %v2794 = vpop.f32.mrb[0].mxu0
      %2795 = vmatprep.mubr.f32.mxu0 0.0
      %2796 = vmatmul.mubr.f32.gmra.mrb[0].mxu0 %v2552
      %v2797 = vpop.f32.mrb[0].mxu0
      %v2798 = vadd.f32 %v2694, %v2797
      %v2799 = vpop.f32.mrb[0].mxu0
      %2800 = vmatprep.mubr.f32.mxu0 0.0
      %2801 = vmatmul.mubr.f32.gmra.mrb[0].mxu0 %v2553
      %v2802 = vpop.f32.mrb[0].mxu0
      %v2803 = vadd.f32 %v2694, %v2802
      %v2804 = vpop.f32.mrb[0].mxu0
      %2805 = vmatprep.mubr.f32.mxu0 0.0
      %2806 = vmatmul.mubr.f32.gmra.mrb[0].mxu0 %v2554
      %v2807 = vpop.f32.mrb[0].mxu0
      %v2808 = vadd.f32 %v2694, %v2807
      %v2809 = vpop.f32.mrb[0].mxu0
      %2810 = vmatprep.mubr.f32.mxu0 0.0
      %2811 = vmatmul.mubr.f32.gmra.mrb[0].mxu0 %v2555
      %v2812 = vpop.f32.mrb[0].mxu0
      %v2813 = vadd.f32 %v2694, %v2812
      %v2814 = vpop.f32.mrb[0].mxu0
      %2815 = vmatprep.mubr.f32.mxu0 0.0
      %2816 = vmatmul.mubr.f32.gmra.mrb[0].mxu0 %v2556
      %v2817 = vpop.f32.mrb[0].mxu0
      %v2818 = vadd.f32 %v2694, %v2817
      %v2819 = vpop.f32.mrb[0].mxu0
      %2820 = vmatprep.mubr.f32.mxu0 0.0
      %2821 = vmatmul.mubr.f32.gmra.mrb[0].mxu0 %v2557
      %v2822 = vpop.f32.mrb[0].mxu0
      %v2823 = vadd.f32 %v2694, %v2822
      %v2824 = vpop.f32.mrb[0].mxu0
      %2825 = vmatprep.mubr.f32.mxu0 0.0
      %2826 = vmatmul.mubr.f32.gmra.mrb[0].mxu0 %v2558
      %v2827 = vpop.f32.mrb[0].mxu0
      %v2828 = vadd.f32 %v2694, %v2827
      %v2829 = vpop.f32.mrb[0].mxu0
      %2830 = vmatprep.mubr.f32.mxu0 0.0
      %2831 = vmatmul.mubr.f32.gmra.mrb[0].mxu0 %v2559
      %v2832 = vpop.f32.mrb[0].mxu0
      %v2833 = vadd.f32 %v2694, %v2832
      %v2834 = vpop.f32.mrb[0].mxu0
      %2835 = vmatprep.mubr.f32.mxu0 0.0
      %2836 = vmatmul.mubr.f32.gmra.mrb[0].mxu0 %v2560
      %v2837 = vpop.f32.mrb[0].mxu0
      %v2838 = vadd.f32 %v2694, %v2837
      %v2839 = vpop.f32.mrb[0].mxu0
      %2840 = vmatprep.mubr.f32.mxu0 0.0
      %2841 = vmatmul.mubr.f32.gmra.mrb[0].mxu0 %v2561
      %v2842 = vpop.f32.mrb[0].mxu0
      %v2843 = vadd.f32 %v2694, %v2842
      %v2844 = vpop.f32.mrb[0].mxu0
      %2845 = vmatprep.mubr.f32.mxu0 0.0
      %2846 = vmatmul.mubr.f32.gmra.mrb[0].mxu0 %v2562
      %v2847 = vpop.f32.mrb[0].mxu0
      %v2848 = vadd.f32 %v2694, %v2847
      %v2849 = vpop.f32.mrb[0].mxu0
      %2850 = vmatprep.mubr.f32.mxu0 0.0
      %2851 = vmatmul.mubr.f32.gmra.mrb[0].mxu0 %v2563
      %v2852 = vpop.f32.mrb[0].mxu0
      %v2853 = vadd.f32 %v2694, %v2852
      %v2854 = vpop.f32.mrb[0].mxu0
      %2855 = vmatprep.mubr.f32.mxu0 0.0
      %2856 = vmatmul.mubr.f32.gmra.mrb[0].mxu0 %v2564
      %v2857 = vpop.f32.mrb[0].mxu0
      %v2858 = vadd.f32 %v2694, %v2857
      %v2859 = vpop.f32.mrb[0].mxu0
      %2860 = vmatprep.mubr.f32.mxu0 0.0
      %2861 = vmatmul.mubr.f32.gmra.mrb[0].mxu0 %v2565
      %v2862 = vpop.f32.mrb[0].mxu0
      %v2863 = vadd.f32 %v2694, %v2862
      %v2864 = vpop.f32.mrb[0].mxu0
      %2865 = vmatprep.mubr.f32.mxu0 0.0
      %2866 = vmatmul.mubr.f32.gmra.mrb[0].mxu0 %v2566
      %v2867 = vpop.f32.mrb[0].mxu0
      %v2868 = vadd.f32 %v2694, %v2867
      %v2869 = vpop.f32.mrb[0].mxu0
      %2870 = vmatprep.mubr.f32.mxu0 0.0
      %2871 = vmatmul.mubr.f32.gmra.mrb[0].mxu0 %v2567
      %v2872 = vpop.f32.mrb[0].mxu0
      %v2873 = vadd.f32 %v2694, %v2872
      %v2874 = vpop.f32.mrb[0].mxu0
      %2875 = vmatprep.mubr.f32.mxu0 0.0
      %2876 = vmatmul.mubr.f32.gmra.mrb[0].mxu0 %v2568
      %v2877 = vpop.f32.mrb[0].mxu0
      %v2878 = vadd.f32 %v2694, %v2877
      %v2879 = vpop.f32.mrb[0].mxu0
      %2880 = vmatprep.mubr.f32.mxu0 0.0
      %2881 = vmatmul.mubr.f32.gmra.mrb[0].mxu0 %v2569
      %v2882 = vpop.f32.mrb[0].mxu0
      %v2883 = vadd.f32 %v2694, %v2882
      %v2884 = vpop.f32.mrb[0].mxu0
      %2885 = vmatprep.mubr.f32.mxu0 0.0
      %2886 = vmatmul.mubr.f32.gmra.mrb[0].mxu0 %v2570
      %v2887 = vpop.f32.mrb[0].mxu0
      %v2888 = vadd.f32 %v2694, %v2887
      %v2889 = vpop.f32.mrb[0].mxu0
      %2890 = vmatprep.mubr.f32.mxu0 0.0
      %2891 = vmatmul.mubr.f32.gmra.mrb[0].mxu0 %v2571
      %v2892 = vpop.f32.mrb[0].mxu0
      %v2893 = vadd.f32 %v2694, %v2892
      %v2894 = vpop.f32.mrb[0].mxu0
      %2895 = vmatprep.mubr.f32.mxu0 0.0
      %2896 = vmatmul.mubr.f32.gmra.mrb[0].mxu0 %v2572
      %v2897 = vpop.f32.mrb[0].mxu0
      %v2898 = vadd.f32 %v2694, %v2897
      %v2899 = vpop.f32.mrb[0].mxu0
      %2900 = vmatprep.mubr.f32.mxu0 0.0
      %2901 = vmatmul.mubr.f32.gmra.mrb[0].mxu0 %v2573
      %v2902 = vpop.f32.mrb[0].mxu0
      %v2903 = vadd.f32 %v2694, %v2902
      %v2904 = vpop.f32.mrb[0].mxu0
      %2905 = vmatprep.mubr.f32.mxu0 0.0
      %2906 = vmatmul.mubr.f32.gmra.mrb[0].mxu0 %v2574
      %v2907 = vpop.f32.mrb[0].mxu0
      %v2908 = vadd.f32 %v2694, %v2907
      %v2909 = vpop.f32.mrb[0].mxu0
      %2910 = vmatprep.mubr.f32.mxu0 0.0
      %2911 = vmatmul.mubr.f32.gmra.mrb[0].mxu0 %v2575
      %v2912 = vpop.f32.mrb[0].mxu0
      %v2913 = vadd.f32 %v2694, %v2912
      %v2914 = vpop.f32.mrb[0].mxu0
      %2915 = vmatprep.mubr.f32.mxu0 0.0
      %2916 = vmatmul.mubr.f32.gmra.mrb[0].mxu0 %v2576
      %v2917 = vpop.f32.mrb[0].mxu0
      %v2918 = vadd.f32 %v2694, %v2917
      %v2919 = vpop.f32.mrb[0].mxu0
      %2920 = vmatprep.mubr.f32.mxu0 0.0
      %2921 = vmatmul.mubr.f32.gmra.mrb[0].mxu0 %v2577
      %v2922 = vpop.f32.mrb[0].mxu0
      %v2923 = vadd.f32 %v2694, %v2922
      %v2924 = vpop.f32.mrb[0].mxu0
      %2925 = vmatprep.mubr.f32.mxu0 0.0
      %2926 = vmatmul.mubr.f32.gmra.mrb[0].mxu0 %v2578
      %v2927 = vpop.f32.mrb[0].mxu0
      %v2928 = vadd.f32 %v2694, %v2927
      %v2929 = vpop.f32.mrb[0].mxu0
      %2930 = vmatprep.mubr.f32.mxu0 0.0
      %2931 = vmatmul.mubr.f32.gmra.mrb[0].mxu0 %v2579
      %v2932 = vpop.f32.mrb[0].mxu0
      %v2933 = vadd.f32 %v2694, %v2932
      %v2934 = vpop.f32.mrb[0].mxu0
      %2935 = vmatprep.mubr.f32.mxu0 0.0
      %2936 = vmatmul.mubr.f32.gmra.mrb[0].mxu0 %v2580
      %v2937 = vpop.f32.mrb[0].mxu0
      %v2938 = vadd.f32 %v2694, %v2937
      %v2939 = vpop.f32.mrb[0].mxu0
      %2940 = vmatprep.mubr.f32.mxu0 0.0
      %2941 = vmatmul.mubr.f32.gmra.mrb[0].mxu0 %v2581
      %v2942 = vpop.f32.mrb[0].mxu0
      %v2943 = vadd.f32 %v2694, %v2942
      %v2944 = vpop.f32.mrb[0].mxu0
      %2945 = vmatprep.mubr.f32.mxu0 0.0
      %2946 = vmatmul.mubr.f32.gmra.mrb[0].mxu0 %v2582
      %v2947 = vpop.f32.mrb[0].mxu0
      %v2948 = vadd.f32 %v2694, %v2947
      %v2949 = vpop.f32.mrb[0].mxu0
      %2950 = vmatprep.mubr.f32.mxu0 0.0
      %2951 = vmatmul.mubr.f32.gmra.mrb[0].mxu0 %v2583
      %v2952 = vpop.f32.mrb[0].mxu0
      %v2953 = vadd.f32 %v2694, %v2952
      %v2954 = vpop.f32.mrb[0].mxu0
      %2955 = vmatprep.mubr.f32.mxu0 0.0
      %2956 = vmatmul.mubr.f32.gmra.mrb[0].mxu0 %v2584
      %v2957 = vpop.f32.mrb[0].mxu0
      %v2958 = vadd.f32 %v2694, %v2957
      %v2959 = vpop.f32.mrb[0].mxu0
      %2960 = vmatprep.mubr.f32.mxu0 0.0
      %2961 = vmatmul.mubr.f32.gmra.mrb[0].mxu0 %v2585
      %v2962 = vpop.f32.mrb[0].mxu0
      %v2963 = vadd.f32 %v2694, %v2962
      %v2964 = vpop.f32.mrb[0].mxu0
      %2965 = vmatprep.mubr.f32.mxu0 0.0
      %2966 = vmatmul.mubr.f32.gmra.mrb[0].mxu0 %v2586
      %v2967 = vpop.f32.mrb[0].mxu0
      %v2968 = vadd.f32 %v2694, %v2967
      %v2969 = vpop.f32.mrb[0].mxu0
      %2970 = vmatprep.mubr.f32.mxu0 0.0
      %2971 = vmatmul.mubr.f32.gmra.mrb[0].mxu0 %v2587
      %v2972 = vpop.f32.mrb[0].mxu0
      %v2973 = vadd.f32 %v2694, %v2972
      %v2974 = vpop.f32.mrb[0].mxu0
      %2975 = vmatprep.mubr.f32.mxu0 0.0
      %2976 = vmatmul.mubr.f32.gmra.mrb[0].mxu0 %v2588
      %v2977 = vpop.f32.mrb[0].mxu0
      %v2978 = vadd.f32 %v2694, %v2977
      %v2979 = vpop.f32.mrb[0].mxu0
      %2980 = vmatprep.mubr.f32.mxu0 0.0
      %2981 = vmatmul.mubr.f32.gmra.mrb[0].mxu0 %v2589
      %v2982 = vpop.f32.mrb[0].mxu0
      %v2983 = vadd.f32 %v2694, %v2982
      %v2984 = vpop.f32.mrb[0].mxu0
      %2985 = vmatprep.mubr.f32.mxu0 0.0
      %2986 = vmatmul.mubr.f32.gmra.mrb[0].mxu0 %v2590
      %v2987 = vpop.f32.mrb[0].mxu0
      %v2988 = vadd.f32 %v2694, %v2987
      %v2989 = vpop.f32.mrb[0].mxu0
      %2990 = vmatprep.mubr.f32.mxu0 0.0
      %2991 = vmatmul.mubr.f32.gmra.mrb[0].mxu0 %v2591
      %v2992 = vpop.f32.mrb[0].mxu0
      %v2993 = vadd.f32 %v2694, %v2992
      %v2994 = vpop.f32.mrb[0].mxu0
      %2995 = vmatprep.mubr.f32.mxu0 0.0
      %2996 = vmatmul.mubr.f32.gmra.mrb[0].mxu0 %v2592
      %v2997 = vpop.f32.mrb[0].mxu0
      %v2998 = vadd.f32 %v2694, %v2997
      %v2999 = vpop.f32.mrb[0].mxu0
      %3000 = vmatprep.mubr.f32.mxu0 0.0
      %3001 = vmatmul.mubr.f32.gmra.mrb[0].mxu0 %v2593
      %v3002 = vpop.f32.mrb[0].mxu0
      %v3003 = vadd.f32 %v2694, %v3002
      %v3004 = vpop.f32.mrb[0].mxu0
      %3005 = vmatprep.mubr.f32.mxu0 0.0
      %3006 = vmatmul.mubr.f32.gmra.mrb[0].mxu0 %v2594
      %v3007 = vpop.f32.mrb[0].mxu0
      %v3008 = vadd.f32 %v2694, %v3007
      %v3009 = vpop.f32.mrb[0].mxu0
      %3010 = vmatprep.mubr.f32.mxu0 0.0
      %3011 = vmatmul.mubr.f32.gmra.mrb[0].mxu0 %v2595
      %v3012 = vpop.f32.mrb[0].mxu0
      %v3013 = vadd.f32 %v2694, %v3012
      %v3014 = vpop.f32.mrb[0].mxu0
      %3015 = vmatprep.mubr.f32.mxu0 0.0
      %3016 = vmatmul.mubr.f32.gmra.mrb[0].mxu0 %v2596
      %v3017 = vpop.f32.mrb[0].mxu0
      %v3018 = vadd.f32 %v2694, %v3017
      %v3019 = vpop.f32.mrb[0].mxu0
      %3020 = vmatprep.mubr.f32.mxu0 0.0
      %3021 = vmatmul.mubr.f32.gmra.mrb[0].mxu0 %v2597
      %v3022 = vpop.f32.mrb[0].mxu0
      %v3023 = vadd.f32 %v2694, %v3022
      %v3024 = vpop.f32.mrb[0].mxu0
      %3025 = vmatprep.mubr.f32.mxu0 0.0
      %3026 = vmatmul.mubr.f32.gmra.mrb[0].mxu0 %v2598
      %v3027 = vpop.f32.mrb[0].mxu0
      %v3028 = vadd.f32 %v2694, %v3027
      %v3029 = vpop.f32.mrb[0].mxu0
      %3030 = vmatprep.mubr.f32.mxu0 0.0
      %3031 = vmatmul.mubr.f32.gmra.mrb[0].mxu0 %v2599
      %v3032 = vpop.f32.mrb[0].mxu0
      %v3033 = vadd.f32 %v2694, %v3032
      %v3034 = vpop.f32.mrb[0].mxu0
      %3035 = vmatprep.mubr.f32.mxu0 0.0
      %3036 = vmatmul.mubr.f32.gmra.mrb[0].mxu0 %v2600
      %v3037 = vpop.f32.mrb[0].mxu0
      %v3038 = vadd.f32 %v2694, %v3037
      %v3039 = vpop.f32.mrb[0].mxu0
      %3040 = vmatprep.mubr.f32.mxu0 0.0
      %3041 = vmatmul.mubr.f32.gmra.mrb[0].mxu0 %v2601
      %v3042 = vpop.f32.mrb[0].mxu0
      %v3043 = vadd.f32 %v2694, %v3042
      %v3044 = vpop.f32.mrb[0].mxu0
      %3045 = vmatprep.mubr.f32.mxu0 0.0
      %3046 = vmatmul.mubr.f32.gmra.mrb[0].mxu0 %v2602
      %v3047 = vpop.f32.mrb[0].mxu0
      %v3048 = vadd.f32 %v2694, %v3047
      %v3049 = vpop.f32.mrb[0].mxu0
      %3050 = vmatprep.mubr.f32.mxu0 0.0
      %3051 = vmatmul.mubr.f32.gmra.mrb[0].mxu0 %v2603
      %v3052 = vpop.f32.mrb[0].mxu0
      %v3053 = vadd.f32 %v2694, %v3052
      %v3054 = vpop.f32.mrb[0].mxu0
      %3055 = vmatprep.mubr.f32.mxu0 0.0
      %3056 = vmatmul.mubr.f32.gmra.mrb[0].mxu0 %v2604
      %v3057 = vpop.f32.mrb[0].mxu0
      %v3058 = vadd.f32 %v2694, %v3057
      %v3059 = vpop.f32.mrb[0].mxu0
      %3060 = vmatprep.mubr.f32.mxu0 0.0
      %3061 = vmatmul.mubr.f32.gmra.mrb[0].mxu0 %v2605
      %v3062 = vpop.f32.mrb[0].mxu0
      %v3063 = vadd.f32 %v2694, %v3062
      %v3064 = vpop.f32.mrb[0].mxu0
      %3065 = vmatprep.mubr.f32.mxu0 0.0
      %3066 = vmatmul.mubr.f32.gmra.mrb[0].mxu0 %v2606
      %v3067 = vpop.f32.mrb[0].mxu0
      %v3068 = vadd.f32 %v2694, %v3067
      %v3069 = vpop.f32.mrb[0].mxu0
      %3070 = vmatprep.mubr.f32.mxu0 0.0
      %3071 = vmatmul.mubr.f32.gmra.mrb[0].mxu0 %v2607
      %v3072 = vpop.f32.mrb[0].mxu0
      %v3073 = vadd.f32 %v2694, %v3072
      %v3074 = vpop.f32.mrb[0].mxu0
      %3075 = vmatprep.mubr.f32.mxu0 0.0
      %3076 = vmatmul.mubr.f32.gmra.mrb[0].mxu0 %v2608
      %v3077 = vpop.f32.mrb[0].mxu0
      %v3078 = vadd.f32 %v2694, %v3077
      %v3079 = vpop.f32.mrb[0].mxu0
      %3080 = vmatprep.mubr.f32.mxu0 0.0
      %3081 = vmatmul.mubr.f32.gmra.mrb[0].mxu0 %v2609
      %v3082 = vpop.f32.mrb[0].mxu0
      %v3083 = vadd.f32 %v2694, %v3082
      %v3084 = vpop.f32.mrb[0].mxu0
      %3085 = vmatprep.mubr.f32.mxu0 0.0
      %3086 = vmatmul.mubr.f32.gmra.mrb[0].mxu0 %v2610
      %v3087 = vpop.f32.mrb[0].mxu0
      %v3088 = vadd.f32 %v2694, %v3087
      %v3089 = vpop.f32.mrb[0].mxu0
      %3090 = vmatprep.mubr.f32.mxu0 0.0
      %3091 = vmatmul.mubr.f32.gmra.mrb[0].mxu0 %v2611
      %v3092 = vpop.f32.mrb[0].mxu0
      %v3093 = vadd.f32 %v2694, %v3092
      %v3094 = vpop.f32.mrb[0].mxu0
      %3095 = vmatprep.mubr.f32.mxu0 0.0
      %3096 = vmatmul.mubr.f32.gmra.mrb[0].mxu0 %v2612
      %v3097 = vpop.f32.mrb[0].mxu0
      %v3098 = vadd.f32 %v2694, %v3097
      %v3099 = vpop.f32.mrb[0].mxu0
      %3100 = vmatprep.mubr.f32.mxu0 0.0
      %3101 = vmatmul.mubr.f32.gmra.mrb[0].mxu0 %v2613
      %v3102 = vpop.f32.mrb[0].mxu0
      %v3103 = vadd.f32 %v2694, %v3102
      %v3104 = vpop.f32.mrb[0].mxu0
      %3105 = vmatprep.mubr.f32.mxu0 0.0
      %3106 = vmatmul.mubr.f32.gmra.mrb[0].mxu0 %v2614
      %v3107 = vpop.f32.mrb[0].mxu0
      %v3108 = vadd.f32 %v2694, %v3107
      %v3109 = vpop.f32.mrb[0].mxu0
      %3110 = vmatprep.mubr.f32.mxu0 0.0
      %3111 = vmatmul.mubr.f32.gmra.mrb[0].mxu0 %v2615
      %v3112 = vpop.f32.mrb[0].mxu0
      %v3113 = vadd.f32 %v2694, %v3112
      %v3114 = vpop.f32.mrb[0].mxu0
      %3115 = vmatprep.mubr.f32.mxu0 0.0
      %3116 = vmatmul.mubr.f32.gmra.mrb[0].mxu0 %v2616
      %v3117 = vpop.f32.mrb[0].mxu0
      %v3118 = vadd.f32 %v2694, %v3117
      %v3119 = vpop.f32.mrb[0].mxu0
      %3120 = vmatprep.mubr.f32.mxu0 0.0
      %3121 = vmatmul.mubr.f32.gmra.mrb[0].mxu0 %v2617
      %v3122 = vpop.f32.mrb[0].mxu0
      %v3123 = vadd.f32 %v2694, %v3122
      %v3124 = vpop.f32.mrb[0].mxu0
      %3125 = vmatprep.mubr.f32.mxu0 0.0
      %3126 = vmatmul.mubr.f32.gmra.mrb[0].mxu0 %v2618
      %v3127 = vpop.f32.mrb[0].mxu0
      %v3128 = vadd.f32 %v2694, %v3127
      %v3129 = vpop.f32.mrb[0].mxu0
      %3130 = vmatprep.mubr.f32.mxu0 0.0
      %3131 = vmatmul.mubr.f32.gmra.mrb[0].mxu0 %v2619
      %v3132 = vpop.f32.mrb[0].mxu0
      %v3133 = vadd.f32 %v2694, %v3132
      %v3134 = vpop.f32.mrb[0].mxu0
      %3135 = vmatprep.mubr.f32.mxu0 0.0
      %3136 = vmatmul.mubr.f32.gmra.mrb[0].mxu0 %v2620
      %v3137 = vpop.f32.mrb[0].mxu0
      %v3138 = vadd.f32 %v2694, %v3137
      %v3139 = vpop.f32.mrb[0].mxu0
      %3140 = vmatprep.mubr.f32.mxu0 0.0
      %3141 = vmatmul.mubr.f32.gmra.mrb[0].mxu0 %v2621
      %v3142 = vpop.f32.mrb[0].mxu0
      %v3143 = vadd.f32 %v2694, %v3142
      %v3144 = vpop.f32.mrb[0].mxu0
      %3145 = vmatprep.mubr.f32.mxu0 0.0
      %3146 = vmatmul.mubr.f32.gmra.mrb[0].mxu0 %v2622
      %v3147 = vpop.f32.mrb[0].mxu0
      %v3148 = vadd.f32 %v2694, %v3147
      %v3149 = vpop.f32.mrb[0].mxu0
      %3150 = vmatprep.mubr.f32.mxu0 0.0
      %3151 = vmatmul.mubr.f32.gmra.mrb[0].mxu0 %v2623
      %v3152 = vpop.f32.mrb[0].mxu0
      %v3153 = vadd.f32 %v2694, %v3152
      %v3154 = vpop.f32.mrb[0].mxu0
      %3155 = vmatprep.mubr.f32.mxu0 0.0
      %3156 = vmatmul.mubr.f32.gmra.mrb[0].mxu0 %v2624
      %v3157 = vpop.f32.mrb[0].mxu0
      %v3158 = vadd.f32 %v2694, %v3157
      %v3159 = vpop.f32.mrb[0].mxu0
      %3160 = vmatprep.mubr.f32.mxu0 0.0
      %3161 = vmatmul.mubr.f32.gmra.mrb[0].mxu0 %v2625
      %v3162 = vpop.f32.mrb[0].mxu0
      %v3163 = vadd.f32 %v2694, %v3162
      %v3164 = vpop.f32.mrb[0].mxu0
      %3165 = vmatprep.mubr.f32.mxu0 0.0
      %3166 = vmatmul.mubr.f32.gmra.mrb[0].mxu0 %v2626
      %v3167 = vpop.f32.mrb[0].mxu0
      %v3168 = vadd.f32 %v2694, %v3167
      %v3169 = vpop.f32.mrb[0].mxu0
      %3170 = vmatprep.mubr.f32.mxu0 0.0
      %3171 = vmatmul.mubr.f32.gmra.mrb[0].mxu0 %v2627
      %v3172 = vpop.f32.mrb[0].mxu0
      %v3173 = vadd.f32 %v2694, %v3172
      %v3174 = vpop.f32.mrb[0].mxu0
      %3175 = vmatprep.mubr.f32.mxu0 0.0
      %3176 = vmatmul.mubr.f32.gmra.mrb[0].mxu0 %v2628
      %v3177 = vpop.f32.mrb[0].mxu0
      %v3178 = vadd.f32 %v2694, %v3177
      %v3179 = vpop.f32.mrb[0].mxu0
      %3180 = vmatprep.mubr.f32.mxu0 0.0
      %3181 = vmatmul.mubr.f32.gmra.mrb[0].mxu0 %v2629
      %v3182 = vpop.f32.mrb[0].mxu0
      %v3183 = vadd.f32 %v2694, %v3182
      %v3184 = vpop.f32.mrb[0].mxu0
      %3185 = vmatprep.mubr.f32.mxu0 0.0
      %3186 = vmatmul.mubr.f32.gmra.mrb[0].mxu0 %v2630
      %v3187 = vpop.f32.mrb[0].mxu0
      %v3188 = vadd.f32 %v2694, %v3187
      %v3189 = vpop.f32.mrb[0].mxu0
      %3190 = vmatprep.mubr.f32.mxu0 0.0
      %3191 = vmatmul.mubr.f32.gmra.mrb[0].mxu0 %v2631
      %v3192 = vpop.f32.mrb[0].mxu0
      %v3193 = vadd.f32 %v2694, %v3192
      %v3194 = vpop.f32.mrb[0].mxu0
      %3195 = vmatprep.mubr.f32.mxu0 0.0
      %3196 = vmatmul.mubr.f32.gmra.mrb[0].mxu0 %v2632
      %v3197 = vpop.f32.mrb[0].mxu0
      %v3198 = vadd.f32 %v2694, %v3197
      %v3199 = vpop.f32.mrb[0].mxu0
      %3200 = vmatprep.mubr.f32.mxu0 0.0
      %3201 = vmatmul.mubr.f32.gmra.mrb[0].mxu0 %v2633
      %v3202 = vpop.f32.mrb[0].mxu0
      %v3203 = vadd.f32 %v2694, %v3202
      %v3204 = vpop.f32.mrb[0].mxu0
      %3205 = vmatprep.mubr.f32.mxu0 0.0
      %3206 = vmatmul.mubr.f32.gmra.mrb[0].mxu0 %v2634
      %v3207 = vpop.f32.mrb[0].mxu0
      %v3208 = vadd.f32 %v2694, %v3207
      %v3209 = vpop.f32.mrb[0].mxu0
      %3210 = vmatprep.mubr.f32.mxu0 0.0
      %3211 = vmatmul.mubr.f32.gmra.mrb[0].mxu0 %v2635
      %v3212 = vpop.f32.mrb[0].mxu0
      %v3213 = vadd.f32 %v2694, %v3212
      %v3214 = vpop.f32.mrb[0].mxu0
      %3215 = vmatprep.mubr.f32.mxu0 0.0
      %3216 = vmatmul.mubr.f32.gmra.mrb[0].mxu0 %v2636
      %v3217 = vpop.f32.mrb[0].mxu0
      %v3218 = vadd.f32 %v2694, %v3217
      %v3219 = vpop.f32.mrb[0].mxu0
      %3220 = vmatprep.mubr.f32.mxu0 0.0
      %3221 = vmatmul.mubr.f32.gmra.mrb[0].mxu0 %v2637
      %v3222 = vpop.f32.mrb[0].mxu0
      %v3223 = vadd.f32 %v2694, %v3222
      %v3224 = vpop.f32.mrb[0].mxu0
      %3225 = vmatprep.mubr.f32.mxu0 0.0
      %3226 = vmatmul.mubr.f32.gmra.mrb[0].mxu0 %v2638
      %v3227 = vpop.f32.mrb[0].mxu0
      %v3228 = vadd.f32 %v2694, %v3227
      %v3229 = vpop.f32.mrb[0].mxu0
      %3230 = vmatprep.mubr.f32.mxu0 0.0
      %3231 = vmatmul.mubr.f32.gmra.mrb[0].mxu0 %v2639
      %v3232 = vpop.f32.mrb[0].mxu0
      %v3233 = vadd.f32 %v2694, %v3232
      %v3234 = vpop.f32.mrb[0].mxu0
      %3235 = vmatprep.mubr.f32.mxu0 0.0
      %3236 = vmatmul.mubr.f32.gmra.mrb[0].mxu0 %v2640
      %v3237 = vpop.f32.mrb[0].mxu0
      %v3238 = vadd.f32 %v2694, %v3237
      %v3239 = vpop.f32.mrb[0].mxu0
      %3240 = vmatprep.mubr.f32.mxu0 0.0
      %3241 = vmatmul.mubr.f32.gmra.mrb[0].mxu0 %v2641
      %v3242 = vpop.f32.mrb[0].mxu0
      %v3243 = vadd.f32 %v2694, %v3242
      %v3244 = vpop.f32.mrb[0].mxu0
      %3245 = vmatprep.mubr.f32.mxu0 0.0
      %3246 = vmatmul.mubr.f32.gmra.mrb[0].mxu0 %v2642
      %v3247 = vpop.f32.mrb[0].mxu0
      %v3248 = vadd.f32 %v2694, %v3247
      %v3249 = vpop.f32.mrb[0].mxu0
      %3250 = vmatprep.mubr.f32.mxu0 0.0
      %3251 = vmatmul.mubr.f32.gmra.mrb[0].mxu0 %v2643
      %v3252 = vpop.f32.mrb[0].mxu0
      %v3253 = vadd.f32 %v2694, %v3252
      %v3254 = vpop.f32.mrb[0].mxu0
      %3255 = vmatprep.mubr.f32.mxu0 0.0
      %3256 = vmatmul.mubr.f32.gmra.mrb[0].mxu0 %v2644
      %v3257 = vpop.f32.mrb[0].mxu0
      %v3258 = vadd.f32 %v2694, %v3257
      %v3259 = vpop.f32.mrb[0].mxu0
      %3260 = vmatprep.mubr.f32.mxu0 0.0
      %3261 = vmatmul.mubr.f32.gmra.mrb[0].mxu0 %v2645
      %v3262 = vpop.f32.mrb[0].mxu0
      %v3263 = vadd.f32 %v2694, %v3262
      %v3264 = vpop.f32.mrb[0].mxu0
      %3265 = vmatprep.mubr.f32.mxu0 0.0
      %3266 = vmatmul.mubr.f32.gmra.mrb[0].mxu0 %v2646
      %v3267 = vpop.f32.mrb[0].mxu0
      %v3268 = vadd.f32 %v2694, %v3267
      %v3269 = vpop.f32.mrb[0].mxu0
      %3270 = vmatprep.mubr.f32.mxu0 0.0
      %3271 = vmatmul.mubr.f32.gmra.mrb[0].mxu0 %v2647
      %v3272 = vpop.f32.mrb[0].mxu0
      %v3273 = vadd.f32 %v2694, %v3272
      %v3274 = vpop.f32.mrb[0].mxu0
      %3275 = vmatprep.mubr.f32.mxu0 0.0
      %3276 = vmatmul.mubr.f32.gmra.mrb[0].mxu0 %v2648
      %v3277 = vpop.f32.mrb[0].mxu0
      %v3278 = vadd.f32 %v2694, %v3277
      %v3279 = vpop.f32.mrb[0].mxu0
      %3280 = vmatprep.mubr.f32.mxu0 0.0
      %3281 = vmatmul.mubr.f32.gmra.mrb[0].mxu0 %v2649
      %v3282 = vpop.f32.mrb[0].mxu0
      %v3283 = vadd.f32 %v2694, %v3282
      %v3284 = vpop.f32.mrb[0].mxu0
      %3285 = vmatprep.mubr.f32.mxu0 0.0
      %3286 = vmatmul.mubr.f32.gmra.mrb[0].mxu0 %v2650
      %v3287 = vpop.f32.mrb[0].mxu0
      %v3288 = vadd.f32 %v2694, %v3287
      %v3289 = vpop.f32.mrb[0].mxu0
      %3290 = vmatprep.mubr.f32.mxu0 0.0
      %3291 = vmatmul.mubr.f32.gmra.mrb[0].mxu0 %v2651
      %v3292 = vpop.f32.mrb[0].mxu0
      %v3293 = vadd.f32 %v2694, %v3292
      %v3294 = vpop.f32.mrb[0].mxu0
      %3295 = vmatprep.mubr.f32.mxu0 0.0
      %3296 = vmatmul.mubr.f32.gmra.mrb[0].mxu0 %v2652
      %v3297 = vpop.f32.mrb[0].mxu0
      %v3298 = vadd.f32 %v2694, %v3297
      %v3299 = vpop.f32.mrb[0].mxu0
      %3300 = vmatprep.mubr.f32.mxu0 0.0
      %3301 = vmatmul.mubr.f32.gmra.mrb[0].mxu0 %v2653
      %v3302 = vpop.f32.mrb[0].mxu0
      %v3303 = vadd.f32 %v2694, %v3302
      %v3304 = vpop.f32.mrb[0].mxu0
      %3305 = vmatprep.mubr.f32.mxu0 0.0
      %3306 = vmatmul.mubr.f32.gmra.mrb[0].mxu0 %v2654
      %v3307 = vpop.f32.mrb[0].mxu0
      %v3308 = vadd.f32 %v2694, %v3307
      %v3309 = vpop.f32.mrb[0].mxu0
      %3310 = vmatprep.mubr.f32.mxu0 0.0
      %3311 = vmatmul.mubr.f32.gmra.mrb[0].mxu0 %v2655
      %v3312 = vpop.f32.mrb[0].mxu0
      %v3313 = vadd.f32 %v2694, %v3312
      %v3314 = vpop.f32.mrb[0].mxu0
      %3315 = vmatprep.mubr.f32.mxu0 0.0
      %3316 = vmatmul.mubr.f32.gmra.mrb[0].mxu0 %v2656
      %v3317 = vpop.f32.mrb[0].mxu0
      %v3318 = vadd.f32 %v2694, %v3317
      %v3319 = vpop.f32.mrb[0].mxu0
      %3320 = vmatprep.mubr.f32.mxu0 0.0
      %3321 = vmatmul.mubr.f32.gmra.mrb[0].mxu0 %v2657
      %v3322 = vpop.f32.mrb[0].mxu0
      %v3323 = vadd.f32 %v2694, %v3322
      %v3324 = vpop.f32.mrb[0].mxu0
      %3325 = vmatprep.mubr.f32.mxu0 0.0
      %3326 = vmatmul.mubr.f32.gmra.mrb[0].mxu0 %v2658
      %v3327 = vpop.f32.mrb[0].mxu0
      %v3328 = vadd.f32 %v2694, %v3327
      %v3329 = vpop.f32.mrb[0].mxu0
      %3330 = vmatprep.mubr.f32.mxu0 0.0
      %3331 = vmatmul.mubr.f32.gmra.mrb[0].mxu0 %v2659
      %v3332 = vpop.f32.mrb[0].mxu0
      %v3333 = vadd.f32 %v2694, %v3332
      %v3334 = vpop.f32.mrb[0].mxu0
      %3335 = vmatprep.mubr.f32.mxu0 0.0
      %3336 = vmatmul.mubr.f32.gmra.mrb[0].mxu0 %v2660
      %v3337 = vpop.f32.mrb[0].mxu0
      %v3338 = vadd.f32 %v2694, %v3337
      %v3339 = vpop.f32.mrb[0].mxu0
      %3340 = vmatprep.mubr.f32.mxu0 0.0
      %3341 = vmatmul.mubr.f32.gmra.mrb[0].mxu0 %v2661
      %v3342 = vpop.f32.mrb[0].mxu0
      %v3343 = vadd.f32 %v2694, %v3342
      %v3344 = vpop.f32.mrb[0].mxu0
      %3345 = vmatprep.mubr.f32.mxu0 0.0
      %3346 = vmatmul.mubr.f32.gmra.mrb[0].mxu0 %v2662
      %v3347 = vpop.f32.mrb[0].mxu0
      %v3348 = vadd.f32 %v2694, %v3347
      %v3349 = vpop.f32.mrb[0].mxu0
      %3350 = vmatprep.mubr.f32.mxu0 0.0
      %3351 = vmatmul.mubr.f32.gmra.mrb[0].mxu0 %v2663
      %v3352 = vpop.f32.mrb[0].mxu0
      %v3353 = vadd.f32 %v2694, %v3352
      %v3354 = vpop.f32.mrb[0].mxu0
      %3355 = vmatprep.mubr.f32.mxu0 0.0
      %3356 = vmatmul.mubr.f32.gmra.mrb[0].mxu0 %v2664
      %v3357 = vpop.f32.mrb[0].mxu0
      %v3358 = vadd.f32 %v2694, %v3357
      %v3359 = vpop.f32.mrb[0].mxu0
      %3360 = vmatprep.mubr.f32.mxu0 0.0
      %3361 = vmatmul.mubr.f32.gmra.mrb[0].mxu0 %v2665
      %v3362 = vpop.f32.mrb[0].mxu0
      %v3363 = vadd.f32 %v2694, %v3362
      %v3364 = vpop.f32.mrb[0].mxu0
      %3365 = vmatprep.mubr.f32.mxu0 0.0
      %3366 = vmatmul.mubr.f32.gmra.mrb[0].mxu0 %v2666
      %v3367 = vpop.f32.mrb[0].mxu0
      %v3368 = vadd.f32 %v2694, %v3367
      %v3369 = vpop.f32.mrb[0].mxu0
      %3370 = vmatprep.mubr.f32.mxu0 0.0
      %3371 = vmatmul.mubr.f32.gmra.mrb[0].mxu0 %v2667
      %v3372 = vpop.f32.mrb[0].mxu0
      %v3373 = vadd.f32 %v2694, %v3372
      %v3374 = vpop.f32.mrb[0].mxu0
      %3375 = vmatprep.mubr.f32.mxu0 0.0
      %3376 = vmatmul.mubr.f32.gmra.mrb[0].mxu0 %v2668
      %v3377 = vpop.f32.mrb[0].mxu0
      %v3378 = vadd.f32 %v2694, %v3377
      %v3379 = vpop.f32.mrb[0].mxu0
      %3380 = vmatprep.mubr.f32.mxu0 0.0
      %3381 = vmatmul.mubr.f32.gmra.mrb[0].mxu0 %v2669
      %v3382 = vpop.f32.mrb[0].mxu0
      %v3383 = vadd.f32 %v2694, %v3382
      %v3384 = vpop.f32.mrb[0].mxu0
      %3385 = vmatprep.mubr.f32.mxu0 0.0
      %3386 = vmatmul.mubr.f32.gmra.mrb[0].mxu0 %v2670
      %v3387 = vpop.f32.mrb[0].mxu0
      %v3388 = vadd.f32 %v2694, %v3387
      %v3389 = vpop.f32.mrb[0].mxu0
      %3390 = vmatprep.mubr.f32.mxu0 0.0
      %3391 = vmatmul.mubr.f32.gmra.mrb[0].mxu0 %v2671
      %v3392 = vpop.f32.mrb[0].mxu0
      %v3393 = vadd.f32 %v2694, %v3392
      %v3394 = vpop.f32.mrb[0].mxu0
      %3395 = vmatprep.mubr.f32.mxu0 0.0
      %3396 = vmatmul.mubr.f32.gmra.mrb[0].mxu0 %v2672
      %v3397 = vpop.f32.mrb[0].mxu0
      %v3398 = vadd.f32 %v2694, %v3397
      %v3399 = vpop.f32.mrb[0].mxu0
      %3400 = vdwg.mxu0
      %v3401 = vtanh.pop %v2763
      %v3402 = vtanh.pop %v2768
      %v3403 = vtanh.pop %v2773
      %v3404 = vtanh.pop %v2778
      %v3405 = vtanh.pop %v2783
      %v3406 = vtanh.pop %v2788
      %v3407 = vtanh.pop %v2793
      %v3408 = vtanh.pop %v2798
      %v3409 = vtanh.pop %v2803
      %v3410 = vtanh.pop %v2808
      %v3411 = vtanh.pop %v2813
      %v3412 = vtanh.pop %v2818
      %v3413 = vtanh.pop %v2823
      %v3414 = vtanh.pop %v2828
      %v3415 = vtanh.pop %v2833
      %v3416 = vtanh.pop %v2838
      %v3417 = vtanh.pop %v2843
      %v3418 = vtanh.pop %v2848
      %v3419 = vtanh.pop %v2853
      %v3420 = vtanh.pop %v2858
      %v3421 = vtanh.pop %v2863
      %v3422 = vtanh.pop %v2868
      %v3423 = vtanh.pop %v2873
      %v3424 = vtanh.pop %v2878
      %v3425 = vtanh.pop %v2883
      %v3426 = vtanh.pop %v2888
      %v3427 = vtanh.pop %v2893
      %v3428 = vtanh.pop %v2898
      %v3429 = vtanh.pop %v2903
      %v3430 = vtanh.pop %v2908
      %v3431 = vtanh.pop %v2913
      %v3432 = vtanh.pop %v2918
      %v3433 = vtanh.pop %v2923
      %v3434 = vtanh.pop %v2928
      %v3435 = vtanh.pop %v2933
      %v3436 = vtanh.pop %v2938
      %v3437 = vtanh.pop %v2943
      %v3438 = vtanh.pop %v2948
      %v3439 = vtanh.pop %v2953
      %v3440 = vtanh.pop %v2958
      %v3441 = vtanh.pop %v2963
      %v3442 = vtanh.pop %v2968
      %v3443 = vtanh.pop %v2973
      %v3444 = vtanh.pop %v2978
      %v3445 = vtanh.pop %v2983
      %v3446 = vtanh.pop %v2988
      %v3447 = vtanh.pop %v2993
      %v3448 = vtanh.pop %v2998
      %v3449 = vtanh.pop %v3003
      %v3450 = vtanh.pop %v3008
      %v3451 = vtanh.pop %v3013
      %v3452 = vtanh.pop %v3018
      %v3453 = vtanh.pop %v3023
      %v3454 = vtanh.pop %v3028
      %v3455 = vtanh.pop %v3033
      %v3456 = vtanh.pop %v3038
      %v3457 = vtanh.pop %v3043
      %v3458 = vtanh.pop %v3048
      %v3459 = vtanh.pop %v3053
      %v3460 = vtanh.pop %v3058
      %v3461 = vtanh.pop %v3063
      %v3462 = vtanh.pop %v3068
      %v3463 = vtanh.pop %v3073
      %v3464 = vtanh.pop %v3078
      %v3465 = vtanh.pop %v3083
      %v3466 = vtanh.pop %v3088
      %v3467 = vtanh.pop %v3093
      %v3468 = vtanh.pop %v3098
      %v3469 = vtanh.pop %v3103
      %v3470 = vtanh.pop %v3108
      %v3471 = vtanh.pop %v3113
      %v3472 = vtanh.pop %v3118
      %v3473 = vtanh.pop %v3123
      %v3474 = vtanh.pop %v3128
      %v3475 = vtanh.pop %v3133
      %v3476 = vtanh.pop %v3138
      %v3477 = vtanh.pop %v3143
      %v3478 = vtanh.pop %v3148
      %v3479 = vtanh.pop %v3153
      %v3480 = vtanh.pop %v3158
      %v3481 = vtanh.pop %v3163
      %v3482 = vtanh.pop %v3168
      %v3483 = vtanh.pop %v3173
      %v3484 = vtanh.pop %v3178
      %v3485 = vtanh.pop %v3183
      %v3486 = vtanh.pop %v3188
      %v3487 = vtanh.pop %v3193
      %v3488 = vtanh.pop %v3198
      %v3489 = vtanh.pop %v3203
      %v3490 = vtanh.pop %v3208
      %v3491 = vtanh.pop %v3213
      %v3492 = vtanh.pop %v3218
      %v3493 = vtanh.pop %v3223
      %v3494 = vtanh.pop %v3228
      %v3495 = vtanh.pop %v3233
      %v3496 = vtanh.pop %v3238
      %v3497 = vtanh.pop %v3243
      %v3498 = vtanh.pop %v3248
      %v3499 = vtanh.pop %v3253
      %v3500 = vtanh.pop %v3258
      %v3501 = vtanh.pop %v3263
      %v3502 = vtanh.pop %v3268
      %v3503 = vtanh.pop %v3273
      %v3504 = vtanh.pop %v3278
      %v3505 = vtanh.pop %v3283
      %v3506 = vtanh.pop %v3288
      %v3507 = vtanh.pop %v3293
      %v3508 = vtanh.pop %v3298
      %v3509 = vtanh.pop %v3303
      %v3510 = vtanh.pop %v3308
      %v3511 = vtanh.pop %v3313
      %v3512 = vtanh.pop %v3318
      %v3513 = vtanh.pop %v3323
      %v3514 = vtanh.pop %v3328
      %v3515 = vtanh.pop %v3333
      %v3516 = vtanh.pop %v3338
      %v3517 = vtanh.pop %v3343
      %v3518 = vtanh.pop %v3348
      %v3519 = vtanh.pop %v3353
      %v3520 = vtanh.pop %v3358
      %v3521 = vtanh.pop %v3363
      %v3522 = vtanh.pop %v3368
      %v3523 = vtanh.pop %v3373
      %v3524 = vtanh.pop %v3378
      %v3525 = vtanh.pop %v3383
      %v3526 = vtanh.pop %v3388
      %v3527 = vtanh.pop %v3393
      %v3528 = vtanh.pop %v3398
      %v3529 = vld [vmem:[%s6] sm:$0xff]
      %v3530 = vld [vmem:[%s6 + $0x8] sm:$0xff]
      %v3531 = vld [vmem:[%s6 + $0x10] sm:$0xff]
      %v3532 = vld [vmem:[%s6 + $0x18] sm:$0xff]
      %v3533 = vld [vmem:[%s6 + $0x20] sm:$0xff]
      %v3534 = vld [vmem:[%s6 + $0x28] sm:$0xff]
      %v3535 = vld [vmem:[%s6 + $0x30] sm:$0xff]
      %v3536 = vld [vmem:[%s6 + $0x38] sm:$0xff]
      %v3537 = vld [vmem:[%s6 + $0x40] sm:$0xff]
      %v3538 = vld [vmem:[%s6 + $0x48] sm:$0xff]
      %v3539 = vld [vmem:[%s6 + $0x50] sm:$0xff]
      %v3540 = vld [vmem:[%s6 + $0x58] sm:$0xff]
      %v3541 = vld [vmem:[%s6 + $0x60] sm:$0xff]
      %v3542 = vld [vmem:[%s6 + $0x68] sm:$0xff]
      %v3543 = vld [vmem:[%s6 + $0x70] sm:$0xff]
      %v3544 = vld [vmem:[%s6 + $0x78] sm:$0xff]
      %v3545 = vld [vmem:[%s7] sm:$0x1]
      %v3547 = vlaneseq
      %v3548 = vshrl.u32 %v3547, 7
      %v3549 = vsub.s32 0, %v3548
      %v3550 = vrot.slane %v3545, %v3549
      %3552 = vmatprep.subr.mxu0 0.0
      %3553 = vmatpush1.msra.mxu0 %v3529
      %3554 = vmatprep.subr.mxu0 0.0
      %3555 = vmatpush1.msra.mxu0 %v3530
      %3556 = vmatprep.subr.mxu0 0.0
      %3557 = vmatpush1.msra.mxu0 %v3531
      %3558 = vmatprep.subr.mxu0 0.0
      %3559 = vmatpush1.msra.mxu0 %v3532
      %3560 = vmatprep.subr.mxu0 0.0
      %3561 = vmatpush1.msra.mxu0 %v3533
      %3562 = vmatprep.subr.mxu0 0.0
      %3563 = vmatpush1.msra.mxu0 %v3534
      %3564 = vmatprep.subr.mxu0 0.0
      %3565 = vmatpush1.msra.mxu0 %v3535
      %3566 = vmatprep.subr.mxu0 0.0
      %3567 = vmatpush1.msra.mxu0 %v3536
      %3568 = vmatprep.subr.mxu0 0.0
      %3569 = vmatpush1.msra.mxu0 %v3537
      %3570 = vmatprep.subr.mxu0 0.0
      %3571 = vmatpush1.msra.mxu0 %v3538
      %3572 = vmatprep.subr.mxu0 0.0
      %3573 = vmatpush1.msra.mxu0 %v3539
      %3574 = vmatprep.subr.mxu0 0.0
      %3575 = vmatpush1.msra.mxu0 %v3540
      %3576 = vmatprep.subr.mxu0 0.0
      %3577 = vmatpush1.msra.mxu0 %v3541
      %3578 = vmatprep.subr.mxu0 0.0
      %3579 = vmatpush1.msra.mxu0 %v3542
      %3580 = vmatprep.subr.mxu0 0.0
      %3581 = vmatpush1.msra.mxu0 %v3543
      %3582 = vmatprep.subr.mxu0 0.0
      %3583 = vmatpush1.msra.mxu0 %v3544
      %3584 = vmatprep.subr.mxu0 0.0
      %3585 = vmatpush1.msra.mxu0 0.0
      %3586 = vmatprep.subr.mxu0 0.0
      %3587 = vmatpush1.msra.mxu0 0.0
      %3588 = vmatprep.subr.mxu0 0.0
      %3589 = vmatpush1.msra.mxu0 0.0
      %3590 = vmatprep.subr.mxu0 0.0
      %3591 = vmatpush1.msra.mxu0 0.0
      %3592 = vmatprep.subr.mxu0 0.0
      %3593 = vmatpush1.msra.mxu0 0.0
      %3594 = vmatprep.subr.mxu0 0.0
      %3595 = vmatpush1.msra.mxu0 0.0
      %3596 = vmatprep.subr.mxu0 0.0
      %3597 = vmatpush1.msra.mxu0 0.0
      %3598 = vmatprep.subr.mxu0 0.0
      %3599 = vmatpush1.msra.mxu0 0.0
      %3600 = vmatprep.subr.mxu0 0.0
      %3601 = vmatpush1.msra.mxu0 0.0
      %3602 = vmatprep.subr.mxu0 0.0
      %3603 = vmatpush1.msra.mxu0 0.0
      %3604 = vmatprep.subr.mxu0 0.0
      %3605 = vmatpush1.msra.mxu0 0.0
      %3606 = vmatprep.subr.mxu0 0.0
      %3607 = vmatpush1.msra.mxu0 0.0
      %3608 = vmatprep.subr.mxu0 0.0
      %3609 = vmatpush1.msra.mxu0 0.0
      %3610 = vmatprep.subr.mxu0 0.0
      %3611 = vmatpush1.msra.mxu0 0.0
      %3612 = vmatprep.subr.mxu0 0.0
      %3613 = vmatpush1.msra.mxu0 0.0
      %3614 = vmatprep.subr.mxu0 0.0
      %3615 = vmatpush1.msra.mxu0 0.0
      %3616 = vmatprep.mubr.f32.mxu0 0.0
      %3617 = vmatmul.mubr.f32.gmra.mrb[0].mxu0 %v3401
      %v3618 = vpop.f32.mrb[0].mxu0
      %v3619 = vadd.f32 %v3550, %v3618
      %v3620 = vpop.f32.mrb[0].mxu0
      %3621 = vmatprep.mubr.f32.mxu0 0.0
      %3622 = vmatmul.mubr.f32.gmra.mrb[0].mxu0 %v3402
      %v3623 = vpop.f32.mrb[0].mxu0
      %v3624 = vadd.f32 %v3550, %v3623
      %v3625 = vpop.f32.mrb[0].mxu0
      %3626 = vmatprep.mubr.f32.mxu0 0.0
      %3627 = vmatmul.mubr.f32.gmra.mrb[0].mxu0 %v3403
      %v3628 = vpop.f32.mrb[0].mxu0
      %v3629 = vadd.f32 %v3550, %v3628
      %v3630 = vpop.f32.mrb[0].mxu0
      %3631 = vmatprep.mubr.f32.mxu0 0.0
      %3632 = vmatmul.mubr.f32.gmra.mrb[0].mxu0 %v3404
      %v3633 = vpop.f32.mrb[0].mxu0
      %v3634 = vadd.f32 %v3550, %v3633
      %v3635 = vpop.f32.mrb[0].mxu0
      %3636 = vmatprep.mubr.f32.mxu0 0.0
      %3637 = vmatmul.mubr.f32.gmra.mrb[0].mxu0 %v3405
      %v3638 = vpop.f32.mrb[0].mxu0
      %v3639 = vadd.f32 %v3550, %v3638
      %v3640 = vpop.f32.mrb[0].mxu0
      %3641 = vmatprep.mubr.f32.mxu0 0.0
      %3642 = vmatmul.mubr.f32.gmra.mrb[0].mxu0 %v3406
      %v3643 = vpop.f32.mrb[0].mxu0
      %v3644 = vadd.f32 %v3550, %v3643
      %v3645 = vpop.f32.mrb[0].mxu0
      %3646 = vmatprep.mubr.f32.mxu0 0.0
      %3647 = vmatmul.mubr.f32.gmra.mrb[0].mxu0 %v3407
      %v3648 = vpop.f32.mrb[0].mxu0
      %v3649 = vadd.f32 %v3550, %v3648
      %v3650 = vpop.f32.mrb[0].mxu0
      %3651 = vmatprep.mubr.f32.mxu0 0.0
      %3652 = vmatmul.mubr.f32.gmra.mrb[0].mxu0 %v3408
      %v3653 = vpop.f32.mrb[0].mxu0
      %v3654 = vadd.f32 %v3550, %v3653
      %v3655 = vpop.f32.mrb[0].mxu0
      %3656 = vmatprep.mubr.f32.mxu0 0.0
      %3657 = vmatmul.mubr.f32.gmra.mrb[0].mxu0 %v3409
      %v3658 = vpop.f32.mrb[0].mxu0
      %v3659 = vadd.f32 %v3550, %v3658
      %v3660 = vpop.f32.mrb[0].mxu0
      %3661 = vmatprep.mubr.f32.mxu0 0.0
      %3662 = vmatmul.mubr.f32.gmra.mrb[0].mxu0 %v3410
      %v3663 = vpop.f32.mrb[0].mxu0
      %v3664 = vadd.f32 %v3550, %v3663
      %v3665 = vpop.f32.mrb[0].mxu0
      %3666 = vmatprep.mubr.f32.mxu0 0.0
      %3667 = vmatmul.mubr.f32.gmra.mrb[0].mxu0 %v3411
      %v3668 = vpop.f32.mrb[0].mxu0
      %v3669 = vadd.f32 %v3550, %v3668
      %v3670 = vpop.f32.mrb[0].mxu0
      %3671 = vmatprep.mubr.f32.mxu0 0.0
      %3672 = vmatmul.mubr.f32.gmra.mrb[0].mxu0 %v3412
      %v3673 = vpop.f32.mrb[0].mxu0
      %v3674 = vadd.f32 %v3550, %v3673
      %v3675 = vpop.f32.mrb[0].mxu0
      %3676 = vmatprep.mubr.f32.mxu0 0.0
      %3677 = vmatmul.mubr.f32.gmra.mrb[0].mxu0 %v3413
      %v3678 = vpop.f32.mrb[0].mxu0
      %v3679 = vadd.f32 %v3550, %v3678
      %v3680 = vpop.f32.mrb[0].mxu0
      %3681 = vmatprep.mubr.f32.mxu0 0.0
      %3682 = vmatmul.mubr.f32.gmra.mrb[0].mxu0 %v3414
      %v3683 = vpop.f32.mrb[0].mxu0
      %v3684 = vadd.f32 %v3550, %v3683
      %v3685 = vpop.f32.mrb[0].mxu0
      %3686 = vmatprep.mubr.f32.mxu0 0.0
      %3687 = vmatmul.mubr.f32.gmra.mrb[0].mxu0 %v3415
      %v3688 = vpop.f32.mrb[0].mxu0
      %v3689 = vadd.f32 %v3550, %v3688
      %v3690 = vpop.f32.mrb[0].mxu0
      %3691 = vmatprep.mubr.f32.mxu0 0.0
      %3692 = vmatmul.mubr.f32.gmra.mrb[0].mxu0 %v3416
      %v3693 = vpop.f32.mrb[0].mxu0
      %v3694 = vadd.f32 %v3550, %v3693
      %v3695 = vpop.f32.mrb[0].mxu0
      %3696 = vmatprep.mubr.f32.mxu0 0.0
      %3697 = vmatmul.mubr.f32.gmra.mrb[0].mxu0 %v3417
      %v3698 = vpop.f32.mrb[0].mxu0
      %v3699 = vadd.f32 %v3550, %v3698
      %v3700 = vpop.f32.mrb[0].mxu0
      %3701 = vmatprep.mubr.f32.mxu0 0.0
      %3702 = vmatmul.mubr.f32.gmra.mrb[0].mxu0 %v3418
      %v3703 = vpop.f32.mrb[0].mxu0
      %v3704 = vadd.f32 %v3550, %v3703
      %v3705 = vpop.f32.mrb[0].mxu0
      %3706 = vmatprep.mubr.f32.mxu0 0.0
      %3707 = vmatmul.mubr.f32.gmra.mrb[0].mxu0 %v3419
      %v3708 = vpop.f32.mrb[0].mxu0
      %v3709 = vadd.f32 %v3550, %v3708
      %v3710 = vpop.f32.mrb[0].mxu0
      %3711 = vmatprep.mubr.f32.mxu0 0.0
      %3712 = vmatmul.mubr.f32.gmra.mrb[0].mxu0 %v3420
      %v3713 = vpop.f32.mrb[0].mxu0
      %v3714 = vadd.f32 %v3550, %v3713
      %v3715 = vpop.f32.mrb[0].mxu0
      %3716 = vmatprep.mubr.f32.mxu0 0.0
      %3717 = vmatmul.mubr.f32.gmra.mrb[0].mxu0 %v3421
      %v3718 = vpop.f32.mrb[0].mxu0
      %v3719 = vadd.f32 %v3550, %v3718
      %v3720 = vpop.f32.mrb[0].mxu0
      %3721 = vmatprep.mubr.f32.mxu0 0.0
      %3722 = vmatmul.mubr.f32.gmra.mrb[0].mxu0 %v3422
      %v3723 = vpop.f32.mrb[0].mxu0
      %v3724 = vadd.f32 %v3550, %v3723
      %v3725 = vpop.f32.mrb[0].mxu0
      %3726 = vmatprep.mubr.f32.mxu0 0.0
      %3727 = vmatmul.mubr.f32.gmra.mrb[0].mxu0 %v3423
      %v3728 = vpop.f32.mrb[0].mxu0
      %v3729 = vadd.f32 %v3550, %v3728
      %v3730 = vpop.f32.mrb[0].mxu0
      %3731 = vmatprep.mubr.f32.mxu0 0.0
      %3732 = vmatmul.mubr.f32.gmra.mrb[0].mxu0 %v3424
      %v3733 = vpop.f32.mrb[0].mxu0
      %v3734 = vadd.f32 %v3550, %v3733
      %v3735 = vpop.f32.mrb[0].mxu0
      %3736 = vmatprep.mubr.f32.mxu0 0.0
      %3737 = vmatmul.mubr.f32.gmra.mrb[0].mxu0 %v3425
      %v3738 = vpop.f32.mrb[0].mxu0
      %v3739 = vadd.f32 %v3550, %v3738
      %v3740 = vpop.f32.mrb[0].mxu0
      %3741 = vmatprep.mubr.f32.mxu0 0.0
      %3742 = vmatmul.mubr.f32.gmra.mrb[0].mxu0 %v3426
      %v3743 = vpop.f32.mrb[0].mxu0
      %v3744 = vadd.f32 %v3550, %v3743
      %v3745 = vpop.f32.mrb[0].mxu0
      %3746 = vmatprep.mubr.f32.mxu0 0.0
      %3747 = vmatmul.mubr.f32.gmra.mrb[0].mxu0 %v3427
      %v3748 = vpop.f32.mrb[0].mxu0
      %v3749 = vadd.f32 %v3550, %v3748
      %v3750 = vpop.f32.mrb[0].mxu0
      %3751 = vmatprep.mubr.f32.mxu0 0.0
      %3752 = vmatmul.mubr.f32.gmra.mrb[0].mxu0 %v3428
      %v3753 = vpop.f32.mrb[0].mxu0
      %v3754 = vadd.f32 %v3550, %v3753
      %v3755 = vpop.f32.mrb[0].mxu0
      %3756 = vmatprep.mubr.f32.mxu0 0.0
      %3757 = vmatmul.mubr.f32.gmra.mrb[0].mxu0 %v3429
      %v3758 = vpop.f32.mrb[0].mxu0
      %v3759 = vadd.f32 %v3550, %v3758
      %v3760 = vpop.f32.mrb[0].mxu0
      %3761 = vmatprep.mubr.f32.mxu0 0.0
      %3762 = vmatmul.mubr.f32.gmra.mrb[0].mxu0 %v3430
      %v3763 = vpop.f32.mrb[0].mxu0
      %v3764 = vadd.f32 %v3550, %v3763
      %v3765 = vpop.f32.mrb[0].mxu0
      %3766 = vmatprep.mubr.f32.mxu0 0.0
      %3767 = vmatmul.mubr.f32.gmra.mrb[0].mxu0 %v3431
      %v3768 = vpop.f32.mrb[0].mxu0
      %v3769 = vadd.f32 %v3550, %v3768
      %v3770 = vpop.f32.mrb[0].mxu0
      %3771 = vmatprep.mubr.f32.mxu0 0.0
      %3772 = vmatmul.mubr.f32.gmra.mrb[0].mxu0 %v3432
      %v3773 = vpop.f32.mrb[0].mxu0
      %v3774 = vadd.f32 %v3550, %v3773
      %v3775 = vpop.f32.mrb[0].mxu0
      %3776 = vmatprep.mubr.f32.mxu0 0.0
      %3777 = vmatmul.mubr.f32.gmra.mrb[0].mxu0 %v3433
      %v3778 = vpop.f32.mrb[0].mxu0
      %v3779 = vadd.f32 %v3550, %v3778
      %v3780 = vpop.f32.mrb[0].mxu0
      %3781 = vmatprep.mubr.f32.mxu0 0.0
      %3782 = vmatmul.mubr.f32.gmra.mrb[0].mxu0 %v3434
      %v3783 = vpop.f32.mrb[0].mxu0
      %v3784 = vadd.f32 %v3550, %v3783
      %v3785 = vpop.f32.mrb[0].mxu0
      %3786 = vmatprep.mubr.f32.mxu0 0.0
      %3787 = vmatmul.mubr.f32.gmra.mrb[0].mxu0 %v3435
      %v3788 = vpop.f32.mrb[0].mxu0
      %v3789 = vadd.f32 %v3550, %v3788
      %v3790 = vpop.f32.mrb[0].mxu0
      %3791 = vmatprep.mubr.f32.mxu0 0.0
      %3792 = vmatmul.mubr.f32.gmra.mrb[0].mxu0 %v3436
      %v3793 = vpop.f32.mrb[0].mxu0
      %v3794 = vadd.f32 %v3550, %v3793
      %v3795 = vpop.f32.mrb[0].mxu0
      %3796 = vmatprep.mubr.f32.mxu0 0.0
      %3797 = vmatmul.mubr.f32.gmra.mrb[0].mxu0 %v3437
      %v3798 = vpop.f32.mrb[0].mxu0
      %v3799 = vadd.f32 %v3550, %v3798
      %v3800 = vpop.f32.mrb[0].mxu0
      %3801 = vmatprep.mubr.f32.mxu0 0.0
      %3802 = vmatmul.mubr.f32.gmra.mrb[0].mxu0 %v3438
      %v3803 = vpop.f32.mrb[0].mxu0
      %v3804 = vadd.f32 %v3550, %v3803
      %v3805 = vpop.f32.mrb[0].mxu0
      %3806 = vmatprep.mubr.f32.mxu0 0.0
      %3807 = vmatmul.mubr.f32.gmra.mrb[0].mxu0 %v3439
      %v3808 = vpop.f32.mrb[0].mxu0
      %v3809 = vadd.f32 %v3550, %v3808
      %v3810 = vpop.f32.mrb[0].mxu0
      %3811 = vmatprep.mubr.f32.mxu0 0.0
      %3812 = vmatmul.mubr.f32.gmra.mrb[0].mxu0 %v3440
      %v3813 = vpop.f32.mrb[0].mxu0
      %v3814 = vadd.f32 %v3550, %v3813
      %v3815 = vpop.f32.mrb[0].mxu0
      %3816 = vmatprep.mubr.f32.mxu0 0.0
      %3817 = vmatmul.mubr.f32.gmra.mrb[0].mxu0 %v3441
      %v3818 = vpop.f32.mrb[0].mxu0
      %v3819 = vadd.f32 %v3550, %v3818
      %v3820 = vpop.f32.mrb[0].mxu0
      %3821 = vmatprep.mubr.f32.mxu0 0.0
      %3822 = vmatmul.mubr.f32.gmra.mrb[0].mxu0 %v3442
      %v3823 = vpop.f32.mrb[0].mxu0
      %v3824 = vadd.f32 %v3550, %v3823
      %v3825 = vpop.f32.mrb[0].mxu0
      %3826 = vmatprep.mubr.f32.mxu0 0.0
      %3827 = vmatmul.mubr.f32.gmra.mrb[0].mxu0 %v3443
      %v3828 = vpop.f32.mrb[0].mxu0
      %v3829 = vadd.f32 %v3550, %v3828
      %v3830 = vpop.f32.mrb[0].mxu0
      %3831 = vmatprep.mubr.f32.mxu0 0.0
      %3832 = vmatmul.mubr.f32.gmra.mrb[0].mxu0 %v3444
      %v3833 = vpop.f32.mrb[0].mxu0
      %v3834 = vadd.f32 %v3550, %v3833
      %v3835 = vpop.f32.mrb[0].mxu0
      %3836 = vmatprep.mubr.f32.mxu0 0.0
      %3837 = vmatmul.mubr.f32.gmra.mrb[0].mxu0 %v3445
      %v3838 = vpop.f32.mrb[0].mxu0
      %v3839 = vadd.f32 %v3550, %v3838
      %v3840 = vpop.f32.mrb[0].mxu0
      %3841 = vmatprep.mubr.f32.mxu0 0.0
      %3842 = vmatmul.mubr.f32.gmra.mrb[0].mxu0 %v3446
      %v3843 = vpop.f32.mrb[0].mxu0
      %v3844 = vadd.f32 %v3550, %v3843
      %v3845 = vpop.f32.mrb[0].mxu0
      %3846 = vmatprep.mubr.f32.mxu0 0.0
      %3847 = vmatmul.mubr.f32.gmra.mrb[0].mxu0 %v3447
      %v3848 = vpop.f32.mrb[0].mxu0
      %v3849 = vadd.f32 %v3550, %v3848
      %v3850 = vpop.f32.mrb[0].mxu0
      %3851 = vmatprep.mubr.f32.mxu0 0.0
      %3852 = vmatmul.mubr.f32.gmra.mrb[0].mxu0 %v3448
      %v3853 = vpop.f32.mrb[0].mxu0
      %v3854 = vadd.f32 %v3550, %v3853
      %v3855 = vpop.f32.mrb[0].mxu0
      %3856 = vmatprep.mubr.f32.mxu0 0.0
      %3857 = vmatmul.mubr.f32.gmra.mrb[0].mxu0 %v3449
      %v3858 = vpop.f32.mrb[0].mxu0
      %v3859 = vadd.f32 %v3550, %v3858
      %v3860 = vpop.f32.mrb[0].mxu0
      %3861 = vmatprep.mubr.f32.mxu0 0.0
      %3862 = vmatmul.mubr.f32.gmra.mrb[0].mxu0 %v3450
      %v3863 = vpop.f32.mrb[0].mxu0
      %v3864 = vadd.f32 %v3550, %v3863
      %v3865 = vpop.f32.mrb[0].mxu0
      %3866 = vmatprep.mubr.f32.mxu0 0.0
      %3867 = vmatmul.mubr.f32.gmra.mrb[0].mxu0 %v3451
      %v3868 = vpop.f32.mrb[0].mxu0
      %v3869 = vadd.f32 %v3550, %v3868
      %v3870 = vpop.f32.mrb[0].mxu0
      %3871 = vmatprep.mubr.f32.mxu0 0.0
      %3872 = vmatmul.mubr.f32.gmra.mrb[0].mxu0 %v3452
      %v3873 = vpop.f32.mrb[0].mxu0
      %v3874 = vadd.f32 %v3550, %v3873
      %v3875 = vpop.f32.mrb[0].mxu0
      %3876 = vmatprep.mubr.f32.mxu0 0.0
      %3877 = vmatmul.mubr.f32.gmra.mrb[0].mxu0 %v3453
      %v3878 = vpop.f32.mrb[0].mxu0
      %v3879 = vadd.f32 %v3550, %v3878
      %v3880 = vpop.f32.mrb[0].mxu0
      %3881 = vmatprep.mubr.f32.mxu0 0.0
      %3882 = vmatmul.mubr.f32.gmra.mrb[0].mxu0 %v3454
      %v3883 = vpop.f32.mrb[0].mxu0
      %v3884 = vadd.f32 %v3550, %v3883
      %v3885 = vpop.f32.mrb[0].mxu0
      %3886 = vmatprep.mubr.f32.mxu0 0.0
      %3887 = vmatmul.mubr.f32.gmra.mrb[0].mxu0 %v3455
      %v3888 = vpop.f32.mrb[0].mxu0
      %v3889 = vadd.f32 %v3550, %v3888
      %v3890 = vpop.f32.mrb[0].mxu0
      %3891 = vmatprep.mubr.f32.mxu0 0.0
      %3892 = vmatmul.mubr.f32.gmra.mrb[0].mxu0 %v3456
      %v3893 = vpop.f32.mrb[0].mxu0
      %v3894 = vadd.f32 %v3550, %v3893
      %v3895 = vpop.f32.mrb[0].mxu0
      %3896 = vmatprep.mubr.f32.mxu0 0.0
      %3897 = vmatmul.mubr.f32.gmra.mrb[0].mxu0 %v3457
      %v3898 = vpop.f32.mrb[0].mxu0
      %v3899 = vadd.f32 %v3550, %v3898
      %v3900 = vpop.f32.mrb[0].mxu0
      %3901 = vmatprep.mubr.f32.mxu0 0.0
      %3902 = vmatmul.mubr.f32.gmra.mrb[0].mxu0 %v3458
      %v3903 = vpop.f32.mrb[0].mxu0
      %v3904 = vadd.f32 %v3550, %v3903
      %v3905 = vpop.f32.mrb[0].mxu0
      %3906 = vmatprep.mubr.f32.mxu0 0.0
      %3907 = vmatmul.mubr.f32.gmra.mrb[0].mxu0 %v3459
      %v3908 = vpop.f32.mrb[0].mxu0
      %v3909 = vadd.f32 %v3550, %v3908
      %v3910 = vpop.f32.mrb[0].mxu0
      %3911 = vmatprep.mubr.f32.mxu0 0.0
      %3912 = vmatmul.mubr.f32.gmra.mrb[0].mxu0 %v3460
      %v3913 = vpop.f32.mrb[0].mxu0
      %v3914 = vadd.f32 %v3550, %v3913
      %v3915 = vpop.f32.mrb[0].mxu0
      %3916 = vmatprep.mubr.f32.mxu0 0.0
      %3917 = vmatmul.mubr.f32.gmra.mrb[0].mxu0 %v3461
      %v3918 = vpop.f32.mrb[0].mxu0
      %v3919 = vadd.f32 %v3550, %v3918
      %v3920 = vpop.f32.mrb[0].mxu0
      %3921 = vmatprep.mubr.f32.mxu0 0.0
      %3922 = vmatmul.mubr.f32.gmra.mrb[0].mxu0 %v3462
      %v3923 = vpop.f32.mrb[0].mxu0
      %v3924 = vadd.f32 %v3550, %v3923
      %v3925 = vpop.f32.mrb[0].mxu0
      %3926 = vmatprep.mubr.f32.mxu0 0.0
      %3927 = vmatmul.mubr.f32.gmra.mrb[0].mxu0 %v3463
      %v3928 = vpop.f32.mrb[0].mxu0
      %v3929 = vadd.f32 %v3550, %v3928
      %v3930 = vpop.f32.mrb[0].mxu0
      %3931 = vmatprep.mubr.f32.mxu0 0.0
      %3932 = vmatmul.mubr.f32.gmra.mrb[0].mxu0 %v3464
      %v3933 = vpop.f32.mrb[0].mxu0
      %v3934 = vadd.f32 %v3550, %v3933
      %v3935 = vpop.f32.mrb[0].mxu0
      %3936 = vmatprep.mubr.f32.mxu0 0.0
      %3937 = vmatmul.mubr.f32.gmra.mrb[0].mxu0 %v3465
      %v3938 = vpop.f32.mrb[0].mxu0
      %v3939 = vadd.f32 %v3550, %v3938
      %v3940 = vpop.f32.mrb[0].mxu0
      %3941 = vmatprep.mubr.f32.mxu0 0.0
      %3942 = vmatmul.mubr.f32.gmra.mrb[0].mxu0 %v3466
      %v3943 = vpop.f32.mrb[0].mxu0
      %v3944 = vadd.f32 %v3550, %v3943
      %v3945 = vpop.f32.mrb[0].mxu0
      %3946 = vmatprep.mubr.f32.mxu0 0.0
      %3947 = vmatmul.mubr.f32.gmra.mrb[0].mxu0 %v3467
      %v3948 = vpop.f32.mrb[0].mxu0
      %v3949 = vadd.f32 %v3550, %v3948
      %v3950 = vpop.f32.mrb[0].mxu0
      %3951 = vmatprep.mubr.f32.mxu0 0.0
      %3952 = vmatmul.mubr.f32.gmra.mrb[0].mxu0 %v3468
      %v3953 = vpop.f32.mrb[0].mxu0
      %v3954 = vadd.f32 %v3550, %v3953
      %v3955 = vpop.f32.mrb[0].mxu0
      %3956 = vmatprep.mubr.f32.mxu0 0.0
      %3957 = vmatmul.mubr.f32.gmra.mrb[0].mxu0 %v3469
      %v3958 = vpop.f32.mrb[0].mxu0
      %v3959 = vadd.f32 %v3550, %v3958
      %v3960 = vpop.f32.mrb[0].mxu0
      %3961 = vmatprep.mubr.f32.mxu0 0.0
      %3962 = vmatmul.mubr.f32.gmra.mrb[0].mxu0 %v3470
      %v3963 = vpop.f32.mrb[0].mxu0
      %v3964 = vadd.f32 %v3550, %v3963
      %v3965 = vpop.f32.mrb[0].mxu0
      %3966 = vmatprep.mubr.f32.mxu0 0.0
      %3967 = vmatmul.mubr.f32.gmra.mrb[0].mxu0 %v3471
      %v3968 = vpop.f32.mrb[0].mxu0
      %v3969 = vadd.f32 %v3550, %v3968
      %v3970 = vpop.f32.mrb[0].mxu0
      %3971 = vmatprep.mubr.f32.mxu0 0.0
      %3972 = vmatmul.mubr.f32.gmra.mrb[0].mxu0 %v3472
      %v3973 = vpop.f32.mrb[0].mxu0
      %v3974 = vadd.f32 %v3550, %v3973
      %v3975 = vpop.f32.mrb[0].mxu0
      %3976 = vmatprep.mubr.f32.mxu0 0.0
      %3977 = vmatmul.mubr.f32.gmra.mrb[0].mxu0 %v3473
      %v3978 = vpop.f32.mrb[0].mxu0
      %v3979 = vadd.f32 %v3550, %v3978
      %v3980 = vpop.f32.mrb[0].mxu0
      %3981 = vmatprep.mubr.f32.mxu0 0.0
      %3982 = vmatmul.mubr.f32.gmra.mrb[0].mxu0 %v3474
      %v3983 = vpop.f32.mrb[0].mxu0
      %v3984 = vadd.f32 %v3550, %v3983
      %v3985 = vpop.f32.mrb[0].mxu0
      %3986 = vmatprep.mubr.f32.mxu0 0.0
      %3987 = vmatmul.mubr.f32.gmra.mrb[0].mxu0 %v3475
      %v3988 = vpop.f32.mrb[0].mxu0
      %v3989 = vadd.f32 %v3550, %v3988
      %v3990 = vpop.f32.mrb[0].mxu0
      %3991 = vmatprep.mubr.f32.mxu0 0.0
      %3992 = vmatmul.mubr.f32.gmra.mrb[0].mxu0 %v3476
      %v3993 = vpop.f32.mrb[0].mxu0
      %v3994 = vadd.f32 %v3550, %v3993
      %v3995 = vpop.f32.mrb[0].mxu0
      %3996 = vmatprep.mubr.f32.mxu0 0.0
      %3997 = vmatmul.mubr.f32.gmra.mrb[0].mxu0 %v3477
      %v3998 = vpop.f32.mrb[0].mxu0
      %v3999 = vadd.f32 %v3550, %v3998
      %v4000 = vpop.f32.mrb[0].mxu0
      %4001 = vmatprep.mubr.f32.mxu0 0.0
      %4002 = vmatmul.mubr.f32.gmra.mrb[0].mxu0 %v3478
      %v4003 = vpop.f32.mrb[0].mxu0
      %v4004 = vadd.f32 %v3550, %v4003
      %v4005 = vpop.f32.mrb[0].mxu0
      %4006 = vmatprep.mubr.f32.mxu0 0.0
      %4007 = vmatmul.mubr.f32.gmra.mrb[0].mxu0 %v3479
      %v4008 = vpop.f32.mrb[0].mxu0
      %v4009 = vadd.f32 %v3550, %v4008
      %v4010 = vpop.f32.mrb[0].mxu0
      %4011 = vmatprep.mubr.f32.mxu0 0.0
      %4012 = vmatmul.mubr.f32.gmra.mrb[0].mxu0 %v3480
      %v4013 = vpop.f32.mrb[0].mxu0
      %v4014 = vadd.f32 %v3550, %v4013
      %v4015 = vpop.f32.mrb[0].mxu0
      %4016 = vmatprep.mubr.f32.mxu0 0.0
      %4017 = vmatmul.mubr.f32.gmra.mrb[0].mxu0 %v3481
      %v4018 = vpop.f32.mrb[0].mxu0
      %v4019 = vadd.f32 %v3550, %v4018
      %v4020 = vpop.f32.mrb[0].mxu0
      %4021 = vmatprep.mubr.f32.mxu0 0.0
      %4022 = vmatmul.mubr.f32.gmra.mrb[0].mxu0 %v3482
      %v4023 = vpop.f32.mrb[0].mxu0
      %v4024 = vadd.f32 %v3550, %v4023
      %v4025 = vpop.f32.mrb[0].mxu0
      %4026 = vmatprep.mubr.f32.mxu0 0.0
      %4027 = vmatmul.mubr.f32.gmra.mrb[0].mxu0 %v3483
      %v4028 = vpop.f32.mrb[0].mxu0
      %v4029 = vadd.f32 %v3550, %v4028
      %v4030 = vpop.f32.mrb[0].mxu0
      %4031 = vmatprep.mubr.f32.mxu0 0.0
      %4032 = vmatmul.mubr.f32.gmra.mrb[0].mxu0 %v3484
      %v4033 = vpop.f32.mrb[0].mxu0
      %v4034 = vadd.f32 %v3550, %v4033
      %v4035 = vpop.f32.mrb[0].mxu0
      %4036 = vmatprep.mubr.f32.mxu0 0.0
      %4037 = vmatmul.mubr.f32.gmra.mrb[0].mxu0 %v3485
      %v4038 = vpop.f32.mrb[0].mxu0
      %v4039 = vadd.f32 %v3550, %v4038
      %v4040 = vpop.f32.mrb[0].mxu0
      %4041 = vmatprep.mubr.f32.mxu0 0.0
      %4042 = vmatmul.mubr.f32.gmra.mrb[0].mxu0 %v3486
      %v4043 = vpop.f32.mrb[0].mxu0
      %v4044 = vadd.f32 %v3550, %v4043
      %v4045 = vpop.f32.mrb[0].mxu0
      %4046 = vmatprep.mubr.f32.mxu0 0.0
      %4047 = vmatmul.mubr.f32.gmra.mrb[0].mxu0 %v3487
      %v4048 = vpop.f32.mrb[0].mxu0
      %v4049 = vadd.f32 %v3550, %v4048
      %v4050 = vpop.f32.mrb[0].mxu0
      %4051 = vmatprep.mubr.f32.mxu0 0.0
      %4052 = vmatmul.mubr.f32.gmra.mrb[0].mxu0 %v3488
      %v4053 = vpop.f32.mrb[0].mxu0
      %v4054 = vadd.f32 %v3550, %v4053
      %v4055 = vpop.f32.mrb[0].mxu0
      %4056 = vmatprep.mubr.f32.mxu0 0.0
      %4057 = vmatmul.mubr.f32.gmra.mrb[0].mxu0 %v3489
      %v4058 = vpop.f32.mrb[0].mxu0
      %v4059 = vadd.f32 %v3550, %v4058
      %v4060 = vpop.f32.mrb[0].mxu0
      %4061 = vmatprep.mubr.f32.mxu0 0.0
      %4062 = vmatmul.mubr.f32.gmra.mrb[0].mxu0 %v3490
      %v4063 = vpop.f32.mrb[0].mxu0
      %v4064 = vadd.f32 %v3550, %v4063
      %v4065 = vpop.f32.mrb[0].mxu0
      %4066 = vmatprep.mubr.f32.mxu0 0.0
      %4067 = vmatmul.mubr.f32.gmra.mrb[0].mxu0 %v3491
      %v4068 = vpop.f32.mrb[0].mxu0
      %v4069 = vadd.f32 %v3550, %v4068
      %v4070 = vpop.f32.mrb[0].mxu0
      %4071 = vmatprep.mubr.f32.mxu0 0.0
      %4072 = vmatmul.mubr.f32.gmra.mrb[0].mxu0 %v3492
      %v4073 = vpop.f32.mrb[0].mxu0
      %v4074 = vadd.f32 %v3550, %v4073
      %v4075 = vpop.f32.mrb[0].mxu0
      %4076 = vmatprep.mubr.f32.mxu0 0.0
      %4077 = vmatmul.mubr.f32.gmra.mrb[0].mxu0 %v3493
      %v4078 = vpop.f32.mrb[0].mxu0
      %v4079 = vadd.f32 %v3550, %v4078
      %v4080 = vpop.f32.mrb[0].mxu0
      %4081 = vmatprep.mubr.f32.mxu0 0.0
      %4082 = vmatmul.mubr.f32.gmra.mrb[0].mxu0 %v3494
      %v4083 = vpop.f32.mrb[0].mxu0
      %v4084 = vadd.f32 %v3550, %v4083
      %v4085 = vpop.f32.mrb[0].mxu0
      %4086 = vmatprep.mubr.f32.mxu0 0.0
      %4087 = vmatmul.mubr.f32.gmra.mrb[0].mxu0 %v3495
      %v4088 = vpop.f32.mrb[0].mxu0
      %v4089 = vadd.f32 %v3550, %v4088
      %v4090 = vpop.f32.mrb[0].mxu0
      %4091 = vmatprep.mubr.f32.mxu0 0.0
      %4092 = vmatmul.mubr.f32.gmra.mrb[0].mxu0 %v3496
      %v4093 = vpop.f32.mrb[0].mxu0
      %v4094 = vadd.f32 %v3550, %v4093
      %v4095 = vpop.f32.mrb[0].mxu0
      %4096 = vmatprep.mubr.f32.mxu0 0.0
      %4097 = vmatmul.mubr.f32.gmra.mrb[0].mxu0 %v3497
      %v4098 = vpop.f32.mrb[0].mxu0
      %v4099 = vadd.f32 %v3550, %v4098
      %v4100 = vpop.f32.mrb[0].mxu0
      %4101 = vmatprep.mubr.f32.mxu0 0.0
      %4102 = vmatmul.mubr.f32.gmra.mrb[0].mxu0 %v3498
      %v4103 = vpop.f32.mrb[0].mxu0
      %v4104 = vadd.f32 %v3550, %v4103
      %v4105 = vpop.f32.mrb[0].mxu0
      %4106 = vmatprep.mubr.f32.mxu0 0.0
      %4107 = vmatmul.mubr.f32.gmra.mrb[0].mxu0 %v3499
      %v4108 = vpop.f32.mrb[0].mxu0
      %v4109 = vadd.f32 %v3550, %v4108
      %v4110 = vpop.f32.mrb[0].mxu0
      %4111 = vmatprep.mubr.f32.mxu0 0.0
      %4112 = vmatmul.mubr.f32.gmra.mrb[0].mxu0 %v3500
      %v4113 = vpop.f32.mrb[0].mxu0
      %v4114 = vadd.f32 %v3550, %v4113
      %v4115 = vpop.f32.mrb[0].mxu0
      %4116 = vmatprep.mubr.f32.mxu0 0.0
      %4117 = vmatmul.mubr.f32.gmra.mrb[0].mxu0 %v3501
      %v4118 = vpop.f32.mrb[0].mxu0
      %v4119 = vadd.f32 %v3550, %v4118
      %v4120 = vpop.f32.mrb[0].mxu0
      %4121 = vmatprep.mubr.f32.mxu0 0.0
      %4122 = vmatmul.mubr.f32.gmra.mrb[0].mxu0 %v3502
      %v4123 = vpop.f32.mrb[0].mxu0
      %v4124 = vadd.f32 %v3550, %v4123
      %v4125 = vpop.f32.mrb[0].mxu0
      %4126 = vmatprep.mubr.f32.mxu0 0.0
      %4127 = vmatmul.mubr.f32.gmra.mrb[0].mxu0 %v3503
      %v4128 = vpop.f32.mrb[0].mxu0
      %v4129 = vadd.f32 %v3550, %v4128
      %v4130 = vpop.f32.mrb[0].mxu0
      %4131 = vmatprep.mubr.f32.mxu0 0.0
      %4132 = vmatmul.mubr.f32.gmra.mrb[0].mxu0 %v3504
      %v4133 = vpop.f32.mrb[0].mxu0
      %v4134 = vadd.f32 %v3550, %v4133
      %v4135 = vpop.f32.mrb[0].mxu0
      %4136 = vmatprep.mubr.f32.mxu0 0.0
      %4137 = vmatmul.mubr.f32.gmra.mrb[0].mxu0 %v3505
      %v4138 = vpop.f32.mrb[0].mxu0
      %v4139 = vadd.f32 %v3550, %v4138
      %v4140 = vpop.f32.mrb[0].mxu0
      %4141 = vmatprep.mubr.f32.mxu0 0.0
      %4142 = vmatmul.mubr.f32.gmra.mrb[0].mxu0 %v3506
      %v4143 = vpop.f32.mrb[0].mxu0
      %v4144 = vadd.f32 %v3550, %v4143
      %v4145 = vpop.f32.mrb[0].mxu0
      %4146 = vmatprep.mubr.f32.mxu0 0.0
      %4147 = vmatmul.mubr.f32.gmra.mrb[0].mxu0 %v3507
      %v4148 = vpop.f32.mrb[0].mxu0
      %v4149 = vadd.f32 %v3550, %v4148
      %v4150 = vpop.f32.mrb[0].mxu0
      %4151 = vmatprep.mubr.f32.mxu0 0.0
      %4152 = vmatmul.mubr.f32.gmra.mrb[0].mxu0 %v3508
      %v4153 = vpop.f32.mrb[0].mxu0
      %v4154 = vadd.f32 %v3550, %v4153
      %v4155 = vpop.f32.mrb[0].mxu0
      %4156 = vmatprep.mubr.f32.mxu0 0.0
      %4157 = vmatmul.mubr.f32.gmra.mrb[0].mxu0 %v3509
      %v4158 = vpop.f32.mrb[0].mxu0
      %v4159 = vadd.f32 %v3550, %v4158
      %v4160 = vpop.f32.mrb[0].mxu0
      %4161 = vmatprep.mubr.f32.mxu0 0.0
      %4162 = vmatmul.mubr.f32.gmra.mrb[0].mxu0 %v3510
      %v4163 = vpop.f32.mrb[0].mxu0
      %v4164 = vadd.f32 %v3550, %v4163
      %v4165 = vpop.f32.mrb[0].mxu0
      %4166 = vmatprep.mubr.f32.mxu0 0.0
      %4167 = vmatmul.mubr.f32.gmra.mrb[0].mxu0 %v3511
      %v4168 = vpop.f32.mrb[0].mxu0
      %v4169 = vadd.f32 %v3550, %v4168
      %v4170 = vpop.f32.mrb[0].mxu0
      %4171 = vmatprep.mubr.f32.mxu0 0.0
      %4172 = vmatmul.mubr.f32.gmra.mrb[0].mxu0 %v3512
      %v4173 = vpop.f32.mrb[0].mxu0
      %v4174 = vadd.f32 %v3550, %v4173
      %v4175 = vpop.f32.mrb[0].mxu0
      %4176 = vmatprep.mubr.f32.mxu0 0.0
      %4177 = vmatmul.mubr.f32.gmra.mrb[0].mxu0 %v3513
      %v4178 = vpop.f32.mrb[0].mxu0
      %v4179 = vadd.f32 %v3550, %v4178
      %v4180 = vpop.f32.mrb[0].mxu0
      %4181 = vmatprep.mubr.f32.mxu0 0.0
      %4182 = vmatmul.mubr.f32.gmra.mrb[0].mxu0 %v3514
      %v4183 = vpop.f32.mrb[0].mxu0
      %v4184 = vadd.f32 %v3550, %v4183
      %v4185 = vpop.f32.mrb[0].mxu0
      %4186 = vmatprep.mubr.f32.mxu0 0.0
      %4187 = vmatmul.mubr.f32.gmra.mrb[0].mxu0 %v3515
      %v4188 = vpop.f32.mrb[0].mxu0
      %v4189 = vadd.f32 %v3550, %v4188
      %v4190 = vpop.f32.mrb[0].mxu0
      %4191 = vmatprep.mubr.f32.mxu0 0.0
      %4192 = vmatmul.mubr.f32.gmra.mrb[0].mxu0 %v3516
      %v4193 = vpop.f32.mrb[0].mxu0
      %v4194 = vadd.f32 %v3550, %v4193
      %v4195 = vpop.f32.mrb[0].mxu0
      %4196 = vmatprep.mubr.f32.mxu0 0.0
      %4197 = vmatmul.mubr.f32.gmra.mrb[0].mxu0 %v3517
      %v4198 = vpop.f32.mrb[0].mxu0
      %v4199 = vadd.f32 %v3550, %v4198
      %v4200 = vpop.f32.mrb[0].mxu0
      %4201 = vmatprep.mubr.f32.mxu0 0.0
      %4202 = vmatmul.mubr.f32.gmra.mrb[0].mxu0 %v3518
      %v4203 = vpop.f32.mrb[0].mxu0
      %v4204 = vadd.f32 %v3550, %v4203
      %v4205 = vpop.f32.mrb[0].mxu0
      %4206 = vmatprep.mubr.f32.mxu0 0.0
      %4207 = vmatmul.mubr.f32.gmra.mrb[0].mxu0 %v3519
      %v4208 = vpop.f32.mrb[0].mxu0
      %v4209 = vadd.f32 %v3550, %v4208
      %v4210 = vpop.f32.mrb[0].mxu0
      %4211 = vmatprep.mubr.f32.mxu0 0.0
      %4212 = vmatmul.mubr.f32.gmra.mrb[0].mxu0 %v3520
      %v4213 = vpop.f32.mrb[0].mxu0
      %v4214 = vadd.f32 %v3550, %v4213
      %v4215 = vpop.f32.mrb[0].mxu0
      %4216 = vmatprep.mubr.f32.mxu0 0.0
      %4217 = vmatmul.mubr.f32.gmra.mrb[0].mxu0 %v3521
      %v4218 = vpop.f32.mrb[0].mxu0
      %v4219 = vadd.f32 %v3550, %v4218
      %v4220 = vpop.f32.mrb[0].mxu0
      %4221 = vmatprep.mubr.f32.mxu0 0.0
      %4222 = vmatmul.mubr.f32.gmra.mrb[0].mxu0 %v3522
      %v4223 = vpop.f32.mrb[0].mxu0
      %v4224 = vadd.f32 %v3550, %v4223
      %v4225 = vpop.f32.mrb[0].mxu0
      %4226 = vmatprep.mubr.f32.mxu0 0.0
      %4227 = vmatmul.mubr.f32.gmra.mrb[0].mxu0 %v3523
      %v4228 = vpop.f32.mrb[0].mxu0
      %v4229 = vadd.f32 %v3550, %v4228
      %v4230 = vpop.f32.mrb[0].mxu0
      %4231 = vmatprep.mubr.f32.mxu0 0.0
      %4232 = vmatmul.mubr.f32.gmra.mrb[0].mxu0 %v3524
      %v4233 = vpop.f32.mrb[0].mxu0
      %v4234 = vadd.f32 %v3550, %v4233
      %v4235 = vpop.f32.mrb[0].mxu0
      %4236 = vmatprep.mubr.f32.mxu0 0.0
      %4237 = vmatmul.mubr.f32.gmra.mrb[0].mxu0 %v3525
      %v4238 = vpop.f32.mrb[0].mxu0
      %v4239 = vadd.f32 %v3550, %v4238
      %v4240 = vpop.f32.mrb[0].mxu0
      %4241 = vmatprep.mubr.f32.mxu0 0.0
      %4242 = vmatmul.mubr.f32.gmra.mrb[0].mxu0 %v3526
      %v4243 = vpop.f32.mrb[0].mxu0
      %v4244 = vadd.f32 %v3550, %v4243
      %v4245 = vpop.f32.mrb[0].mxu0
      %4246 = vmatprep.mubr.f32.mxu0 0.0
      %4247 = vmatmul.mubr.f32.gmra.mrb[0].mxu0 %v3527
      %v4248 = vpop.f32.mrb[0].mxu0
      %v4249 = vadd.f32 %v3550, %v4248
      %v4250 = vpop.f32.mrb[0].mxu0
      %4251 = vmatprep.mubr.f32.mxu0 0.0
      %4252 = vmatmul.mubr.f32.gmra.mrb[0].mxu0 %v3528
      %v4253 = vpop.f32.mrb[0].mxu0
      %v4254 = vadd.f32 %v3550, %v4253
      %v4255 = vpop.f32.mrb[0].mxu0
      %4256 = vdwg.mxu0
      %v4257 = vtanh.pop %v3619
      %v4258 = vtanh.pop %v3624
      %v4259 = vtanh.pop %v3629
      %v4260 = vtanh.pop %v3634
      %v4261 = vtanh.pop %v3639
      %v4262 = vtanh.pop %v3644
      %v4263 = vtanh.pop %v3649
      %v4264 = vtanh.pop %v3654
      %v4265 = vtanh.pop %v3659
      %v4266 = vtanh.pop %v3664
      %v4267 = vtanh.pop %v3669
      %v4268 = vtanh.pop %v3674
      %v4269 = vtanh.pop %v3679
      %v4270 = vtanh.pop %v3684
      %v4271 = vtanh.pop %v3689
      %v4272 = vtanh.pop %v3694
      %v4273 = vtanh.pop %v3699
      %v4274 = vtanh.pop %v3704
      %v4275 = vtanh.pop %v3709
      %v4276 = vtanh.pop %v3714
      %v4277 = vtanh.pop %v3719
      %v4278 = vtanh.pop %v3724
      %v4279 = vtanh.pop %v3729
      %v4280 = vtanh.pop %v3734
      %v4281 = vtanh.pop %v3739
      %v4282 = vtanh.pop %v3744
      %v4283 = vtanh.pop %v3749
      %v4284 = vtanh.pop %v3754
      %v4285 = vtanh.pop %v3759
      %v4286 = vtanh.pop %v3764
      %v4287 = vtanh.pop %v3769
      %v4288 = vtanh.pop %v3774
      %v4289 = vtanh.pop %v3779
      %v4290 = vtanh.pop %v3784
      %v4291 = vtanh.pop %v3789
      %v4292 = vtanh.pop %v3794
      %v4293 = vtanh.pop %v3799
      %v4294 = vtanh.pop %v3804
      %v4295 = vtanh.pop %v3809
      %v4296 = vtanh.pop %v3814
      %v4297 = vtanh.pop %v3819
      %v4298 = vtanh.pop %v3824
      %v4299 = vtanh.pop %v3829
      %v4300 = vtanh.pop %v3834
      %v4301 = vtanh.pop %v3839
      %v4302 = vtanh.pop %v3844
      %v4303 = vtanh.pop %v3849
      %v4304 = vtanh.pop %v3854
      %v4305 = vtanh.pop %v3859
      %v4306 = vtanh.pop %v3864
      %v4307 = vtanh.pop %v3869
      %v4308 = vtanh.pop %v3874
      %v4309 = vtanh.pop %v3879
      %v4310 = vtanh.pop %v3884
      %v4311 = vtanh.pop %v3889
      %v4312 = vtanh.pop %v3894
      %v4313 = vtanh.pop %v3899
      %v4314 = vtanh.pop %v3904
      %v4315 = vtanh.pop %v3909
      %v4316 = vtanh.pop %v3914
      %v4317 = vtanh.pop %v3919
      %v4318 = vtanh.pop %v3924
      %v4319 = vtanh.pop %v3929
      %v4320 = vtanh.pop %v3934
      %v4321 = vtanh.pop %v3939
      %v4322 = vtanh.pop %v3944
      %v4323 = vtanh.pop %v3949
      %v4324 = vtanh.pop %v3954
      %v4325 = vtanh.pop %v3959
      %v4326 = vtanh.pop %v3964
      %v4327 = vtanh.pop %v3969
      %v4328 = vtanh.pop %v3974
      %v4329 = vtanh.pop %v3979
      %v4330 = vtanh.pop %v3984
      %v4331 = vtanh.pop %v3989
      %v4332 = vtanh.pop %v3994
      %v4333 = vtanh.pop %v3999
      %v4334 = vtanh.pop %v4004
      %v4335 = vtanh.pop %v4009
      %v4336 = vtanh.pop %v4014
      %v4337 = vtanh.pop %v4019
      %v4338 = vtanh.pop %v4024
      %v4339 = vtanh.pop %v4029
      %v4340 = vtanh.pop %v4034
      %v4341 = vtanh.pop %v4039
      %v4342 = vtanh.pop %v4044
      %v4343 = vtanh.pop %v4049
      %v4344 = vtanh.pop %v4054
      %v4345 = vtanh.pop %v4059
      %v4346 = vtanh.pop %v4064
      %v4347 = vtanh.pop %v4069
      %v4348 = vtanh.pop %v4074
      %v4349 = vtanh.pop %v4079
      %v4350 = vtanh.pop %v4084
      %v4351 = vtanh.pop %v4089
      %v4352 = vtanh.pop %v4094
      %v4353 = vtanh.pop %v4099
      %v4354 = vtanh.pop %v4104
      %v4355 = vtanh.pop %v4109
      %v4356 = vtanh.pop %v4114
      %v4357 = vtanh.pop %v4119
      %v4358 = vtanh.pop %v4124
      %v4359 = vtanh.pop %v4129
      %v4360 = vtanh.pop %v4134
      %v4361 = vtanh.pop %v4139
      %v4362 = vtanh.pop %v4144
      %v4363 = vtanh.pop %v4149
      %v4364 = vtanh.pop %v4154
      %v4365 = vtanh.pop %v4159
      %v4366 = vtanh.pop %v4164
      %v4367 = vtanh.pop %v4169
      %v4368 = vtanh.pop %v4174
      %v4369 = vtanh.pop %v4179
      %v4370 = vtanh.pop %v4184
      %v4371 = vtanh.pop %v4189
      %v4372 = vtanh.pop %v4194
      %v4373 = vtanh.pop %v4199
      %v4374 = vtanh.pop %v4204
      %v4375 = vtanh.pop %v4209
      %v4376 = vtanh.pop %v4214
      %v4377 = vtanh.pop %v4219
      %v4378 = vtanh.pop %v4224
      %v4379 = vtanh.pop %v4229
      %v4380 = vtanh.pop %v4234
      %v4381 = vtanh.pop %v4239
      %v4382 = vtanh.pop %v4244
      %v4383 = vtanh.pop %v4249
      %v4384 = vtanh.pop %v4254
      %v4385 = vld [vmem:[%s8] sm:$0xff]
      %v4386 = vld [vmem:[%s8 + $0x8] sm:$0xff]
      %v4387 = vld [vmem:[%s8 + $0x10] sm:$0xff]
      %v4388 = vld [vmem:[%s8 + $0x18] sm:$0xff]
      %v4389 = vld [vmem:[%s8 + $0x20] sm:$0xff]
      %v4390 = vld [vmem:[%s8 + $0x28] sm:$0xff]
      %v4391 = vld [vmem:[%s8 + $0x30] sm:$0xff]
      %v4392 = vld [vmem:[%s8 + $0x38] sm:$0xff]
      %v4393 = vld [vmem:[%s8 + $0x40] sm:$0xff]
      %v4394 = vld [vmem:[%s8 + $0x48] sm:$0xff]
      %v4395 = vld [vmem:[%s8 + $0x50] sm:$0xff]
      %v4396 = vld [vmem:[%s8 + $0x58] sm:$0xff]
      %v4397 = vld [vmem:[%s8 + $0x60] sm:$0xff]
      %v4398 = vld [vmem:[%s8 + $0x68] sm:$0xff]
      %v4399 = vld [vmem:[%s8 + $0x70] sm:$0xff]
      %v4400 = vld [vmem:[%s8 + $0x78] sm:$0xff]
      %v4401 = vld [vmem:[%s9] sm:$0x1]
      %v4403 = vlaneseq
      %v4404 = vshrl.u32 %v4403, 7
      %v4405 = vsub.s32 0, %v4404
      %v4406 = vrot.slane %v4401, %v4405
      %4408 = vmatprep.subr.mxu0 0.0
      %4409 = vmatpush1.msra.mxu0 %v4385
      %4410 = vmatprep.subr.mxu0 0.0
      %4411 = vmatpush1.msra.mxu0 %v4386
      %4412 = vmatprep.subr.mxu0 0.0
      %4413 = vmatpush1.msra.mxu0 %v4387
      %4414 = vmatprep.subr.mxu0 0.0
      %4415 = vmatpush1.msra.mxu0 %v4388
      %4416 = vmatprep.subr.mxu0 0.0
      %4417 = vmatpush1.msra.mxu0 %v4389
      %4418 = vmatprep.subr.mxu0 0.0
      %4419 = vmatpush1.msra.mxu0 %v4390
      %4420 = vmatprep.subr.mxu0 0.0
      %4421 = vmatpush1.msra.mxu0 %v4391
      %4422 = vmatprep.subr.mxu0 0.0
      %4423 = vmatpush1.msra.mxu0 %v4392
      %4424 = vmatprep.subr.mxu0 0.0
      %4425 = vmatpush1.msra.mxu0 %v4393
      %4426 = vmatprep.subr.mxu0 0.0
      %4427 = vmatpush1.msra.mxu0 %v4394
      %4428 = vmatprep.subr.mxu0 0.0
      %4429 = vmatpush1.msra.mxu0 %v4395
      %4430 = vmatprep.subr.mxu0 0.0
      %4431 = vmatpush1.msra.mxu0 %v4396
      %4432 = vmatprep.subr.mxu0 0.0
      %4433 = vmatpush1.msra.mxu0 %v4397
      %4434 = vmatprep.subr.mxu0 0.0
      %4435 = vmatpush1.msra.mxu0 %v4398
      %4436 = vmatprep.subr.mxu0 0.0
      %4437 = vmatpush1.msra.mxu0 %v4399
      %4438 = vmatprep.subr.mxu0 0.0
      %4439 = vmatpush1.msra.mxu0 %v4400
      %4440 = vmatprep.subr.mxu0 0.0
      %4441 = vmatpush1.msra.mxu0 0.0
      %4442 = vmatprep.subr.mxu0 0.0
      %4443 = vmatpush1.msra.mxu0 0.0
      %4444 = vmatprep.subr.mxu0 0.0
      %4445 = vmatpush1.msra.mxu0 0.0
      %4446 = vmatprep.subr.mxu0 0.0
      %4447 = vmatpush1.msra.mxu0 0.0
      %4448 = vmatprep.subr.mxu0 0.0
      %4449 = vmatpush1.msra.mxu0 0.0
      %4450 = vmatprep.subr.mxu0 0.0
      %4451 = vmatpush1.msra.mxu0 0.0
      %4452 = vmatprep.subr.mxu0 0.0
      %4453 = vmatpush1.msra.mxu0 0.0
      %4454 = vmatprep.subr.mxu0 0.0
      %4455 = vmatpush1.msra.mxu0 0.0
      %4456 = vmatprep.subr.mxu0 0.0
      %4457 = vmatpush1.msra.mxu0 0.0
      %4458 = vmatprep.subr.mxu0 0.0
      %4459 = vmatpush1.msra.mxu0 0.0
      %4460 = vmatprep.subr.mxu0 0.0
      %4461 = vmatpush1.msra.mxu0 0.0
      %4462 = vmatprep.subr.mxu0 0.0
      %4463 = vmatpush1.msra.mxu0 0.0
      %4464 = vmatprep.subr.mxu0 0.0
      %4465 = vmatpush1.msra.mxu0 0.0
      %4466 = vmatprep.subr.mxu0 0.0
      %4467 = vmatpush1.msra.mxu0 0.0
      %4468 = vmatprep.subr.mxu0 0.0
      %4469 = vmatpush1.msra.mxu0 0.0
      %4470 = vmatprep.subr.mxu0 0.0
      %4471 = vmatpush1.msra.mxu0 0.0
      %4472 = vmatprep.mubr.f32.mxu0 0.0
      %4473 = vmatmul.mubr.f32.gmra.mrb[0].mxu0 %v4257
      %v4474 = vpop.f32.mrb[0].mxu0
      %v4475 = vadd.f32 %v4406, %v4474
      %v4476 = vpop.f32.mrb[0].mxu0
      %4477 = vmatprep.mubr.f32.mxu0 0.0
      %4478 = vmatmul.mubr.f32.gmra.mrb[0].mxu0 %v4258
      %v4479 = vpop.f32.mrb[0].mxu0
      %v4480 = vadd.f32 %v4406, %v4479
      %v4481 = vpop.f32.mrb[0].mxu0
      %4482 = vmatprep.mubr.f32.mxu0 0.0
      %4483 = vmatmul.mubr.f32.gmra.mrb[0].mxu0 %v4259
      %v4484 = vpop.f32.mrb[0].mxu0
      %v4485 = vadd.f32 %v4406, %v4484
      %v4486 = vpop.f32.mrb[0].mxu0
      %4487 = vmatprep.mubr.f32.mxu0 0.0
      %4488 = vmatmul.mubr.f32.gmra.mrb[0].mxu0 %v4260
      %v4489 = vpop.f32.mrb[0].mxu0
      %v4490 = vadd.f32 %v4406, %v4489
      %v4491 = vpop.f32.mrb[0].mxu0
      %4492 = vmatprep.mubr.f32.mxu0 0.0
      %4493 = vmatmul.mubr.f32.gmra.mrb[0].mxu0 %v4261
      %v4494 = vpop.f32.mrb[0].mxu0
      %v4495 = vadd.f32 %v4406, %v4494
      %v4496 = vpop.f32.mrb[0].mxu0
      %4497 = vmatprep.mubr.f32.mxu0 0.0
      %4498 = vmatmul.mubr.f32.gmra.mrb[0].mxu0 %v4262
      %v4499 = vpop.f32.mrb[0].mxu0
      %v4500 = vadd.f32 %v4406, %v4499
      %v4501 = vpop.f32.mrb[0].mxu0
      %4502 = vmatprep.mubr.f32.mxu0 0.0
      %4503 = vmatmul.mubr.f32.gmra.mrb[0].mxu0 %v4263
      %v4504 = vpop.f32.mrb[0].mxu0
      %v4505 = vadd.f32 %v4406, %v4504
      %v4506 = vpop.f32.mrb[0].mxu0
      %4507 = vmatprep.mubr.f32.mxu0 0.0
      %4508 = vmatmul.mubr.f32.gmra.mrb[0].mxu0 %v4264
      %v4509 = vpop.f32.mrb[0].mxu0
      %v4510 = vadd.f32 %v4406, %v4509
      %v4511 = vpop.f32.mrb[0].mxu0
      %4512 = vmatprep.mubr.f32.mxu0 0.0
      %4513 = vmatmul.mubr.f32.gmra.mrb[0].mxu0 %v4265
      %v4514 = vpop.f32.mrb[0].mxu0
      %v4515 = vadd.f32 %v4406, %v4514
      %v4516 = vpop.f32.mrb[0].mxu0
      %4517 = vmatprep.mubr.f32.mxu0 0.0
      %4518 = vmatmul.mubr.f32.gmra.mrb[0].mxu0 %v4266
      %v4519 = vpop.f32.mrb[0].mxu0
      %v4520 = vadd.f32 %v4406, %v4519
      %v4521 = vpop.f32.mrb[0].mxu0
      %4522 = vmatprep.mubr.f32.mxu0 0.0
      %4523 = vmatmul.mubr.f32.gmra.mrb[0].mxu0 %v4267
      %v4524 = vpop.f32.mrb[0].mxu0
      %v4525 = vadd.f32 %v4406, %v4524
      %v4526 = vpop.f32.mrb[0].mxu0
      %4527 = vmatprep.mubr.f32.mxu0 0.0
      %4528 = vmatmul.mubr.f32.gmra.mrb[0].mxu0 %v4268
      %v4529 = vpop.f32.mrb[0].mxu0
      %v4530 = vadd.f32 %v4406, %v4529
      %v4531 = vpop.f32.mrb[0].mxu0
      %4532 = vmatprep.mubr.f32.mxu0 0.0
      %4533 = vmatmul.mubr.f32.gmra.mrb[0].mxu0 %v4269
      %v4534 = vpop.f32.mrb[0].mxu0
      %v4535 = vadd.f32 %v4406, %v4534
      %v4536 = vpop.f32.mrb[0].mxu0
      %4537 = vmatprep.mubr.f32.mxu0 0.0
      %4538 = vmatmul.mubr.f32.gmra.mrb[0].mxu0 %v4270
      %v4539 = vpop.f32.mrb[0].mxu0
      %v4540 = vadd.f32 %v4406, %v4539
      %v4541 = vpop.f32.mrb[0].mxu0
      %4542 = vmatprep.mubr.f32.mxu0 0.0
      %4543 = vmatmul.mubr.f32.gmra.mrb[0].mxu0 %v4271
      %v4544 = vpop.f32.mrb[0].mxu0
      %v4545 = vadd.f32 %v4406, %v4544
      %v4546 = vpop.f32.mrb[0].mxu0
      %4547 = vmatprep.mubr.f32.mxu0 0.0
      %4548 = vmatmul.mubr.f32.gmra.mrb[0].mxu0 %v4272
      %v4549 = vpop.f32.mrb[0].mxu0
      %v4550 = vadd.f32 %v4406, %v4549
      %v4551 = vpop.f32.mrb[0].mxu0
      %4552 = vmatprep.mubr.f32.mxu0 0.0
      %4553 = vmatmul.mubr.f32.gmra.mrb[0].mxu0 %v4273
      %v4554 = vpop.f32.mrb[0].mxu0
      %v4555 = vadd.f32 %v4406, %v4554
      %v4556 = vpop.f32.mrb[0].mxu0
      %4557 = vmatprep.mubr.f32.mxu0 0.0
      %4558 = vmatmul.mubr.f32.gmra.mrb[0].mxu0 %v4274
      %v4559 = vpop.f32.mrb[0].mxu0
      %v4560 = vadd.f32 %v4406, %v4559
      %v4561 = vpop.f32.mrb[0].mxu0
      %4562 = vmatprep.mubr.f32.mxu0 0.0
      %4563 = vmatmul.mubr.f32.gmra.mrb[0].mxu0 %v4275
      %v4564 = vpop.f32.mrb[0].mxu0
      %v4565 = vadd.f32 %v4406, %v4564
      %v4566 = vpop.f32.mrb[0].mxu0
      %4567 = vmatprep.mubr.f32.mxu0 0.0
      %4568 = vmatmul.mubr.f32.gmra.mrb[0].mxu0 %v4276
      %v4569 = vpop.f32.mrb[0].mxu0
      %v4570 = vadd.f32 %v4406, %v4569
      %v4571 = vpop.f32.mrb[0].mxu0
      %4572 = vmatprep.mubr.f32.mxu0 0.0
      %4573 = vmatmul.mubr.f32.gmra.mrb[0].mxu0 %v4277
      %v4574 = vpop.f32.mrb[0].mxu0
      %v4575 = vadd.f32 %v4406, %v4574
      %v4576 = vpop.f32.mrb[0].mxu0
      %4577 = vmatprep.mubr.f32.mxu0 0.0
      %4578 = vmatmul.mubr.f32.gmra.mrb[0].mxu0 %v4278
      %v4579 = vpop.f32.mrb[0].mxu0
      %v4580 = vadd.f32 %v4406, %v4579
      %v4581 = vpop.f32.mrb[0].mxu0
      %4582 = vmatprep.mubr.f32.mxu0 0.0
      %4583 = vmatmul.mubr.f32.gmra.mrb[0].mxu0 %v4279
      %v4584 = vpop.f32.mrb[0].mxu0
      %v4585 = vadd.f32 %v4406, %v4584
      %v4586 = vpop.f32.mrb[0].mxu0
      %4587 = vmatprep.mubr.f32.mxu0 0.0
      %4588 = vmatmul.mubr.f32.gmra.mrb[0].mxu0 %v4280
      %v4589 = vpop.f32.mrb[0].mxu0
      %v4590 = vadd.f32 %v4406, %v4589
      %v4591 = vpop.f32.mrb[0].mxu0
      %4592 = vmatprep.mubr.f32.mxu0 0.0
      %4593 = vmatmul.mubr.f32.gmra.mrb[0].mxu0 %v4281
      %v4594 = vpop.f32.mrb[0].mxu0
      %v4595 = vadd.f32 %v4406, %v4594
      %v4596 = vpop.f32.mrb[0].mxu0
      %4597 = vmatprep.mubr.f32.mxu0 0.0
      %4598 = vmatmul.mubr.f32.gmra.mrb[0].mxu0 %v4282
      %v4599 = vpop.f32.mrb[0].mxu0
      %v4600 = vadd.f32 %v4406, %v4599
      %v4601 = vpop.f32.mrb[0].mxu0
      %4602 = vmatprep.mubr.f32.mxu0 0.0
      %4603 = vmatmul.mubr.f32.gmra.mrb[0].mxu0 %v4283
      %v4604 = vpop.f32.mrb[0].mxu0
      %v4605 = vadd.f32 %v4406, %v4604
      %v4606 = vpop.f32.mrb[0].mxu0
      %4607 = vmatprep.mubr.f32.mxu0 0.0
      %4608 = vmatmul.mubr.f32.gmra.mrb[0].mxu0 %v4284
      %v4609 = vpop.f32.mrb[0].mxu0
      %v4610 = vadd.f32 %v4406, %v4609
      %v4611 = vpop.f32.mrb[0].mxu0
      %4612 = vmatprep.mubr.f32.mxu0 0.0
      %4613 = vmatmul.mubr.f32.gmra.mrb[0].mxu0 %v4285
      %v4614 = vpop.f32.mrb[0].mxu0
      %v4615 = vadd.f32 %v4406, %v4614
      %v4616 = vpop.f32.mrb[0].mxu0
      %4617 = vmatprep.mubr.f32.mxu0 0.0
      %4618 = vmatmul.mubr.f32.gmra.mrb[0].mxu0 %v4286
      %v4619 = vpop.f32.mrb[0].mxu0
      %v4620 = vadd.f32 %v4406, %v4619
      %v4621 = vpop.f32.mrb[0].mxu0
      %4622 = vmatprep.mubr.f32.mxu0 0.0
      %4623 = vmatmul.mubr.f32.gmra.mrb[0].mxu0 %v4287
      %v4624 = vpop.f32.mrb[0].mxu0
      %v4625 = vadd.f32 %v4406, %v4624
      %v4626 = vpop.f32.mrb[0].mxu0
      %4627 = vmatprep.mubr.f32.mxu0 0.0
      %4628 = vmatmul.mubr.f32.gmra.mrb[0].mxu0 %v4288
      %v4629 = vpop.f32.mrb[0].mxu0
      %v4630 = vadd.f32 %v4406, %v4629
      %v4631 = vpop.f32.mrb[0].mxu0
      %4632 = vmatprep.mubr.f32.mxu0 0.0
      %4633 = vmatmul.mubr.f32.gmra.mrb[0].mxu0 %v4289
      %v4634 = vpop.f32.mrb[0].mxu0
      %v4635 = vadd.f32 %v4406, %v4634
      %v4636 = vpop.f32.mrb[0].mxu0
      %4637 = vmatprep.mubr.f32.mxu0 0.0
      %4638 = vmatmul.mubr.f32.gmra.mrb[0].mxu0 %v4290
      %v4639 = vpop.f32.mrb[0].mxu0
      %v4640 = vadd.f32 %v4406, %v4639
      %v4641 = vpop.f32.mrb[0].mxu0
      %4642 = vmatprep.mubr.f32.mxu0 0.0
      %4643 = vmatmul.mubr.f32.gmra.mrb[0].mxu0 %v4291
      %v4644 = vpop.f32.mrb[0].mxu0
      %v4645 = vadd.f32 %v4406, %v4644
      %v4646 = vpop.f32.mrb[0].mxu0
      %4647 = vmatprep.mubr.f32.mxu0 0.0
      %4648 = vmatmul.mubr.f32.gmra.mrb[0].mxu0 %v4292
      %v4649 = vpop.f32.mrb[0].mxu0
      %v4650 = vadd.f32 %v4406, %v4649
      %v4651 = vpop.f32.mrb[0].mxu0
      %4652 = vmatprep.mubr.f32.mxu0 0.0
      %4653 = vmatmul.mubr.f32.gmra.mrb[0].mxu0 %v4293
      %v4654 = vpop.f32.mrb[0].mxu0
      %v4655 = vadd.f32 %v4406, %v4654
      %v4656 = vpop.f32.mrb[0].mxu0
      %4657 = vmatprep.mubr.f32.mxu0 0.0
      %4658 = vmatmul.mubr.f32.gmra.mrb[0].mxu0 %v4294
      %v4659 = vpop.f32.mrb[0].mxu0
      %v4660 = vadd.f32 %v4406, %v4659
      %v4661 = vpop.f32.mrb[0].mxu0
      %4662 = vmatprep.mubr.f32.mxu0 0.0
      %4663 = vmatmul.mubr.f32.gmra.mrb[0].mxu0 %v4295
      %v4664 = vpop.f32.mrb[0].mxu0
      %v4665 = vadd.f32 %v4406, %v4664
      %v4666 = vpop.f32.mrb[0].mxu0
      %4667 = vmatprep.mubr.f32.mxu0 0.0
      %4668 = vmatmul.mubr.f32.gmra.mrb[0].mxu0 %v4296
      %v4669 = vpop.f32.mrb[0].mxu0
      %v4670 = vadd.f32 %v4406, %v4669
      %v4671 = vpop.f32.mrb[0].mxu0
      %4672 = vmatprep.mubr.f32.mxu0 0.0
      %4673 = vmatmul.mubr.f32.gmra.mrb[0].mxu0 %v4297
      %v4674 = vpop.f32.mrb[0].mxu0
      %v4675 = vadd.f32 %v4406, %v4674
      %v4676 = vpop.f32.mrb[0].mxu0
      %4677 = vmatprep.mubr.f32.mxu0 0.0
      %4678 = vmatmul.mubr.f32.gmra.mrb[0].mxu0 %v4298
      %v4679 = vpop.f32.mrb[0].mxu0
      %v4680 = vadd.f32 %v4406, %v4679
      %v4681 = vpop.f32.mrb[0].mxu0
      %4682 = vmatprep.mubr.f32.mxu0 0.0
      %4683 = vmatmul.mubr.f32.gmra.mrb[0].mxu0 %v4299
      %v4684 = vpop.f32.mrb[0].mxu0
      %v4685 = vadd.f32 %v4406, %v4684
      %v4686 = vpop.f32.mrb[0].mxu0
      %4687 = vmatprep.mubr.f32.mxu0 0.0
      %4688 = vmatmul.mubr.f32.gmra.mrb[0].mxu0 %v4300
      %v4689 = vpop.f32.mrb[0].mxu0
      %v4690 = vadd.f32 %v4406, %v4689
      %v4691 = vpop.f32.mrb[0].mxu0
      %4692 = vmatprep.mubr.f32.mxu0 0.0
      %4693 = vmatmul.mubr.f32.gmra.mrb[0].mxu0 %v4301
      %v4694 = vpop.f32.mrb[0].mxu0
      %v4695 = vadd.f32 %v4406, %v4694
      %v4696 = vpop.f32.mrb[0].mxu0
      %4697 = vmatprep.mubr.f32.mxu0 0.0
      %4698 = vmatmul.mubr.f32.gmra.mrb[0].mxu0 %v4302
      %v4699 = vpop.f32.mrb[0].mxu0
      %v4700 = vadd.f32 %v4406, %v4699
      %v4701 = vpop.f32.mrb[0].mxu0
      %4702 = vmatprep.mubr.f32.mxu0 0.0
      %4703 = vmatmul.mubr.f32.gmra.mrb[0].mxu0 %v4303
      %v4704 = vpop.f32.mrb[0].mxu0
      %v4705 = vadd.f32 %v4406, %v4704
      %v4706 = vpop.f32.mrb[0].mxu0
      %4707 = vmatprep.mubr.f32.mxu0 0.0
      %4708 = vmatmul.mubr.f32.gmra.mrb[0].mxu0 %v4304
      %v4709 = vpop.f32.mrb[0].mxu0
      %v4710 = vadd.f32 %v4406, %v4709
      %v4711 = vpop.f32.mrb[0].mxu0
      %4712 = vmatprep.mubr.f32.mxu0 0.0
      %4713 = vmatmul.mubr.f32.gmra.mrb[0].mxu0 %v4305
      %v4714 = vpop.f32.mrb[0].mxu0
      %v4715 = vadd.f32 %v4406, %v4714
      %v4716 = vpop.f32.mrb[0].mxu0
      %4717 = vmatprep.mubr.f32.mxu0 0.0
      %4718 = vmatmul.mubr.f32.gmra.mrb[0].mxu0 %v4306
      %v4719 = vpop.f32.mrb[0].mxu0
      %v4720 = vadd.f32 %v4406, %v4719
      %v4721 = vpop.f32.mrb[0].mxu0
      %4722 = vmatprep.mubr.f32.mxu0 0.0
      %4723 = vmatmul.mubr.f32.gmra.mrb[0].mxu0 %v4307
      %v4724 = vpop.f32.mrb[0].mxu0
      %v4725 = vadd.f32 %v4406, %v4724
      %v4726 = vpop.f32.mrb[0].mxu0
      %4727 = vmatprep.mubr.f32.mxu0 0.0
      %4728 = vmatmul.mubr.f32.gmra.mrb[0].mxu0 %v4308
      %v4729 = vpop.f32.mrb[0].mxu0
      %v4730 = vadd.f32 %v4406, %v4729
      %v4731 = vpop.f32.mrb[0].mxu0
      %4732 = vmatprep.mubr.f32.mxu0 0.0
      %4733 = vmatmul.mubr.f32.gmra.mrb[0].mxu0 %v4309
      %v4734 = vpop.f32.mrb[0].mxu0
      %v4735 = vadd.f32 %v4406, %v4734
      %v4736 = vpop.f32.mrb[0].mxu0
      %4737 = vmatprep.mubr.f32.mxu0 0.0
      %4738 = vmatmul.mubr.f32.gmra.mrb[0].mxu0 %v4310
      %v4739 = vpop.f32.mrb[0].mxu0
      %v4740 = vadd.f32 %v4406, %v4739
      %v4741 = vpop.f32.mrb[0].mxu0
      %4742 = vmatprep.mubr.f32.mxu0 0.0
      %4743 = vmatmul.mubr.f32.gmra.mrb[0].mxu0 %v4311
      %v4744 = vpop.f32.mrb[0].mxu0
      %v4745 = vadd.f32 %v4406, %v4744
      %v4746 = vpop.f32.mrb[0].mxu0
      %4747 = vmatprep.mubr.f32.mxu0 0.0
      %4748 = vmatmul.mubr.f32.gmra.mrb[0].mxu0 %v4312
      %v4749 = vpop.f32.mrb[0].mxu0
      %v4750 = vadd.f32 %v4406, %v4749
      %v4751 = vpop.f32.mrb[0].mxu0
      %4752 = vmatprep.mubr.f32.mxu0 0.0
      %4753 = vmatmul.mubr.f32.gmra.mrb[0].mxu0 %v4313
      %v4754 = vpop.f32.mrb[0].mxu0
      %v4755 = vadd.f32 %v4406, %v4754
      %v4756 = vpop.f32.mrb[0].mxu0
      %4757 = vmatprep.mubr.f32.mxu0 0.0
      %4758 = vmatmul.mubr.f32.gmra.mrb[0].mxu0 %v4314
      %v4759 = vpop.f32.mrb[0].mxu0
      %v4760 = vadd.f32 %v4406, %v4759
      %v4761 = vpop.f32.mrb[0].mxu0
      %4762 = vmatprep.mubr.f32.mxu0 0.0
      %4763 = vmatmul.mubr.f32.gmra.mrb[0].mxu0 %v4315
      %v4764 = vpop.f32.mrb[0].mxu0
      %v4765 = vadd.f32 %v4406, %v4764
      %v4766 = vpop.f32.mrb[0].mxu0
      %4767 = vmatprep.mubr.f32.mxu0 0.0
      %4768 = vmatmul.mubr.f32.gmra.mrb[0].mxu0 %v4316
      %v4769 = vpop.f32.mrb[0].mxu0
      %v4770 = vadd.f32 %v4406, %v4769
      %v4771 = vpop.f32.mrb[0].mxu0
      %4772 = vmatprep.mubr.f32.mxu0 0.0
      %4773 = vmatmul.mubr.f32.gmra.mrb[0].mxu0 %v4317
      %v4774 = vpop.f32.mrb[0].mxu0
      %v4775 = vadd.f32 %v4406, %v4774
      %v4776 = vpop.f32.mrb[0].mxu0
      %4777 = vmatprep.mubr.f32.mxu0 0.0
      %4778 = vmatmul.mubr.f32.gmra.mrb[0].mxu0 %v4318
      %v4779 = vpop.f32.mrb[0].mxu0
      %v4780 = vadd.f32 %v4406, %v4779
      %v4781 = vpop.f32.mrb[0].mxu0
      %4782 = vmatprep.mubr.f32.mxu0 0.0
      %4783 = vmatmul.mubr.f32.gmra.mrb[0].mxu0 %v4319
      %v4784 = vpop.f32.mrb[0].mxu0
      %v4785 = vadd.f32 %v4406, %v4784
      %v4786 = vpop.f32.mrb[0].mxu0
      %4787 = vmatprep.mubr.f32.mxu0 0.0
      %4788 = vmatmul.mubr.f32.gmra.mrb[0].mxu0 %v4320
      %v4789 = vpop.f32.mrb[0].mxu0
      %v4790 = vadd.f32 %v4406, %v4789
      %v4791 = vpop.f32.mrb[0].mxu0
      %4792 = vmatprep.mubr.f32.mxu0 0.0
      %4793 = vmatmul.mubr.f32.gmra.mrb[0].mxu0 %v4321
      %v4794 = vpop.f32.mrb[0].mxu0
      %v4795 = vadd.f32 %v4406, %v4794
      %v4796 = vpop.f32.mrb[0].mxu0
      %4797 = vmatprep.mubr.f32.mxu0 0.0
      %4798 = vmatmul.mubr.f32.gmra.mrb[0].mxu0 %v4322
      %v4799 = vpop.f32.mrb[0].mxu0
      %v4800 = vadd.f32 %v4406, %v4799
      %v4801 = vpop.f32.mrb[0].mxu0
      %4802 = vmatprep.mubr.f32.mxu0 0.0
      %4803 = vmatmul.mubr.f32.gmra.mrb[0].mxu0 %v4323
      %v4804 = vpop.f32.mrb[0].mxu0
      %v4805 = vadd.f32 %v4406, %v4804
      %v4806 = vpop.f32.mrb[0].mxu0
      %4807 = vmatprep.mubr.f32.mxu0 0.0
      %4808 = vmatmul.mubr.f32.gmra.mrb[0].mxu0 %v4324
      %v4809 = vpop.f32.mrb[0].mxu0
      %v4810 = vadd.f32 %v4406, %v4809
      %v4811 = vpop.f32.mrb[0].mxu0
      %4812 = vmatprep.mubr.f32.mxu0 0.0
      %4813 = vmatmul.mubr.f32.gmra.mrb[0].mxu0 %v4325
      %v4814 = vpop.f32.mrb[0].mxu0
      %v4815 = vadd.f32 %v4406, %v4814
      %v4816 = vpop.f32.mrb[0].mxu0
      %4817 = vmatprep.mubr.f32.mxu0 0.0
      %4818 = vmatmul.mubr.f32.gmra.mrb[0].mxu0 %v4326
      %v4819 = vpop.f32.mrb[0].mxu0
      %v4820 = vadd.f32 %v4406, %v4819
      %v4821 = vpop.f32.mrb[0].mxu0
      %4822 = vmatprep.mubr.f32.mxu0 0.0
      %4823 = vmatmul.mubr.f32.gmra.mrb[0].mxu0 %v4327
      %v4824 = vpop.f32.mrb[0].mxu0
      %v4825 = vadd.f32 %v4406, %v4824
      %v4826 = vpop.f32.mrb[0].mxu0
      %4827 = vmatprep.mubr.f32.mxu0 0.0
      %4828 = vmatmul.mubr.f32.gmra.mrb[0].mxu0 %v4328
      %v4829 = vpop.f32.mrb[0].mxu0
      %v4830 = vadd.f32 %v4406, %v4829
      %v4831 = vpop.f32.mrb[0].mxu0
      %4832 = vmatprep.mubr.f32.mxu0 0.0
      %4833 = vmatmul.mubr.f32.gmra.mrb[0].mxu0 %v4329
      %v4834 = vpop.f32.mrb[0].mxu0
      %v4835 = vadd.f32 %v4406, %v4834
      %v4836 = vpop.f32.mrb[0].mxu0
      %4837 = vmatprep.mubr.f32.mxu0 0.0
      %4838 = vmatmul.mubr.f32.gmra.mrb[0].mxu0 %v4330
      %v4839 = vpop.f32.mrb[0].mxu0
      %v4840 = vadd.f32 %v4406, %v4839
      %v4841 = vpop.f32.mrb[0].mxu0
      %4842 = vmatprep.mubr.f32.mxu0 0.0
      %4843 = vmatmul.mubr.f32.gmra.mrb[0].mxu0 %v4331
      %v4844 = vpop.f32.mrb[0].mxu0
      %v4845 = vadd.f32 %v4406, %v4844
      %v4846 = vpop.f32.mrb[0].mxu0
      %4847 = vmatprep.mubr.f32.mxu0 0.0
      %4848 = vmatmul.mubr.f32.gmra.mrb[0].mxu0 %v4332
      %v4849 = vpop.f32.mrb[0].mxu0
      %v4850 = vadd.f32 %v4406, %v4849
      %v4851 = vpop.f32.mrb[0].mxu0
      %4852 = vmatprep.mubr.f32.mxu0 0.0
      %4853 = vmatmul.mubr.f32.gmra.mrb[0].mxu0 %v4333
      %v4854 = vpop.f32.mrb[0].mxu0
      %v4855 = vadd.f32 %v4406, %v4854
      %v4856 = vpop.f32.mrb[0].mxu0
      %4857 = vmatprep.mubr.f32.mxu0 0.0
      %4858 = vmatmul.mubr.f32.gmra.mrb[0].mxu0 %v4334
      %v4859 = vpop.f32.mrb[0].mxu0
      %v4860 = vadd.f32 %v4406, %v4859
      %v4861 = vpop.f32.mrb[0].mxu0
      %4862 = vmatprep.mubr.f32.mxu0 0.0
      %4863 = vmatmul.mubr.f32.gmra.mrb[0].mxu0 %v4335
      %v4864 = vpop.f32.mrb[0].mxu0
      %v4865 = vadd.f32 %v4406, %v4864
      %v4866 = vpop.f32.mrb[0].mxu0
      %4867 = vmatprep.mubr.f32.mxu0 0.0
      %4868 = vmatmul.mubr.f32.gmra.mrb[0].mxu0 %v4336
      %v4869 = vpop.f32.mrb[0].mxu0
      %v4870 = vadd.f32 %v4406, %v4869
      %v4871 = vpop.f32.mrb[0].mxu0
      %4872 = vmatprep.mubr.f32.mxu0 0.0
      %4873 = vmatmul.mubr.f32.gmra.mrb[0].mxu0 %v4337
      %v4874 = vpop.f32.mrb[0].mxu0
      %v4875 = vadd.f32 %v4406, %v4874
      %v4876 = vpop.f32.mrb[0].mxu0
      %4877 = vmatprep.mubr.f32.mxu0 0.0
      %4878 = vmatmul.mubr.f32.gmra.mrb[0].mxu0 %v4338
      %v4879 = vpop.f32.mrb[0].mxu0
      %v4880 = vadd.f32 %v4406, %v4879
      %v4881 = vpop.f32.mrb[0].mxu0
      %4882 = vmatprep.mubr.f32.mxu0 0.0
      %4883 = vmatmul.mubr.f32.gmra.mrb[0].mxu0 %v4339
      %v4884 = vpop.f32.mrb[0].mxu0
      %v4885 = vadd.f32 %v4406, %v4884
      %v4886 = vpop.f32.mrb[0].mxu0
      %4887 = vmatprep.mubr.f32.mxu0 0.0
      %4888 = vmatmul.mubr.f32.gmra.mrb[0].mxu0 %v4340
      %v4889 = vpop.f32.mrb[0].mxu0
      %v4890 = vadd.f32 %v4406, %v4889
      %v4891 = vpop.f32.mrb[0].mxu0
      %4892 = vmatprep.mubr.f32.mxu0 0.0
      %4893 = vmatmul.mubr.f32.gmra.mrb[0].mxu0 %v4341
      %v4894 = vpop.f32.mrb[0].mxu0
      %v4895 = vadd.f32 %v4406, %v4894
      %v4896 = vpop.f32.mrb[0].mxu0
      %4897 = vmatprep.mubr.f32.mxu0 0.0
      %4898 = vmatmul.mubr.f32.gmra.mrb[0].mxu0 %v4342
      %v4899 = vpop.f32.mrb[0].mxu0
      %v4900 = vadd.f32 %v4406, %v4899
      %v4901 = vpop.f32.mrb[0].mxu0
      %4902 = vmatprep.mubr.f32.mxu0 0.0
      %4903 = vmatmul.mubr.f32.gmra.mrb[0].mxu0 %v4343
      %v4904 = vpop.f32.mrb[0].mxu0
      %v4905 = vadd.f32 %v4406, %v4904
      %v4906 = vpop.f32.mrb[0].mxu0
      %4907 = vmatprep.mubr.f32.mxu0 0.0
      %4908 = vmatmul.mubr.f32.gmra.mrb[0].mxu0 %v4344
      %v4909 = vpop.f32.mrb[0].mxu0
      %v4910 = vadd.f32 %v4406, %v4909
      %v4911 = vpop.f32.mrb[0].mxu0
      %4912 = vmatprep.mubr.f32.mxu0 0.0
      %4913 = vmatmul.mubr.f32.gmra.mrb[0].mxu0 %v4345
      %v4914 = vpop.f32.mrb[0].mxu0
      %v4915 = vadd.f32 %v4406, %v4914
      %v4916 = vpop.f32.mrb[0].mxu0
      %4917 = vmatprep.mubr.f32.mxu0 0.0
      %4918 = vmatmul.mubr.f32.gmra.mrb[0].mxu0 %v4346
      %v4919 = vpop.f32.mrb[0].mxu0
      %v4920 = vadd.f32 %v4406, %v4919
      %v4921 = vpop.f32.mrb[0].mxu0
      %4922 = vmatprep.mubr.f32.mxu0 0.0
      %4923 = vmatmul.mubr.f32.gmra.mrb[0].mxu0 %v4347
      %v4924 = vpop.f32.mrb[0].mxu0
      %v4925 = vadd.f32 %v4406, %v4924
      %v4926 = vpop.f32.mrb[0].mxu0
      %4927 = vmatprep.mubr.f32.mxu0 0.0
      %4928 = vmatmul.mubr.f32.gmra.mrb[0].mxu0 %v4348
      %v4929 = vpop.f32.mrb[0].mxu0
      %v4930 = vadd.f32 %v4406, %v4929
      %v4931 = vpop.f32.mrb[0].mxu0
      %4932 = vmatprep.mubr.f32.mxu0 0.0
      %4933 = vmatmul.mubr.f32.gmra.mrb[0].mxu0 %v4349
      %v4934 = vpop.f32.mrb[0].mxu0
      %v4935 = vadd.f32 %v4406, %v4934
      %v4936 = vpop.f32.mrb[0].mxu0
      %4937 = vmatprep.mubr.f32.mxu0 0.0
      %4938 = vmatmul.mubr.f32.gmra.mrb[0].mxu0 %v4350
      %v4939 = vpop.f32.mrb[0].mxu0
      %v4940 = vadd.f32 %v4406, %v4939
      %v4941 = vpop.f32.mrb[0].mxu0
      %4942 = vmatprep.mubr.f32.mxu0 0.0
      %4943 = vmatmul.mubr.f32.gmra.mrb[0].mxu0 %v4351
      %v4944 = vpop.f32.mrb[0].mxu0
      %v4945 = vadd.f32 %v4406, %v4944
      %v4946 = vpop.f32.mrb[0].mxu0
      %4947 = vmatprep.mubr.f32.mxu0 0.0
      %4948 = vmatmul.mubr.f32.gmra.mrb[0].mxu0 %v4352
      %v4949 = vpop.f32.mrb[0].mxu0
      %v4950 = vadd.f32 %v4406, %v4949
      %v4951 = vpop.f32.mrb[0].mxu0
      %4952 = vmatprep.mubr.f32.mxu0 0.0
      %4953 = vmatmul.mubr.f32.gmra.mrb[0].mxu0 %v4353
      %v4954 = vpop.f32.mrb[0].mxu0
      %v4955 = vadd.f32 %v4406, %v4954
      %v4956 = vpop.f32.mrb[0].mxu0
      %4957 = vmatprep.mubr.f32.mxu0 0.0
      %4958 = vmatmul.mubr.f32.gmra.mrb[0].mxu0 %v4354
      %v4959 = vpop.f32.mrb[0].mxu0
      %v4960 = vadd.f32 %v4406, %v4959
      %v4961 = vpop.f32.mrb[0].mxu0
      %4962 = vmatprep.mubr.f32.mxu0 0.0
      %4963 = vmatmul.mubr.f32.gmra.mrb[0].mxu0 %v4355
      %v4964 = vpop.f32.mrb[0].mxu0
      %v4965 = vadd.f32 %v4406, %v4964
      %v4966 = vpop.f32.mrb[0].mxu0
      %4967 = vmatprep.mubr.f32.mxu0 0.0
      %4968 = vmatmul.mubr.f32.gmra.mrb[0].mxu0 %v4356
      %v4969 = vpop.f32.mrb[0].mxu0
      %v4970 = vadd.f32 %v4406, %v4969
      %v4971 = vpop.f32.mrb[0].mxu0
      %4972 = vmatprep.mubr.f32.mxu0 0.0
      %4973 = vmatmul.mubr.f32.gmra.mrb[0].mxu0 %v4357
      %v4974 = vpop.f32.mrb[0].mxu0
      %v4975 = vadd.f32 %v4406, %v4974
      %v4976 = vpop.f32.mrb[0].mxu0
      %4977 = vmatprep.mubr.f32.mxu0 0.0
      %4978 = vmatmul.mubr.f32.gmra.mrb[0].mxu0 %v4358
      %v4979 = vpop.f32.mrb[0].mxu0
      %v4980 = vadd.f32 %v4406, %v4979
      %v4981 = vpop.f32.mrb[0].mxu0
      %4982 = vmatprep.mubr.f32.mxu0 0.0
      %4983 = vmatmul.mubr.f32.gmra.mrb[0].mxu0 %v4359
      %v4984 = vpop.f32.mrb[0].mxu0
      %v4985 = vadd.f32 %v4406, %v4984
      %v4986 = vpop.f32.mrb[0].mxu0
      %4987 = vmatprep.mubr.f32.mxu0 0.0
      %4988 = vmatmul.mubr.f32.gmra.mrb[0].mxu0 %v4360
      %v4989 = vpop.f32.mrb[0].mxu0
      %v4990 = vadd.f32 %v4406, %v4989
      %v4991 = vpop.f32.mrb[0].mxu0
      %4992 = vmatprep.mubr.f32.mxu0 0.0
      %4993 = vmatmul.mubr.f32.gmra.mrb[0].mxu0 %v4361
      %v4994 = vpop.f32.mrb[0].mxu0
      %v4995 = vadd.f32 %v4406, %v4994
      %v4996 = vpop.f32.mrb[0].mxu0
      %4997 = vmatprep.mubr.f32.mxu0 0.0
      %4998 = vmatmul.mubr.f32.gmra.mrb[0].mxu0 %v4362
      %v4999 = vpop.f32.mrb[0].mxu0
      %v5000 = vadd.f32 %v4406, %v4999
      %v5001 = vpop.f32.mrb[0].mxu0
      %5002 = vmatprep.mubr.f32.mxu0 0.0
      %5003 = vmatmul.mubr.f32.gmra.mrb[0].mxu0 %v4363
      %v5004 = vpop.f32.mrb[0].mxu0
      %v5005 = vadd.f32 %v4406, %v5004
      %v5006 = vpop.f32.mrb[0].mxu0
      %5007 = vmatprep.mubr.f32.mxu0 0.0
      %5008 = vmatmul.mubr.f32.gmra.mrb[0].mxu0 %v4364
      %v5009 = vpop.f32.mrb[0].mxu0
      %v5010 = vadd.f32 %v4406, %v5009
      %v5011 = vpop.f32.mrb[0].mxu0
      %5012 = vmatprep.mubr.f32.mxu0 0.0
      %5013 = vmatmul.mubr.f32.gmra.mrb[0].mxu0 %v4365
      %v5014 = vpop.f32.mrb[0].mxu0
      %v5015 = vadd.f32 %v4406, %v5014
      %v5016 = vpop.f32.mrb[0].mxu0
      %5017 = vmatprep.mubr.f32.mxu0 0.0
      %5018 = vmatmul.mubr.f32.gmra.mrb[0].mxu0 %v4366
      %v5019 = vpop.f32.mrb[0].mxu0
      %v5020 = vadd.f32 %v4406, %v5019
      %v5021 = vpop.f32.mrb[0].mxu0
      %5022 = vmatprep.mubr.f32.mxu0 0.0
      %5023 = vmatmul.mubr.f32.gmra.mrb[0].mxu0 %v4367
      %v5024 = vpop.f32.mrb[0].mxu0
      %v5025 = vadd.f32 %v4406, %v5024
      %v5026 = vpop.f32.mrb[0].mxu0
      %5027 = vmatprep.mubr.f32.mxu0 0.0
      %5028 = vmatmul.mubr.f32.gmra.mrb[0].mxu0 %v4368
      %v5029 = vpop.f32.mrb[0].mxu0
      %v5030 = vadd.f32 %v4406, %v5029
      %v5031 = vpop.f32.mrb[0].mxu0
      %5032 = vmatprep.mubr.f32.mxu0 0.0
      %5033 = vmatmul.mubr.f32.gmra.mrb[0].mxu0 %v4369
      %v5034 = vpop.f32.mrb[0].mxu0
      %v5035 = vadd.f32 %v4406, %v5034
      %v5036 = vpop.f32.mrb[0].mxu0
      %5037 = vmatprep.mubr.f32.mxu0 0.0
      %5038 = vmatmul.mubr.f32.gmra.mrb[0].mxu0 %v4370
      %v5039 = vpop.f32.mrb[0].mxu0
      %v5040 = vadd.f32 %v4406, %v5039
      %v5041 = vpop.f32.mrb[0].mxu0
      %5042 = vmatprep.mubr.f32.mxu0 0.0
      %5043 = vmatmul.mubr.f32.gmra.mrb[0].mxu0 %v4371
      %v5044 = vpop.f32.mrb[0].mxu0
      %v5045 = vadd.f32 %v4406, %v5044
      %v5046 = vpop.f32.mrb[0].mxu0
      %5047 = vmatprep.mubr.f32.mxu0 0.0
      %5048 = vmatmul.mubr.f32.gmra.mrb[0].mxu0 %v4372
      %v5049 = vpop.f32.mrb[0].mxu0
      %v5050 = vadd.f32 %v4406, %v5049
      %v5051 = vpop.f32.mrb[0].mxu0
      %5052 = vmatprep.mubr.f32.mxu0 0.0
      %5053 = vmatmul.mubr.f32.gmra.mrb[0].mxu0 %v4373
      %v5054 = vpop.f32.mrb[0].mxu0
      %v5055 = vadd.f32 %v4406, %v5054
      %v5056 = vpop.f32.mrb[0].mxu0
      %5057 = vmatprep.mubr.f32.mxu0 0.0
      %5058 = vmatmul.mubr.f32.gmra.mrb[0].mxu0 %v4374
      %v5059 = vpop.f32.mrb[0].mxu0
      %v5060 = vadd.f32 %v4406, %v5059
      %v5061 = vpop.f32.mrb[0].mxu0
      %5062 = vmatprep.mubr.f32.mxu0 0.0
      %5063 = vmatmul.mubr.f32.gmra.mrb[0].mxu0 %v4375
      %v5064 = vpop.f32.mrb[0].mxu0
      %v5065 = vadd.f32 %v4406, %v5064
      %v5066 = vpop.f32.mrb[0].mxu0
      %5067 = vmatprep.mubr.f32.mxu0 0.0
      %5068 = vmatmul.mubr.f32.gmra.mrb[0].mxu0 %v4376
      %v5069 = vpop.f32.mrb[0].mxu0
      %v5070 = vadd.f32 %v4406, %v5069
      %v5071 = vpop.f32.mrb[0].mxu0
      %5072 = vmatprep.mubr.f32.mxu0 0.0
      %5073 = vmatmul.mubr.f32.gmra.mrb[0].mxu0 %v4377
      %v5074 = vpop.f32.mrb[0].mxu0
      %v5075 = vadd.f32 %v4406, %v5074
      %v5076 = vpop.f32.mrb[0].mxu0
      %5077 = vmatprep.mubr.f32.mxu0 0.0
      %5078 = vmatmul.mubr.f32.gmra.mrb[0].mxu0 %v4378
      %v5079 = vpop.f32.mrb[0].mxu0
      %v5080 = vadd.f32 %v4406, %v5079
      %v5081 = vpop.f32.mrb[0].mxu0
      %5082 = vmatprep.mubr.f32.mxu0 0.0
      %5083 = vmatmul.mubr.f32.gmra.mrb[0].mxu0 %v4379
      %v5084 = vpop.f32.mrb[0].mxu0
      %v5085 = vadd.f32 %v4406, %v5084
      %v5086 = vpop.f32.mrb[0].mxu0
      %5087 = vmatprep.mubr.f32.mxu0 0.0
      %5088 = vmatmul.mubr.f32.gmra.mrb[0].mxu0 %v4380
      %v5089 = vpop.f32.mrb[0].mxu0
      %v5090 = vadd.f32 %v4406, %v5089
      %v5091 = vpop.f32.mrb[0].mxu0
      %5092 = vmatprep.mubr.f32.mxu0 0.0
      %5093 = vmatmul.mubr.f32.gmra.mrb[0].mxu0 %v4381
      %v5094 = vpop.f32.mrb[0].mxu0
      %v5095 = vadd.f32 %v4406, %v5094
      %v5096 = vpop.f32.mrb[0].mxu0
      %5097 = vmatprep.mubr.f32.mxu0 0.0
      %5098 = vmatmul.mubr.f32.gmra.mrb[0].mxu0 %v4382
      %v5099 = vpop.f32.mrb[0].mxu0
      %v5100 = vadd.f32 %v4406, %v5099
      %v5101 = vpop.f32.mrb[0].mxu0
      %5102 = vmatprep.mubr.f32.mxu0 0.0
      %5103 = vmatmul.mubr.f32.gmra.mrb[0].mxu0 %v4383
      %v5104 = vpop.f32.mrb[0].mxu0
      %v5105 = vadd.f32 %v4406, %v5104
      %v5106 = vpop.f32.mrb[0].mxu0
      %5107 = vmatprep.mubr.f32.mxu0 0.0
      %5108 = vmatmul.mubr.f32.gmra.mrb[0].mxu0 %v4384
      %v5109 = vpop.f32.mrb[0].mxu0
      %v5110 = vadd.f32 %v4406, %v5109
      %v5111 = vpop.f32.mrb[0].mxu0
      %5112 = vdwg.mxu0
      %v5113 = vtanh.pop %v4475
      %v5114 = vtanh.pop %v4480
      %v5115 = vtanh.pop %v4485
      %v5116 = vtanh.pop %v4490
      %v5117 = vtanh.pop %v4495
      %v5118 = vtanh.pop %v4500
      %v5119 = vtanh.pop %v4505
      %v5120 = vtanh.pop %v4510
      %v5121 = vtanh.pop %v4515
      %v5122 = vtanh.pop %v4520
      %v5123 = vtanh.pop %v4525
      %v5124 = vtanh.pop %v4530
      %v5125 = vtanh.pop %v4535
      %v5126 = vtanh.pop %v4540
      %v5127 = vtanh.pop %v4545
      %v5128 = vtanh.pop %v4550
      %v5129 = vtanh.pop %v4555
      %v5130 = vtanh.pop %v4560
      %v5131 = vtanh.pop %v4565
      %v5132 = vtanh.pop %v4570
      %v5133 = vtanh.pop %v4575
      %v5134 = vtanh.pop %v4580
      %v5135 = vtanh.pop %v4585
      %v5136 = vtanh.pop %v4590
      %v5137 = vtanh.pop %v4595
      %v5138 = vtanh.pop %v4600
      %v5139 = vtanh.pop %v4605
      %v5140 = vtanh.pop %v4610
      %v5141 = vtanh.pop %v4615
      %v5142 = vtanh.pop %v4620
      %v5143 = vtanh.pop %v4625
      %v5144 = vtanh.pop %v4630
      %v5145 = vtanh.pop %v4635
      %v5146 = vtanh.pop %v4640
      %v5147 = vtanh.pop %v4645
      %v5148 = vtanh.pop %v4650
      %v5149 = vtanh.pop %v4655
      %v5150 = vtanh.pop %v4660
      %v5151 = vtanh.pop %v4665
      %v5152 = vtanh.pop %v4670
      %v5153 = vtanh.pop %v4675
      %v5154 = vtanh.pop %v4680
      %v5155 = vtanh.pop %v4685
      %v5156 = vtanh.pop %v4690
      %v5157 = vtanh.pop %v4695
      %v5158 = vtanh.pop %v4700
      %v5159 = vtanh.pop %v4705
      %v5160 = vtanh.pop %v4710
      %v5161 = vtanh.pop %v4715
      %v5162 = vtanh.pop %v4720
      %v5163 = vtanh.pop %v4725
      %v5164 = vtanh.pop %v4730
      %v5165 = vtanh.pop %v4735
      %v5166 = vtanh.pop %v4740
      %v5167 = vtanh.pop %v4745
      %v5168 = vtanh.pop %v4750
      %v5169 = vtanh.pop %v4755
      %v5170 = vtanh.pop %v4760
      %v5171 = vtanh.pop %v4765
      %v5172 = vtanh.pop %v4770
      %v5173 = vtanh.pop %v4775
      %v5174 = vtanh.pop %v4780
      %v5175 = vtanh.pop %v4785
      %v5176 = vtanh.pop %v4790
      %v5177 = vtanh.pop %v4795
      %v5178 = vtanh.pop %v4800
      %v5179 = vtanh.pop %v4805
      %v5180 = vtanh.pop %v4810
      %v5181 = vtanh.pop %v4815
      %v5182 = vtanh.pop %v4820
      %v5183 = vtanh.pop %v4825
      %v5184 = vtanh.pop %v4830
      %v5185 = vtanh.pop %v4835
      %v5186 = vtanh.pop %v4840
      %v5187 = vtanh.pop %v4845
      %v5188 = vtanh.pop %v4850
      %v5189 = vtanh.pop %v4855
      %v5190 = vtanh.pop %v4860
      %v5191 = vtanh.pop %v4865
      %v5192 = vtanh.pop %v4870
      %v5193 = vtanh.pop %v4875
      %v5194 = vtanh.pop %v4880
      %v5195 = vtanh.pop %v4885
      %v5196 = vtanh.pop %v4890
      %v5197 = vtanh.pop %v4895
      %v5198 = vtanh.pop %v4900
      %v5199 = vtanh.pop %v4905
      %v5200 = vtanh.pop %v4910
      %v5201 = vtanh.pop %v4915
      %v5202 = vtanh.pop %v4920
      %v5203 = vtanh.pop %v4925
      %v5204 = vtanh.pop %v4930
      %v5205 = vtanh.pop %v4935
      %v5206 = vtanh.pop %v4940
      %v5207 = vtanh.pop %v4945
      %v5208 = vtanh.pop %v4950
      %v5209 = vtanh.pop %v4955
      %v5210 = vtanh.pop %v4960
      %v5211 = vtanh.pop %v4965
      %v5212 = vtanh.pop %v4970
      %v5213 = vtanh.pop %v4975
      %v5214 = vtanh.pop %v4980
      %v5215 = vtanh.pop %v4985
      %v5216 = vtanh.pop %v4990
      %v5217 = vtanh.pop %v4995
      %v5218 = vtanh.pop %v5000
      %v5219 = vtanh.pop %v5005
      %v5220 = vtanh.pop %v5010
      %v5221 = vtanh.pop %v5015
      %v5222 = vtanh.pop %v5020
      %v5223 = vtanh.pop %v5025
      %v5224 = vtanh.pop %v5030
      %v5225 = vtanh.pop %v5035
      %v5226 = vtanh.pop %v5040
      %v5227 = vtanh.pop %v5045
      %v5228 = vtanh.pop %v5050
      %v5229 = vtanh.pop %v5055
      %v5230 = vtanh.pop %v5060
      %v5231 = vtanh.pop %v5065
      %v5232 = vtanh.pop %v5070
      %v5233 = vtanh.pop %v5075
      %v5234 = vtanh.pop %v5080
      %v5235 = vtanh.pop %v5085
      %v5236 = vtanh.pop %v5090
      %v5237 = vtanh.pop %v5095
      %v5238 = vtanh.pop %v5100
      %v5239 = vtanh.pop %v5105
      %v5240 = vtanh.pop %v5110
      %v5241 = vld [vmem:[%s10] sm:$0xff]
      %v5242 = vld [vmem:[%s10 + $0x8] sm:$0xff]
      %v5243 = vld [vmem:[%s10 + $0x10] sm:$0xff]
      %v5244 = vld [vmem:[%s10 + $0x18] sm:$0xff]
      %v5245 = vld [vmem:[%s10 + $0x20] sm:$0xff]
      %v5246 = vld [vmem:[%s10 + $0x28] sm:$0xff]
      %v5247 = vld [vmem:[%s10 + $0x30] sm:$0xff]
      %v5248 = vld [vmem:[%s10 + $0x38] sm:$0xff]
      %v5249 = vld [vmem:[%s10 + $0x40] sm:$0xff]
      %v5250 = vld [vmem:[%s10 + $0x48] sm:$0xff]
      %v5251 = vld [vmem:[%s10 + $0x50] sm:$0xff]
      %v5252 = vld [vmem:[%s10 + $0x58] sm:$0xff]
      %v5253 = vld [vmem:[%s10 + $0x60] sm:$0xff]
      %v5254 = vld [vmem:[%s10 + $0x68] sm:$0xff]
      %v5255 = vld [vmem:[%s10 + $0x70] sm:$0xff]
      %v5256 = vld [vmem:[%s10 + $0x78] sm:$0xff]
      %v5257 = vld [vmem:[%s11] sm:$0x1]
      %v5259 = vlaneseq
      %v5260 = vshrl.u32 %v5259, 7
      %v5261 = vsub.s32 0, %v5260
      %v5262 = vrot.slane %v5257, %v5261
      %5264 = vmatprep.subr.mxu0 0.0
      %5265 = vmatpush1.msra.mxu0 %v5241
      %5266 = vmatprep.subr.mxu0 0.0
      %5267 = vmatpush1.msra.mxu0 %v5242
      %5268 = vmatprep.subr.mxu0 0.0
      %5269 = vmatpush1.msra.mxu0 %v5243
      %5270 = vmatprep.subr.mxu0 0.0
      %5271 = vmatpush1.msra.mxu0 %v5244
      %5272 = vmatprep.subr.mxu0 0.0
      %5273 = vmatpush1.msra.mxu0 %v5245
      %5274 = vmatprep.subr.mxu0 0.0
      %5275 = vmatpush1.msra.mxu0 %v5246
      %5276 = vmatprep.subr.mxu0 0.0
      %5277 = vmatpush1.msra.mxu0 %v5247
      %5278 = vmatprep.subr.mxu0 0.0
      %5279 = vmatpush1.msra.mxu0 %v5248
      %5280 = vmatprep.subr.mxu0 0.0
      %5281 = vmatpush1.msra.mxu0 %v5249
      %5282 = vmatprep.subr.mxu0 0.0
      %5283 = vmatpush1.msra.mxu0 %v5250
      %5284 = vmatprep.subr.mxu0 0.0
      %5285 = vmatpush1.msra.mxu0 %v5251
      %5286 = vmatprep.subr.mxu0 0.0
      %5287 = vmatpush1.msra.mxu0 %v5252
      %5288 = vmatprep.subr.mxu0 0.0
      %5289 = vmatpush1.msra.mxu0 %v5253
      %5290 = vmatprep.subr.mxu0 0.0
      %5291 = vmatpush1.msra.mxu0 %v5254
      %5292 = vmatprep.subr.mxu0 0.0
      %5293 = vmatpush1.msra.mxu0 %v5255
      %5294 = vmatprep.subr.mxu0 0.0
      %5295 = vmatpush1.msra.mxu0 %v5256
      %5296 = vmatprep.subr.mxu0 0.0
      %5297 = vmatpush1.msra.mxu0 0.0
      %5298 = vmatprep.subr.mxu0 0.0
      %5299 = vmatpush1.msra.mxu0 0.0
      %5300 = vmatprep.subr.mxu0 0.0
      %5301 = vmatpush1.msra.mxu0 0.0
      %5302 = vmatprep.subr.mxu0 0.0
      %5303 = vmatpush1.msra.mxu0 0.0
      %5304 = vmatprep.subr.mxu0 0.0
      %5305 = vmatpush1.msra.mxu0 0.0
      %5306 = vmatprep.subr.mxu0 0.0
      %5307 = vmatpush1.msra.mxu0 0.0
      %5308 = vmatprep.subr.mxu0 0.0
      %5309 = vmatpush1.msra.mxu0 0.0
      %5310 = vmatprep.subr.mxu0 0.0
      %5311 = vmatpush1.msra.mxu0 0.0
      %5312 = vmatprep.subr.mxu0 0.0
      %5313 = vmatpush1.msra.mxu0 0.0
      %5314 = vmatprep.subr.mxu0 0.0
      %5315 = vmatpush1.msra.mxu0 0.0
      %5316 = vmatprep.subr.mxu0 0.0
      %5317 = vmatpush1.msra.mxu0 0.0
      %5318 = vmatprep.subr.mxu0 0.0
      %5319 = vmatpush1.msra.mxu0 0.0
      %5320 = vmatprep.subr.mxu0 0.0
      %5321 = vmatpush1.msra.mxu0 0.0
      %5322 = vmatprep.subr.mxu0 0.0
      %5323 = vmatpush1.msra.mxu0 0.0
      %5324 = vmatprep.subr.mxu0 0.0
      %5325 = vmatpush1.msra.mxu0 0.0
      %5326 = vmatprep.subr.mxu0 0.0
      %5327 = vmatpush1.msra.mxu0 0.0
      %5328 = vmatprep.mubr.f32.mxu0 0.0
      %5329 = vmatmul.mubr.f32.gmra.mrb[0].mxu0 %v5113
      %v5330 = vpop.f32.mrb[0].mxu0
      %v5331 = vadd.f32 %v5262, %v5330
      %v5332 = vpop.f32.mrb[0].mxu0
      %5333 = vmatprep.mubr.f32.mxu0 0.0
      %5334 = vmatmul.mubr.f32.gmra.mrb[0].mxu0 %v5114
      %v5335 = vpop.f32.mrb[0].mxu0
      %v5336 = vadd.f32 %v5262, %v5335
      %v5337 = vpop.f32.mrb[0].mxu0
      %5338 = vmatprep.mubr.f32.mxu0 0.0
      %5339 = vmatmul.mubr.f32.gmra.mrb[0].mxu0 %v5115
      %v5340 = vpop.f32.mrb[0].mxu0
      %v5341 = vadd.f32 %v5262, %v5340
      %v5342 = vpop.f32.mrb[0].mxu0
      %5343 = vmatprep.mubr.f32.mxu0 0.0
      %5344 = vmatmul.mubr.f32.gmra.mrb[0].mxu0 %v5116
      %v5345 = vpop.f32.mrb[0].mxu0
      %v5346 = vadd.f32 %v5262, %v5345
      %v5347 = vpop.f32.mrb[0].mxu0
      %5348 = vmatprep.mubr.f32.mxu0 0.0
      %5349 = vmatmul.mubr.f32.gmra.mrb[0].mxu0 %v5117
      %v5350 = vpop.f32.mrb[0].mxu0
      %v5351 = vadd.f32 %v5262, %v5350
      %v5352 = vpop.f32.mrb[0].mxu0
      %5353 = vmatprep.mubr.f32.mxu0 0.0
      %5354 = vmatmul.mubr.f32.gmra.mrb[0].mxu0 %v5118
      %v5355 = vpop.f32.mrb[0].mxu0
      %v5356 = vadd.f32 %v5262, %v5355
      %v5357 = vpop.f32.mrb[0].mxu0
      %5358 = vmatprep.mubr.f32.mxu0 0.0
      %5359 = vmatmul.mubr.f32.gmra.mrb[0].mxu0 %v5119
      %v5360 = vpop.f32.mrb[0].mxu0
      %v5361 = vadd.f32 %v5262, %v5360
      %v5362 = vpop.f32.mrb[0].mxu0
      %5363 = vmatprep.mubr.f32.mxu0 0.0
      %5364 = vmatmul.mubr.f32.gmra.mrb[0].mxu0 %v5120
      %v5365 = vpop.f32.mrb[0].mxu0
      %v5366 = vadd.f32 %v5262, %v5365
      %v5367 = vpop.f32.mrb[0].mxu0
      %5368 = vmatprep.mubr.f32.mxu0 0.0
      %5369 = vmatmul.mubr.f32.gmra.mrb[0].mxu0 %v5121
      %v5370 = vpop.f32.mrb[0].mxu0
      %v5371 = vadd.f32 %v5262, %v5370
      %v5372 = vpop.f32.mrb[0].mxu0
      %5373 = vmatprep.mubr.f32.mxu0 0.0
      %5374 = vmatmul.mubr.f32.gmra.mrb[0].mxu0 %v5122
      %v5375 = vpop.f32.mrb[0].mxu0
      %v5376 = vadd.f32 %v5262, %v5375
      %v5377 = vpop.f32.mrb[0].mxu0
      %5378 = vmatprep.mubr.f32.mxu0 0.0
      %5379 = vmatmul.mubr.f32.gmra.mrb[0].mxu0 %v5123
      %v5380 = vpop.f32.mrb[0].mxu0
      %v5381 = vadd.f32 %v5262, %v5380
      %v5382 = vpop.f32.mrb[0].mxu0
      %5383 = vmatprep.mubr.f32.mxu0 0.0
      %5384 = vmatmul.mubr.f32.gmra.mrb[0].mxu0 %v5124
      %v5385 = vpop.f32.mrb[0].mxu0
      %v5386 = vadd.f32 %v5262, %v5385
      %v5387 = vpop.f32.mrb[0].mxu0
      %5388 = vmatprep.mubr.f32.mxu0 0.0
      %5389 = vmatmul.mubr.f32.gmra.mrb[0].mxu0 %v5125
      %v5390 = vpop.f32.mrb[0].mxu0
      %v5391 = vadd.f32 %v5262, %v5390
      %v5392 = vpop.f32.mrb[0].mxu0
      %5393 = vmatprep.mubr.f32.mxu0 0.0
      %5394 = vmatmul.mubr.f32.gmra.mrb[0].mxu0 %v5126
      %v5395 = vpop.f32.mrb[0].mxu0
      %v5396 = vadd.f32 %v5262, %v5395
      %v5397 = vpop.f32.mrb[0].mxu0
      %5398 = vmatprep.mubr.f32.mxu0 0.0
      %5399 = vmatmul.mubr.f32.gmra.mrb[0].mxu0 %v5127
      %v5400 = vpop.f32.mrb[0].mxu0
      %v5401 = vadd.f32 %v5262, %v5400
      %v5402 = vpop.f32.mrb[0].mxu0
      %5403 = vmatprep.mubr.f32.mxu0 0.0
      %5404 = vmatmul.mubr.f32.gmra.mrb[0].mxu0 %v5128
      %v5405 = vpop.f32.mrb[0].mxu0
      %v5406 = vadd.f32 %v5262, %v5405
      %v5407 = vpop.f32.mrb[0].mxu0
      %5408 = vmatprep.mubr.f32.mxu0 0.0
      %5409 = vmatmul.mubr.f32.gmra.mrb[0].mxu0 %v5129
      %v5410 = vpop.f32.mrb[0].mxu0
      %v5411 = vadd.f32 %v5262, %v5410
      %v5412 = vpop.f32.mrb[0].mxu0
      %5413 = vmatprep.mubr.f32.mxu0 0.0
      %5414 = vmatmul.mubr.f32.gmra.mrb[0].mxu0 %v5130
      %v5415 = vpop.f32.mrb[0].mxu0
      %v5416 = vadd.f32 %v5262, %v5415
      %v5417 = vpop.f32.mrb[0].mxu0
      %5418 = vmatprep.mubr.f32.mxu0 0.0
      %5419 = vmatmul.mubr.f32.gmra.mrb[0].mxu0 %v5131
      %v5420 = vpop.f32.mrb[0].mxu0
      %v5421 = vadd.f32 %v5262, %v5420
      %v5422 = vpop.f32.mrb[0].mxu0
      %5423 = vmatprep.mubr.f32.mxu0 0.0
      %5424 = vmatmul.mubr.f32.gmra.mrb[0].mxu0 %v5132
      %v5425 = vpop.f32.mrb[0].mxu0
      %v5426 = vadd.f32 %v5262, %v5425
      %v5427 = vpop.f32.mrb[0].mxu0
      %5428 = vmatprep.mubr.f32.mxu0 0.0
      %5429 = vmatmul.mubr.f32.gmra.mrb[0].mxu0 %v5133
      %v5430 = vpop.f32.mrb[0].mxu0
      %v5431 = vadd.f32 %v5262, %v5430
      %v5432 = vpop.f32.mrb[0].mxu0
      %5433 = vmatprep.mubr.f32.mxu0 0.0
      %5434 = vmatmul.mubr.f32.gmra.mrb[0].mxu0 %v5134
      %v5435 = vpop.f32.mrb[0].mxu0
      %v5436 = vadd.f32 %v5262, %v5435
      %v5437 = vpop.f32.mrb[0].mxu0
      %5438 = vmatprep.mubr.f32.mxu0 0.0
      %5439 = vmatmul.mubr.f32.gmra.mrb[0].mxu0 %v5135
      %v5440 = vpop.f32.mrb[0].mxu0
      %v5441 = vadd.f32 %v5262, %v5440
      %v5442 = vpop.f32.mrb[0].mxu0
      %5443 = vmatprep.mubr.f32.mxu0 0.0
      %5444 = vmatmul.mubr.f32.gmra.mrb[0].mxu0 %v5136
      %v5445 = vpop.f32.mrb[0].mxu0
      %v5446 = vadd.f32 %v5262, %v5445
      %v5447 = vpop.f32.mrb[0].mxu0
      %5448 = vmatprep.mubr.f32.mxu0 0.0
      %5449 = vmatmul.mubr.f32.gmra.mrb[0].mxu0 %v5137
      %v5450 = vpop.f32.mrb[0].mxu0
      %v5451 = vadd.f32 %v5262, %v5450
      %v5452 = vpop.f32.mrb[0].mxu0
      %5453 = vmatprep.mubr.f32.mxu0 0.0
      %5454 = vmatmul.mubr.f32.gmra.mrb[0].mxu0 %v5138
      %v5455 = vpop.f32.mrb[0].mxu0
      %v5456 = vadd.f32 %v5262, %v5455
      %v5457 = vpop.f32.mrb[0].mxu0
      %5458 = vmatprep.mubr.f32.mxu0 0.0
      %5459 = vmatmul.mubr.f32.gmra.mrb[0].mxu0 %v5139
      %v5460 = vpop.f32.mrb[0].mxu0
      %v5461 = vadd.f32 %v5262, %v5460
      %v5462 = vpop.f32.mrb[0].mxu0
      %5463 = vmatprep.mubr.f32.mxu0 0.0
      %5464 = vmatmul.mubr.f32.gmra.mrb[0].mxu0 %v5140
      %v5465 = vpop.f32.mrb[0].mxu0
      %v5466 = vadd.f32 %v5262, %v5465
      %v5467 = vpop.f32.mrb[0].mxu0
      %5468 = vmatprep.mubr.f32.mxu0 0.0
      %5469 = vmatmul.mubr.f32.gmra.mrb[0].mxu0 %v5141
      %v5470 = vpop.f32.mrb[0].mxu0
      %v5471 = vadd.f32 %v5262, %v5470
      %v5472 = vpop.f32.mrb[0].mxu0
      %5473 = vmatprep.mubr.f32.mxu0 0.0
      %5474 = vmatmul.mubr.f32.gmra.mrb[0].mxu0 %v5142
      %v5475 = vpop.f32.mrb[0].mxu0
      %v5476 = vadd.f32 %v5262, %v5475
      %v5477 = vpop.f32.mrb[0].mxu0
      %5478 = vmatprep.mubr.f32.mxu0 0.0
      %5479 = vmatmul.mubr.f32.gmra.mrb[0].mxu0 %v5143
      %v5480 = vpop.f32.mrb[0].mxu0
      %v5481 = vadd.f32 %v5262, %v5480
      %v5482 = vpop.f32.mrb[0].mxu0
      %5483 = vmatprep.mubr.f32.mxu0 0.0
      %5484 = vmatmul.mubr.f32.gmra.mrb[0].mxu0 %v5144
      %v5485 = vpop.f32.mrb[0].mxu0
      %v5486 = vadd.f32 %v5262, %v5485
      %v5487 = vpop.f32.mrb[0].mxu0
      %5488 = vmatprep.mubr.f32.mxu0 0.0
      %5489 = vmatmul.mubr.f32.gmra.mrb[0].mxu0 %v5145
      %v5490 = vpop.f32.mrb[0].mxu0
      %v5491 = vadd.f32 %v5262, %v5490
      %v5492 = vpop.f32.mrb[0].mxu0
      %5493 = vmatprep.mubr.f32.mxu0 0.0
      %5494 = vmatmul.mubr.f32.gmra.mrb[0].mxu0 %v5146
      %v5495 = vpop.f32.mrb[0].mxu0
      %v5496 = vadd.f32 %v5262, %v5495
      %v5497 = vpop.f32.mrb[0].mxu0
      %5498 = vmatprep.mubr.f32.mxu0 0.0
      %5499 = vmatmul.mubr.f32.gmra.mrb[0].mxu0 %v5147
      %v5500 = vpop.f32.mrb[0].mxu0
      %v5501 = vadd.f32 %v5262, %v5500
      %v5502 = vpop.f32.mrb[0].mxu0
      %5503 = vmatprep.mubr.f32.mxu0 0.0
      %5504 = vmatmul.mubr.f32.gmra.mrb[0].mxu0 %v5148
      %v5505 = vpop.f32.mrb[0].mxu0
      %v5506 = vadd.f32 %v5262, %v5505
      %v5507 = vpop.f32.mrb[0].mxu0
      %5508 = vmatprep.mubr.f32.mxu0 0.0
      %5509 = vmatmul.mubr.f32.gmra.mrb[0].mxu0 %v5149
      %v5510 = vpop.f32.mrb[0].mxu0
      %v5511 = vadd.f32 %v5262, %v5510
      %v5512 = vpop.f32.mrb[0].mxu0
      %5513 = vmatprep.mubr.f32.mxu0 0.0
      %5514 = vmatmul.mubr.f32.gmra.mrb[0].mxu0 %v5150
      %v5515 = vpop.f32.mrb[0].mxu0
      %v5516 = vadd.f32 %v5262, %v5515
      %v5517 = vpop.f32.mrb[0].mxu0
      %5518 = vmatprep.mubr.f32.mxu0 0.0
      %5519 = vmatmul.mubr.f32.gmra.mrb[0].mxu0 %v5151
      %v5520 = vpop.f32.mrb[0].mxu0
      %v5521 = vadd.f32 %v5262, %v5520
      %v5522 = vpop.f32.mrb[0].mxu0
      %5523 = vmatprep.mubr.f32.mxu0 0.0
      %5524 = vmatmul.mubr.f32.gmra.mrb[0].mxu0 %v5152
      %v5525 = vpop.f32.mrb[0].mxu0
      %v5526 = vadd.f32 %v5262, %v5525
      %v5527 = vpop.f32.mrb[0].mxu0
      %5528 = vmatprep.mubr.f32.mxu0 0.0
      %5529 = vmatmul.mubr.f32.gmra.mrb[0].mxu0 %v5153
      %v5530 = vpop.f32.mrb[0].mxu0
      %v5531 = vadd.f32 %v5262, %v5530
      %v5532 = vpop.f32.mrb[0].mxu0
      %5533 = vmatprep.mubr.f32.mxu0 0.0
      %5534 = vmatmul.mubr.f32.gmra.mrb[0].mxu0 %v5154
      %v5535 = vpop.f32.mrb[0].mxu0
      %v5536 = vadd.f32 %v5262, %v5535
      %v5537 = vpop.f32.mrb[0].mxu0
      %5538 = vmatprep.mubr.f32.mxu0 0.0
      %5539 = vmatmul.mubr.f32.gmra.mrb[0].mxu0 %v5155
      %v5540 = vpop.f32.mrb[0].mxu0
      %v5541 = vadd.f32 %v5262, %v5540
      %v5542 = vpop.f32.mrb[0].mxu0
      %5543 = vmatprep.mubr.f32.mxu0 0.0
      %5544 = vmatmul.mubr.f32.gmra.mrb[0].mxu0 %v5156
      %v5545 = vpop.f32.mrb[0].mxu0
      %v5546 = vadd.f32 %v5262, %v5545
      %v5547 = vpop.f32.mrb[0].mxu0
      %5548 = vmatprep.mubr.f32.mxu0 0.0
      %5549 = vmatmul.mubr.f32.gmra.mrb[0].mxu0 %v5157
      %v5550 = vpop.f32.mrb[0].mxu0
      %v5551 = vadd.f32 %v5262, %v5550
      %v5552 = vpop.f32.mrb[0].mxu0
      %5553 = vmatprep.mubr.f32.mxu0 0.0
      %5554 = vmatmul.mubr.f32.gmra.mrb[0].mxu0 %v5158
      %v5555 = vpop.f32.mrb[0].mxu0
      %v5556 = vadd.f32 %v5262, %v5555
      %v5557 = vpop.f32.mrb[0].mxu0
      %5558 = vmatprep.mubr.f32.mxu0 0.0
      %5559 = vmatmul.mubr.f32.gmra.mrb[0].mxu0 %v5159
      %v5560 = vpop.f32.mrb[0].mxu0
      %v5561 = vadd.f32 %v5262, %v5560
      %v5562 = vpop.f32.mrb[0].mxu0
      %5563 = vmatprep.mubr.f32.mxu0 0.0
      %5564 = vmatmul.mubr.f32.gmra.mrb[0].mxu0 %v5160
      %v5565 = vpop.f32.mrb[0].mxu0
      %v5566 = vadd.f32 %v5262, %v5565
      %v5567 = vpop.f32.mrb[0].mxu0
      %5568 = vmatprep.mubr.f32.mxu0 0.0
      %5569 = vmatmul.mubr.f32.gmra.mrb[0].mxu0 %v5161
      %v5570 = vpop.f32.mrb[0].mxu0
      %v5571 = vadd.f32 %v5262, %v5570
      %v5572 = vpop.f32.mrb[0].mxu0
      %5573 = vmatprep.mubr.f32.mxu0 0.0
      %5574 = vmatmul.mubr.f32.gmra.mrb[0].mxu0 %v5162
      %v5575 = vpop.f32.mrb[0].mxu0
      %v5576 = vadd.f32 %v5262, %v5575
      %v5577 = vpop.f32.mrb[0].mxu0
      %5578 = vmatprep.mubr.f32.mxu0 0.0
      %5579 = vmatmul.mubr.f32.gmra.mrb[0].mxu0 %v5163
      %v5580 = vpop.f32.mrb[0].mxu0
      %v5581 = vadd.f32 %v5262, %v5580
      %v5582 = vpop.f32.mrb[0].mxu0
      %5583 = vmatprep.mubr.f32.mxu0 0.0
      %5584 = vmatmul.mubr.f32.gmra.mrb[0].mxu0 %v5164
      %v5585 = vpop.f32.mrb[0].mxu0
      %v5586 = vadd.f32 %v5262, %v5585
      %v5587 = vpop.f32.mrb[0].mxu0
      %5588 = vmatprep.mubr.f32.mxu0 0.0
      %5589 = vmatmul.mubr.f32.gmra.mrb[0].mxu0 %v5165
      %v5590 = vpop.f32.mrb[0].mxu0
      %v5591 = vadd.f32 %v5262, %v5590
      %v5592 = vpop.f32.mrb[0].mxu0
      %5593 = vmatprep.mubr.f32.mxu0 0.0
      %5594 = vmatmul.mubr.f32.gmra.mrb[0].mxu0 %v5166
      %v5595 = vpop.f32.mrb[0].mxu0
      %v5596 = vadd.f32 %v5262, %v5595
      %v5597 = vpop.f32.mrb[0].mxu0
      %5598 = vmatprep.mubr.f32.mxu0 0.0
      %5599 = vmatmul.mubr.f32.gmra.mrb[0].mxu0 %v5167
      %v5600 = vpop.f32.mrb[0].mxu0
      %v5601 = vadd.f32 %v5262, %v5600
      %v5602 = vpop.f32.mrb[0].mxu0
      %5603 = vmatprep.mubr.f32.mxu0 0.0
      %5604 = vmatmul.mubr.f32.gmra.mrb[0].mxu0 %v5168
      %v5605 = vpop.f32.mrb[0].mxu0
      %v5606 = vadd.f32 %v5262, %v5605
      %v5607 = vpop.f32.mrb[0].mxu0
      %5608 = vmatprep.mubr.f32.mxu0 0.0
      %5609 = vmatmul.mubr.f32.gmra.mrb[0].mxu0 %v5169
      %v5610 = vpop.f32.mrb[0].mxu0
      %v5611 = vadd.f32 %v5262, %v5610
      %v5612 = vpop.f32.mrb[0].mxu0
      %5613 = vmatprep.mubr.f32.mxu0 0.0
      %5614 = vmatmul.mubr.f32.gmra.mrb[0].mxu0 %v5170
      %v5615 = vpop.f32.mrb[0].mxu0
      %v5616 = vadd.f32 %v5262, %v5615
      %v5617 = vpop.f32.mrb[0].mxu0
      %5618 = vmatprep.mubr.f32.mxu0 0.0
      %5619 = vmatmul.mubr.f32.gmra.mrb[0].mxu0 %v5171
      %v5620 = vpop.f32.mrb[0].mxu0
      %v5621 = vadd.f32 %v5262, %v5620
      %v5622 = vpop.f32.mrb[0].mxu0
      %5623 = vmatprep.mubr.f32.mxu0 0.0
      %5624 = vmatmul.mubr.f32.gmra.mrb[0].mxu0 %v5172
      %v5625 = vpop.f32.mrb[0].mxu0
      %v5626 = vadd.f32 %v5262, %v5625
      %v5627 = vpop.f32.mrb[0].mxu0
      %5628 = vmatprep.mubr.f32.mxu0 0.0
      %5629 = vmatmul.mubr.f32.gmra.mrb[0].mxu0 %v5173
      %v5630 = vpop.f32.mrb[0].mxu0
      %v5631 = vadd.f32 %v5262, %v5630
      %v5632 = vpop.f32.mrb[0].mxu0
      %5633 = vmatprep.mubr.f32.mxu0 0.0
      %5634 = vmatmul.mubr.f32.gmra.mrb[0].mxu0 %v5174
      %v5635 = vpop.f32.mrb[0].mxu0
      %v5636 = vadd.f32 %v5262, %v5635
      %v5637 = vpop.f32.mrb[0].mxu0
      %5638 = vmatprep.mubr.f32.mxu0 0.0
      %5639 = vmatmul.mubr.f32.gmra.mrb[0].mxu0 %v5175
      %v5640 = vpop.f32.mrb[0].mxu0
      %v5641 = vadd.f32 %v5262, %v5640
      %v5642 = vpop.f32.mrb[0].mxu0
      %5643 = vmatprep.mubr.f32.mxu0 0.0
      %5644 = vmatmul.mubr.f32.gmra.mrb[0].mxu0 %v5176
      %v5645 = vpop.f32.mrb[0].mxu0
      %v5646 = vadd.f32 %v5262, %v5645
      %v5647 = vpop.f32.mrb[0].mxu0
      %5648 = vmatprep.mubr.f32.mxu0 0.0
      %5649 = vmatmul.mubr.f32.gmra.mrb[0].mxu0 %v5177
      %v5650 = vpop.f32.mrb[0].mxu0
      %v5651 = vadd.f32 %v5262, %v5650
      %v5652 = vpop.f32.mrb[0].mxu0
      %5653 = vmatprep.mubr.f32.mxu0 0.0
      %5654 = vmatmul.mubr.f32.gmra.mrb[0].mxu0 %v5178
      %v5655 = vpop.f32.mrb[0].mxu0
      %v5656 = vadd.f32 %v5262, %v5655
      %v5657 = vpop.f32.mrb[0].mxu0
      %5658 = vmatprep.mubr.f32.mxu0 0.0
      %5659 = vmatmul.mubr.f32.gmra.mrb[0].mxu0 %v5179
      %v5660 = vpop.f32.mrb[0].mxu0
      %v5661 = vadd.f32 %v5262, %v5660
      %v5662 = vpop.f32.mrb[0].mxu0
      %5663 = vmatprep.mubr.f32.mxu0 0.0
      %5664 = vmatmul.mubr.f32.gmra.mrb[0].mxu0 %v5180
      %v5665 = vpop.f32.mrb[0].mxu0
      %v5666 = vadd.f32 %v5262, %v5665
      %v5667 = vpop.f32.mrb[0].mxu0
      %5668 = vmatprep.mubr.f32.mxu0 0.0
      %5669 = vmatmul.mubr.f32.gmra.mrb[0].mxu0 %v5181
      %v5670 = vpop.f32.mrb[0].mxu0
      %v5671 = vadd.f32 %v5262, %v5670
      %v5672 = vpop.f32.mrb[0].mxu0
      %5673 = vmatprep.mubr.f32.mxu0 0.0
      %5674 = vmatmul.mubr.f32.gmra.mrb[0].mxu0 %v5182
      %v5675 = vpop.f32.mrb[0].mxu0
      %v5676 = vadd.f32 %v5262, %v5675
      %v5677 = vpop.f32.mrb[0].mxu0
      %5678 = vmatprep.mubr.f32.mxu0 0.0
      %5679 = vmatmul.mubr.f32.gmra.mrb[0].mxu0 %v5183
      %v5680 = vpop.f32.mrb[0].mxu0
      %v5681 = vadd.f32 %v5262, %v5680
      %v5682 = vpop.f32.mrb[0].mxu0
      %5683 = vmatprep.mubr.f32.mxu0 0.0
      %5684 = vmatmul.mubr.f32.gmra.mrb[0].mxu0 %v5184
      %v5685 = vpop.f32.mrb[0].mxu0
      %v5686 = vadd.f32 %v5262, %v5685
      %v5687 = vpop.f32.mrb[0].mxu0
      %5688 = vmatprep.mubr.f32.mxu0 0.0
      %5689 = vmatmul.mubr.f32.gmra.mrb[0].mxu0 %v5185
      %v5690 = vpop.f32.mrb[0].mxu0
      %v5691 = vadd.f32 %v5262, %v5690
      %v5692 = vpop.f32.mrb[0].mxu0
      %5693 = vmatprep.mubr.f32.mxu0 0.0
      %5694 = vmatmul.mubr.f32.gmra.mrb[0].mxu0 %v5186
      %v5695 = vpop.f32.mrb[0].mxu0
      %v5696 = vadd.f32 %v5262, %v5695
      %v5697 = vpop.f32.mrb[0].mxu0
      %5698 = vmatprep.mubr.f32.mxu0 0.0
      %5699 = vmatmul.mubr.f32.gmra.mrb[0].mxu0 %v5187
      %v5700 = vpop.f32.mrb[0].mxu0
      %v5701 = vadd.f32 %v5262, %v5700
      %v5702 = vpop.f32.mrb[0].mxu0
      %5703 = vmatprep.mubr.f32.mxu0 0.0
      %5704 = vmatmul.mubr.f32.gmra.mrb[0].mxu0 %v5188
      %v5705 = vpop.f32.mrb[0].mxu0
      %v5706 = vadd.f32 %v5262, %v5705
      %v5707 = vpop.f32.mrb[0].mxu0
      %5708 = vmatprep.mubr.f32.mxu0 0.0
      %5709 = vmatmul.mubr.f32.gmra.mrb[0].mxu0 %v5189
      %v5710 = vpop.f32.mrb[0].mxu0
      %v5711 = vadd.f32 %v5262, %v5710
      %v5712 = vpop.f32.mrb[0].mxu0
      %5713 = vmatprep.mubr.f32.mxu0 0.0
      %5714 = vmatmul.mubr.f32.gmra.mrb[0].mxu0 %v5190
      %v5715 = vpop.f32.mrb[0].mxu0
      %v5716 = vadd.f32 %v5262, %v5715
      %v5717 = vpop.f32.mrb[0].mxu0
      %5718 = vmatprep.mubr.f32.mxu0 0.0
      %5719 = vmatmul.mubr.f32.gmra.mrb[0].mxu0 %v5191
      %v5720 = vpop.f32.mrb[0].mxu0
      %v5721 = vadd.f32 %v5262, %v5720
      %v5722 = vpop.f32.mrb[0].mxu0
      %5723 = vmatprep.mubr.f32.mxu0 0.0
      %5724 = vmatmul.mubr.f32.gmra.mrb[0].mxu0 %v5192
      %v5725 = vpop.f32.mrb[0].mxu0
      %v5726 = vadd.f32 %v5262, %v5725
      %v5727 = vpop.f32.mrb[0].mxu0
      %5728 = vmatprep.mubr.f32.mxu0 0.0
      %5729 = vmatmul.mubr.f32.gmra.mrb[0].mxu0 %v5193
      %v5730 = vpop.f32.mrb[0].mxu0
      %v5731 = vadd.f32 %v5262, %v5730
      %v5732 = vpop.f32.mrb[0].mxu0
      %5733 = vmatprep.mubr.f32.mxu0 0.0
      %5734 = vmatmul.mubr.f32.gmra.mrb[0].mxu0 %v5194
      %v5735 = vpop.f32.mrb[0].mxu0
      %v5736 = vadd.f32 %v5262, %v5735
      %v5737 = vpop.f32.mrb[0].mxu0
      %5738 = vmatprep.mubr.f32.mxu0 0.0
      %5739 = vmatmul.mubr.f32.gmra.mrb[0].mxu0 %v5195
      %v5740 = vpop.f32.mrb[0].mxu0
      %v5741 = vadd.f32 %v5262, %v5740
      %v5742 = vpop.f32.mrb[0].mxu0
      %5743 = vmatprep.mubr.f32.mxu0 0.0
      %5744 = vmatmul.mubr.f32.gmra.mrb[0].mxu0 %v5196
      %v5745 = vpop.f32.mrb[0].mxu0
      %v5746 = vadd.f32 %v5262, %v5745
      %v5747 = vpop.f32.mrb[0].mxu0
      %5748 = vmatprep.mubr.f32.mxu0 0.0
      %5749 = vmatmul.mubr.f32.gmra.mrb[0].mxu0 %v5197
      %v5750 = vpop.f32.mrb[0].mxu0
      %v5751 = vadd.f32 %v5262, %v5750
      %v5752 = vpop.f32.mrb[0].mxu0
      %5753 = vmatprep.mubr.f32.mxu0 0.0
      %5754 = vmatmul.mubr.f32.gmra.mrb[0].mxu0 %v5198
      %v5755 = vpop.f32.mrb[0].mxu0
      %v5756 = vadd.f32 %v5262, %v5755
      %v5757 = vpop.f32.mrb[0].mxu0
      %5758 = vmatprep.mubr.f32.mxu0 0.0
      %5759 = vmatmul.mubr.f32.gmra.mrb[0].mxu0 %v5199
      %v5760 = vpop.f32.mrb[0].mxu0
      %v5761 = vadd.f32 %v5262, %v5760
      %v5762 = vpop.f32.mrb[0].mxu0
      %5763 = vmatprep.mubr.f32.mxu0 0.0
      %5764 = vmatmul.mubr.f32.gmra.mrb[0].mxu0 %v5200
      %v5765 = vpop.f32.mrb[0].mxu0
      %v5766 = vadd.f32 %v5262, %v5765
      %v5767 = vpop.f32.mrb[0].mxu0
      %5768 = vmatprep.mubr.f32.mxu0 0.0
      %5769 = vmatmul.mubr.f32.gmra.mrb[0].mxu0 %v5201
      %v5770 = vpop.f32.mrb[0].mxu0
      %v5771 = vadd.f32 %v5262, %v5770
      %v5772 = vpop.f32.mrb[0].mxu0
      %5773 = vmatprep.mubr.f32.mxu0 0.0
      %5774 = vmatmul.mubr.f32.gmra.mrb[0].mxu0 %v5202
      %v5775 = vpop.f32.mrb[0].mxu0
      %v5776 = vadd.f32 %v5262, %v5775
      %v5777 = vpop.f32.mrb[0].mxu0
      %5778 = vmatprep.mubr.f32.mxu0 0.0
      %5779 = vmatmul.mubr.f32.gmra.mrb[0].mxu0 %v5203
      %v5780 = vpop.f32.mrb[0].mxu0
      %v5781 = vadd.f32 %v5262, %v5780
      %v5782 = vpop.f32.mrb[0].mxu0
      %5783 = vmatprep.mubr.f32.mxu0 0.0
      %5784 = vmatmul.mubr.f32.gmra.mrb[0].mxu0 %v5204
      %v5785 = vpop.f32.mrb[0].mxu0
      %v5786 = vadd.f32 %v5262, %v5785
      %v5787 = vpop.f32.mrb[0].mxu0
      %5788 = vmatprep.mubr.f32.mxu0 0.0
      %5789 = vmatmul.mubr.f32.gmra.mrb[0].mxu0 %v5205
      %v5790 = vpop.f32.mrb[0].mxu0
      %v5791 = vadd.f32 %v5262, %v5790
      %v5792 = vpop.f32.mrb[0].mxu0
      %5793 = vmatprep.mubr.f32.mxu0 0.0
      %5794 = vmatmul.mubr.f32.gmra.mrb[0].mxu0 %v5206
      %v5795 = vpop.f32.mrb[0].mxu0
      %v5796 = vadd.f32 %v5262, %v5795
      %v5797 = vpop.f32.mrb[0].mxu0
      %5798 = vmatprep.mubr.f32.mxu0 0.0
      %5799 = vmatmul.mubr.f32.gmra.mrb[0].mxu0 %v5207
      %v5800 = vpop.f32.mrb[0].mxu0
      %v5801 = vadd.f32 %v5262, %v5800
      %v5802 = vpop.f32.mrb[0].mxu0
      %5803 = vmatprep.mubr.f32.mxu0 0.0
      %5804 = vmatmul.mubr.f32.gmra.mrb[0].mxu0 %v5208
      %v5805 = vpop.f32.mrb[0].mxu0
      %v5806 = vadd.f32 %v5262, %v5805
      %v5807 = vpop.f32.mrb[0].mxu0
      %5808 = vmatprep.mubr.f32.mxu0 0.0
      %5809 = vmatmul.mubr.f32.gmra.mrb[0].mxu0 %v5209
      %v5810 = vpop.f32.mrb[0].mxu0
      %v5811 = vadd.f32 %v5262, %v5810
      %v5812 = vpop.f32.mrb[0].mxu0
      %5813 = vmatprep.mubr.f32.mxu0 0.0
      %5814 = vmatmul.mubr.f32.gmra.mrb[0].mxu0 %v5210
      %v5815 = vpop.f32.mrb[0].mxu0
      %v5816 = vadd.f32 %v5262, %v5815
      %v5817 = vpop.f32.mrb[0].mxu0
      %5818 = vmatprep.mubr.f32.mxu0 0.0
      %5819 = vmatmul.mubr.f32.gmra.mrb[0].mxu0 %v5211
      %v5820 = vpop.f32.mrb[0].mxu0
      %v5821 = vadd.f32 %v5262, %v5820
      %v5822 = vpop.f32.mrb[0].mxu0
      %5823 = vmatprep.mubr.f32.mxu0 0.0
      %5824 = vmatmul.mubr.f32.gmra.mrb[0].mxu0 %v5212
      %v5825 = vpop.f32.mrb[0].mxu0
      %v5826 = vadd.f32 %v5262, %v5825
      %v5827 = vpop.f32.mrb[0].mxu0
      %5828 = vmatprep.mubr.f32.mxu0 0.0
      %5829 = vmatmul.mubr.f32.gmra.mrb[0].mxu0 %v5213
      %v5830 = vpop.f32.mrb[0].mxu0
      %v5831 = vadd.f32 %v5262, %v5830
      %v5832 = vpop.f32.mrb[0].mxu0
      %5833 = vmatprep.mubr.f32.mxu0 0.0
      %5834 = vmatmul.mubr.f32.gmra.mrb[0].mxu0 %v5214
      %v5835 = vpop.f32.mrb[0].mxu0
      %v5836 = vadd.f32 %v5262, %v5835
      %v5837 = vpop.f32.mrb[0].mxu0
      %5838 = vmatprep.mubr.f32.mxu0 0.0
      %5839 = vmatmul.mubr.f32.gmra.mrb[0].mxu0 %v5215
      %v5840 = vpop.f32.mrb[0].mxu0
      %v5841 = vadd.f32 %v5262, %v5840
      %v5842 = vpop.f32.mrb[0].mxu0
      %5843 = vmatprep.mubr.f32.mxu0 0.0
      %5844 = vmatmul.mubr.f32.gmra.mrb[0].mxu0 %v5216
      %v5845 = vpop.f32.mrb[0].mxu0
      %v5846 = vadd.f32 %v5262, %v5845
      %v5847 = vpop.f32.mrb[0].mxu0
      %5848 = vmatprep.mubr.f32.mxu0 0.0
      %5849 = vmatmul.mubr.f32.gmra.mrb[0].mxu0 %v5217
      %v5850 = vpop.f32.mrb[0].mxu0
      %v5851 = vadd.f32 %v5262, %v5850
      %v5852 = vpop.f32.mrb[0].mxu0
      %5853 = vmatprep.mubr.f32.mxu0 0.0
      %5854 = vmatmul.mubr.f32.gmra.mrb[0].mxu0 %v5218
      %v5855 = vpop.f32.mrb[0].mxu0
      %v5856 = vadd.f32 %v5262, %v5855
      %v5857 = vpop.f32.mrb[0].mxu0
      %5858 = vmatprep.mubr.f32.mxu0 0.0
      %5859 = vmatmul.mubr.f32.gmra.mrb[0].mxu0 %v5219
      %v5860 = vpop.f32.mrb[0].mxu0
      %v5861 = vadd.f32 %v5262, %v5860
      %v5862 = vpop.f32.mrb[0].mxu0
      %5863 = vmatprep.mubr.f32.mxu0 0.0
      %5864 = vmatmul.mubr.f32.gmra.mrb[0].mxu0 %v5220
      %v5865 = vpop.f32.mrb[0].mxu0
      %v5866 = vadd.f32 %v5262, %v5865
      %v5867 = vpop.f32.mrb[0].mxu0
      %5868 = vmatprep.mubr.f32.mxu0 0.0
      %5869 = vmatmul.mubr.f32.gmra.mrb[0].mxu0 %v5221
      %v5870 = vpop.f32.mrb[0].mxu0
      %v5871 = vadd.f32 %v5262, %v5870
      %v5872 = vpop.f32.mrb[0].mxu0
      %5873 = vmatprep.mubr.f32.mxu0 0.0
      %5874 = vmatmul.mubr.f32.gmra.mrb[0].mxu0 %v5222
      %v5875 = vpop.f32.mrb[0].mxu0
      %v5876 = vadd.f32 %v5262, %v5875
      %v5877 = vpop.f32.mrb[0].mxu0
      %5878 = vmatprep.mubr.f32.mxu0 0.0
      %5879 = vmatmul.mubr.f32.gmra.mrb[0].mxu0 %v5223
      %v5880 = vpop.f32.mrb[0].mxu0
      %v5881 = vadd.f32 %v5262, %v5880
      %v5882 = vpop.f32.mrb[0].mxu0
      %5883 = vmatprep.mubr.f32.mxu0 0.0
      %5884 = vmatmul.mubr.f32.gmra.mrb[0].mxu0 %v5224
      %v5885 = vpop.f32.mrb[0].mxu0
      %v5886 = vadd.f32 %v5262, %v5885
      %v5887 = vpop.f32.mrb[0].mxu0
      %5888 = vmatprep.mubr.f32.mxu0 0.0
      %5889 = vmatmul.mubr.f32.gmra.mrb[0].mxu0 %v5225
      %v5890 = vpop.f32.mrb[0].mxu0
      %v5891 = vadd.f32 %v5262, %v5890
      %v5892 = vpop.f32.mrb[0].mxu0
      %5893 = vmatprep.mubr.f32.mxu0 0.0
      %5894 = vmatmul.mubr.f32.gmra.mrb[0].mxu0 %v5226
      %v5895 = vpop.f32.mrb[0].mxu0
      %v5896 = vadd.f32 %v5262, %v5895
      %v5897 = vpop.f32.mrb[0].mxu0
      %5898 = vmatprep.mubr.f32.mxu0 0.0
      %5899 = vmatmul.mubr.f32.gmra.mrb[0].mxu0 %v5227
      %v5900 = vpop.f32.mrb[0].mxu0
      %v5901 = vadd.f32 %v5262, %v5900
      %v5902 = vpop.f32.mrb[0].mxu0
      %5903 = vmatprep.mubr.f32.mxu0 0.0
      %5904 = vmatmul.mubr.f32.gmra.mrb[0].mxu0 %v5228
      %v5905 = vpop.f32.mrb[0].mxu0
      %v5906 = vadd.f32 %v5262, %v5905
      %v5907 = vpop.f32.mrb[0].mxu0
      %5908 = vmatprep.mubr.f32.mxu0 0.0
      %5909 = vmatmul.mubr.f32.gmra.mrb[0].mxu0 %v5229
      %v5910 = vpop.f32.mrb[0].mxu0
      %v5911 = vadd.f32 %v5262, %v5910
      %v5912 = vpop.f32.mrb[0].mxu0
      %5913 = vmatprep.mubr.f32.mxu0 0.0
      %5914 = vmatmul.mubr.f32.gmra.mrb[0].mxu0 %v5230
      %v5915 = vpop.f32.mrb[0].mxu0
      %v5916 = vadd.f32 %v5262, %v5915
      %v5917 = vpop.f32.mrb[0].mxu0
      %5918 = vmatprep.mubr.f32.mxu0 0.0
      %5919 = vmatmul.mubr.f32.gmra.mrb[0].mxu0 %v5231
      %v5920 = vpop.f32.mrb[0].mxu0
      %v5921 = vadd.f32 %v5262, %v5920
      %v5922 = vpop.f32.mrb[0].mxu0
      %5923 = vmatprep.mubr.f32.mxu0 0.0
      %5924 = vmatmul.mubr.f32.gmra.mrb[0].mxu0 %v5232
      %v5925 = vpop.f32.mrb[0].mxu0
      %v5926 = vadd.f32 %v5262, %v5925
      %v5927 = vpop.f32.mrb[0].mxu0
      %5928 = vmatprep.mubr.f32.mxu0 0.0
      %5929 = vmatmul.mubr.f32.gmra.mrb[0].mxu0 %v5233
      %v5930 = vpop.f32.mrb[0].mxu0
      %v5931 = vadd.f32 %v5262, %v5930
      %v5932 = vpop.f32.mrb[0].mxu0
      %5933 = vmatprep.mubr.f32.mxu0 0.0
      %5934 = vmatmul.mubr.f32.gmra.mrb[0].mxu0 %v5234
      %v5935 = vpop.f32.mrb[0].mxu0
      %v5936 = vadd.f32 %v5262, %v5935
      %v5937 = vpop.f32.mrb[0].mxu0
      %5938 = vmatprep.mubr.f32.mxu0 0.0
      %5939 = vmatmul.mubr.f32.gmra.mrb[0].mxu0 %v5235
      %v5940 = vpop.f32.mrb[0].mxu0
      %v5941 = vadd.f32 %v5262, %v5940
      %v5942 = vpop.f32.mrb[0].mxu0
      %5943 = vmatprep.mubr.f32.mxu0 0.0
      %5944 = vmatmul.mubr.f32.gmra.mrb[0].mxu0 %v5236
      %v5945 = vpop.f32.mrb[0].mxu0
      %v5946 = vadd.f32 %v5262, %v5945
      %v5947 = vpop.f32.mrb[0].mxu0
      %5948 = vmatprep.mubr.f32.mxu0 0.0
      %5949 = vmatmul.mubr.f32.gmra.mrb[0].mxu0 %v5237
      %v5950 = vpop.f32.mrb[0].mxu0
      %v5951 = vadd.f32 %v5262, %v5950
      %v5952 = vpop.f32.mrb[0].mxu0
      %5953 = vmatprep.mubr.f32.mxu0 0.0
      %5954 = vmatmul.mubr.f32.gmra.mrb[0].mxu0 %v5238
      %v5955 = vpop.f32.mrb[0].mxu0
      %v5956 = vadd.f32 %v5262, %v5955
      %v5957 = vpop.f32.mrb[0].mxu0
      %5958 = vmatprep.mubr.f32.mxu0 0.0
      %5959 = vmatmul.mubr.f32.gmra.mrb[0].mxu0 %v5239
      %v5960 = vpop.f32.mrb[0].mxu0
      %v5961 = vadd.f32 %v5262, %v5960
      %v5962 = vpop.f32.mrb[0].mxu0
      %5963 = vmatprep.mubr.f32.mxu0 0.0
      %5964 = vmatmul.mubr.f32.gmra.mrb[0].mxu0 %v5240
      %v5965 = vpop.f32.mrb[0].mxu0
      %v5966 = vadd.f32 %v5262, %v5965
      %v5967 = vpop.f32.mrb[0].mxu0
      %5968 = vdwg.mxu0
      %vm5969 = vcmask 7168
      %5970 = vst.msk [vmem:[%s472] sm:$0xff] %vm5969, %v5331
      %5971 = vst.msk [vmem:[%s472 + $0x8] sm:$0xff] %vm5969, %v5336
      %5972 = vst.msk [vmem:[%s472 + $0x10] sm:$0xff] %vm5969, %v5341
      %5973 = vst.msk [vmem:[%s472 + $0x18] sm:$0xff] %vm5969, %v5346
      %5974 = vst.msk [vmem:[%s472 + $0x20] sm:$0xff] %vm5969, %v5351
      %5975 = vst.msk [vmem:[%s472 + $0x28] sm:$0xff] %vm5969, %v5356
      %5976 = vst.msk [vmem:[%s472 + $0x30] sm:$0xff] %vm5969, %v5361
      %5977 = vst.msk [vmem:[%s472 + $0x38] sm:$0xff] %vm5969, %v5366
      %5978 = vst.msk [vmem:[%s472 + $0x40] sm:$0xff] %vm5969, %v5371
      %5979 = vst.msk [vmem:[%s472 + $0x48] sm:$0xff] %vm5969, %v5376
      %5980 = vst.msk [vmem:[%s472 + $0x50] sm:$0xff] %vm5969, %v5381
      %5981 = vst.msk [vmem:[%s472 + $0x58] sm:$0xff] %vm5969, %v5386
      %5982 = vst.msk [vmem:[%s472 + $0x60] sm:$0xff] %vm5969, %v5391
      %5983 = vst.msk [vmem:[%s472 + $0x68] sm:$0xff] %vm5969, %v5396
      %5984 = vst.msk [vmem:[%s472 + $0x70] sm:$0xff] %vm5969, %v5401
      %5985 = vst.msk [vmem:[%s472 + $0x78] sm:$0xff] %vm5969, %v5406
      %5986 = vst.msk [vmem:[%s472 + $0x80] sm:$0xff] %vm5969, %v5411
      %5987 = vst.msk [vmem:[%s472 + $0x88] sm:$0xff] %vm5969, %v5416
      %5988 = vst.msk [vmem:[%s472 + $0x90] sm:$0xff] %vm5969, %v5421
      %5989 = vst.msk [vmem:[%s472 + $0x98] sm:$0xff] %vm5969, %v5426
      %5990 = vst.msk [vmem:[%s472 + $0xa0] sm:$0xff] %vm5969, %v5431
      %5991 = vst.msk [vmem:[%s472 + $0xa8] sm:$0xff] %vm5969, %v5436
      %5992 = vst.msk [vmem:[%s472 + $0xb0] sm:$0xff] %vm5969, %v5441
      %5993 = vst.msk [vmem:[%s472 + $0xb8] sm:$0xff] %vm5969, %v5446
      %5994 = vst.msk [vmem:[%s472 + $0xc0] sm:$0xff] %vm5969, %v5451
      %5995 = vst.msk [vmem:[%s472 + $0xc8] sm:$0xff] %vm5969, %v5456
      %5996 = vst.msk [vmem:[%s472 + $0xd0] sm:$0xff] %vm5969, %v5461
      %5997 = vst.msk [vmem:[%s472 + $0xd8] sm:$0xff] %vm5969, %v5466
      %5998 = vst.msk [vmem:[%s472 + $0xe0] sm:$0xff] %vm5969, %v5471
      %5999 = vst.msk [vmem:[%s472 + $0xe8] sm:$0xff] %vm5969, %v5476
      %6000 = vst.msk [vmem:[%s472 + $0xf0] sm:$0xff] %vm5969, %v5481
      %6001 = vst.msk [vmem:[%s472 + $0xf8] sm:$0xff] %vm5969, %v5486
      %6002 = vst.msk [vmem:[%s472 + $0x100] sm:$0xff] %vm5969, %v5491
      %6003 = vst.msk [vmem:[%s472 + $0x108] sm:$0xff] %vm5969, %v5496
      %6004 = vst.msk [vmem:[%s472 + $0x110] sm:$0xff] %vm5969, %v5501
      %6005 = vst.msk [vmem:[%s472 + $0x118] sm:$0xff] %vm5969, %v5506
      %6006 = vst.msk [vmem:[%s472 + $0x120] sm:$0xff] %vm5969, %v5511
      %6007 = vst.msk [vmem:[%s472 + $0x128] sm:$0xff] %vm5969, %v5516
      %6008 = vst.msk [vmem:[%s472 + $0x130] sm:$0xff] %vm5969, %v5521
      %6009 = vst.msk [vmem:[%s472 + $0x138] sm:$0xff] %vm5969, %v5526
      %6010 = vst.msk [vmem:[%s472 + $0x140] sm:$0xff] %vm5969, %v5531
      %6011 = vst.msk [vmem:[%s472 + $0x148] sm:$0xff] %vm5969, %v5536
      %6012 = vst.msk [vmem:[%s472 + $0x150] sm:$0xff] %vm5969, %v5541
      %6013 = vst.msk [vmem:[%s472 + $0x158] sm:$0xff] %vm5969, %v5546
      %6014 = vst.msk [vmem:[%s472 + $0x160] sm:$0xff] %vm5969, %v5551
      %6015 = vst.msk [vmem:[%s472 + $0x168] sm:$0xff] %vm5969, %v5556
      %6016 = vst.msk [vmem:[%s472 + $0x170] sm:$0xff] %vm5969, %v5561
      %6017 = vst.msk [vmem:[%s472 + $0x178] sm:$0xff] %vm5969, %v5566
      %6018 = vst.msk [vmem:[%s472 + $0x180] sm:$0xff] %vm5969, %v5571
      %6019 = vst.msk [vmem:[%s472 + $0x188] sm:$0xff] %vm5969, %v5576
      %6020 = vst.msk [vmem:[%s472 + $0x190] sm:$0xff] %vm5969, %v5581
      %6021 = vst.msk [vmem:[%s472 + $0x198] sm:$0xff] %vm5969, %v5586
      %6022 = vst.msk [vmem:[%s472 + $0x1a0] sm:$0xff] %vm5969, %v5591
      %6023 = vst.msk [vmem:[%s472 + $0x1a8] sm:$0xff] %vm5969, %v5596
      %6024 = vst.msk [vmem:[%s472 + $0x1b0] sm:$0xff] %vm5969, %v5601
      %6025 = vst.msk [vmem:[%s472 + $0x1b8] sm:$0xff] %vm5969, %v5606
      %6026 = vst.msk [vmem:[%s472 + $0x1c0] sm:$0xff] %vm5969, %v5611
      %6027 = vst.msk [vmem:[%s472 + $0x1c8] sm:$0xff] %vm5969, %v5616
      %6028 = vst.msk [vmem:[%s472 + $0x1d0] sm:$0xff] %vm5969, %v5621
      %6029 = vst.msk [vmem:[%s472 + $0x1d8] sm:$0xff] %vm5969, %v5626
      %6030 = vst.msk [vmem:[%s472 + $0x1e0] sm:$0xff] %vm5969, %v5631
      %6031 = vst.msk [vmem:[%s472 + $0x1e8] sm:$0xff] %vm5969, %v5636
      %6032 = vst.msk [vmem:[%s472 + $0x1f0] sm:$0xff] %vm5969, %v5641
      %6033 = vst.msk [vmem:[%s472 + $0x1f8] sm:$0xff] %vm5969, %v5646
      %6034 = vst.msk [vmem:[%s472 + $0x200] sm:$0xff] %vm5969, %v5651
      %6035 = vst.msk [vmem:[%s472 + $0x208] sm:$0xff] %vm5969, %v5656
      %6036 = vst.msk [vmem:[%s472 + $0x210] sm:$0xff] %vm5969, %v5661
      %6037 = vst.msk [vmem:[%s472 + $0x218] sm:$0xff] %vm5969, %v5666
      %6038 = vst.msk [vmem:[%s472 + $0x220] sm:$0xff] %vm5969, %v5671
      %6039 = vst.msk [vmem:[%s472 + $0x228] sm:$0xff] %vm5969, %v5676
      %6040 = vst.msk [vmem:[%s472 + $0x230] sm:$0xff] %vm5969, %v5681
      %6041 = vst.msk [vmem:[%s472 + $0x238] sm:$0xff] %vm5969, %v5686
      %6042 = vst.msk [vmem:[%s472 + $0x240] sm:$0xff] %vm5969, %v5691
      %6043 = vst.msk [vmem:[%s472 + $0x248] sm:$0xff] %vm5969, %v5696
      %6044 = vst.msk [vmem:[%s472 + $0x250] sm:$0xff] %vm5969, %v5701
      %6045 = vst.msk [vmem:[%s472 + $0x258] sm:$0xff] %vm5969, %v5706
      %6046 = vst.msk [vmem:[%s472 + $0x260] sm:$0xff] %vm5969, %v5711
      %6047 = vst.msk [vmem:[%s472 + $0x268] sm:$0xff] %vm5969, %v5716
      %6048 = vst.msk [vmem:[%s472 + $0x270] sm:$0xff] %vm5969, %v5721
      %6049 = vst.msk [vmem:[%s472 + $0x278] sm:$0xff] %vm5969, %v5726
      %6050 = vst.msk [vmem:[%s472 + $0x280] sm:$0xff] %vm5969, %v5731
      %6051 = vst.msk [vmem:[%s472 + $0x288] sm:$0xff] %vm5969, %v5736
      %6052 = vst.msk [vmem:[%s472 + $0x290] sm:$0xff] %vm5969, %v5741
      %6053 = vst.msk [vmem:[%s472 + $0x298] sm:$0xff] %vm5969, %v5746
      %6054 = vst.msk [vmem:[%s472 + $0x2a0] sm:$0xff] %vm5969, %v5751
      %6055 = vst.msk [vmem:[%s472 + $0x2a8] sm:$0xff] %vm5969, %v5756
      %6056 = vst.msk [vmem:[%s472 + $0x2b0] sm:$0xff] %vm5969, %v5761
      %6057 = vst.msk [vmem:[%s472 + $0x2b8] sm:$0xff] %vm5969, %v5766
      %6058 = vst.msk [vmem:[%s472 + $0x2c0] sm:$0xff] %vm5969, %v5771
      %6059 = vst.msk [vmem:[%s472 + $0x2c8] sm:$0xff] %vm5969, %v5776
      %6060 = vst.msk [vmem:[%s472 + $0x2d0] sm:$0xff] %vm5969, %v5781
      %6061 = vst.msk [vmem:[%s472 + $0x2d8] sm:$0xff] %vm5969, %v5786
      %6062 = vst.msk [vmem:[%s472 + $0x2e0] sm:$0xff] %vm5969, %v5791
      %6063 = vst.msk [vmem:[%s472 + $0x2e8] sm:$0xff] %vm5969, %v5796
      %6064 = vst.msk [vmem:[%s472 + $0x2f0] sm:$0xff] %vm5969, %v5801
      %6065 = vst.msk [vmem:[%s472 + $0x2f8] sm:$0xff] %vm5969, %v5806
      %6066 = vst.msk [vmem:[%s472 + $0x300] sm:$0xff] %vm5969, %v5811
      %6067 = vst.msk [vmem:[%s472 + $0x308] sm:$0xff] %vm5969, %v5816
      %6068 = vst.msk [vmem:[%s472 + $0x310] sm:$0xff] %vm5969, %v5821
      %6069 = vst.msk [vmem:[%s472 + $0x318] sm:$0xff] %vm5969, %v5826
      %6070 = vst.msk [vmem:[%s472 + $0x320] sm:$0xff] %vm5969, %v5831
      %6071 = vst.msk [vmem:[%s472 + $0x328] sm:$0xff] %vm5969, %v5836
      %6072 = vst.msk [vmem:[%s472 + $0x330] sm:$0xff] %vm5969, %v5841
      %6073 = vst.msk [vmem:[%s472 + $0x338] sm:$0xff] %vm5969, %v5846
      %6074 = vst.msk [vmem:[%s472 + $0x340] sm:$0xff] %vm5969, %v5851
      %6075 = vst.msk [vmem:[%s472 + $0x348] sm:$0xff] %vm5969, %v5856
      %6076 = vst.msk [vmem:[%s472 + $0x350] sm:$0xff] %vm5969, %v5861
      %6077 = vst.msk [vmem:[%s472 + $0x358] sm:$0xff] %vm5969, %v5866
      %6078 = vst.msk [vmem:[%s472 + $0x360] sm:$0xff] %vm5969, %v5871
      %6079 = vst.msk [vmem:[%s472 + $0x368] sm:$0xff] %vm5969, %v5876
      %6080 = vst.msk [vmem:[%s472 + $0x370] sm:$0xff] %vm5969, %v5881
      %6081 = vst.msk [vmem:[%s472 + $0x378] sm:$0xff] %vm5969, %v5886
      %6082 = vst.msk [vmem:[%s472 + $0x380] sm:$0xff] %vm5969, %v5891
      %6083 = vst.msk [vmem:[%s472 + $0x388] sm:$0xff] %vm5969, %v5896
      %6084 = vst.msk [vmem:[%s472 + $0x390] sm:$0xff] %vm5969, %v5901
      %6085 = vst.msk [vmem:[%s472 + $0x398] sm:$0xff] %vm5969, %v5906
      %6086 = vst.msk [vmem:[%s472 + $0x3a0] sm:$0xff] %vm5969, %v5911
      %6087 = vst.msk [vmem:[%s472 + $0x3a8] sm:$0xff] %vm5969, %v5916
      %6088 = vst.msk [vmem:[%s472 + $0x3b0] sm:$0xff] %vm5969, %v5921
      %6089 = vst.msk [vmem:[%s472 + $0x3b8] sm:$0xff] %vm5969, %v5926
      %6090 = vst.msk [vmem:[%s472 + $0x3c0] sm:$0xff] %vm5969, %v5931
      %6091 = vst.msk [vmem:[%s472 + $0x3c8] sm:$0xff] %vm5969, %v5936
      %6092 = vst.msk [vmem:[%s472 + $0x3d0] sm:$0xff] %vm5969, %v5941
      %6093 = vst.msk [vmem:[%s472 + $0x3d8] sm:$0xff] %vm5969, %v5946
      %6094 = vst.msk [vmem:[%s472 + $0x3e0] sm:$0xff] %vm5969, %v5951
      %6095 = vst.msk [vmem:[%s472 + $0x3e8] sm:$0xff] %vm5969, %v5956
      %6096 = vst.msk [vmem:[%s472 + $0x3f0] sm:$0xff] %vm5969, %v5961
      %6097 = vst.msk [vmem:[%s472 + $0x3f8] sm:$0xff] %vm5969, %v5966
      %6226 = vrot.lane.b32.xlu0 %v5331, 127
      %v6227 = vpop.permute.xlu0 %6226
      %6228 = vrot.lane.b32.xlu0 %v5336, 127
      %v6229 = vpop.permute.xlu0 %6228
      %6230 = vrot.lane.b32.xlu0 %v5341, 127
      %v6231 = vpop.permute.xlu0 %6230
      %6232 = vrot.lane.b32.xlu0 %v5346, 127
      %v6233 = vpop.permute.xlu0 %6232
      %6234 = vrot.lane.b32.xlu0 %v5351, 127
      %v6235 = vpop.permute.xlu0 %6234
      %6236 = vrot.lane.b32.xlu0 %v5356, 127
      %v6237 = vpop.permute.xlu0 %6236
      %6238 = vrot.lane.b32.xlu0 %v5361, 127
      %v6239 = vpop.permute.xlu0 %6238
      %6240 = vrot.lane.b32.xlu0 %v5366, 127
      %v6241 = vpop.permute.xlu0 %6240
      %6242 = vrot.lane.b32.xlu0 %v5371, 127
      %v6243 = vpop.permute.xlu0 %6242
      %6244 = vrot.lane.b32.xlu0 %v5376, 127
      %v6245 = vpop.permute.xlu0 %6244
      %6246 = vrot.lane.b32.xlu0 %v5381, 127
      %v6247 = vpop.permute.xlu0 %6246
      %6248 = vrot.lane.b32.xlu0 %v5386, 127
      %v6249 = vpop.permute.xlu0 %6248
      %6250 = vrot.lane.b32.xlu0 %v5391, 127
      %v6251 = vpop.permute.xlu0 %6250
      %6252 = vrot.lane.b32.xlu0 %v5396, 127
      %v6253 = vpop.permute.xlu0 %6252
      %6254 = vrot.lane.b32.xlu0 %v5401, 127
      %v6255 = vpop.permute.xlu0 %6254
      %6256 = vrot.lane.b32.xlu0 %v5406, 127
      %v6257 = vpop.permute.xlu0 %6256
      %6258 = vrot.lane.b32.xlu0 %v5411, 127
      %v6259 = vpop.permute.xlu0 %6258
      %6260 = vrot.lane.b32.xlu0 %v5416, 127
      %v6261 = vpop.permute.xlu0 %6260
      %6262 = vrot.lane.b32.xlu0 %v5421, 127
      %v6263 = vpop.permute.xlu0 %6262
      %6264 = vrot.lane.b32.xlu0 %v5426, 127
      %v6265 = vpop.permute.xlu0 %6264
      %6266 = vrot.lane.b32.xlu0 %v5431, 127
      %v6267 = vpop.permute.xlu0 %6266
      %6268 = vrot.lane.b32.xlu0 %v5436, 127
      %v6269 = vpop.permute.xlu0 %6268
      %6270 = vrot.lane.b32.xlu0 %v5441, 127
      %v6271 = vpop.permute.xlu0 %6270
      %6272 = vrot.lane.b32.xlu0 %v5446, 127
      %v6273 = vpop.permute.xlu0 %6272
      %6274 = vrot.lane.b32.xlu0 %v5451, 127
      %v6275 = vpop.permute.xlu0 %6274
      %6276 = vrot.lane.b32.xlu0 %v5456, 127
      %v6277 = vpop.permute.xlu0 %6276
      %6278 = vrot.lane.b32.xlu0 %v5461, 127
      %v6279 = vpop.permute.xlu0 %6278
      %6280 = vrot.lane.b32.xlu0 %v5466, 127
      %v6281 = vpop.permute.xlu0 %6280
      %6282 = vrot.lane.b32.xlu0 %v5471, 127
      %v6283 = vpop.permute.xlu0 %6282
      %6284 = vrot.lane.b32.xlu0 %v5476, 127
      %v6285 = vpop.permute.xlu0 %6284
      %6286 = vrot.lane.b32.xlu0 %v5481, 127
      %v6287 = vpop.permute.xlu0 %6286
      %6288 = vrot.lane.b32.xlu0 %v5486, 127
      %v6289 = vpop.permute.xlu0 %6288
      %6290 = vrot.lane.b32.xlu0 %v5491, 127
      %v6291 = vpop.permute.xlu0 %6290
      %6292 = vrot.lane.b32.xlu0 %v5496, 127
      %v6293 = vpop.permute.xlu0 %6292
      %6294 = vrot.lane.b32.xlu0 %v5501, 127
      %v6295 = vpop.permute.xlu0 %6294
      %6296 = vrot.lane.b32.xlu0 %v5506, 127
      %v6297 = vpop.permute.xlu0 %6296
      %6298 = vrot.lane.b32.xlu0 %v5511, 127
      %v6299 = vpop.permute.xlu0 %6298
      %6300 = vrot.lane.b32.xlu0 %v5516, 127
      %v6301 = vpop.permute.xlu0 %6300
      %6302 = vrot.lane.b32.xlu0 %v5521, 127
      %v6303 = vpop.permute.xlu0 %6302
      %6304 = vrot.lane.b32.xlu0 %v5526, 127
      %v6305 = vpop.permute.xlu0 %6304
      %6306 = vrot.lane.b32.xlu0 %v5531, 127
      %v6307 = vpop.permute.xlu0 %6306
      %6308 = vrot.lane.b32.xlu0 %v5536, 127
      %v6309 = vpop.permute.xlu0 %6308
      %6310 = vrot.lane.b32.xlu0 %v5541, 127
      %v6311 = vpop.permute.xlu0 %6310
      %6312 = vrot.lane.b32.xlu0 %v5546, 127
      %v6313 = vpop.permute.xlu0 %6312
      %6314 = vrot.lane.b32.xlu0 %v5551, 127
      %v6315 = vpop.permute.xlu0 %6314
      %6316 = vrot.lane.b32.xlu0 %v5556, 127
      %v6317 = vpop.permute.xlu0 %6316
      %6318 = vrot.lane.b32.xlu0 %v5561, 127
      %v6319 = vpop.permute.xlu0 %6318
      %6320 = vrot.lane.b32.xlu0 %v5566, 127
      %v6321 = vpop.permute.xlu0 %6320
      %6322 = vrot.lane.b32.xlu0 %v5571, 127
      %v6323 = vpop.permute.xlu0 %6322
      %6324 = vrot.lane.b32.xlu0 %v5576, 127
      %v6325 = vpop.permute.xlu0 %6324
      %6326 = vrot.lane.b32.xlu0 %v5581, 127
      %v6327 = vpop.permute.xlu0 %6326
      %6328 = vrot.lane.b32.xlu0 %v5586, 127
      %v6329 = vpop.permute.xlu0 %6328
      %6330 = vrot.lane.b32.xlu0 %v5591, 127
      %v6331 = vpop.permute.xlu0 %6330
      %6332 = vrot.lane.b32.xlu0 %v5596, 127
      %v6333 = vpop.permute.xlu0 %6332
      %6334 = vrot.lane.b32.xlu0 %v5601, 127
      %v6335 = vpop.permute.xlu0 %6334
      %6336 = vrot.lane.b32.xlu0 %v5606, 127
      %v6337 = vpop.permute.xlu0 %6336
      %6338 = vrot.lane.b32.xlu0 %v5611, 127
      %v6339 = vpop.permute.xlu0 %6338
      %6340 = vrot.lane.b32.xlu0 %v5616, 127
      %v6341 = vpop.permute.xlu0 %6340
      %6342 = vrot.lane.b32.xlu0 %v5621, 127
      %v6343 = vpop.permute.xlu0 %6342
      %6344 = vrot.lane.b32.xlu0 %v5626, 127
      %v6345 = vpop.permute.xlu0 %6344
      %6346 = vrot.lane.b32.xlu0 %v5631, 127
      %v6347 = vpop.permute.xlu0 %6346
      %6348 = vrot.lane.b32.xlu0 %v5636, 127
      %v6349 = vpop.permute.xlu0 %6348
      %6350 = vrot.lane.b32.xlu0 %v5641, 127
      %v6351 = vpop.permute.xlu0 %6350
      %6352 = vrot.lane.b32.xlu0 %v5646, 127
      %v6353 = vpop.permute.xlu0 %6352
      %6354 = vrot.lane.b32.xlu0 %v5651, 127
      %v6355 = vpop.permute.xlu0 %6354
      %6356 = vrot.lane.b32.xlu0 %v5656, 127
      %v6357 = vpop.permute.xlu0 %6356
      %6358 = vrot.lane.b32.xlu0 %v5661, 127
      %v6359 = vpop.permute.xlu0 %6358
      %6360 = vrot.lane.b32.xlu0 %v5666, 127
      %v6361 = vpop.permute.xlu0 %6360
      %6362 = vrot.lane.b32.xlu0 %v5671, 127
      %v6363 = vpop.permute.xlu0 %6362
      %6364 = vrot.lane.b32.xlu0 %v5676, 127
      %v6365 = vpop.permute.xlu0 %6364
      %6366 = vrot.lane.b32.xlu0 %v5681, 127
      %v6367 = vpop.permute.xlu0 %6366
      %6368 = vrot.lane.b32.xlu0 %v5686, 127
      %v6369 = vpop.permute.xlu0 %6368
      %6370 = vrot.lane.b32.xlu0 %v5691, 127
      %v6371 = vpop.permute.xlu0 %6370
      %6372 = vrot.lane.b32.xlu0 %v5696, 127
      %v6373 = vpop.permute.xlu0 %6372
      %6374 = vrot.lane.b32.xlu0 %v5701, 127
      %v6375 = vpop.permute.xlu0 %6374
      %6376 = vrot.lane.b32.xlu0 %v5706, 127
      %v6377 = vpop.permute.xlu0 %6376
      %6378 = vrot.lane.b32.xlu0 %v5711, 127
      %v6379 = vpop.permute.xlu0 %6378
      %6380 = vrot.lane.b32.xlu0 %v5716, 127
      %v6381 = vpop.permute.xlu0 %6380
      %6382 = vrot.lane.b32.xlu0 %v5721, 127
      %v6383 = vpop.permute.xlu0 %6382
      %6384 = vrot.lane.b32.xlu0 %v5726, 127
      %v6385 = vpop.permute.xlu0 %6384
      %6386 = vrot.lane.b32.xlu0 %v5731, 127
      %v6387 = vpop.permute.xlu0 %6386
      %6388 = vrot.lane.b32.xlu0 %v5736, 127
      %v6389 = vpop.permute.xlu0 %6388
      %6390 = vrot.lane.b32.xlu0 %v5741, 127
      %v6391 = vpop.permute.xlu0 %6390
      %6392 = vrot.lane.b32.xlu0 %v5746, 127
      %v6393 = vpop.permute.xlu0 %6392
      %6394 = vrot.lane.b32.xlu0 %v5751, 127
      %v6395 = vpop.permute.xlu0 %6394
      %6396 = vrot.lane.b32.xlu0 %v5756, 127
      %v6397 = vpop.permute.xlu0 %6396
      %6398 = vrot.lane.b32.xlu0 %v5761, 127
      %v6399 = vpop.permute.xlu0 %6398
      %6400 = vrot.lane.b32.xlu0 %v5766, 127
      %v6401 = vpop.permute.xlu0 %6400
      %6402 = vrot.lane.b32.xlu0 %v5771, 127
      %v6403 = vpop.permute.xlu0 %6402
      %6404 = vrot.lane.b32.xlu0 %v5776, 127
      %v6405 = vpop.permute.xlu0 %6404
      %6406 = vrot.lane.b32.xlu0 %v5781, 127
      %v6407 = vpop.permute.xlu0 %6406
      %6408 = vrot.lane.b32.xlu0 %v5786, 127
      %v6409 = vpop.permute.xlu0 %6408
      %6410 = vrot.lane.b32.xlu0 %v5791, 127
      %v6411 = vpop.permute.xlu0 %6410
      %6412 = vrot.lane.b32.xlu0 %v5796, 127
      %v6413 = vpop.permute.xlu0 %6412
      %6414 = vrot.lane.b32.xlu0 %v5801, 127
      %v6415 = vpop.permute.xlu0 %6414
      %6416 = vrot.lane.b32.xlu0 %v5806, 127
      %v6417 = vpop.permute.xlu0 %6416
      %6418 = vrot.lane.b32.xlu0 %v5811, 127
      %v6419 = vpop.permute.xlu0 %6418
      %6420 = vrot.lane.b32.xlu0 %v5816, 127
      %v6421 = vpop.permute.xlu0 %6420
      %6422 = vrot.lane.b32.xlu0 %v5821, 127
      %v6423 = vpop.permute.xlu0 %6422
      %6424 = vrot.lane.b32.xlu0 %v5826, 127
      %v6425 = vpop.permute.xlu0 %6424
      %6426 = vrot.lane.b32.xlu0 %v5831, 127
      %v6427 = vpop.permute.xlu0 %6426
      %6428 = vrot.lane.b32.xlu0 %v5836, 127
      %v6429 = vpop.permute.xlu0 %6428
      %6430 = vrot.lane.b32.xlu0 %v5841, 127
      %v6431 = vpop.permute.xlu0 %6430
      %6432 = vrot.lane.b32.xlu0 %v5846, 127
      %v6433 = vpop.permute.xlu0 %6432
      %6434 = vrot.lane.b32.xlu0 %v5851, 127
      %v6435 = vpop.permute.xlu0 %6434
      %6436 = vrot.lane.b32.xlu0 %v5856, 127
      %v6437 = vpop.permute.xlu0 %6436
      %6438 = vrot.lane.b32.xlu0 %v5861, 127
      %v6439 = vpop.permute.xlu0 %6438
      %6440 = vrot.lane.b32.xlu0 %v5866, 127
      %v6441 = vpop.permute.xlu0 %6440
      %6442 = vrot.lane.b32.xlu0 %v5871, 127
      %v6443 = vpop.permute.xlu0 %6442
      %6444 = vrot.lane.b32.xlu0 %v5876, 127
      %v6445 = vpop.permute.xlu0 %6444
      %6446 = vrot.lane.b32.xlu0 %v5881, 127
      %v6447 = vpop.permute.xlu0 %6446
      %6448 = vrot.lane.b32.xlu0 %v5886, 127
      %v6449 = vpop.permute.xlu0 %6448
      %6450 = vrot.lane.b32.xlu0 %v5891, 127
      %v6451 = vpop.permute.xlu0 %6450
      %6452 = vrot.lane.b32.xlu0 %v5896, 127
      %v6453 = vpop.permute.xlu0 %6452
      %6454 = vrot.lane.b32.xlu0 %v5901, 127
      %v6455 = vpop.permute.xlu0 %6454
      %6456 = vrot.lane.b32.xlu0 %v5906, 127
      %v6457 = vpop.permute.xlu0 %6456
      %6458 = vrot.lane.b32.xlu0 %v5911, 127
      %v6459 = vpop.permute.xlu0 %6458
      %6460 = vrot.lane.b32.xlu0 %v5916, 127
      %v6461 = vpop.permute.xlu0 %6460
      %6462 = vrot.lane.b32.xlu0 %v5921, 127
      %v6463 = vpop.permute.xlu0 %6462
      %6464 = vrot.lane.b32.xlu0 %v5926, 127
      %v6465 = vpop.permute.xlu0 %6464
      %6466 = vrot.lane.b32.xlu0 %v5931, 127
      %v6467 = vpop.permute.xlu0 %6466
      %6468 = vrot.lane.b32.xlu0 %v5936, 127
      %v6469 = vpop.permute.xlu0 %6468
      %6470 = vrot.lane.b32.xlu0 %v5941, 127
      %v6471 = vpop.permute.xlu0 %6470
      %6472 = vrot.lane.b32.xlu0 %v5946, 127
      %v6473 = vpop.permute.xlu0 %6472
      %6474 = vrot.lane.b32.xlu0 %v5951, 127
      %v6475 = vpop.permute.xlu0 %6474
      %6476 = vrot.lane.b32.xlu0 %v5956, 127
      %v6477 = vpop.permute.xlu0 %6476
      %6478 = vrot.lane.b32.xlu0 %v5961, 127
      %v6479 = vpop.permute.xlu0 %6478
      %6480 = vrot.lane.b32.xlu0 %v5966, 127
      %v6481 = vpop.permute.xlu0 %6480
      %6610 = vst.msk [vmem:[%s478] sm:$0xff] %vm5969, %v6227
      %6611 = vst.msk [vmem:[%s478 + $0x8] sm:$0xff] %vm5969, %v6229
      %6612 = vst.msk [vmem:[%s478 + $0x10] sm:$0xff] %vm5969, %v6231
      %6613 = vst.msk [vmem:[%s478 + $0x18] sm:$0xff] %vm5969, %v6233
      %6614 = vst.msk [vmem:[%s478 + $0x20] sm:$0xff] %vm5969, %v6235
      %6615 = vst.msk [vmem:[%s478 + $0x28] sm:$0xff] %vm5969, %v6237
      %6616 = vst.msk [vmem:[%s478 + $0x30] sm:$0xff] %vm5969, %v6239
      %6617 = vst.msk [vmem:[%s478 + $0x38] sm:$0xff] %vm5969, %v6241
      %6618 = vst.msk [vmem:[%s478 + $0x40] sm:$0xff] %vm5969, %v6243
      %6619 = vst.msk [vmem:[%s478 + $0x48] sm:$0xff] %vm5969, %v6245
      %6620 = vst.msk [vmem:[%s478 + $0x50] sm:$0xff] %vm5969, %v6247
      %6621 = vst.msk [vmem:[%s478 + $0x58] sm:$0xff] %vm5969, %v6249
      %6622 = vst.msk [vmem:[%s478 + $0x60] sm:$0xff] %vm5969, %v6251
      %6623 = vst.msk [vmem:[%s478 + $0x68] sm:$0xff] %vm5969, %v6253
      %6624 = vst.msk [vmem:[%s478 + $0x70] sm:$0xff] %vm5969, %v6255
      %6625 = vst.msk [vmem:[%s478 + $0x78] sm:$0xff] %vm5969, %v6257
      %6626 = vst.msk [vmem:[%s478 + $0x80] sm:$0xff] %vm5969, %v6259
      %6627 = vst.msk [vmem:[%s478 + $0x88] sm:$0xff] %vm5969, %v6261
      %6628 = vst.msk [vmem:[%s478 + $0x90] sm:$0xff] %vm5969, %v6263
      %6629 = vst.msk [vmem:[%s478 + $0x98] sm:$0xff] %vm5969, %v6265
      %6630 = vst.msk [vmem:[%s478 + $0xa0] sm:$0xff] %vm5969, %v6267
      %6631 = vst.msk [vmem:[%s478 + $0xa8] sm:$0xff] %vm5969, %v6269
      %6632 = vst.msk [vmem:[%s478 + $0xb0] sm:$0xff] %vm5969, %v6271
      %6633 = vst.msk [vmem:[%s478 + $0xb8] sm:$0xff] %vm5969, %v6273
      %6634 = vst.msk [vmem:[%s478 + $0xc0] sm:$0xff] %vm5969, %v6275
      %6635 = vst.msk [vmem:[%s478 + $0xc8] sm:$0xff] %vm5969, %v6277
      %6636 = vst.msk [vmem:[%s478 + $0xd0] sm:$0xff] %vm5969, %v6279
      %6637 = vst.msk [vmem:[%s478 + $0xd8] sm:$0xff] %vm5969, %v6281
      %6638 = vst.msk [vmem:[%s478 + $0xe0] sm:$0xff] %vm5969, %v6283
      %6639 = vst.msk [vmem:[%s478 + $0xe8] sm:$0xff] %vm5969, %v6285
      %6640 = vst.msk [vmem:[%s478 + $0xf0] sm:$0xff] %vm5969, %v6287
      %6641 = vst.msk [vmem:[%s478 + $0xf8] sm:$0xff] %vm5969, %v6289
      %6642 = vst.msk [vmem:[%s478 + $0x100] sm:$0xff] %vm5969, %v6291
      %6643 = vst.msk [vmem:[%s478 + $0x108] sm:$0xff] %vm5969, %v6293
      %6644 = vst.msk [vmem:[%s478 + $0x110] sm:$0xff] %vm5969, %v6295
      %6645 = vst.msk [vmem:[%s478 + $0x118] sm:$0xff] %vm5969, %v6297
      %6646 = vst.msk [vmem:[%s478 + $0x120] sm:$0xff] %vm5969, %v6299
      %6647 = vst.msk [vmem:[%s478 + $0x128] sm:$0xff] %vm5969, %v6301
      %6648 = vst.msk [vmem:[%s478 + $0x130] sm:$0xff] %vm5969, %v6303
      %6649 = vst.msk [vmem:[%s478 + $0x138] sm:$0xff] %vm5969, %v6305
      %6650 = vst.msk [vmem:[%s478 + $0x140] sm:$0xff] %vm5969, %v6307
      %6651 = vst.msk [vmem:[%s478 + $0x148] sm:$0xff] %vm5969, %v6309
      %6652 = vst.msk [vmem:[%s478 + $0x150] sm:$0xff] %vm5969, %v6311
      %6653 = vst.msk [vmem:[%s478 + $0x158] sm:$0xff] %vm5969, %v6313
      %6654 = vst.msk [vmem:[%s478 + $0x160] sm:$0xff] %vm5969, %v6315
      %6655 = vst.msk [vmem:[%s478 + $0x168] sm:$0xff] %vm5969, %v6317
      %6656 = vst.msk [vmem:[%s478 + $0x170] sm:$0xff] %vm5969, %v6319
      %6657 = vst.msk [vmem:[%s478 + $0x178] sm:$0xff] %vm5969, %v6321
      %6658 = vst.msk [vmem:[%s478 + $0x180] sm:$0xff] %vm5969, %v6323
      %6659 = vst.msk [vmem:[%s478 + $0x188] sm:$0xff] %vm5969, %v6325
      %6660 = vst.msk [vmem:[%s478 + $0x190] sm:$0xff] %vm5969, %v6327
      %6661 = vst.msk [vmem:[%s478 + $0x198] sm:$0xff] %vm5969, %v6329
      %6662 = vst.msk [vmem:[%s478 + $0x1a0] sm:$0xff] %vm5969, %v6331
      %6663 = vst.msk [vmem:[%s478 + $0x1a8] sm:$0xff] %vm5969, %v6333
      %6664 = vst.msk [vmem:[%s478 + $0x1b0] sm:$0xff] %vm5969, %v6335
      %6665 = vst.msk [vmem:[%s478 + $0x1b8] sm:$0xff] %vm5969, %v6337
      %6666 = vst.msk [vmem:[%s478 + $0x1c0] sm:$0xff] %vm5969, %v6339
      %6667 = vst.msk [vmem:[%s478 + $0x1c8] sm:$0xff] %vm5969, %v6341
      %6668 = vst.msk [vmem:[%s478 + $0x1d0] sm:$0xff] %vm5969, %v6343
      %6669 = vst.msk [vmem:[%s478 + $0x1d8] sm:$0xff] %vm5969, %v6345
      %6670 = vst.msk [vmem:[%s478 + $0x1e0] sm:$0xff] %vm5969, %v6347
      %6671 = vst.msk [vmem:[%s478 + $0x1e8] sm:$0xff] %vm5969, %v6349
      %6672 = vst.msk [vmem:[%s478 + $0x1f0] sm:$0xff] %vm5969, %v6351
      %6673 = vst.msk [vmem:[%s478 + $0x1f8] sm:$0xff] %vm5969, %v6353
      %6674 = vst.msk [vmem:[%s478 + $0x200] sm:$0xff] %vm5969, %v6355
      %6675 = vst.msk [vmem:[%s478 + $0x208] sm:$0xff] %vm5969, %v6357
      %6676 = vst.msk [vmem:[%s478 + $0x210] sm:$0xff] %vm5969, %v6359
      %6677 = vst.msk [vmem:[%s478 + $0x218] sm:$0xff] %vm5969, %v6361
      %6678 = vst.msk [vmem:[%s478 + $0x220] sm:$0xff] %vm5969, %v6363
      %6679 = vst.msk [vmem:[%s478 + $0x228] sm:$0xff] %vm5969, %v6365
      %6680 = vst.msk [vmem:[%s478 + $0x230] sm:$0xff] %vm5969, %v6367
      %6681 = vst.msk [vmem:[%s478 + $0x238] sm:$0xff] %vm5969, %v6369
      %6682 = vst.msk [vmem:[%s478 + $0x240] sm:$0xff] %vm5969, %v6371
      %6683 = vst.msk [vmem:[%s478 + $0x248] sm:$0xff] %vm5969, %v6373
      %6684 = vst.msk [vmem:[%s478 + $0x250] sm:$0xff] %vm5969, %v6375
      %6685 = vst.msk [vmem:[%s478 + $0x258] sm:$0xff] %vm5969, %v6377
      %6686 = vst.msk [vmem:[%s478 + $0x260] sm:$0xff] %vm5969, %v6379
      %6687 = vst.msk [vmem:[%s478 + $0x268] sm:$0xff] %vm5969, %v6381
      %6688 = vst.msk [vmem:[%s478 + $0x270] sm:$0xff] %vm5969, %v6383
      %6689 = vst.msk [vmem:[%s478 + $0x278] sm:$0xff] %vm5969, %v6385
      %6690 = vst.msk [vmem:[%s478 + $0x280] sm:$0xff] %vm5969, %v6387
      %6691 = vst.msk [vmem:[%s478 + $0x288] sm:$0xff] %vm5969, %v6389
      %6692 = vst.msk [vmem:[%s478 + $0x290] sm:$0xff] %vm5969, %v6391
      %6693 = vst.msk [vmem:[%s478 + $0x298] sm:$0xff] %vm5969, %v6393
      %6694 = vst.msk [vmem:[%s478 + $0x2a0] sm:$0xff] %vm5969, %v6395
      %6695 = vst.msk [vmem:[%s478 + $0x2a8] sm:$0xff] %vm5969, %v6397
      %6696 = vst.msk [vmem:[%s478 + $0x2b0] sm:$0xff] %vm5969, %v6399
      %6697 = vst.msk [vmem:[%s478 + $0x2b8] sm:$0xff] %vm5969, %v6401
      %6698 = vst.msk [vmem:[%s478 + $0x2c0] sm:$0xff] %vm5969, %v6403
      %6699 = vst.msk [vmem:[%s478 + $0x2c8] sm:$0xff] %vm5969, %v6405
      %6700 = vst.msk [vmem:[%s478 + $0x2d0] sm:$0xff] %vm5969, %v6407
      %6701 = vst.msk [vmem:[%s478 + $0x2d8] sm:$0xff] %vm5969, %v6409
      %6702 = vst.msk [vmem:[%s478 + $0x2e0] sm:$0xff] %vm5969, %v6411
      %6703 = vst.msk [vmem:[%s478 + $0x2e8] sm:$0xff] %vm5969, %v6413
      %6704 = vst.msk [vmem:[%s478 + $0x2f0] sm:$0xff] %vm5969, %v6415
      %6705 = vst.msk [vmem:[%s478 + $0x2f8] sm:$0xff] %vm5969, %v6417
      %6706 = vst.msk [vmem:[%s478 + $0x300] sm:$0xff] %vm5969, %v6419
      %6707 = vst.msk [vmem:[%s478 + $0x308] sm:$0xff] %vm5969, %v6421
      %6708 = vst.msk [vmem:[%s478 + $0x310] sm:$0xff] %vm5969, %v6423
      %6709 = vst.msk [vmem:[%s478 + $0x318] sm:$0xff] %vm5969, %v6425
      %6710 = vst.msk [vmem:[%s478 + $0x320] sm:$0xff] %vm5969, %v6427
      %6711 = vst.msk [vmem:[%s478 + $0x328] sm:$0xff] %vm5969, %v6429
      %6712 = vst.msk [vmem:[%s478 + $0x330] sm:$0xff] %vm5969, %v6431
      %6713 = vst.msk [vmem:[%s478 + $0x338] sm:$0xff] %vm5969, %v6433
      %6714 = vst.msk [vmem:[%s478 + $0x340] sm:$0xff] %vm5969, %v6435
      %6715 = vst.msk [vmem:[%s478 + $0x348] sm:$0xff] %vm5969, %v6437
      %6716 = vst.msk [vmem:[%s478 + $0x350] sm:$0xff] %vm5969, %v6439
      %6717 = vst.msk [vmem:[%s478 + $0x358] sm:$0xff] %vm5969, %v6441
      %6718 = vst.msk [vmem:[%s478 + $0x360] sm:$0xff] %vm5969, %v6443
      %6719 = vst.msk [vmem:[%s478 + $0x368] sm:$0xff] %vm5969, %v6445
      %6720 = vst.msk [vmem:[%s478 + $0x370] sm:$0xff] %vm5969, %v6447
      %6721 = vst.msk [vmem:[%s478 + $0x378] sm:$0xff] %vm5969, %v6449
      %6722 = vst.msk [vmem:[%s478 + $0x380] sm:$0xff] %vm5969, %v6451
      %6723 = vst.msk [vmem:[%s478 + $0x388] sm:$0xff] %vm5969, %v6453
      %6724 = vst.msk [vmem:[%s478 + $0x390] sm:$0xff] %vm5969, %v6455
      %6725 = vst.msk [vmem:[%s478 + $0x398] sm:$0xff] %vm5969, %v6457
      %6726 = vst.msk [vmem:[%s478 + $0x3a0] sm:$0xff] %vm5969, %v6459
      %6727 = vst.msk [vmem:[%s478 + $0x3a8] sm:$0xff] %vm5969, %v6461
      %6728 = vst.msk [vmem:[%s478 + $0x3b0] sm:$0xff] %vm5969, %v6463
      %6729 = vst.msk [vmem:[%s478 + $0x3b8] sm:$0xff] %vm5969, %v6465
      %6730 = vst.msk [vmem:[%s478 + $0x3c0] sm:$0xff] %vm5969, %v6467
      %6731 = vst.msk [vmem:[%s478 + $0x3c8] sm:$0xff] %vm5969, %v6469
      %6732 = vst.msk [vmem:[%s478 + $0x3d0] sm:$0xff] %vm5969, %v6471
      %6733 = vst.msk [vmem:[%s478 + $0x3d8] sm:$0xff] %vm5969, %v6473
      %6734 = vst.msk [vmem:[%s478 + $0x3e0] sm:$0xff] %vm5969, %v6475
      %6735 = vst.msk [vmem:[%s478 + $0x3e8] sm:$0xff] %vm5969, %v6477
      %6736 = vst.msk [vmem:[%s478 + $0x3f0] sm:$0xff] %vm5969, %v6479
      %6737 = vst.msk [vmem:[%s478 + $0x3f8] sm:$0xff] %vm5969, %v6481
      %s6738 = smul.u32 128, %s25
      %p6739 = scmp.lt.s32.totalorder %s6738, 511
      %s6740 = scalar_select %p6739, %s6738, 511
      %s6741 = smul.addr %s6740, 8
      %s6742 = scalar_lea.vmem %s12, %s6741
      %s6743 = smul.u32 128, %s25
      %p6744 = scmp.lt.s32.totalorder %s6743, 511
      %s6745 = scalar_select %p6744, %s6743, 511
      %s6746 = smul.addr %s6745, 8
      %s6747 = scalar_lea.vmem %s13, %s6746
      // Predicated region
      $region69: #{dnn_forward.1} parent=67 // pred_check
        %p6748 = pneg %p305
      $region70: #{dnn_forward.1} parent=67 // pred_check_branch
        %6750 = sbr.rel (%p6748) target = $region72
      $region71: #{dnn_forward.1} parent=67 // pred_region
        %s6751 = smul.u32 128, %s25
      $region72: #{dnn_forward.1} parent=67 // pred_fallthru
        _
      // Predicated region
      $region73: #{dnn_forward.1} parent=67 // pred_check
        %p6752 = pneg %p331
      $region74: #{dnn_forward.1} parent=67 // pred_check_branch
        %6754 = sbr.rel (%p6752) target = $region76
      $region75: #{dnn_forward.1} parent=67 // pred_region
        %s6755 = smul.u32 128, %s25
      $region76: #{dnn_forward.1} parent=67 // pred_fallthru
        _
    $region68: #{dnn_forward.1} parent=5 // pred_fallthru
      _
    %p6756 = scmp.le.s32.totalorder 2, %s20
    // Predicated region
    $region77: #{dnn_forward.1} parent=5 // pred_check
      %p6757 = pneg %p6756
    $region78: #{dnn_forward.1} parent=5 // pred_check_branch
      %6759 = sbr.rel (%p6757) target = $region80
    $region79: #{dnn_forward.1} parent=5 // pred_region
      %s6760 = ssub.s32 %s20, 2
      // Predicated region
      $region81: #{dnn_forward.1} parent=79 // pred_check
        %p6761 = pneg %p311
      $region82: #{dnn_forward.1} parent=79 // pred_check_branch
        %6763 = sbr.rel (%p6761) target = $region84
      $region83: #{dnn_forward.1} parent=79 // pred_region
        %s6764 = smul.u32 128, %s26
        %p6765 = scmp.lt.s32.totalorder %s6764, 511
        %s6766 = scalar_select %p6765, %s6764, 511
        %s6767 = smul.addr %s6766, 8
        %s6768 = scalar_lea.vmem %s12, %s6767
      $region84: #{dnn_forward.1} parent=79 // pred_fallthru
        _
      // Predicated region
      $region85: #{dnn_forward.1} parent=79 // pred_check
        %p6769 = pneg %p337
      $region86: #{dnn_forward.1} parent=79 // pred_check_branch
        %6771 = sbr.rel (%p6769) target = $region88
      $region87: #{dnn_forward.1} parent=79 // pred_region
        %s6772 = smul.u32 128, %s26
        %p6773 = scmp.lt.s32.totalorder %s6772, 511
        %s6774 = scalar_select %p6773, %s6772, 511
        %s6775 = smul.addr %s6774, 8
        %s6776 = scalar_lea.vmem %s13, %s6775
      $region88: #{dnn_forward.1} parent=79 // pred_fallthru
        _
    $region80: #{dnn_forward.1} parent=5 // pred_fallthru
      _
  $region6: #{dnn_forward.1} parent=0 // loop_footer
    %s24 = sadd.s32 1, %s20
  $region7: #{dnn_forward.1} parent=0 // loop_footer_branch
    %19 = sbr.rel target = $region3
  $region8: #{dnn_forward.1} parent=0 // loop_exit
    _

</llo_original>
